<compile_context>
chip_gen: v7x
topology: tpu7x:2x2x1
jax: 0.10.0
libtpu: 0.0.40
codegen_flags: <defaults>
</compile_context>

<pallas_src>
import functools
import numpy as np
import jax
import jax.numpy as jnp
from jax.experimental import pallas as pl
from jax.experimental.pallas import tpu as pltpu

NEG_SLOPE = 0.2
HEADS = 9
VMEM_LIMIT = 64 * 1024 * 1024


def _round_up(x, m):
    return ((x + m - 1) // m) * m


# ----------------------------- Pallas kernels -----------------------------

def _feast_edge_kernel(qs_ref, qd_ref, xj_ref, c_ref, w_ref, o_ref, *, heads, fout):
    # FeaStConv per-edge message (PyG semantics) with the attention projection
    # hoisted to node level:
    #   q   = softmax(xU[j] - xU[i] + c, axis=heads)      (f32 softmax)
    #   m_e = sum_h q[:, h] * (x_j @ W)[:, h*F:(h+1)*F]   (bf16 MXU, f32 acc)
    q = qs_ref[...] - qd_ref[...] + c_ref[...]
    q = q - jnp.max(q, axis=-1, keepdims=True)
    q = jnp.exp(q)
    q = q * pl.reciprocal(jnp.sum(q, axis=-1, keepdims=True), approx=True)

    # Single wide MXU matmul: (TE, cin) @ (cin, heads*fout), bf16 in, f32 out.
    xjw = jnp.dot(xj_ref[...], w_ref[...], preferred_element_type=jnp.float32)

    # Head mix.  Slices are 128-lane aligned for the FLOP-dominant fout=128
    # layers; for fout in {32, 64} the unaligned slices cost a few XLU copies
    # per tile, which is cheaper than padding each head to 128 MXU columns.
    # TODO(synk): a minor-dim reshape (TE, H, F) + sum(axis=1) would avoid the
    # slices but its Mosaic lowering is not guaranteed for F not % 128.
    acc = q[:, 0:1] * xjw[:, 0:fout]
    for h in range(1, heads):
        acc = acc + q[:, h:h + 1] * xjw[:, h * fout:(h + 1) * fout]
    o_ref[...] = acc.astype(o_ref.dtype)


def pallas_feast_edge(qs, qd, xj, c, w, fout, heads=HEADS):
    """Per-edge FeaStConv messages, tiled over the edge dimension."""
    e = qs.shape[0]
    cin = xj.shape[1]
    # Bigger tiles for the cheaper convs; multiples of 16 (bf16 sublanes).
    cap = 1024 if fout <= 64 else 512
    te = min(cap, _round_up(e, 16))
    e_pad = _round_up(e, te)
    if e_pad != e:
        pad = ((0, e_pad - e), (0, 0))
        qs = jnp.pad(qs, pad)
        qd = jnp.pad(qd, pad)
        xj = jnp.pad(xj, pad)

    out = pl.pallas_call(
        functools.partial(_feast_edge_kernel, heads=heads, fout=fout),
        out_shape=jax.ShapeDtypeStruct((e_pad, fout), jnp.float32),
        grid=(e_pad // te,),
        in_specs=[
            pl.BlockSpec((te, heads), lambda i: (i, 0)),           # xU[src] tile
            pl.BlockSpec((te, heads), lambda i: (i, 0)),           # xU[dst] tile
            pl.BlockSpec((te, cin), lambda i: (i, 0)),             # x_j tile (bf16)
            pl.BlockSpec((1, heads), lambda i: (0, 0)),            # c   (resident)
            pl.BlockSpec((cin, heads * fout), lambda i: (0, 0)),   # W   (resident, bf16)
        ],
        out_specs=pl.BlockSpec((te, fout), lambda i: (i, 0)),
        compiler_params=pltpu.CompilerParams(
            dimension_semantics=("parallel",),
            vmem_limit_bytes=VMEM_LIMIT,
        ),
    )(qs, qd, xj, c, w)
    return out[:e]


def _mlp_head_kernel(x_ref, w1_ref, b1_ref, w2_ref, b2_ref, o_ref, *, slope):
    # Fused fc1 -> leaky_relu -> fc2.  The (TN, 1024) hidden stays in VMEM.
    h = jnp.dot(x_ref[...].astype(jnp.bfloat16), w1_ref[...],
                preferred_element_type=jnp.float32) + b1_ref[...]
    h = jnp.where(h >= 0, h, slope * h)
    y = jnp.dot(h.astype(jnp.bfloat16), w2_ref[...],
                preferred_element_type=jnp.float32) + b2_ref[...]
    o_ref[...] = y.astype(o_ref.dtype)


def pallas_mlp_head(x, p1, p2, slope=NEG_SLOPE):
    """y = fc2(leaky_relu(fc1(x))) as one row-tiled pallas_call."""
    n, cin = x.shape
    hid = p1['W'].shape[1]
    cout = p2['W'].shape[1]
    tn = min(256, _round_up(n, 8))
    n_pad = _round_up(n, tn)
    xp = jnp.pad(x, ((0, n_pad - n), (0, 0))) if n_pad != n else x
    w1 = p1['W'].astype(jnp.bfloat16)
    w2 = p2['W'].astype(jnp.bfloat16)

    out = pl.pallas_call(
        functools.partial(_mlp_head_kernel, slope=slope),
        out_shape=jax.ShapeDtypeStruct((n_pad, cout), jnp.float32),
        grid=(n_pad // tn,),
        in_specs=[
            pl.BlockSpec((tn, cin), lambda i: (i, 0)),      # x tile
            pl.BlockSpec((cin, hid), lambda i: (0, 0)),     # W1 (resident, bf16)
            pl.BlockSpec((1, hid), lambda i: (0, 0)),       # b1
            pl.BlockSpec((hid, cout), lambda i: (0, 0)),    # W2 (resident, bf16)
            pl.BlockSpec((1, cout), lambda i: (0, 0)),      # b2
        ],
        out_specs=pl.BlockSpec((tn, cout), lambda i: (i, 0)),
        compiler_params=pltpu.CompilerParams(
            dimension_semantics=("parallel",),
            vmem_limit_bytes=VMEM_LIMIT,
        ),
    )(xp, w1, p1['b'], w2, p2['b'])
    return out[:n]


# ------------------------------ FeaStConv ----------------------------------

def feast_conv(p, x, edge_index, slope):
    """FeaStConv (heads=9, mean aggregation, self-loops already in edge_index)."""
    src = edge_index[0]          # x_j (source)
    dst = edge_index[1]          # x_i (target)
    n = x.shape[0]
    fout = p['b'].shape[1]

    # Hoisted attention projection: (N, cin) @ (cin, 9) once per layer; the
    # skinny matmul is left to XLA and only 36 B/edge is gathered afterwards.
    xu = jnp.dot(x, p['u'])                       # (N, 9) f32
    qs = xu[src]                                  # (E, 9)
    qd = xu[dst]                                  # (E, 9)
    xj = x[src].astype(jnp.bfloat16)              # (E, cin) bf16 (halves gather bytes)
    w_bf = p['W'].astype(jnp.bfloat16)

    msg = pallas_feast_edge(qs, qd, xj, p['c'], w_bf, fout)

    # Scatter-mean aggregation + bias + leaky-relu (data-dependent scatter kept
    # in JAX; XLA fuses the bias/activation with the degree normalization).
    # TODO(synk): a fully fused gather/message/scatter kernel via
    # PrefetchScalarGridSpec over dst-sorted edges would remove the (E, cin)
    # and (E, fout) HBM round trips entirely.
    summed = jax.ops.segment_sum(msg, dst, num_segments=n)
    deg = jax.ops.segment_sum(jnp.ones((dst.shape[0], 1), jnp.float32), dst,
                              num_segments=n)
    out = summed / deg + p['b']
    if slope is not None:
        out = jnp.where(out >= 0, out, slope * out)
    return out


# ------------------------------ pooling ------------------------------------

# TODO(synk): PoolingLayer source not provided; reconstructed as consecutive-
# pair clustering (cluster = node // 2) with 'max' feature pooling and coarse
# edges = deduped mapped fine edges (edge_weight_type / wei_param unused).

def pool_max(x):
    n, c = x.shape
    return x.reshape(n // 2, 2, c).max(axis=1)


def unpool(x):
    return jnp.repeat(x, 2, axis=0)


def build_hierarchy(edge_index, n_nodes, levels=3, step=2):
    """Host-side (numpy) graph hierarchy; adds self-loops at every level."""
    hier = {}
    e = edge_index
    nodes = n_nodes
    for lvl in range(1, levels + 1):
        loops = np.stack([np.arange(nodes), np.arange(nodes)])
        e_sl = np.concatenate([e, loops], axis=1).astype(np.int32)
        hier[f'e{lvl}'] = jnp.asarray(e_sl)
        if lvl < levels:
            c = e // step
            c = c[:, c[0] != c[1]]
            c = np.unique(c.T, axis=0).T if c.size else np.zeros((2, 0), np.int64)
            e = c
            nodes = nodes // step
    return hier


# ------------------------------ GNNModule ----------------------------------

def gnn_forward(p, x, hier):
    x1 = feast_conv(p['l_conv1'], x, hier['e1'], NEG_SLOPE)        # (N1, 32)
    x2 = pool_max(x1)                                              # (N2, 32)
    x2 = feast_conv(p['l_conv2'], x2, hier['e2'], NEG_SLOPE)       # (N2, 64)
    x3 = pool_max(x2)                                              # (N3, 64)
    x3 = feast_conv(p['l_conv3'], x3, hier['e3'], NEG_SLOPE)       # (N3, 128)
    x3 = feast_conv(p['l_conv4'], x3, hier['e3'], NEG_SLOPE)       # (N3, 128)
    f2 = unpool(x3)                                                # (N2, 128)
    f2 = feast_conv(p['r_conv1'], f2, hier['e2'], None)            # (N2, 64)
    x2 = jnp.concatenate([x2, f2], axis=1)                         # (N2, 128)
    x2 = feast_conv(p['r_conv2'], x2, hier['e2'], NEG_SLOPE)       # (N2, 64)
    f1 = unpool(x2)                                                # (N1, 64)
    f1 = feast_conv(p['r_conv3'], f1, hier['e1'], None)            # (N1, 32)
    x1 = jnp.concatenate([x1, f1], axis=1)                         # (N1, 64)
    return feast_conv(p['r_conv4'], x1, hier['e1'], NEG_SLOPE)     # (N1, 32)


# ------------------------------ DualGNN ------------------------------------

def compute_face_normal(verts, fv):
    # TODO(synk): data_util.computer_face_normal source not provided; standard
    # normalized cross product of the two face edge vectors.
    v0, v1, v2 = verts[fv[:, 0]], verts[fv[:, 1]], verts[fv[:, 2]]
    n = jnp.cross(v1 - v0, v2 - v0)
    return n / jnp.maximum(jnp.linalg.norm(n, axis=1, keepdims=True), 1e-12)


def dual_gnn_forward(params, x_v, x_f, fv_indices, hier_v, hier_f):
    xyz = x_v[:, :3]
    feat_v = gnn_forward(params['gnn_v'], x_v, hier_v)                       # (Nv, 32)
    feat_v = pallas_mlp_head(feat_v, params['fc_v1'], params['fc_v2'])       # (Nv, 3)
    feat_v = feat_v + xyz
    face_cent = feat_v[fv_indices].mean(axis=1)                              # (Nf, 3)
    face_norm = compute_face_normal(feat_v, fv_indices)                      # (Nf, 3)
    xf = jnp.concatenate([x_f, face_cent, face_norm], axis=1)                # (Nf, 12)
    feat_f = gnn_forward(params['gnn_f'], xf, hier_f)                        # (Nf, 32)
    feat_f = pallas_mlp_head(feat_f, params['fc_f1'], params['fc_f2'])       # (Nf, 3)
    feat_f = feat_f / jnp.maximum(jnp.linalg.norm(feat_f, axis=1, keepdims=True), 1e-12)
    return feat_v, feat_f, None


dual_gnn_forward_jit = jax.jit(dual_gnn_forward)


# ------------------------------ parameters ---------------------------------

def init_feast(key, cin, cout, heads=HEADS):
    k1, k2, k3, k4 = jax.random.split(key, 4)
    return {
        'W': jax.random.normal(k1, (cin, heads * cout), jnp.float32) * 0.1,
        'u': jax.random.normal(k2, (cin, heads), jnp.float32) * 0.1,
        'c': jax.random.normal(k3, (1, heads), jnp.float32) * 0.1,
        'b': jax.random.normal(k4, (1, cout), jnp.float32) * 0.1,
    }


def init_linear(key, cin, cout):
    k1, k2 = jax.random.split(key)
    return {
        'W': jax.random.normal(k1, (cin, cout), jnp.float32) / np.sqrt(cin),
        'b': jax.random.normal(k2, (1, cout), jnp.float32) * 0.01,
    }


def init_gnn(key, in_ch):
    ks = jax.random.split(key, 8)
    return {
        'l_conv1': init_feast(ks[0], in_ch, 32),
        'l_conv2': init_feast(ks[1], 32, 64),
        'l_conv3': init_feast(ks[2], 64, 128),
        'l_conv4': init_feast(ks[3], 128, 128),
        'r_conv1': init_feast(ks[4], 128, 64),
        'r_conv2': init_feast(ks[5], 128, 64),
        'r_conv3': init_feast(ks[6], 64, 32),
        'r_conv4': init_feast(ks[7], 64, 32),
    }


def init_dual_gnn(key, force_depth=False):
    k1, k2, k3, k4, k5, k6 = jax.random.split(key, 6)
    return {
        'gnn_v': init_gnn(k1, 6),
        'fc_v1': init_linear(k2, 32, 1024),
        'fc_v2': init_linear(k3, 1024, 1 if force_depth else 3),
        'gnn_f': init_gnn(k4, 12),
        'fc_f1': init_linear(k5, 32, 1024),
        'fc_f2': init_linear(k6, 1024, 3),
    }


# --------------------------------- main -------------------------------------

def ring_edges(n):
    s = np.arange(n)
    t = (s + 1) % n
    return np.concatenate([np.stack([s, t]), np.stack([t, s])], axis=1)  # (2, 2n)


if __name__ == "__main__":
    key = jax.random.PRNGKey(0)
    k_par, k_pos, k_nrm, k_fx = jax.random.split(key, 4)

    Nv, Nf = 16, 16
    # vertex data: x = [xyz, vertex normal]  -> (Nv, 6)
    pos = jax.random.normal(k_pos, (Nv, 3), jnp.float32)
    nrm = jax.random.normal(k_nrm, (Nv, 3), jnp.float32)
    nrm = nrm / jnp.maximum(jnp.linalg.norm(nrm, axis=1, keepdims=True), 1e-12)
    x_v = jnp.concatenate([pos, nrm], axis=1)
    # face data: 6 input features per face -> (Nf, 6)
    x_f = jax.random.normal(k_fx, (Nf, 6), jnp.float32)
    # face-vertex indices (Nf, 3)
    fv_np = np.stack([np.arange(Nf), (np.arange(Nf) + 1) % Nv,
                      (np.arange(Nf) + 2) % Nv], axis=1).astype(np.int32)
    fv_indices = jnp.asarray(fv_np)

    hier_v = build_hierarchy(ring_edges(Nv), Nv)
    hier_f = build_hierarchy(ring_edges(Nf), Nf)

    params = init_dual_gnn(k_par, force_depth=False)

    feat_v, feat_f, _ = dual_gnn_forward_jit(params, x_v, x_f, fv_indices,
                                             hier_v, hier_f)
    feat_v = jax.block_until_ready(feat_v)
    feat_f = jax.block_until_ready(feat_f)

    assert feat_v.shape == (Nv, 3) and feat_f.shape == (Nf, 3)
    assert bool(jnp.all(jnp.isfinite(feat_v))) and bool(jnp.all(jnp.isfinite(feat_f)))
    print("KERNEL_OK")
</pallas_src>

<mosaic_0001>
module attributes {stable_mosaic.version = 11 : i64} {
  func.func private @main(%arg0: i32) attributes {dimension_semantics = [#tpu.dimension_semantics<core_parallel>], iteration_bounds = array<i64: 2>, tpu.core_type = #tpu.core_type<sc_scalar_subcore>, window_params = []} {
    return
  }
}

module attributes {stable_mosaic.version = 11 : i64} {
  func.func private @main(%arg0: i32) attributes {dimension_semantics = [#tpu.dimension_semantics<core_parallel>], iteration_bounds = array<i64: 2>, tpu.core_type = #tpu.core_type<sc_scalar_subcore>, window_params = []} {
    return
  }
}

module attributes {stable_mosaic.version = 11 : i64} {
  func.func @_feast_edge_kernel(%arg0: i32, %arg1: memref<48x9xf32, #tpu.memory_space<vmem>>, %arg2: memref<48x9xf32, #tpu.memory_space<vmem>>, %arg3: memref<48x6xbf16, #tpu.memory_space<vmem>>, %arg4: memref<1x9xf32, #tpu.memory_space<vmem>>, %arg5: memref<6x288xbf16, #tpu.memory_space<vmem>>, %arg6: memref<48x32xf32, #tpu.memory_space<vmem>>) attributes {dimension_semantics = [#tpu.dimension_semantics<parallel>], iteration_bounds = array<i64: 1>, scalar_prefetch = 0 : i64, scratch_operands = 0 : i64, tpu.core_type = #tpu.core_type<tc>, window_params = [{transform_indices = @transform_0, window_bounds = array<i64: 48, 9>}, {transform_indices = @transform_1, window_bounds = array<i64: 48, 9>}, {transform_indices = @transform_2, window_bounds = array<i64: 48, 6>}, {pipeline_mode = #tpu.pipeline_mode<synchronous>, transform_indices = @transform_3, window_bounds = array<i64: 1, 9>}, {pipeline_mode = #tpu.pipeline_mode<synchronous>, transform_indices = @transform_4, window_bounds = array<i64: 6, 288>}, {transform_indices = @transform_5, window_bounds = array<i64: 48, 32>}]} {
    %c0 = arith.constant 0 : index
    %c0_0 = arith.constant 0 : index
    %0 = vector.load %arg1[%c0, %c0_0] : memref<48x9xf32, #tpu.memory_space<vmem>>, vector<48x9xf32>
    %c0_1 = arith.constant 0 : index
    %c0_2 = arith.constant 0 : index
    %1 = vector.load %arg2[%c0_1, %c0_2] : memref<48x9xf32, #tpu.memory_space<vmem>>, vector<48x9xf32>
    %2 = arith.subf %0, %1 : vector<48x9xf32>
    %c0_3 = arith.constant 0 : index
    %c0_4 = arith.constant 0 : index
    %3 = vector.load %arg4[%c0_3, %c0_4] : memref<1x9xf32, #tpu.memory_space<vmem>>, vector<1x9xf32>
    %4 = vector.broadcast %3 : vector<1x9xf32> to vector<48x9xf32>
    %5 = arith.addf %2, %4 : vector<48x9xf32>
    %cst = arith.constant dense<0xFF800000> : vector<48xf32>
    %6 = vector.multi_reduction <maximumf>, %5, %cst [1] : vector<48x9xf32> to vector<48xf32>
    %7 = vector.shape_cast %6 : vector<48xf32> to vector<48x1xf32>
    %8 = vector.broadcast %7 : vector<48x1xf32> to vector<48x9xf32>
    %9 = arith.subf %5, %8 : vector<48x9xf32>
    %10 = math.exp %9 : vector<48x9xf32>
    %cst_5 = arith.constant dense<0.000000e+00> : vector<48xf32>
    %11 = vector.multi_reduction <add>, %10, %cst_5 [1] : vector<48x9xf32> to vector<48xf32>
    %12 = vector.shape_cast %11 : vector<48xf32> to vector<48x1xf32>
    %13 = tpu.reciprocal %12 {approx = true} : vector<48x1xf32> -> vector<48x1xf32>
    %14 = vector.broadcast %13 : vector<48x1xf32> to vector<48x9xf32>
    %15 = arith.mulf %10, %14 : vector<48x9xf32>
    %c0_6 = arith.constant 0 : index
    %c0_7 = arith.constant 0 : index
    %16 = vector.load %arg3[%c0_6, %c0_7] : memref<48x6xbf16, #tpu.memory_space<vmem>>, vector<48x6xbf16>
    %c0_8 = arith.constant 0 : index
    %c0_9 = arith.constant 0 : index
    %17 = vector.load %arg5[%c0_8, %c0_9] : memref<6x288xbf16, #tpu.memory_space<vmem>>, vector<6x288xbf16>
    %cst_10 = arith.constant dense<0.000000e+00> : vector<48x288xf32>
    %18 = tpu.matmul %16, %17, %cst_10 {dimension_numbers = #tpu.dot_dimension_numbers<[1], [0], [0], [1], [0, 0, 1, 1], [], []>} : vector<48x6xbf16>, vector<6x288xbf16>, vector<48x288xf32> -> vector<48x288xf32>
    %19 = vector.extract_strided_slice %15 {offsets = [0, 0], sizes = [48, 1], strides = [1, 1]} : vector<48x9xf32> to vector<48x1xf32>
    %20 = vector.extract_strided_slice %18 {offsets = [0, 0], sizes = [48, 32], strides = [1, 1]} : vector<48x288xf32> to vector<48x32xf32>
    %21 = vector.broadcast %19 : vector<48x1xf32> to vector<48x32xf32>
    %22 = arith.mulf %21, %20 : vector<48x32xf32>
    %23 = vector.extract_strided_slice %15 {offsets = [0, 1], sizes = [48, 1], strides = [1, 1]} : vector<48x9xf32> to vector<48x1xf32>
    %24 = vector.extract_strided_slice %18 {offsets = [0, 32], sizes = [48, 32], strides = [1, 1]} : vector<48x288xf32> to vector<48x32xf32>
    %25 = vector.broadcast %23 : vector<48x1xf32> to vector<48x32xf32>
    %26 = arith.mulf %25, %24 : vector<48x32xf32>
    %27 = arith.addf %22, %26 : vector<48x32xf32>
    %28 = vector.extract_strided_slice %15 {offsets = [0, 2], sizes = [48, 1], strides = [1, 1]} : vector<48x9xf32> to vector<48x1xf32>
    %29 = vector.extract_strided_slice %18 {offsets = [0, 64], sizes = [48, 32], strides = [1, 1]} : vector<48x288xf32> to vector<48x32xf32>
    %30 = vector.broadcast %28 : vector<48x1xf32> to vector<48x32xf32>
    %31 = arith.mulf %30, %29 : vector<48x32xf32>
    %32 = arith.addf %27, %31 : vector<48x32xf32>
    %33 = vector.extract_strided_slice %15 {offsets = [0, 3], sizes = [48, 1], strides = [1, 1]} : vector<48x9xf32> to vector<48x1xf32>
    %34 = vector.extract_strided_slice %18 {offsets = [0, 96], sizes = [48, 32], strides = [1, 1]} : vector<48x288xf32> to vector<48x32xf32>
    %35 = vector.broadcast %33 : vector<48x1xf32> to vector<48x32xf32>
    %36 = arith.mulf %35, %34 : vector<48x32xf32>
    %37 = arith.addf %32, %36 : vector<48x32xf32>
    %38 = vector.extract_strided_slice %15 {offsets = [0, 4], sizes = [48, 1], strides = [1, 1]} : vector<48x9xf32> to vector<48x1xf32>
    %39 = vector.extract_strided_slice %18 {offsets = [0, 128], sizes = [48, 32], strides = [1, 1]} : vector<48x288xf32> to vector<48x32xf32>
    %40 = vector.broadcast %38 : vector<48x1xf32> to vector<48x32xf32>
    %41 = arith.mulf %40, %39 : vector<48x32xf32>
    %42 = arith.addf %37, %41 : vector<48x32xf32>
    %43 = vector.extract_strided_slice %15 {offsets = [0, 5], sizes = [48, 1], strides = [1, 1]} : vector<48x9xf32> to vector<48x1xf32>
    %44 = vector.extract_strided_slice %18 {offsets = [0, 160], sizes = [48, 32], strides = [1, 1]} : vector<48x288xf32> to vector<48x32xf32>
    %45 = vector.broadcast %43 : vector<48x1xf32> to vector<48x32xf32>
    %46 = arith.mulf %45, %44 : vector<48x32xf32>
    %47 = arith.addf %42, %46 : vector<48x32xf32>
    %48 = vector.extract_strided_slice %15 {offsets = [0, 6], sizes = [48, 1], strides = [1, 1]} : vector<48x9xf32> to vector<48x1xf32>
    %49 = vector.extract_strided_slice %18 {offsets = [0, 192], sizes = [48, 32], strides = [1, 1]} : vector<48x288xf32> to vector<48x32xf32>
    %50 = vector.broadcast %48 : vector<48x1xf32> to vector<48x32xf32>
    %51 = arith.mulf %50, %49 : vector<48x32xf32>
    %52 = arith.addf %47, %51 : vector<48x32xf32>
    %53 = vector.extract_strided_slice %15 {offsets = [0, 7], sizes = [48, 1], strides = [1, 1]} : vector<48x9xf32> to vector<48x1xf32>
    %54 = vector.extract_strided_slice %18 {offsets = [0, 224], sizes = [48, 32], strides = [1, 1]} : vector<48x288xf32> to vector<48x32xf32>
    %55 = vector.broadcast %53 : vector<48x1xf32> to vector<48x32xf32>
    %56 = arith.mulf %55, %54 : vector<48x32xf32>
    %57 = arith.addf %52, %56 : vector<48x32xf32>
    %58 = vector.extract_strided_slice %15 {offsets = [0, 8], sizes = [48, 1], strides = [1, 1]} : vector<48x9xf32> to vector<48x1xf32>
    %59 = vector.extract_strided_slice %18 {offsets = [0, 256], sizes = [48, 32], strides = [1, 1]} : vector<48x288xf32> to vector<48x32xf32>
    %60 = vector.broadcast %58 : vector<48x1xf32> to vector<48x32xf32>
    %61 = arith.mulf %60, %59 : vector<48x32xf32>
    %62 = arith.addf %57, %61 : vector<48x32xf32>
    %c0_11 = arith.constant 0 : index
    %c0_12 = arith.constant 0 : index
    %63 = vector.load %arg6[%c0_11, %c0_12] : memref<48x32xf32, #tpu.memory_space<vmem>>, vector<48x32xf32>
    tpu.vector_store %arg6[%c0_11, %c0_12], %62 {strides = array<i32>} : memref<48x32xf32, #tpu.memory_space<vmem>>, vector<48x32xf32>,
    return
  }
  func.func @transform_0(%arg0: i32) -> (i32, i32) {
    %c0_i32 = arith.constant 0 : i32
    %c0_i32_0 = arith.constant 0 : i32
    return %arg0, %c0_i32 : i32, i32
  }
  func.func @transform_1(%arg0: i32) -> (i32, i32) {
    %c0_i32 = arith.constant 0 : i32
    %c0_i32_0 = arith.constant 0 : i32
    return %arg0, %c0_i32 : i32, i32
  }
  func.func @transform_2(%arg0: i32) -> (i32, i32) {
    %c0_i32 = arith.constant 0 : i32
    %c0_i32_0 = arith.constant 0 : i32
    return %arg0, %c0_i32 : i32, i32
  }
  func.func @transform_3(%arg0: i32) -> (i32, i32) {
    %c0_i32 = arith.constant 0 : i32
    %c0_i32_0 = arith.constant 0 : i32
    %c0_i32_1 = arith.constant 0 : i32
    return %c0_i32, %c0_i32_0 : i32, i32
  }
  func.func @transform_4(%arg0: i32) -> (i32, i32) {
    %c0_i32 = arith.constant 0 : i32
    %c0_i32_0 = arith.constant 0 : i32
    %c0_i32_1 = arith.constant 0 : i32
    return %c0_i32, %c0_i32_0 : i32, i32
  }
  func.func @transform_5(%arg0: i32) -> (i32, i32) {
    %c0_i32 = arith.constant 0 : i32
    %c0_i32_0 = arith.constant 0 : i32
    return %arg0, %c0_i32 : i32, i32
  }
}

module attributes {stable_mosaic.version = 11 : i64} {
  func.func @_feast_edge_kernel(%arg0: i32, %arg1: memref<32x9xf32, #tpu.memory_space<vmem>>, %arg2: memref<32x9xf32, #tpu.memory_space<vmem>>, %arg3: memref<32x32xbf16, #tpu.memory_space<vmem>>, %arg4: memref<1x9xf32, #tpu.memory_space<vmem>>, %arg5: memref<32x576xbf16, #tpu.memory_space<vmem>>, %arg6: memref<32x64xf32, #tpu.memory_space<vmem>>) attributes {dimension_semantics = [#tpu.dimension_semantics<parallel>], iteration_bounds = array<i64: 1>, scalar_prefetch = 0 : i64, scratch_operands = 0 : i64, tpu.core_type = #tpu.core_type<tc>, window_params = [{transform_indices = @transform_0, window_bounds = array<i64: 32, 9>}, {transform_indices = @transform_1, window_bounds = array<i64: 32, 9>}, {transform_indices = @transform_2, window_bounds = array<i64: 32, 32>}, {pipeline_mode = #tpu.pipeline_mode<synchronous>, transform_indices = @transform_3, window_bounds = array<i64: 1, 9>}, {pipeline_mode = #tpu.pipeline_mode<synchronous>, transform_indices = @transform_4, window_bounds = array<i64: 32, 576>}, {transform_indices = @transform_5, window_bounds = array<i64: 32, 64>}]} {
    %c0 = arith.constant 0 : index
    %c0_0 = arith.constant 0 : index
    %0 = vector.load %arg1[%c0, %c0_0] : memref<32x9xf32, #tpu.memory_space<vmem>>, vector<32x9xf32>
    %c0_1 = arith.constant 0 : index
    %c0_2 = arith.constant 0 : index
    %1 = vector.load %arg2[%c0_1, %c0_2] : memref<32x9xf32, #tpu.memory_space<vmem>>, vector<32x9xf32>
    %2 = arith.subf %0, %1 : vector<32x9xf32>
    %c0_3 = arith.constant 0 : index
    %c0_4 = arith.constant 0 : index
    %3 = vector.load %arg4[%c0_3, %c0_4] : memref<1x9xf32, #tpu.memory_space<vmem>>, vector<1x9xf32>
    %4 = vector.broadcast %3 : vector<1x9xf32> to vector<32x9xf32>
    %5 = arith.addf %2, %4 : vector<32x9xf32>
    %cst = arith.constant dense<0xFF800000> : vector<32xf32>
    %6 = vector.multi_reduction <maximumf>, %5, %cst [1] : vector<32x9xf32> to vector<32xf32>
    %7 = vector.shape_cast %6 : vector<32xf32> to vector<32x1xf32>
    %8 = vector.broadcast %7 : vector<32x1xf32> to vector<32x9xf32>
    %9 = arith.subf %5, %8 : vector<32x9xf32>
    %10 = math.exp %9 : vector<32x9xf32>
    %cst_5 = arith.constant dense<0.000000e+00> : vector<32xf32>
    %11 = vector.multi_reduction <add>, %10, %cst_5 [1] : vector<32x9xf32> to vector<32xf32>
    %12 = vector.shape_cast %11 : vector<32xf32> to vector<32x1xf32>
    %13 = tpu.reciprocal %12 {approx = true} : vector<32x1xf32> -> vector<32x1xf32>
    %14 = vector.broadcast %13 : vector<32x1xf32> to vector<32x9xf32>
    %15 = arith.mulf %10, %14 : vector<32x9xf32>
    %c0_6 = arith.constant 0 : index
    %c0_7 = arith.constant 0 : index
    %16 = vector.load %arg3[%c0_6, %c0_7] : memref<32x32xbf16, #tpu.memory_space<vmem>>, vector<32x32xbf16>
    %c0_8 = arith.constant 0 : index
    %c0_9 = arith.constant 0 : index
    %17 = vector.load %arg5[%c0_8, %c0_9] : memref<32x576xbf16, #tpu.memory_space<vmem>>, vector<32x576xbf16>
    %cst_10 = arith.constant dense<0.000000e+00> : vector<32x576xf32>
    %18 = tpu.matmul %16, %17, %cst_10 {dimension_numbers = #tpu.dot_dimension_numbers<[1], [0], [0], [1], [0, 0, 1, 1], [], []>} : vector<32x32xbf16>, vector<32x576xbf16>, vector<32x576xf32> -> vector<32x576xf32>
    %19 = vector.extract_strided_slice %15 {offsets = [0, 0], sizes = [32, 1], strides = [1, 1]} : vector<32x9xf32> to vector<32x1xf32>
    %20 = vector.extract_strided_slice %18 {offsets = [0, 0], sizes = [32, 64], strides = [1, 1]} : vector<32x576xf32> to vector<32x64xf32>
    %21 = vector.broadcast %19 : vector<32x1xf32> to vector<32x64xf32>
    %22 = arith.mulf %21, %20 : vector<32x64xf32>
    %23 = vector.extract_strided_slice %15 {offsets = [0, 1], sizes = [32, 1], strides = [1, 1]} : vector<32x9xf32> to vector<32x1xf32>
    %24 = vector.extract_strided_slice %18 {offsets = [0, 64], sizes = [32, 64], strides = [1, 1]} : vector<32x576xf32> to vector<32x64xf32>
    %25 = vector.broadcast %23 : vector<32x1xf32> to vector<32x64xf32>
    %26 = arith.mulf %25, %24 : vector<32x64xf32>
    %27 = arith.addf %22, %26 : vector<32x64xf32>
    %28 = vector.extract_strided_slice %15 {offsets = [0, 2], sizes = [32, 1], strides = [1, 1]} : vector<32x9xf32> to vector<32x1xf32>
    %29 = vector.extract_strided_slice %18 {offsets = [0, 128], sizes = [32, 64], strides = [1, 1]} : vector<32x576xf32> to vector<32x64xf32>
    %30 = vector.broadcast %28 : vector<32x1xf32> to vector<32x64xf32>
    %31 = arith.mulf %30, %29 : vector<32x64xf32>
    %32 = arith.addf %27, %31 : vector<32x64xf32>
    %33 = vector.extract_strided_slice %15 {offsets = [0, 3], sizes = [32, 1], strides = [1, 1]} : vector<32x9xf32> to vector<32x1xf32>
    %34 = vector.extract_strided_slice %18 {offsets = [0, 192], sizes = [32, 64], strides = [1, 1]} : vector<32x576xf32> to vector<32x64xf32>
    %35 = vector.broadcast %33 : vector<32x1xf32> to vector<32x64xf32>
    %36 = arith.mulf %35, %34 : vector<32x64xf32>
    %37 = arith.addf %32, %36 : vector<32x64xf32>
    %38 = vector.extract_strided_slice %15 {offsets = [0, 4], sizes = [32, 1], strides = [1, 1]} : vector<32x9xf32> to vector<32x1xf32>
    %39 = vector.extract_strided_slice %18 {offsets = [0, 256], sizes = [32, 64], strides = [1, 1]} : vector<32x576xf32> to vector<32x64xf32>
    %40 = vector.broadcast %38 : vector<32x1xf32> to vector<32x64xf32>
    %41 = arith.mulf %40, %39 : vector<32x64xf32>
    %42 = arith.addf %37, %41 : vector<32x64xf32>
    %43 = vector.extract_strided_slice %15 {offsets = [0, 5], sizes = [32, 1], strides = [1, 1]} : vector<32x9xf32> to vector<32x1xf32>
    %44 = vector.extract_strided_slice %18 {offsets = [0, 320], sizes = [32, 64], strides = [1, 1]} : vector<32x576xf32> to vector<32x64xf32>
    %45 = vector.broadcast %43 : vector<32x1xf32> to vector<32x64xf32>
    %46 = arith.mulf %45, %44 : vector<32x64xf32>
    %47 = arith.addf %42, %46 : vector<32x64xf32>
    %48 = vector.extract_strided_slice %15 {offsets = [0, 6], sizes = [32, 1], strides = [1, 1]} : vector<32x9xf32> to vector<32x1xf32>
    %49 = vector.extract_strided_slice %18 {offsets = [0, 384], sizes = [32, 64], strides = [1, 1]} : vector<32x576xf32> to vector<32x64xf32>
    %50 = vector.broadcast %48 : vector<32x1xf32> to vector<32x64xf32>
    %51 = arith.mulf %50, %49 : vector<32x64xf32>
    %52 = arith.addf %47, %51 : vector<32x64xf32>
    %53 = vector.extract_strided_slice %15 {offsets = [0, 7], sizes = [32, 1], strides = [1, 1]} : vector<32x9xf32> to vector<32x1xf32>
    %54 = vector.extract_strided_slice %18 {offsets = [0, 448], sizes = [32, 64], strides = [1, 1]} : vector<32x576xf32> to vector<32x64xf32>
    %55 = vector.broadcast %53 : vector<32x1xf32> to vector<32x64xf32>
    %56 = arith.mulf %55, %54 : vector<32x64xf32>
    %57 = arith.addf %52, %56 : vector<32x64xf32>
    %58 = vector.extract_strided_slice %15 {offsets = [0, 8], sizes = [32, 1], strides = [1, 1]} : vector<32x9xf32> to vector<32x1xf32>
    %59 = vector.extract_strided_slice %18 {offsets = [0, 512], sizes = [32, 64], strides = [1, 1]} : vector<32x576xf32> to vector<32x64xf32>
    %60 = vector.broadcast %58 : vector<32x1xf32> to vector<32x64xf32>
    %61 = arith.mulf %60, %59 : vector<32x64xf32>
    %62 = arith.addf %57, %61 : vector<32x64xf32>
    %c0_11 = arith.constant 0 : index
    %c0_12 = arith.constant 0 : index
    %63 = vector.load %arg6[%c0_11, %c0_12] : memref<32x64xf32, #tpu.memory_space<vmem>>, vector<32x64xf32>
    tpu.vector_store %arg6[%c0_11, %c0_12], %62 {strides = array<i32>} : memref<32x64xf32, #tpu.memory_space<vmem>>, vector<32x64xf32>,
    return
  }
  func.func @transform_0(%arg0: i32) -> (i32, i32) {
    %c0_i32 = arith.constant 0 : i32
    %c0_i32_0 = arith.constant 0 : i32
    return %arg0, %c0_i32 : i32, i32
  }
  func.func @transform_1(%arg0: i32) -> (i32, i32) {
    %c0_i32 = arith.constant 0 : i32
    %c0_i32_0 = arith.constant 0 : i32
    return %arg0, %c0_i32 : i32, i32
  }
  func.func @transform_2(%arg0: i32) -> (i32, i32) {
    %c0_i32 = arith.constant 0 : i32
    %c0_i32_0 = arith.constant 0 : i32
    return %arg0, %c0_i32 : i32, i32
  }
  func.func @transform_3(%arg0: i32) -> (i32, i32) {
    %c0_i32 = arith.constant 0 : i32
    %c0_i32_0 = arith.constant 0 : i32
    %c0_i32_1 = arith.constant 0 : i32
    return %c0_i32, %c0_i32_0 : i32, i32
  }
  func.func @transform_4(%arg0: i32) -> (i32, i32) {
    %c0_i32 = arith.constant 0 : i32
    %c0_i32_0 = arith.constant 0 : i32
    %c0_i32_1 = arith.constant 0 : i32
    return %c0_i32, %c0_i32_0 : i32, i32
  }
  func.func @transform_5(%arg0: i32) -> (i32, i32) {
    %c0_i32 = arith.constant 0 : i32
    %c0_i32_0 = arith.constant 0 : i32
    return %arg0, %c0_i32 : i32, i32
  }
}

module attributes {stable_mosaic.version = 11 : i64} {
  func.func @_feast_edge_kernel(%arg0: i32, %arg1: memref<16x9xf32, #tpu.memory_space<vmem>>, %arg2: memref<16x9xf32, #tpu.memory_space<vmem>>, %arg3: memref<16x64xbf16, #tpu.memory_space<vmem>>, %arg4: memref<1x9xf32, #tpu.memory_space<vmem>>, %arg5: memref<64x1152xbf16, #tpu.memory_space<vmem>>, %arg6: memref<16x128xf32, #tpu.memory_space<vmem>>) attributes {dimension_semantics = [#tpu.dimension_semantics<parallel>], iteration_bounds = array<i64: 1>, scalar_prefetch = 0 : i64, scratch_operands = 0 : i64, tpu.core_type = #tpu.core_type<tc>, window_params = [{transform_indices = @transform_0, window_bounds = array<i64: 16, 9>}, {transform_indices = @transform_1, window_bounds = array<i64: 16, 9>}, {transform_indices = @transform_2, window_bounds = array<i64: 16, 64>}, {pipeline_mode = #tpu.pipeline_mode<synchronous>, transform_indices = @transform_3, window_bounds = array<i64: 1, 9>}, {pipeline_mode = #tpu.pipeline_mode<synchronous>, transform_indices = @transform_4, window_bounds = array<i64: 64, 1152>}, {transform_indices = @transform_5, window_bounds = array<i64: 16, 128>}]} {
    %c0 = arith.constant 0 : index
    %c0_0 = arith.constant 0 : index
    %0 = vector.load %arg1[%c0, %c0_0] : memref<16x9xf32, #tpu.memory_space<vmem>>, vector<16x9xf32>
    %c0_1 = arith.constant 0 : index
    %c0_2 = arith.constant 0 : index
    %1 = vector.load %arg2[%c0_1, %c0_2] : memref<16x9xf32, #tpu.memory_space<vmem>>, vector<16x9xf32>
    %2 = arith.subf %0, %1 : vector<16x9xf32>
    %c0_3 = arith.constant 0 : index
    %c0_4 = arith.constant 0 : index
    %3 = vector.load %arg4[%c0_3, %c0_4] : memref<1x9xf32, #tpu.memory_space<vmem>>, vector<1x9xf32>
    %4 = vector.broadcast %3 : vector<1x9xf32> to vector<16x9xf32>
    %5 = arith.addf %2, %4 : vector<16x9xf32>
    %cst = arith.constant dense<0xFF800000> : vector<16xf32>
    %6 = vector.multi_reduction <maximumf>, %5, %cst [1] : vector<16x9xf32> to vector<16xf32>
    %7 = vector.shape_cast %6 : vector<16xf32> to vector<16x1xf32>
    %8 = vector.broadcast %7 : vector<16x1xf32> to vector<16x9xf32>
    %9 = arith.subf %5, %8 : vector<16x9xf32>
    %10 = math.exp %9 : vector<16x9xf32>
    %cst_5 = arith.constant dense<0.000000e+00> : vector<16xf32>
    %11 = vector.multi_reduction <add>, %10, %cst_5 [1] : vector<16x9xf32> to vector<16xf32>
    %12 = vector.shape_cast %11 : vector<16xf32> to vector<16x1xf32>
    %13 = tpu.reciprocal %12 {approx = true} : vector<16x1xf32> -> vector<16x1xf32>
    %14 = vector.broadcast %13 : vector<16x1xf32> to vector<16x9xf32>
    %15 = arith.mulf %10, %14 : vector<16x9xf32>
    %c0_6 = arith.constant 0 : index
    %c0_7 = arith.constant 0 : index
    %16 = vector.load %arg3[%c0_6, %c0_7] : memref<16x64xbf16, #tpu.memory_space<vmem>>, vector<16x64xbf16>
    %c0_8 = arith.constant 0 : index
    %c0_9 = arith.constant 0 : index
    %17 = vector.load %arg5[%c0_8, %c0_9] : memref<64x1152xbf16, #tpu.memory_space<vmem>>, vector<64x1152xbf16>
    %cst_10 = arith.constant dense<0.000000e+00> : vector<16x1152xf32>
    %18 = tpu.matmul %16, %17, %cst_10 {dimension_numbers = #tpu.dot_dimension_numbers<[1], [0], [0], [1], [0, 0, 1, 1], [], []>} : vector<16x64xbf16>, vector<64x1152xbf16>, vector<16x1152xf32> -> vector<16x1152xf32>
    %19 = vector.extract_strided_slice %15 {offsets = [0, 0], sizes = [16, 1], strides = [1, 1]} : vector<16x9xf32> to vector<16x1xf32>
    %20 = vector.extract_strided_slice %18 {offsets = [0, 0], sizes = [16, 128], strides = [1, 1]} : vector<16x1152xf32> to vector<16x128xf32>
    %21 = vector.broadcast %19 : vector<16x1xf32> to vector<16x128xf32>
    %22 = arith.mulf %21, %20 : vector<16x128xf32>
    %23 = vector.extract_strided_slice %15 {offsets = [0, 1], sizes = [16, 1], strides = [1, 1]} : vector<16x9xf32> to vector<16x1xf32>
    %24 = vector.extract_strided_slice %18 {offsets = [0, 128], sizes = [16, 128], strides = [1, 1]} : vector<16x1152xf32> to vector<16x128xf32>
    %25 = vector.broadcast %23 : vector<16x1xf32> to vector<16x128xf32>
    %26 = arith.mulf %25, %24 : vector<16x128xf32>
    %27 = arith.addf %22, %26 : vector<16x128xf32>
    %28 = vector.extract_strided_slice %15 {offsets = [0, 2], sizes = [16, 1], strides = [1, 1]} : vector<16x9xf32> to vector<16x1xf32>
    %29 = vector.extract_strided_slice %18 {offsets = [0, 256], sizes = [16, 128], strides = [1, 1]} : vector<16x1152xf32> to vector<16x128xf32>
    %30 = vector.broadcast %28 : vector<16x1xf32> to vector<16x128xf32>
    %31 = arith.mulf %30, %29 : vector<16x128xf32>
    %32 = arith.addf %27, %31 : vector<16x128xf32>
    %33 = vector.extract_strided_slice %15 {offsets = [0, 3], sizes = [16, 1], strides = [1, 1]} : vector<16x9xf32> to vector<16x1xf32>
    %34 = vector.extract_strided_slice %18 {offsets = [0, 384], sizes = [16, 128], strides = [1, 1]} : vector<16x1152xf32> to vector<16x128xf32>
    %35 = vector.broadcast %33 : vector<16x1xf32> to vector<16x128xf32>
    %36 = arith.mulf %35, %34 : vector<16x128xf32>
    %37 = arith.addf %32, %36 : vector<16x128xf32>
    %38 = vector.extract_strided_slice %15 {offsets = [0, 4], sizes = [16, 1], strides = [1, 1]} : vector<16x9xf32> to vector<16x1xf32>
    %39 = vector.extract_strided_slice %18 {offsets = [0, 512], sizes = [16, 128], strides = [1, 1]} : vector<16x1152xf32> to vector<16x128xf32>
    %40 = vector.broadcast %38 : vector<16x1xf32> to vector<16x128xf32>
    %41 = arith.mulf %40, %39 : vector<16x128xf32>
    %42 = arith.addf %37, %41 : vector<16x128xf32>
    %43 = vector.extract_strided_slice %15 {offsets = [0, 5], sizes = [16, 1], strides = [1, 1]} : vector<16x9xf32> to vector<16x1xf32>
    %44 = vector.extract_strided_slice %18 {offsets = [0, 640], sizes = [16, 128], strides = [1, 1]} : vector<16x1152xf32> to vector<16x128xf32>
    %45 = vector.broadcast %43 : vector<16x1xf32> to vector<16x128xf32>
    %46 = arith.mulf %45, %44 : vector<16x128xf32>
    %47 = arith.addf %42, %46 : vector<16x128xf32>
    %48 = vector.extract_strided_slice %15 {offsets = [0, 6], sizes = [16, 1], strides = [1, 1]} : vector<16x9xf32> to vector<16x1xf32>
    %49 = vector.extract_strided_slice %18 {offsets = [0, 768], sizes = [16, 128], strides = [1, 1]} : vector<16x1152xf32> to vector<16x128xf32>
    %50 = vector.broadcast %48 : vector<16x1xf32> to vector<16x128xf32>
    %51 = arith.mulf %50, %49 : vector<16x128xf32>
    %52 = arith.addf %47, %51 : vector<16x128xf32>
    %53 = vector.extract_strided_slice %15 {offsets = [0, 7], sizes = [16, 1], strides = [1, 1]} : vector<16x9xf32> to vector<16x1xf32>
    %54 = vector.extract_strided_slice %18 {offsets = [0, 896], sizes = [16, 128], strides = [1, 1]} : vector<16x1152xf32> to vector<16x128xf32>
    %55 = vector.broadcast %53 : vector<16x1xf32> to vector<16x128xf32>
    %56 = arith.mulf %55, %54 : vector<16x128xf32>
    %57 = arith.addf %52, %56 : vector<16x128xf32>
    %58 = vector.extract_strided_slice %15 {offsets = [0, 8], sizes = [16, 1], strides = [1, 1]} : vector<16x9xf32> to vector<16x1xf32>
    %59 = vector.extract_strided_slice %18 {offsets = [0, 1024], sizes = [16, 128], strides = [1, 1]} : vector<16x1152xf32> to vector<16x128xf32>
    %60 = vector.broadcast %58 : vector<16x1xf32> to vector<16x128xf32>
    %61 = arith.mulf %60, %59 : vector<16x128xf32>
    %62 = arith.addf %57, %61 : vector<16x128xf32>
    %c0_11 = arith.constant 0 : index
    %c0_12 = arith.constant 0 : index
    %63 = vector.load %arg6[%c0_11, %c0_12] : memref<16x128xf32, #tpu.memory_space<vmem>>, vector<16x128xf32>
    tpu.vector_store %arg6[%c0_11, %c0_12], %62 {strides = array<i32>} : memref<16x128xf32, #tpu.memory_space<vmem>>, vector<16x128xf32>,
    return
  }
  func.func @transform_0(%arg0: i32) -> (i32, i32) {
    %c0_i32 = arith.constant 0 : i32
    %c0_i32_0 = arith.constant 0 : i32
    return %arg0, %c0_i32 : i32, i32
  }
  func.func @transform_1(%arg0: i32) -> (i32, i32) {
    %c0_i32 = arith.constant 0 : i32
    %c0_i32_0 = arith.constant 0 : i32
    return %arg0, %c0_i32 : i32, i32
  }
  func.func @transform_2(%arg0: i32) -> (i32, i32) {
    %c0_i32 = arith.constant 0 : i32
    %c0_i32_0 = arith.constant 0 : i32
    return %arg0, %c0_i32 : i32, i32
  }
  func.func @transform_3(%arg0: i32) -> (i32, i32) {
    %c0_i32 = arith.constant 0 : i32
    %c0_i32_0 = arith.constant 0 : i32
    %c0_i32_1 = arith.constant 0 : i32
    return %c0_i32, %c0_i32_0 : i32, i32
  }
  func.func @transform_4(%arg0: i32) -> (i32, i32) {
    %c0_i32 = arith.constant 0 : i32
    %c0_i32_0 = arith.constant 0 : i32
    %c0_i32_1 = arith.constant 0 : i32
    return %c0_i32, %c0_i32_0 : i32, i32
  }
  func.func @transform_5(%arg0: i32) -> (i32, i32) {
    %c0_i32 = arith.constant 0 : i32
    %c0_i32_0 = arith.constant 0 : i32
    return %arg0, %c0_i32 : i32, i32
  }
}

module attributes {stable_mosaic.version = 11 : i64} {
  func.func @_feast_edge_kernel(%arg0: i32, %arg1: memref<16x9xf32, #tpu.memory_space<vmem>>, %arg2: memref<16x9xf32, #tpu.memory_space<vmem>>, %arg3: memref<16x128xbf16, #tpu.memory_space<vmem>>, %arg4: memref<1x9xf32, #tpu.memory_space<vmem>>, %arg5: memref<128x1152xbf16, #tpu.memory_space<vmem>>, %arg6: memref<16x128xf32, #tpu.memory_space<vmem>>) attributes {dimension_semantics = [#tpu.dimension_semantics<parallel>], iteration_bounds = array<i64: 1>, scalar_prefetch = 0 : i64, scratch_operands = 0 : i64, tpu.core_type = #tpu.core_type<tc>, window_params = [{transform_indices = @transform_0, window_bounds = array<i64: 16, 9>}, {transform_indices = @transform_1, window_bounds = array<i64: 16, 9>}, {transform_indices = @transform_2, window_bounds = array<i64: 16, 128>}, {pipeline_mode = #tpu.pipeline_mode<synchronous>, transform_indices = @transform_3, window_bounds = array<i64: 1, 9>}, {pipeline_mode = #tpu.pipeline_mode<synchronous>, transform_indices = @transform_4, window_bounds = array<i64: 128, 1152>}, {transform_indices = @transform_5, window_bounds = array<i64: 16, 128>}]} {
    %c0 = arith.constant 0 : index
    %c0_0 = arith.constant 0 : index
    %0 = vector.load %arg1[%c0, %c0_0] : memref<16x9xf32, #tpu.memory_space<vmem>>, vector<16x9xf32>
    %c0_1 = arith.constant 0 : index
    %c0_2 = arith.constant 0 : index
    %1 = vector.load %arg2[%c0_1, %c0_2] : memref<16x9xf32, #tpu.memory_space<vmem>>, vector<16x9xf32>
    %2 = arith.subf %0, %1 : vector<16x9xf32>
    %c0_3 = arith.constant 0 : index
    %c0_4 = arith.constant 0 : index
    %3 = vector.load %arg4[%c0_3, %c0_4] : memref<1x9xf32, #tpu.memory_space<vmem>>, vector<1x9xf32>
    %4 = vector.broadcast %3 : vector<1x9xf32> to vector<16x9xf32>
    %5 = arith.addf %2, %4 : vector<16x9xf32>
    %cst = arith.constant dense<0xFF800000> : vector<16xf32>
    %6 = vector.multi_reduction <maximumf>, %5, %cst [1] : vector<16x9xf32> to vector<16xf32>
    %7 = vector.shape_cast %6 : vector<16xf32> to vector<16x1xf32>
    %8 = vector.broadcast %7 : vector<16x1xf32> to vector<16x9xf32>
    %9 = arith.subf %5, %8 : vector<16x9xf32>
    %10 = math.exp %9 : vector<16x9xf32>
    %cst_5 = arith.constant dense<0.000000e+00> : vector<16xf32>
    %11 = vector.multi_reduction <add>, %10, %cst_5 [1] : vector<16x9xf32> to vector<16xf32>
    %12 = vector.shape_cast %11 : vector<16xf32> to vector<16x1xf32>
    %13 = tpu.reciprocal %12 {approx = true} : vector<16x1xf32> -> vector<16x1xf32>
    %14 = vector.broadcast %13 : vector<16x1xf32> to vector<16x9xf32>
    %15 = arith.mulf %10, %14 : vector<16x9xf32>
    %c0_6 = arith.constant 0 : index
    %c0_7 = arith.constant 0 : index
    %16 = vector.load %arg3[%c0_6, %c0_7] : memref<16x128xbf16, #tpu.memory_space<vmem>>, vector<16x128xbf16>
    %c0_8 = arith.constant 0 : index
    %c0_9 = arith.constant 0 : index
    %17 = vector.load %arg5[%c0_8, %c0_9] : memref<128x1152xbf16, #tpu.memory_space<vmem>>, vector<128x1152xbf16>
    %cst_10 = arith.constant dense<0.000000e+00> : vector<16x1152xf32>
    %18 = tpu.matmul %16, %17, %cst_10 {dimension_numbers = #tpu.dot_dimension_numbers<[1], [0], [0], [1], [0, 0, 1, 1], [], []>} : vector<16x128xbf16>, vector<128x1152xbf16>, vector<16x1152xf32> -> vector<16x1152xf32>
    %19 = vector.extract_strided_slice %15 {offsets = [0, 0], sizes = [16, 1], strides = [1, 1]} : vector<16x9xf32> to vector<16x1xf32>
    %20 = vector.extract_strided_slice %18 {offsets = [0, 0], sizes = [16, 128], strides = [1, 1]} : vector<16x1152xf32> to vector<16x128xf32>
    %21 = vector.broadcast %19 : vector<16x1xf32> to vector<16x128xf32>
    %22 = arith.mulf %21, %20 : vector<16x128xf32>
    %23 = vector.extract_strided_slice %15 {offsets = [0, 1], sizes = [16, 1], strides = [1, 1]} : vector<16x9xf32> to vector<16x1xf32>
    %24 = vector.extract_strided_slice %18 {offsets = [0, 128], sizes = [16, 128], strides = [1, 1]} : vector<16x1152xf32> to vector<16x128xf32>
    %25 = vector.broadcast %23 : vector<16x1xf32> to vector<16x128xf32>
    %26 = arith.mulf %25, %24 : vector<16x128xf32>
    %27 = arith.addf %22, %26 : vector<16x128xf32>
    %28 = vector.extract_strided_slice %15 {offsets = [0, 2], sizes = [16, 1], strides = [1, 1]} : vector<16x9xf32> to vector<16x1xf32>
    %29 = vector.extract_strided_slice %18 {offsets = [0, 256], sizes = [16, 128], strides = [1, 1]} : vector<16x1152xf32> to vector<16x128xf32>
    %30 = vector.broadcast %28 : vector<16x1xf32> to vector<16x128xf32>
    %31 = arith.mulf %30, %29 : vector<16x128xf32>
    %32 = arith.addf %27, %31 : vector<16x128xf32>
    %33 = vector.extract_strided_slice %15 {offsets = [0, 3], sizes = [16, 1], strides = [1, 1]} : vector<16x9xf32> to vector<16x1xf32>
    %34 = vector.extract_strided_slice %18 {offsets = [0, 384], sizes = [16, 128], strides = [1, 1]} : vector<16x1152xf32> to vector<16x128xf32>
    %35 = vector.broadcast %33 : vector<16x1xf32> to vector<16x128xf32>
    %36 = arith.mulf %35, %34 : vector<16x128xf32>
    %37 = arith.addf %32, %36 : vector<16x128xf32>
    %38 = vector.extract_strided_slice %15 {offsets = [0, 4], sizes = [16, 1], strides = [1, 1]} : vector<16x9xf32> to vector<16x1xf32>
    %39 = vector.extract_strided_slice %18 {offsets = [0, 512], sizes = [16, 128], strides = [1, 1]} : vector<16x1152xf32> to vector<16x128xf32>
    %40 = vector.broadcast %38 : vector<16x1xf32> to vector<16x128xf32>
    %41 = arith.mulf %40, %39 : vector<16x128xf32>
    %42 = arith.addf %37, %41 : vector<16x128xf32>
    %43 = vector.extract_strided_slice %15 {offsets = [0, 5], sizes = [16, 1], strides = [1, 1]} : vector<16x9xf32> to vector<16x1xf32>
    %44 = vector.extract_strided_slice %18 {offsets = [0, 640], sizes = [16, 128], strides = [1, 1]} : vector<16x1152xf32> to vector<16x128xf32>
    %45 = vector.broadcast %43 : vector<16x1xf32> to vector<16x128xf32>
    %46 = arith.mulf %45, %44 : vector<16x128xf32>
    %47 = arith.addf %42, %46 : vector<16x128xf32>
    %48 = vector.extract_strided_slice %15 {offsets = [0, 6], sizes = [16, 1], strides = [1, 1]} : vector<16x9xf32> to vector<16x1xf32>
    %49 = vector.extract_strided_slice %18 {offsets = [0, 768], sizes = [16, 128], strides = [1, 1]} : vector<16x1152xf32> to vector<16x128xf32>
    %50 = vector.broadcast %48 : vector<16x1xf32> to vector<16x128xf32>
    %51 = arith.mulf %50, %49 : vector<16x128xf32>
    %52 = arith.addf %47, %51 : vector<16x128xf32>
    %53 = vector.extract_strided_slice %15 {offsets = [0, 7], sizes = [16, 1], strides = [1, 1]} : vector<16x9xf32> to vector<16x1xf32>
    %54 = vector.extract_strided_slice %18 {offsets = [0, 896], sizes = [16, 128], strides = [1, 1]} : vector<16x1152xf32> to vector<16x128xf32>
    %55 = vector.broadcast %53 : vector<16x1xf32> to vector<16x128xf32>
    %56 = arith.mulf %55, %54 : vector<16x128xf32>
    %57 = arith.addf %52, %56 : vector<16x128xf32>
    %58 = vector.extract_strided_slice %15 {offsets = [0, 8], sizes = [16, 1], strides = [1, 1]} : vector<16x9xf32> to vector<16x1xf32>
    %59 = vector.extract_strided_slice %18 {offsets = [0, 1024], sizes = [16, 128], strides = [1, 1]} : vector<16x1152xf32> to vector<16x128xf32>
    %60 = vector.broadcast %58 : vector<16x1xf32> to vector<16x128xf32>
    %61 = arith.mulf %60, %59 : vector<16x128xf32>
    %62 = arith.addf %57, %61 : vector<16x128xf32>
    %c0_11 = arith.constant 0 : index
    %c0_12 = arith.constant 0 : index
    %63 = vector.load %arg6[%c0_11, %c0_12] : memref<16x128xf32, #tpu.memory_space<vmem>>, vector<16x128xf32>
    tpu.vector_store %arg6[%c0_11, %c0_12], %62 {strides = array<i32>} : memref<16x128xf32, #tpu.memory_space<vmem>>, vector<16x128xf32>,
    return
  }
  func.func @transform_0(%arg0: i32) -> (i32, i32) {
    %c0_i32 = arith.constant 0 : i32
    %c0_i32_0 = arith.constant 0 : i32
    return %arg0, %c0_i32 : i32, i32
  }
  func.func @transform_1(%arg0: i32) -> (i32, i32) {
    %c0_i32 = arith.constant 0 : i32
    %c0_i32_0 = arith.constant 0 : i32
    return %arg0, %c0_i32 : i32, i32
  }
  func.func @transform_2(%arg0: i32) -> (i32, i32) {
    %c0_i32 = arith.constant 0 : i32
    %c0_i32_0 = arith.constant 0 : i32
    return %arg0, %c0_i32 : i32, i32
  }
  func.func @transform_3(%arg0: i32) -> (i32, i32) {
    %c0_i32 = arith.constant 0 : i32
    %c0_i32_0 = arith.constant 0 : i32
    %c0_i32_1 = arith.constant 0 : i32
    return %c0_i32, %c0_i32_0 : i32, i32
  }
  func.func @transform_4(%arg0: i32) -> (i32, i32) {
    %c0_i32 = arith.constant 0 : i32
    %c0_i32_0 = arith.constant 0 : i32
    %c0_i32_1 = arith.constant 0 : i32
    return %c0_i32, %c0_i32_0 : i32, i32
  }
  func.func @transform_5(%arg0: i32) -> (i32, i32) {
    %c0_i32 = arith.constant 0 : i32
    %c0_i32_0 = arith.constant 0 : i32
    return %arg0, %c0_i32 : i32, i32
  }
}

module attributes {stable_mosaic.version = 11 : i64} {
  func.func @_feast_edge_kernel(%arg0: i32, %arg1: memref<32x9xf32, #tpu.memory_space<vmem>>, %arg2: memref<32x9xf32, #tpu.memory_space<vmem>>, %arg3: memref<32x128xbf16, #tpu.memory_space<vmem>>, %arg4: memref<1x9xf32, #tpu.memory_space<vmem>>, %arg5: memref<128x576xbf16, #tpu.memory_space<vmem>>, %arg6: memref<32x64xf32, #tpu.memory_space<vmem>>) attributes {dimension_semantics = [#tpu.dimension_semantics<parallel>], iteration_bounds = array<i64: 1>, scalar_prefetch = 0 : i64, scratch_operands = 0 : i64, tpu.core_type = #tpu.core_type<tc>, window_params = [{transform_indices = @transform_0, window_bounds = array<i64: 32, 9>}, {transform_indices = @transform_1, window_bounds = array<i64: 32, 9>}, {transform_indices = @transform_2, window_bounds = array<i64: 32, 128>}, {pipeline_mode = #tpu.pipeline_mode<synchronous>, transform_indices = @transform_3, window_bounds = array<i64: 1, 9>}, {pipeline_mode = #tpu.pipeline_mode<synchronous>, transform_indices = @transform_4, window_bounds = array<i64: 128, 576>}, {transform_indices = @transform_5, window_bounds = array<i64: 32, 64>}]} {
    %c0 = arith.constant 0 : index
    %c0_0 = arith.constant 0 : index
    %0 = vector.load %arg1[%c0, %c0_0] : memref<32x9xf32, #tpu.memory_space<vmem>>, vector<32x9xf32>
    %c0_1 = arith.constant 0 : index
    %c0_2 = arith.constant 0 : index
    %1 = vector.load %arg2[%c0_1, %c0_2] : memref<32x9xf32, #tpu.memory_space<vmem>>, vector<32x9xf32>
    %2 = arith.subf %0, %1 : vector<32x9xf32>
    %c0_3 = arith.constant 0 : index
    %c0_4 = arith.constant 0 : index
    %3 = vector.load %arg4[%c0_3, %c0_4] : memref<1x9xf32, #tpu.memory_space<vmem>>, vector<1x9xf32>
    %4 = vector.broadcast %3 : vector<1x9xf32> to vector<32x9xf32>
    %5 = arith.addf %2, %4 : vector<32x9xf32>
    %cst = arith.constant dense<0xFF800000> : vector<32xf32>
    %6 = vector.multi_reduction <maximumf>, %5, %cst [1] : vector<32x9xf32> to vector<32xf32>
    %7 = vector.shape_cast %6 : vector<32xf32> to vector<32x1xf32>
    %8 = vector.broadcast %7 : vector<32x1xf32> to vector<32x9xf32>
    %9 = arith.subf %5, %8 : vector<32x9xf32>
    %10 = math.exp %9 : vector<32x9xf32>
    %cst_5 = arith.constant dense<0.000000e+00> : vector<32xf32>
    %11 = vector.multi_reduction <add>, %10, %cst_5 [1] : vector<32x9xf32> to vector<32xf32>
    %12 = vector.shape_cast %11 : vector<32xf32> to vector<32x1xf32>
    %13 = tpu.reciprocal %12 {approx = true} : vector<32x1xf32> -> vector<32x1xf32>
    %14 = vector.broadcast %13 : vector<32x1xf32> to vector<32x9xf32>
    %15 = arith.mulf %10, %14 : vector<32x9xf32>
    %c0_6 = arith.constant 0 : index
    %c0_7 = arith.constant 0 : index
    %16 = vector.load %arg3[%c0_6, %c0_7] : memref<32x128xbf16, #tpu.memory_space<vmem>>, vector<32x128xbf16>
    %c0_8 = arith.constant 0 : index
    %c0_9 = arith.constant 0 : index
    %17 = vector.load %arg5[%c0_8, %c0_9] : memref<128x576xbf16, #tpu.memory_space<vmem>>, vector<128x576xbf16>
    %cst_10 = arith.constant dense<0.000000e+00> : vector<32x576xf32>
    %18 = tpu.matmul %16, %17, %cst_10 {dimension_numbers = #tpu.dot_dimension_numbers<[1], [0], [0], [1], [0, 0, 1, 1], [], []>} : vector<32x128xbf16>, vector<128x576xbf16>, vector<32x576xf32> -> vector<32x576xf32>
    %19 = vector.extract_strided_slice %15 {offsets = [0, 0], sizes = [32, 1], strides = [1, 1]} : vector<32x9xf32> to vector<32x1xf32>
    %20 = vector.extract_strided_slice %18 {offsets = [0, 0], sizes = [32, 64], strides = [1, 1]} : vector<32x576xf32> to vector<32x64xf32>
    %21 = vector.broadcast %19 : vector<32x1xf32> to vector<32x64xf32>
    %22 = arith.mulf %21, %20 : vector<32x64xf32>
    %23 = vector.extract_strided_slice %15 {offsets = [0, 1], sizes = [32, 1], strides = [1, 1]} : vector<32x9xf32> to vector<32x1xf32>
    %24 = vector.extract_strided_slice %18 {offsets = [0, 64], sizes = [32, 64], strides = [1, 1]} : vector<32x576xf32> to vector<32x64xf32>
    %25 = vector.broadcast %23 : vector<32x1xf32> to vector<32x64xf32>
    %26 = arith.mulf %25, %24 : vector<32x64xf32>
    %27 = arith.addf %22, %26 : vector<32x64xf32>
    %28 = vector.extract_strided_slice %15 {offsets = [0, 2], sizes = [32, 1], strides = [1, 1]} : vector<32x9xf32> to vector<32x1xf32>
    %29 = vector.extract_strided_slice %18 {offsets = [0, 128], sizes = [32, 64], strides = [1, 1]} : vector<32x576xf32> to vector<32x64xf32>
    %30 = vector.broadcast %28 : vector<32x1xf32> to vector<32x64xf32>
    %31 = arith.mulf %30, %29 : vector<32x64xf32>
    %32 = arith.addf %27, %31 : vector<32x64xf32>
    %33 = vector.extract_strided_slice %15 {offsets = [0, 3], sizes = [32, 1], strides = [1, 1]} : vector<32x9xf32> to vector<32x1xf32>
    %34 = vector.extract_strided_slice %18 {offsets = [0, 192], sizes = [32, 64], strides = [1, 1]} : vector<32x576xf32> to vector<32x64xf32>
    %35 = vector.broadcast %33 : vector<32x1xf32> to vector<32x64xf32>
    %36 = arith.mulf %35, %34 : vector<32x64xf32>
    %37 = arith.addf %32, %36 : vector<32x64xf32>
    %38 = vector.extract_strided_slice %15 {offsets = [0, 4], sizes = [32, 1], strides = [1, 1]} : vector<32x9xf32> to vector<32x1xf32>
    %39 = vector.extract_strided_slice %18 {offsets = [0, 256], sizes = [32, 64], strides = [1, 1]} : vector<32x576xf32> to vector<32x64xf32>
    %40 = vector.broadcast %38 : vector<32x1xf32> to vector<32x64xf32>
    %41 = arith.mulf %40, %39 : vector<32x64xf32>
    %42 = arith.addf %37, %41 : vector<32x64xf32>
    %43 = vector.extract_strided_slice %15 {offsets = [0, 5], sizes = [32, 1], strides = [1, 1]} : vector<32x9xf32> to vector<32x1xf32>
    %44 = vector.extract_strided_slice %18 {offsets = [0, 320], sizes = [32, 64], strides = [1, 1]} : vector<32x576xf32> to vector<32x64xf32>
    %45 = vector.broadcast %43 : vector<32x1xf32> to vector<32x64xf32>
    %46 = arith.mulf %45, %44 : vector<32x64xf32>
    %47 = arith.addf %42, %46 : vector<32x64xf32>
    %48 = vector.extract_strided_slice %15 {offsets = [0, 6], sizes = [32, 1], strides = [1, 1]} : vector<32x9xf32> to vector<32x1xf32>
    %49 = vector.extract_strided_slice %18 {offsets = [0, 384], sizes = [32, 64], strides = [1, 1]} : vector<32x576xf32> to vector<32x64xf32>
    %50 = vector.broadcast %48 : vector<32x1xf32> to vector<32x64xf32>
    %51 = arith.mulf %50, %49 : vector<32x64xf32>
    %52 = arith.addf %47, %51 : vector<32x64xf32>
    %53 = vector.extract_strided_slice %15 {offsets = [0, 7], sizes = [32, 1], strides = [1, 1]} : vector<32x9xf32> to vector<32x1xf32>
    %54 = vector.extract_strided_slice %18 {offsets = [0, 448], sizes = [32, 64], strides = [1, 1]} : vector<32x576xf32> to vector<32x64xf32>
    %55 = vector.broadcast %53 : vector<32x1xf32> to vector<32x64xf32>
    %56 = arith.mulf %55, %54 : vector<32x64xf32>
    %57 = arith.addf %52, %56 : vector<32x64xf32>
    %58 = vector.extract_strided_slice %15 {offsets = [0, 8], sizes = [32, 1], strides = [1, 1]} : vector<32x9xf32> to vector<32x1xf32>
    %59 = vector.extract_strided_slice %18 {offsets = [0, 512], sizes = [32, 64], strides = [1, 1]} : vector<32x576xf32> to vector<32x64xf32>
    %60 = vector.broadcast %58 : vector<32x1xf32> to vector<32x64xf32>
    %61 = arith.mulf %60, %59 : vector<32x64xf32>
    %62 = arith.addf %57, %61 : vector<32x64xf32>
    %c0_11 = arith.constant 0 : index
    %c0_12 = arith.constant 0 : index
    %63 = vector.load %arg6[%c0_11, %c0_12] : memref<32x64xf32, #tpu.memory_space<vmem>>, vector<32x64xf32>
    tpu.vector_store %arg6[%c0_11, %c0_12], %62 {strides = array<i32>} : memref<32x64xf32, #tpu.memory_space<vmem>>, vector<32x64xf32>,
    return
  }
  func.func @transform_0(%arg0: i32) -> (i32, i32) {
    %c0_i32 = arith.constant 0 : i32
    %c0_i32_0 = arith.constant 0 : i32
    return %arg0, %c0_i32 : i32, i32
  }
  func.func @transform_1(%arg0: i32) -> (i32, i32) {
    %c0_i32 = arith.constant 0 : i32
    %c0_i32_0 = arith.constant 0 : i32
    return %arg0, %c0_i32 : i32, i32
  }
  func.func @transform_2(%arg0: i32) -> (i32, i32) {
    %c0_i32 = arith.constant 0 : i32
    %c0_i32_0 = arith.constant 0 : i32
    return %arg0, %c0_i32 : i32, i32
  }
  func.func @transform_3(%arg0: i32) -> (i32, i32) {
    %c0_i32 = arith.constant 0 : i32
    %c0_i32_0 = arith.constant 0 : i32
    %c0_i32_1 = arith.constant 0 : i32
    return %c0_i32, %c0_i32_0 : i32, i32
  }
  func.func @transform_4(%arg0: i32) -> (i32, i32) {
    %c0_i32 = arith.constant 0 : i32
    %c0_i32_0 = arith.constant 0 : i32
    %c0_i32_1 = arith.constant 0 : i32
    return %c0_i32, %c0_i32_0 : i32, i32
  }
  func.func @transform_5(%arg0: i32) -> (i32, i32) {
    %c0_i32 = arith.constant 0 : i32
    %c0_i32_0 = arith.constant 0 : i32
    return %arg0, %c0_i32 : i32, i32
  }
}

module attributes {stable_mosaic.version = 11 : i64} {
  func.func @_feast_edge_kernel(%arg0: i32, %arg1: memref<48x9xf32, #tpu.memory_space<vmem>>, %arg2: memref<48x9xf32, #tpu.memory_space<vmem>>, %arg3: memref<48x64xbf16, #tpu.memory_space<vmem>>, %arg4: memref<1x9xf32, #tpu.memory_space<vmem>>, %arg5: memref<64x288xbf16, #tpu.memory_space<vmem>>, %arg6: memref<48x32xf32, #tpu.memory_space<vmem>>) attributes {dimension_semantics = [#tpu.dimension_semantics<parallel>], iteration_bounds = array<i64: 1>, scalar_prefetch = 0 : i64, scratch_operands = 0 : i64, tpu.core_type = #tpu.core_type<tc>, window_params = [{transform_indices = @transform_0, window_bounds = array<i64: 48, 9>}, {transform_indices = @transform_1, window_bounds = array<i64: 48, 9>}, {transform_indices = @transform_2, window_bounds = array<i64: 48, 64>}, {pipeline_mode = #tpu.pipeline_mode<synchronous>, transform_indices = @transform_3, window_bounds = array<i64: 1, 9>}, {pipeline_mode = #tpu.pipeline_mode<synchronous>, transform_indices = @transform_4, window_bounds = array<i64: 64, 288>}, {transform_indices = @transform_5, window_bounds = array<i64: 48, 32>}]} {
    %c0 = arith.constant 0 : index
    %c0_0 = arith.constant 0 : index
    %0 = vector.load %arg1[%c0, %c0_0] : memref<48x9xf32, #tpu.memory_space<vmem>>, vector<48x9xf32>
    %c0_1 = arith.constant 0 : index
    %c0_2 = arith.constant 0 : index
    %1 = vector.load %arg2[%c0_1, %c0_2] : memref<48x9xf32, #tpu.memory_space<vmem>>, vector<48x9xf32>
    %2 = arith.subf %0, %1 : vector<48x9xf32>
    %c0_3 = arith.constant 0 : index
    %c0_4 = arith.constant 0 : index
    %3 = vector.load %arg4[%c0_3, %c0_4] : memref<1x9xf32, #tpu.memory_space<vmem>>, vector<1x9xf32>
    %4 = vector.broadcast %3 : vector<1x9xf32> to vector<48x9xf32>
    %5 = arith.addf %2, %4 : vector<48x9xf32>
    %cst = arith.constant dense<0xFF800000> : vector<48xf32>
    %6 = vector.multi_reduction <maximumf>, %5, %cst [1] : vector<48x9xf32> to vector<48xf32>
    %7 = vector.shape_cast %6 : vector<48xf32> to vector<48x1xf32>
    %8 = vector.broadcast %7 : vector<48x1xf32> to vector<48x9xf32>
    %9 = arith.subf %5, %8 : vector<48x9xf32>
    %10 = math.exp %9 : vector<48x9xf32>
    %cst_5 = arith.constant dense<0.000000e+00> : vector<48xf32>
    %11 = vector.multi_reduction <add>, %10, %cst_5 [1] : vector<48x9xf32> to vector<48xf32>
    %12 = vector.shape_cast %11 : vector<48xf32> to vector<48x1xf32>
    %13 = tpu.reciprocal %12 {approx = true} : vector<48x1xf32> -> vector<48x1xf32>
    %14 = vector.broadcast %13 : vector<48x1xf32> to vector<48x9xf32>
    %15 = arith.mulf %10, %14 : vector<48x9xf32>
    %c0_6 = arith.constant 0 : index
    %c0_7 = arith.constant 0 : index
    %16 = vector.load %arg3[%c0_6, %c0_7] : memref<48x64xbf16, #tpu.memory_space<vmem>>, vector<48x64xbf16>
    %c0_8 = arith.constant 0 : index
    %c0_9 = arith.constant 0 : index
    %17 = vector.load %arg5[%c0_8, %c0_9] : memref<64x288xbf16, #tpu.memory_space<vmem>>, vector<64x288xbf16>
    %cst_10 = arith.constant dense<0.000000e+00> : vector<48x288xf32>
    %18 = tpu.matmul %16, %17, %cst_10 {dimension_numbers = #tpu.dot_dimension_numbers<[1], [0], [0], [1], [0, 0, 1, 1], [], []>} : vector<48x64xbf16>, vector<64x288xbf16>, vector<48x288xf32> -> vector<48x288xf32>
    %19 = vector.extract_strided_slice %15 {offsets = [0, 0], sizes = [48, 1], strides = [1, 1]} : vector<48x9xf32> to vector<48x1xf32>
    %20 = vector.extract_strided_slice %18 {offsets = [0, 0], sizes = [48, 32], strides = [1, 1]} : vector<48x288xf32> to vector<48x32xf32>
    %21 = vector.broadcast %19 : vector<48x1xf32> to vector<48x32xf32>
    %22 = arith.mulf %21, %20 : vector<48x32xf32>
    %23 = vector.extract_strided_slice %15 {offsets = [0, 1], sizes = [48, 1], strides = [1, 1]} : vector<48x9xf32> to vector<48x1xf32>
    %24 = vector.extract_strided_slice %18 {offsets = [0, 32], sizes = [48, 32], strides = [1, 1]} : vector<48x288xf32> to vector<48x32xf32>
    %25 = vector.broadcast %23 : vector<48x1xf32> to vector<48x32xf32>
    %26 = arith.mulf %25, %24 : vector<48x32xf32>
    %27 = arith.addf %22, %26 : vector<48x32xf32>
    %28 = vector.extract_strided_slice %15 {offsets = [0, 2], sizes = [48, 1], strides = [1, 1]} : vector<48x9xf32> to vector<48x1xf32>
    %29 = vector.extract_strided_slice %18 {offsets = [0, 64], sizes = [48, 32], strides = [1, 1]} : vector<48x288xf32> to vector<48x32xf32>
    %30 = vector.broadcast %28 : vector<48x1xf32> to vector<48x32xf32>
    %31 = arith.mulf %30, %29 : vector<48x32xf32>
    %32 = arith.addf %27, %31 : vector<48x32xf32>
    %33 = vector.extract_strided_slice %15 {offsets = [0, 3], sizes = [48, 1], strides = [1, 1]} : vector<48x9xf32> to vector<48x1xf32>
    %34 = vector.extract_strided_slice %18 {offsets = [0, 96], sizes = [48, 32], strides = [1, 1]} : vector<48x288xf32> to vector<48x32xf32>
    %35 = vector.broadcast %33 : vector<48x1xf32> to vector<48x32xf32>
    %36 = arith.mulf %35, %34 : vector<48x32xf32>
    %37 = arith.addf %32, %36 : vector<48x32xf32>
    %38 = vector.extract_strided_slice %15 {offsets = [0, 4], sizes = [48, 1], strides = [1, 1]} : vector<48x9xf32> to vector<48x1xf32>
    %39 = vector.extract_strided_slice %18 {offsets = [0, 128], sizes = [48, 32], strides = [1, 1]} : vector<48x288xf32> to vector<48x32xf32>
    %40 = vector.broadcast %38 : vector<48x1xf32> to vector<48x32xf32>
    %41 = arith.mulf %40, %39 : vector<48x32xf32>
    %42 = arith.addf %37, %41 : vector<48x32xf32>
    %43 = vector.extract_strided_slice %15 {offsets = [0, 5], sizes = [48, 1], strides = [1, 1]} : vector<48x9xf32> to vector<48x1xf32>
    %44 = vector.extract_strided_slice %18 {offsets = [0, 160], sizes = [48, 32], strides = [1, 1]} : vector<48x288xf32> to vector<48x32xf32>
    %45 = vector.broadcast %43 : vector<48x1xf32> to vector<48x32xf32>
    %46 = arith.mulf %45, %44 : vector<48x32xf32>
    %47 = arith.addf %42, %46 : vector<48x32xf32>
    %48 = vector.extract_strided_slice %15 {offsets = [0, 6], sizes = [48, 1], strides = [1, 1]} : vector<48x9xf32> to vector<48x1xf32>
    %49 = vector.extract_strided_slice %18 {offsets = [0, 192], sizes = [48, 32], strides = [1, 1]} : vector<48x288xf32> to vector<48x32xf32>
    %50 = vector.broadcast %48 : vector<48x1xf32> to vector<48x32xf32>
    %51 = arith.mulf %50, %49 : vector<48x32xf32>
    %52 = arith.addf %47, %51 : vector<48x32xf32>
    %53 = vector.extract_strided_slice %15 {offsets = [0, 7], sizes = [48, 1], strides = [1, 1]} : vector<48x9xf32> to vector<48x1xf32>
    %54 = vector.extract_strided_slice %18 {offsets = [0, 224], sizes = [48, 32], strides = [1, 1]} : vector<48x288xf32> to vector<48x32xf32>
    %55 = vector.broadcast %53 : vector<48x1xf32> to vector<48x32xf32>
    %56 = arith.mulf %55, %54 : vector<48x32xf32>
    %57 = arith.addf %52, %56 : vector<48x32xf32>
    %58 = vector.extract_strided_slice %15 {offsets = [0, 8], sizes = [48, 1], strides = [1, 1]} : vector<48x9xf32> to vector<48x1xf32>
    %59 = vector.extract_strided_slice %18 {offsets = [0, 256], sizes = [48, 32], strides = [1, 1]} : vector<48x288xf32> to vector<48x32xf32>
    %60 = vector.broadcast %58 : vector<48x1xf32> to vector<48x32xf32>
    %61 = arith.mulf %60, %59 : vector<48x32xf32>
    %62 = arith.addf %57, %61 : vector<48x32xf32>
    %c0_11 = arith.constant 0 : index
    %c0_12 = arith.constant 0 : index
    %63 = vector.load %arg6[%c0_11, %c0_12] : memref<48x32xf32, #tpu.memory_space<vmem>>, vector<48x32xf32>
    tpu.vector_store %arg6[%c0_11, %c0_12], %62 {strides = array<i32>} : memref<48x32xf32, #tpu.memory_space<vmem>>, vector<48x32xf32>,
    return
  }
  func.func @transform_0(%arg0: i32) -> (i32, i32) {
    %c0_i32 = arith.constant 0 : i32
    %c0_i32_0 = arith.constant 0 : i32
    return %arg0, %c0_i32 : i32, i32
  }
  func.func @transform_1(%arg0: i32) -> (i32, i32) {
    %c0_i32 = arith.constant 0 : i32
    %c0_i32_0 = arith.constant 0 : i32
    return %arg0, %c0_i32 : i32, i32
  }
  func.func @transform_2(%arg0: i32) -> (i32, i32) {
    %c0_i32 = arith.constant 0 : i32
    %c0_i32_0 = arith.constant 0 : i32
    return %arg0, %c0_i32 : i32, i32
  }
  func.func @transform_3(%arg0: i32) -> (i32, i32) {
    %c0_i32 = arith.constant 0 : i32
    %c0_i32_0 = arith.constant 0 : i32
    %c0_i32_1 = arith.constant 0 : i32
    return %c0_i32, %c0_i32_0 : i32, i32
  }
  func.func @transform_4(%arg0: i32) -> (i32, i32) {
    %c0_i32 = arith.constant 0 : i32
    %c0_i32_0 = arith.constant 0 : i32
    %c0_i32_1 = arith.constant 0 : i32
    return %c0_i32, %c0_i32_0 : i32, i32
  }
  func.func @transform_5(%arg0: i32) -> (i32, i32) {
    %c0_i32 = arith.constant 0 : i32
    %c0_i32_0 = arith.constant 0 : i32
    return %arg0, %c0_i32 : i32, i32
  }
}

module attributes {stable_mosaic.version = 11 : i64} {
  func.func @_mlp_head_kernel(%arg0: i32, %arg1: memref<16x32xf32, #tpu.memory_space<vmem>>, %arg2: memref<32x1024xbf16, #tpu.memory_space<vmem>>, %arg3: memref<1x1024xf32, #tpu.memory_space<vmem>>, %arg4: memref<1024x3xbf16, #tpu.memory_space<vmem>>, %arg5: memref<1x3xf32, #tpu.memory_space<vmem>>, %arg6: memref<16x3xf32, #tpu.memory_space<vmem>>) attributes {dimension_semantics = [#tpu.dimension_semantics<parallel>], iteration_bounds = array<i64: 1>, scalar_prefetch = 0 : i64, scratch_operands = 0 : i64, tpu.core_type = #tpu.core_type<tc>, window_params = [{transform_indices = @transform_0, window_bounds = array<i64: 16, 32>}, {pipeline_mode = #tpu.pipeline_mode<synchronous>, transform_indices = @transform_1, window_bounds = array<i64: 32, 1024>}, {pipeline_mode = #tpu.pipeline_mode<synchronous>, transform_indices = @transform_2, window_bounds = array<i64: 1, 1024>}, {pipeline_mode = #tpu.pipeline_mode<synchronous>, transform_indices = @transform_3, window_bounds = array<i64: 1024, 3>}, {pipeline_mode = #tpu.pipeline_mode<synchronous>, transform_indices = @transform_4, window_bounds = array<i64: 1, 3>}, {transform_indices = @transform_5, window_bounds = array<i64: 16, 3>}]} {
    %c0 = arith.constant 0 : index
    %c0_0 = arith.constant 0 : index
    %0 = vector.load %arg1[%c0, %c0_0] : memref<16x32xf32, #tpu.memory_space<vmem>>, vector<16x32xf32>
    %1 = arith.truncf %0 : vector<16x32xf32> to vector<16x32xbf16>
    %c0_1 = arith.constant 0 : index
    %c0_2 = arith.constant 0 : index
    %2 = vector.load %arg2[%c0_1, %c0_2] : memref<32x1024xbf16, #tpu.memory_space<vmem>>, vector<32x1024xbf16>
    %cst = arith.constant dense<0.000000e+00> : vector<16x1024xf32>
    %3 = tpu.matmul %1, %2, %cst {dimension_numbers = #tpu.dot_dimension_numbers<[1], [0], [0], [1], [0, 0, 1, 1], [], []>} : vector<16x32xbf16>, vector<32x1024xbf16>, vector<16x1024xf32> -> vector<16x1024xf32>
    %c0_3 = arith.constant 0 : index
    %c0_4 = arith.constant 0 : index
    %4 = vector.load %arg3[%c0_3, %c0_4] : memref<1x1024xf32, #tpu.memory_space<vmem>>, vector<1x1024xf32>
    %5 = vector.broadcast %4 : vector<1x1024xf32> to vector<16x1024xf32>
    %6 = arith.addf %3, %5 : vector<16x1024xf32>
    %cst_5 = arith.constant 0.000000e+00 : f32
    %7 = vector.broadcast %cst_5 : f32 to vector<16x1024xf32>
    %8 = arith.cmpf oge, %6, %7 : vector<16x1024xf32>
    %cst_6 = arith.constant 2.000000e-01 : f32
    %9 = vector.broadcast %cst_6 : f32 to vector<16x1024xf32>
    %10 = arith.mulf %9, %6 : vector<16x1024xf32>
    %11 = arith.select %8, %6, %10 : vector<16x1024xi1>, vector<16x1024xf32>
    %12 = arith.truncf %11 : vector<16x1024xf32> to vector<16x1024xbf16>
    %c0_7 = arith.constant 0 : index
    %c0_8 = arith.constant 0 : index
    %13 = vector.load %arg4[%c0_7, %c0_8] : memref<1024x3xbf16, #tpu.memory_space<vmem>>, vector<1024x3xbf16>
    %cst_9 = arith.constant dense<0.000000e+00> : vector<16x3xf32>
    %14 = tpu.matmul %12, %13, %cst_9 {dimension_numbers = #tpu.dot_dimension_numbers<[1], [0], [0], [1], [0, 0, 1, 1], [], []>} : vector<16x1024xbf16>, vector<1024x3xbf16>, vector<16x3xf32> -> vector<16x3xf32>
    %c0_10 = arith.constant 0 : index
    %c0_11 = arith.constant 0 : index
    %15 = vector.load %arg5[%c0_10, %c0_11] : memref<1x3xf32, #tpu.memory_space<vmem>>, vector<1x3xf32>
    %16 = vector.broadcast %15 : vector<1x3xf32> to vector<16x3xf32>
    %17 = arith.addf %14, %16 : vector<16x3xf32>
    %c0_12 = arith.constant 0 : index
    %c0_13 = arith.constant 0 : index
    %18 = vector.load %arg6[%c0_12, %c0_13] : memref<16x3xf32, #tpu.memory_space<vmem>>, vector<16x3xf32>
    tpu.vector_store %arg6[%c0_12, %c0_13], %17 {strides = array<i32>} : memref<16x3xf32, #tpu.memory_space<vmem>>, vector<16x3xf32>,
    return
  }
  func.func @transform_0(%arg0: i32) -> (i32, i32) {
    %c0_i32 = arith.constant 0 : i32
    %c0_i32_0 = arith.constant 0 : i32
    return %arg0, %c0_i32 : i32, i32
  }
  func.func @transform_1(%arg0: i32) -> (i32, i32) {
    %c0_i32 = arith.constant 0 : i32
    %c0_i32_0 = arith.constant 0 : i32
    %c0_i32_1 = arith.constant 0 : i32
    return %c0_i32, %c0_i32_0 : i32, i32
  }
  func.func @transform_2(%arg0: i32) -> (i32, i32) {
    %c0_i32 = arith.constant 0 : i32
    %c0_i32_0 = arith.constant 0 : i32
    %c0_i32_1 = arith.constant 0 : i32
    return %c0_i32, %c0_i32_0 : i32, i32
  }
  func.func @transform_3(%arg0: i32) -> (i32, i32) {
    %c0_i32 = arith.constant 0 : i32
    %c0_i32_0 = arith.constant 0 : i32
    %c0_i32_1 = arith.constant 0 : i32
    return %c0_i32, %c0_i32_0 : i32, i32
  }
  func.func @transform_4(%arg0: i32) -> (i32, i32) {
    %c0_i32 = arith.constant 0 : i32
    %c0_i32_0 = arith.constant 0 : i32
    %c0_i32_1 = arith.constant 0 : i32
    return %c0_i32, %c0_i32_0 : i32, i32
  }
  func.func @transform_5(%arg0: i32) -> (i32, i32) {
    %c0_i32 = arith.constant 0 : i32
    %c0_i32_0 = arith.constant 0 : i32
    return %arg0, %c0_i32 : i32, i32
  }
}

module attributes {stable_mosaic.version = 11 : i64} {
  func.func @_feast_edge_kernel(%arg0: i32, %arg1: memref<48x9xf32, #tpu.memory_space<vmem>>, %arg2: memref<48x9xf32, #tpu.memory_space<vmem>>, %arg3: memref<48x12xbf16, #tpu.memory_space<vmem>>, %arg4: memref<1x9xf32, #tpu.memory_space<vmem>>, %arg5: memref<12x288xbf16, #tpu.memory_space<vmem>>, %arg6: memref<48x32xf32, #tpu.memory_space<vmem>>) attributes {dimension_semantics = [#tpu.dimension_semantics<parallel>], iteration_bounds = array<i64: 1>, scalar_prefetch = 0 : i64, scratch_operands = 0 : i64, tpu.core_type = #tpu.core_type<tc>, window_params = [{transform_indices = @transform_0, window_bounds = array<i64: 48, 9>}, {transform_indices = @transform_1, window_bounds = array<i64: 48, 9>}, {transform_indices = @transform_2, window_bounds = array<i64: 48, 12>}, {pipeline_mode = #tpu.pipeline_mode<synchronous>, transform_indices = @transform_3, window_bounds = array<i64: 1, 9>}, {pipeline_mode = #tpu.pipeline_mode<synchronous>, transform_indices = @transform_4, window_bounds = array<i64: 12, 288>}, {transform_indices = @transform_5, window_bounds = array<i64: 48, 32>}]} {
    %c0 = arith.constant 0 : index
    %c0_0 = arith.constant 0 : index
    %0 = vector.load %arg1[%c0, %c0_0] : memref<48x9xf32, #tpu.memory_space<vmem>>, vector<48x9xf32>
    %c0_1 = arith.constant 0 : index
    %c0_2 = arith.constant 0 : index
    %1 = vector.load %arg2[%c0_1, %c0_2] : memref<48x9xf32, #tpu.memory_space<vmem>>, vector<48x9xf32>
    %2 = arith.subf %0, %1 : vector<48x9xf32>
    %c0_3 = arith.constant 0 : index
    %c0_4 = arith.constant 0 : index
    %3 = vector.load %arg4[%c0_3, %c0_4] : memref<1x9xf32, #tpu.memory_space<vmem>>, vector<1x9xf32>
    %4 = vector.broadcast %3 : vector<1x9xf32> to vector<48x9xf32>
    %5 = arith.addf %2, %4 : vector<48x9xf32>
    %cst = arith.constant dense<0xFF800000> : vector<48xf32>
    %6 = vector.multi_reduction <maximumf>, %5, %cst [1] : vector<48x9xf32> to vector<48xf32>
    %7 = vector.shape_cast %6 : vector<48xf32> to vector<48x1xf32>
    %8 = vector.broadcast %7 : vector<48x1xf32> to vector<48x9xf32>
    %9 = arith.subf %5, %8 : vector<48x9xf32>
    %10 = math.exp %9 : vector<48x9xf32>
    %cst_5 = arith.constant dense<0.000000e+00> : vector<48xf32>
    %11 = vector.multi_reduction <add>, %10, %cst_5 [1] : vector<48x9xf32> to vector<48xf32>
    %12 = vector.shape_cast %11 : vector<48xf32> to vector<48x1xf32>
    %13 = tpu.reciprocal %12 {approx = true} : vector<48x1xf32> -> vector<48x1xf32>
    %14 = vector.broadcast %13 : vector<48x1xf32> to vector<48x9xf32>
    %15 = arith.mulf %10, %14 : vector<48x9xf32>
    %c0_6 = arith.constant 0 : index
    %c0_7 = arith.constant 0 : index
    %16 = vector.load %arg3[%c0_6, %c0_7] : memref<48x12xbf16, #tpu.memory_space<vmem>>, vector<48x12xbf16>
    %c0_8 = arith.constant 0 : index
    %c0_9 = arith.constant 0 : index
    %17 = vector.load %arg5[%c0_8, %c0_9] : memref<12x288xbf16, #tpu.memory_space<vmem>>, vector<12x288xbf16>
    %cst_10 = arith.constant dense<0.000000e+00> : vector<48x288xf32>
    %18 = tpu.matmul %16, %17, %cst_10 {dimension_numbers = #tpu.dot_dimension_numbers<[1], [0], [0], [1], [0, 0, 1, 1], [], []>} : vector<48x12xbf16>, vector<12x288xbf16>, vector<48x288xf32> -> vector<48x288xf32>
    %19 = vector.extract_strided_slice %15 {offsets = [0, 0], sizes = [48, 1], strides = [1, 1]} : vector<48x9xf32> to vector<48x1xf32>
    %20 = vector.extract_strided_slice %18 {offsets = [0, 0], sizes = [48, 32], strides = [1, 1]} : vector<48x288xf32> to vector<48x32xf32>
    %21 = vector.broadcast %19 : vector<48x1xf32> to vector<48x32xf32>
    %22 = arith.mulf %21, %20 : vector<48x32xf32>
    %23 = vector.extract_strided_slice %15 {offsets = [0, 1], sizes = [48, 1], strides = [1, 1]} : vector<48x9xf32> to vector<48x1xf32>
    %24 = vector.extract_strided_slice %18 {offsets = [0, 32], sizes = [48, 32], strides = [1, 1]} : vector<48x288xf32> to vector<48x32xf32>
    %25 = vector.broadcast %23 : vector<48x1xf32> to vector<48x32xf32>
    %26 = arith.mulf %25, %24 : vector<48x32xf32>
    %27 = arith.addf %22, %26 : vector<48x32xf32>
    %28 = vector.extract_strided_slice %15 {offsets = [0, 2], sizes = [48, 1], strides = [1, 1]} : vector<48x9xf32> to vector<48x1xf32>
    %29 = vector.extract_strided_slice %18 {offsets = [0, 64], sizes = [48, 32], strides = [1, 1]} : vector<48x288xf32> to vector<48x32xf32>
    %30 = vector.broadcast %28 : vector<48x1xf32> to vector<48x32xf32>
    %31 = arith.mulf %30, %29 : vector<48x32xf32>
    %32 = arith.addf %27, %31 : vector<48x32xf32>
    %33 = vector.extract_strided_slice %15 {offsets = [0, 3], sizes = [48, 1], strides = [1, 1]} : vector<48x9xf32> to vector<48x1xf32>
    %34 = vector.extract_strided_slice %18 {offsets = [0, 96], sizes = [48, 32], strides = [1, 1]} : vector<48x288xf32> to vector<48x32xf32>
    %35 = vector.broadcast %33 : vector<48x1xf32> to vector<48x32xf32>
    %36 = arith.mulf %35, %34 : vector<48x32xf32>
    %37 = arith.addf %32, %36 : vector<48x32xf32>
    %38 = vector.extract_strided_slice %15 {offsets = [0, 4], sizes = [48, 1], strides = [1, 1]} : vector<48x9xf32> to vector<48x1xf32>
    %39 = vector.extract_strided_slice %18 {offsets = [0, 128], sizes = [48, 32], strides = [1, 1]} : vector<48x288xf32> to vector<48x32xf32>
    %40 = vector.broadcast %38 : vector<48x1xf32> to vector<48x32xf32>
    %41 = arith.mulf %40, %39 : vector<48x32xf32>
    %42 = arith.addf %37, %41 : vector<48x32xf32>
    %43 = vector.extract_strided_slice %15 {offsets = [0, 5], sizes = [48, 1], strides = [1, 1]} : vector<48x9xf32> to vector<48x1xf32>
    %44 = vector.extract_strided_slice %18 {offsets = [0, 160], sizes = [48, 32], strides = [1, 1]} : vector<48x288xf32> to vector<48x32xf32>
    %45 = vector.broadcast %43 : vector<48x1xf32> to vector<48x32xf32>
    %46 = arith.mulf %45, %44 : vector<48x32xf32>
    %47 = arith.addf %42, %46 : vector<48x32xf32>
    %48 = vector.extract_strided_slice %15 {offsets = [0, 6], sizes = [48, 1], strides = [1, 1]} : vector<48x9xf32> to vector<48x1xf32>
    %49 = vector.extract_strided_slice %18 {offsets = [0, 192], sizes = [48, 32], strides = [1, 1]} : vector<48x288xf32> to vector<48x32xf32>
    %50 = vector.broadcast %48 : vector<48x1xf32> to vector<48x32xf32>
    %51 = arith.mulf %50, %49 : vector<48x32xf32>
    %52 = arith.addf %47, %51 : vector<48x32xf32>
    %53 = vector.extract_strided_slice %15 {offsets = [0, 7], sizes = [48, 1], strides = [1, 1]} : vector<48x9xf32> to vector<48x1xf32>
    %54 = vector.extract_strided_slice %18 {offsets = [0, 224], sizes = [48, 32], strides = [1, 1]} : vector<48x288xf32> to vector<48x32xf32>
    %55 = vector.broadcast %53 : vector<48x1xf32> to vector<48x32xf32>
    %56 = arith.mulf %55, %54 : vector<48x32xf32>
    %57 = arith.addf %52, %56 : vector<48x32xf32>
    %58 = vector.extract_strided_slice %15 {offsets = [0, 8], sizes = [48, 1], strides = [1, 1]} : vector<48x9xf32> to vector<48x1xf32>
    %59 = vector.extract_strided_slice %18 {offsets = [0, 256], sizes = [48, 32], strides = [1, 1]} : vector<48x288xf32> to vector<48x32xf32>
    %60 = vector.broadcast %58 : vector<48x1xf32> to vector<48x32xf32>
    %61 = arith.mulf %60, %59 : vector<48x32xf32>
    %62 = arith.addf %57, %61 : vector<48x32xf32>
    %c0_11 = arith.constant 0 : index
    %c0_12 = arith.constant 0 : index
    %63 = vector.load %arg6[%c0_11, %c0_12] : memref<48x32xf32, #tpu.memory_space<vmem>>, vector<48x32xf32>
    tpu.vector_store %arg6[%c0_11, %c0_12], %62 {strides = array<i32>} : memref<48x32xf32, #tpu.memory_space<vmem>>, vector<48x32xf32>,
    return
  }
  func.func @transform_0(%arg0: i32) -> (i32, i32) {
    %c0_i32 = arith.constant 0 : i32
    %c0_i32_0 = arith.constant 0 : i32
    return %arg0, %c0_i32 : i32, i32
  }
  func.func @transform_1(%arg0: i32) -> (i32, i32) {
    %c0_i32 = arith.constant 0 : i32
    %c0_i32_0 = arith.constant 0 : i32
    return %arg0, %c0_i32 : i32, i32
  }
  func.func @transform_2(%arg0: i32) -> (i32, i32) {
    %c0_i32 = arith.constant 0 : i32
    %c0_i32_0 = arith.constant 0 : i32
    return %arg0, %c0_i32 : i32, i32
  }
  func.func @transform_3(%arg0: i32) -> (i32, i32) {
    %c0_i32 = arith.constant 0 : i32
    %c0_i32_0 = arith.constant 0 : i32
    %c0_i32_1 = arith.constant 0 : i32
    return %c0_i32, %c0_i32_0 : i32, i32
  }
  func.func @transform_4(%arg0: i32) -> (i32, i32) {
    %c0_i32 = arith.constant 0 : i32
    %c0_i32_0 = arith.constant 0 : i32
    %c0_i32_1 = arith.constant 0 : i32
    return %c0_i32, %c0_i32_0 : i32, i32
  }
  func.func @transform_5(%arg0: i32) -> (i32, i32) {
    %c0_i32 = arith.constant 0 : i32
    %c0_i32_0 = arith.constant 0 : i32
    return %arg0, %c0_i32 : i32, i32
  }
}

</mosaic_0001>

<llo_original>
// kernel: dual_gnn_forward.18
$region0: #{dual_gnn_forward.18}
  #allocation0 [shape = 'u32[]', space=smem, size = 0x4, offset = 0x4, fixed_abs, tag = 'smem constant byte address 0x4 - core index']
  #allocation1 [shape = 'u32[144,128]{1,0:T(1,128)}', space=vmem, size = 0x12000, scoped, tag = 'internal scratch']
  %s0 = inlined_call_operand.hbm [shape: f32[48,9], index: 0, kind: input, shape index: {}]
  %s1 = inlined_call_operand.hbm [shape: f32[48,9], index: 1, kind: input, shape index: {}]
  %s2 = inlined_call_operand.hbm [shape: bf16[48,6], index: 2, kind: input, shape index: {}]
  %s3 = inlined_call_operand.hbm [shape: f32[1,9], index: 3, kind: input, shape index: {}]
  %s4 = inlined_call_operand.hbm [shape: bf16[6,288], index: 4, kind: input, shape index: {}]
  %s5 = inlined_call_operand.hbm [shape: f32[48,32], index: 5, kind: output, shape index: {}]
  %s6 = sld [smem:[#allocation0]]
  $region50: #{dual_gnn_forward.18} parent=0
    _
  %s8 = ssub.s32 1, %s6
  %s9 = scalar_select 0, %s8, %s6
  $region1: #{dual_gnn_forward.18} parent=0
    #allocation2 [shape = 'u8[24576]{0}', space=vmem, size = 0x6000, scoped, tag = 'input window, operand 0, single buffered']
    #allocation3 [shape = 's32[1]{0}', space=sflag, size = 0x4, scoped, tag = 'scoped memory for dual_gnn_forward.18']
    #allocation4 [shape = 's32[1]{0}', space=sflag, size = 0x4, scoped, tag = 'scoped memory for dual_gnn_forward.18']
    #allocation5 [shape = 'u8[24576]{0}', space=vmem, size = 0x6000, scoped, tag = 'input window, operand 1, single buffered']
    #allocation6 [shape = 's32[1]{0}', space=sflag, size = 0x4, scoped, tag = 'scoped memory for dual_gnn_forward.18']
    #allocation7 [shape = 'u8[12288]{0}', space=vmem, size = 0x3000, scoped, tag = 'input window, operand 2, single buffered']
    #allocation8 [shape = 'u8[512]{0}', space=vmem, size = 0x400, scoped, tag = 'input window, operand 3, single buffered']
    #allocation9 [shape = 's32[1]{0}', space=sflag, size = 0x4, scoped, tag = 'scoped memory for dual_gnn_forward.18']
    #allocation10 [shape = 'u8[6144]{0}', space=vmem, size = 0x1800, scoped, tag = 'input window, operand 4, single buffered']
    #allocation11 [shape = 'u8[24576]{0}', space=vmem, size = 0x6000, scoped, tag = 'output window, operand 0, single buffered']
    %10 = vsyncpa [#allocation3], 0
    %11 = vsyncpa [#allocation6], 0
    %12 = vsyncpa [#allocation9], 0
    %13 = vsyncpa [#allocation4], 0
    // Predicated region
    $region2: #{dual_gnn_forward.18} parent=1 // pred_check
      _
    $region3: #{dual_gnn_forward.18} parent=1 // pred_check_branch
      %15 = sbr.rel (0) target = $region5
    $region4: #{dual_gnn_forward.18} parent=1 // pred_region
      %s17 = ssub.s32 768, 768
      %18 = vsyncadd [#allocation3], %s17
      %s19 = sshll.u32 [#allocation2], 4
      %s20 = int_to_ptr.vmem [resolvable:$true] %s19
      %25 = dma.hbm_to_vmem [thread:$0]  %s0, 768, %s20, [#allocation3], 128, 128, 8
    $region5: #{dual_gnn_forward.18} parent=1 // pred_fallthru
      _
    // Predicated region
    $region6: #{dual_gnn_forward.18} parent=1 // pred_check
      _
    $region7: #{dual_gnn_forward.18} parent=1 // pred_check_branch
      %27 = sbr.rel (0) target = $region9
    $region8: #{dual_gnn_forward.18} parent=1 // pred_region
      %s29 = ssub.s32 768, 768
      %30 = vsyncadd [#allocation6], %s29
      %s31 = sshll.u32 [#allocation5], 4
      %s32 = int_to_ptr.vmem [resolvable:$true] %s31
      %37 = dma.hbm_to_vmem [thread:$0]  %s1, 768, %s32, [#allocation6], 128, 128, 8
    $region9: #{dual_gnn_forward.18} parent=1 // pred_fallthru
      _
    // Predicated region
    $region10: #{dual_gnn_forward.18} parent=1 // pred_check
      _
    $region11: #{dual_gnn_forward.18} parent=1 // pred_check_branch
      %39 = sbr.rel (0) target = $region13
    $region12: #{dual_gnn_forward.18} parent=1 // pred_region
      %s41 = ssub.s32 384, 384
      %42 = vsyncadd [#allocation6], %s41
      %s43 = sshll.u32 [#allocation7], 4
      %s44 = int_to_ptr.vmem [resolvable:$true] %s43
      %49 = dma.hbm_to_vmem [thread:$0]  %s2, 384, %s44, [#allocation6], 64, 64, 4
    $region13: #{dual_gnn_forward.18} parent=1 // pred_fallthru
      _
    // Predicated region
    $region14: #{dual_gnn_forward.18} parent=1 // pred_check
      _
    $region15: #{dual_gnn_forward.18} parent=1 // pred_check_branch
      %51 = sbr.rel (0) target = $region17
    $region16: #{dual_gnn_forward.18} parent=1 // pred_region
      %s53 = ssub.s32 16, 16
      %54 = vsyncadd [#allocation9], %s53
      %s56 = sshll.u32 [#allocation8], 4
      %s57 = int_to_ptr.vmem [resolvable:$true] %s56
      %59 = dma.hbm_to_vmem [thread:$0]  %s3, 16, %s57, [#allocation9]
    $region17: #{dual_gnn_forward.18} parent=1 // pred_fallthru
      _
    // Predicated region
    $region18: #{dual_gnn_forward.18} parent=1 // pred_check
      _
    $region19: #{dual_gnn_forward.18} parent=1 // pred_check_branch
      %61 = sbr.rel (0) target = $region21
    $region20: #{dual_gnn_forward.18} parent=1 // pred_region
      %s63 = ssub.s32 192, 192
      %64 = vsyncadd [#allocation9], %s63
      %s66 = sshll.u32 [#allocation10], 4
      %s67 = int_to_ptr.vmem [resolvable:$true] %s66
      %69 = dma.hbm_to_vmem [thread:$0]  %s4, 192, %s67, [#allocation9]
    $region21: #{dual_gnn_forward.18} parent=1 // pred_fallthru
      _
    // Predicated region
    $region22: #{dual_gnn_forward.18} parent=1 // pred_check
      _
    $region23: #{dual_gnn_forward.18} parent=1 // pred_check_branch
      %71 = sbr.rel (0) target = $region25
    $region24: #{dual_gnn_forward.18} parent=1 // pred_region
      %72 = dma.done [#allocation3], 768
    $region25: #{dual_gnn_forward.18} parent=1 // pred_fallthru
      _
    // Predicated region
    $region26: #{dual_gnn_forward.18} parent=1 // pred_check
      _
    $region27: #{dual_gnn_forward.18} parent=1 // pred_check_branch
      %74 = sbr.rel (0) target = $region29
    $region28: #{dual_gnn_forward.18} parent=1 // pred_region
      %75 = dma.done [#allocation6], 768
    $region29: #{dual_gnn_forward.18} parent=1 // pred_fallthru
      _
    // Predicated region
    $region30: #{dual_gnn_forward.18} parent=1 // pred_check
      _
    $region31: #{dual_gnn_forward.18} parent=1 // pred_check_branch
      %77 = sbr.rel (0) target = $region33
    $region32: #{dual_gnn_forward.18} parent=1 // pred_region
      %78 = dma.done [#allocation6], 384
    $region33: #{dual_gnn_forward.18} parent=1 // pred_fallthru
      _
    // Predicated region
    $region34: #{dual_gnn_forward.18} parent=1 // pred_check
      _
    $region35: #{dual_gnn_forward.18} parent=1 // pred_check_branch
      %80 = sbr.rel (0) target = $region37
    $region36: #{dual_gnn_forward.18} parent=1 // pred_region
      %81 = dma.done [#allocation9], 16
    $region37: #{dual_gnn_forward.18} parent=1 // pred_fallthru
      _
    // Predicated region
    $region38: #{dual_gnn_forward.18} parent=1 // pred_check
      _
    $region39: #{dual_gnn_forward.18} parent=1 // pred_check_branch
      %83 = sbr.rel (0) target = $region41
    $region40: #{dual_gnn_forward.18} parent=1 // pred_region
      %84 = dma.done [#allocation9], 192
    $region41: #{dual_gnn_forward.18} parent=1 // pred_fallthru
      _
    %v86 = vld [vmem:[#allocation2] sm:$0xff]
    %v87 = vld [vmem:[#allocation2 + $0x8] sm:$0xff]
    %v88 = vld [vmem:[#allocation2 + $0x10] sm:$0xff]
    %v89 = vld [vmem:[#allocation2 + $0x18] sm:$0xff]
    %v90 = vld [vmem:[#allocation2 + $0x20] sm:$0xff]
    %v91 = vld [vmem:[#allocation2 + $0x28] sm:$0xff]
    %v92 = vld [vmem:[#allocation5] sm:$0xff]
    %v93 = vld [vmem:[#allocation5 + $0x8] sm:$0xff]
    %v94 = vld [vmem:[#allocation5 + $0x10] sm:$0xff]
    %v95 = vld [vmem:[#allocation5 + $0x18] sm:$0xff]
    %v96 = vld [vmem:[#allocation5 + $0x20] sm:$0xff]
    %v97 = vld [vmem:[#allocation5 + $0x28] sm:$0xff]
    %v98 = vsub.f32 %v86, %v92
    %v99 = vsub.f32 %v87, %v93
    %v100 = vsub.f32 %v88, %v94
    %v101 = vsub.f32 %v89, %v95
    %v102 = vsub.f32 %v90, %v96
    %v103 = vsub.f32 %v91, %v97
    %v104 = vld [vmem:[#allocation8] sm:$0x1]
    %v106 = vlaneseq
    %v107 = vshrl.u32 %v106, 7
    %v108 = vsub.s32 0, %v107
    %v109 = vrot.slane %v104, %v108
    %v111 = vadd.f32 %v98, %v109
    %v112 = vadd.f32 %v99, %v109
    %v113 = vadd.f32 %v100, %v109
    %v114 = vadd.f32 %v101, %v109
    %v115 = vadd.f32 %v102, %v109
    %v116 = vadd.f32 %v103, %v109
    %vm117 = vcmask 72704
    %v118 = vsel %vm117, %v111, -inf
    %119 = vmax.xlane.f32.xlu0 %v118
    %v120 = vpop.xlane.xlu0 %119
    %v121 = vsel %vm117, %v112, -inf
    %122 = vmax.xlane.f32.xlu0 %v121
    %v123 = vpop.xlane.xlu0 %122
    %v124 = vsel %vm117, %v113, -inf
    %125 = vmax.xlane.f32.xlu0 %v124
    %v126 = vpop.xlane.xlu0 %125
    %v127 = vsel %vm117, %v114, -inf
    %128 = vmax.xlane.f32.xlu0 %v127
    %v129 = vpop.xlane.xlu0 %128
    %v130 = vsel %vm117, %v115, -inf
    %131 = vmax.xlane.f32.xlu0 %v130
    %v132 = vpop.xlane.xlu0 %131
    %v133 = vsel %vm117, %v116, -inf
    %134 = vmax.xlane.f32.xlu0 %v133
    %v135 = vpop.xlane.xlu0 %134
    %v136 = vsub.f32 %v111, %v120
    %v137 = vsub.f32 %v112, %v123
    %v138 = vsub.f32 %v113, %v126
    %v139 = vsub.f32 %v114, %v129
    %v140 = vsub.f32 %v115, %v132
    %v141 = vsub.f32 %v116, %v135
    %v142 = vmul.f32 %v136, 1.442695
    %v143 = vpow.pop %v142
    %v144 = vmul.f32 %v137, 1.442695
    %v145 = vpow.pop %v144
    %v146 = vmul.f32 %v138, 1.442695
    %v147 = vpow.pop %v146
    %v148 = vmul.f32 %v139, 1.442695
    %v149 = vpow.pop %v148
    %v150 = vmul.f32 %v140, 1.442695
    %v151 = vpow.pop %v150
    %v152 = vmul.f32 %v141, 1.442695
    %v153 = vpow.pop %v152
    %v154 = vsel %vm117, %v143, 0.0
    %155 = vadd.xlane.f32.xlu0 %v154
    %v156 = vpop.xlane.xlu0 %155
    %v157 = vsel %vm117, %v145, 0.0
    %158 = vadd.xlane.f32.xlu0 %v157
    %v159 = vpop.xlane.xlu0 %158
    %v160 = vsel %vm117, %v147, 0.0
    %161 = vadd.xlane.f32.xlu0 %v160
    %v162 = vpop.xlane.xlu0 %161
    %v163 = vsel %vm117, %v149, 0.0
    %164 = vadd.xlane.f32.xlu0 %v163
    %v165 = vpop.xlane.xlu0 %164
    %v166 = vsel %vm117, %v151, 0.0
    %167 = vadd.xlane.f32.xlu0 %v166
    %v168 = vpop.xlane.xlu0 %167
    %v169 = vsel %vm117, %v153, 0.0
    %170 = vadd.xlane.f32.xlu0 %v169
    %v171 = vpop.xlane.xlu0 %170
    %v172 = vrcp.pop %v156
    %v173 = vrcp.pop %v159
    %v174 = vrcp.pop %v162
    %v175 = vrcp.pop %v165
    %v176 = vrcp.pop %v168
    %v177 = vrcp.pop %v171
    %v178 = vmul.f32 %v143, %v172
    %v179 = vmul.f32 %v145, %v173
    %v180 = vmul.f32 %v147, %v174
    %v181 = vmul.f32 %v149, %v175
    %v182 = vmul.f32 %v151, %v176
    %v183 = vmul.f32 %v153, %v177
    %v184 = vld [vmem:[#allocation7] sm:$0xf]
    %v185 = vld [vmem:[#allocation7 + $0x4] sm:$0xf]
    %v186 = vld [vmem:[#allocation7 + $0x8] sm:$0xf]
    %v187 = vld [vmem:[#allocation7 + $0xc] sm:$0xf]
    %v188 = vld [vmem:[#allocation7 + $0x10] sm:$0xf]
    %v189 = vld [vmem:[#allocation7 + $0x14] sm:$0xf]
    %v190 = vld [vmem:[#allocation10] sm:$0x77]
    %v191 = vld [vmem:[#allocation10 + $0x8] sm:$0x7]
    %v198 = vunpack.c.l.b16 %v184
    %v199 = vunpack.c.l.b16 %v185
    %v200 = vunpack.c.l.b16 %v186
    %v201 = vunpack.c.l.b16 %v187
    %v202 = vunpack.c.l.b16 %v188
    %v203 = vunpack.c.l.b16 %v189
    %v204 = vpack.c.b16 %v199, %v198
    %v205 = vpack.c.b16 %v201, %v200
    %v206 = vpack.c.b16 %v203, %v202
    %v209 = vunpack.c.l.b16 %v190
    %v210 = vunpack.c.h.b16 %v190
    %v211 = vunpack.c.l.b16 %v191
    %v212 = vpack.c.b16 %v209, %v209
    %v213 = vpack.c.b16 %v210, %v210
    %v214 = vpack.c.b16 %v211, %v211
    %vm215 = vcmask 48128
    %v217 = vsel %vm215, %v204, 0
    %v220 = vsel %vm215, %v205, 0
    %v223 = vsel %vm215, %v206, 0
    %vm225 = vcmask 1042432
    %v227 = vsel %vm225, %v212, 0
    %v230 = vsel %vm225, %v213, 0
    %v233 = vsel %vm225, %v214, 0
    %235 = vmatprep.subr.bf16.mxu0 %v230
    %236 = vmatpush1.bf16.msra.mxu0 %v227
    %237 = vmatprep.subr.bf16.mxu0 0
    %238 = vmatpush1.bf16.msra.mxu0 0
    %239 = vmatprep.subr.bf16.mxu0 0
    %240 = vmatpush1.bf16.msra.mxu0 0
    %241 = vmatprep.subr.bf16.mxu0 0
    %242 = vmatpush1.bf16.msra.mxu0 0
    %243 = vmatprep.subr.bf16.mxu0 0
    %244 = vmatpush1.bf16.msra.mxu0 0
    %245 = vmatprep.subr.bf16.mxu0 0
    %246 = vmatpush1.bf16.msra.mxu0 0
    %247 = vmatprep.subr.bf16.mxu0 0
    %248 = vmatpush1.bf16.msra.mxu0 0
    %249 = vmatprep.subr.bf16.mxu0 0
    %250 = vmatpush1.bf16.msra.mxu0 0
    %251 = vmatprep.subr.bf16.mxu0 0
    %252 = vmatpush1.bf16.msra.mxu0 0
    %253 = vmatprep.subr.bf16.mxu0 0
    %254 = vmatpush1.bf16.msra.mxu0 0
    %255 = vmatprep.subr.bf16.mxu0 0
    %256 = vmatpush1.bf16.msra.mxu0 0
    %257 = vmatprep.subr.bf16.mxu0 0
    %258 = vmatpush1.bf16.msra.mxu0 0
    %259 = vmatprep.subr.bf16.mxu0 0
    %260 = vmatpush1.bf16.msra.mxu0 0
    %261 = vmatprep.subr.bf16.mxu0 0
    %262 = vmatpush1.bf16.msra.mxu0 0
    %263 = vmatprep.subr.bf16.mxu0 0
    %264 = vmatpush1.bf16.msra.mxu0 0
    %265 = vmatprep.subr.bf16.mxu0 0
    %266 = vmatpush1.bf16.msra.mxu0 0
    %267 = vmatprep.mubr.bf16.mxu0 0
    %268 = vmatmul.mubr.bf16.gmra.mrb[0].mxu0 %v217
    %v269 = vpop.f32.mrb[0].mxu0
    %v270 = vadd.f32 0.0, %v269
    %v271 = vpop.f32.mrb[0].mxu0
    %v272 = vadd.f32 0.0, %v271
    %v273 = vpop.f32.mrb[0].mxu0
    %v274 = vadd.f32 0.0, %v273
    %v275 = vpop.f32.mrb[0].mxu0
    %v276 = vadd.f32 0.0, %v275
    %277 = vmatprep.mubr.bf16.mxu0 0
    %278 = vmatmul.mubr.bf16.gmra.mrb[0].mxu0 %v220
    %v279 = vpop.f32.mrb[0].mxu0
    %v280 = vadd.f32 0.0, %v279
    %v281 = vpop.f32.mrb[0].mxu0
    %v282 = vadd.f32 0.0, %v281
    %v283 = vpop.f32.mrb[0].mxu0
    %v284 = vadd.f32 0.0, %v283
    %v285 = vpop.f32.mrb[0].mxu0
    %v286 = vadd.f32 0.0, %v285
    %287 = vmatprep.mubr.bf16.mxu0 0
    %288 = vmatmul.mubr.bf16.gmra.mrb[0].mxu0 %v223
    %v289 = vpop.f32.mrb[0].mxu0
    %v290 = vadd.f32 0.0, %v289
    %v291 = vpop.f32.mrb[0].mxu0
    %v292 = vadd.f32 0.0, %v291
    %v293 = vpop.f32.mrb[0].mxu0
    %v294 = vadd.f32 0.0, %v293
    %v295 = vpop.f32.mrb[0].mxu0
    %v296 = vadd.f32 0.0, %v295
    %297 = vdwg.mxu0
    %298 = vmatprep.subr.bf16.mxu0 0
    %299 = vmatpush1.bf16.msra.mxu0 %v233
    %300 = vmatprep.subr.bf16.mxu0 0
    %301 = vmatpush1.bf16.msra.mxu0 0
    %302 = vmatprep.subr.bf16.mxu0 0
    %303 = vmatpush1.bf16.msra.mxu0 0
    %304 = vmatprep.subr.bf16.mxu0 0
    %305 = vmatpush1.bf16.msra.mxu0 0
    %306 = vmatprep.subr.bf16.mxu0 0
    %307 = vmatpush1.bf16.msra.mxu0 0
    %308 = vmatprep.subr.bf16.mxu0 0
    %309 = vmatpush1.bf16.msra.mxu0 0
    %310 = vmatprep.subr.bf16.mxu0 0
    %311 = vmatpush1.bf16.msra.mxu0 0
    %312 = vmatprep.subr.bf16.mxu0 0
    %313 = vmatpush1.bf16.msra.mxu0 0
    %314 = vmatprep.subr.bf16.mxu0 0
    %315 = vmatpush1.bf16.msra.mxu0 0
    %316 = vmatprep.subr.bf16.mxu0 0
    %317 = vmatpush1.bf16.msra.mxu0 0
    %318 = vmatprep.subr.bf16.mxu0 0
    %319 = vmatpush1.bf16.msra.mxu0 0
    %320 = vmatprep.subr.bf16.mxu0 0
    %321 = vmatpush1.bf16.msra.mxu0 0
    %322 = vmatprep.subr.bf16.mxu0 0
    %323 = vmatpush1.bf16.msra.mxu0 0
    %324 = vmatprep.subr.bf16.mxu0 0
    %325 = vmatpush1.bf16.msra.mxu0 0
    %326 = vmatprep.subr.bf16.mxu0 0
    %327 = vmatpush1.bf16.msra.mxu0 0
    %328 = vmatprep.subr.bf16.mxu0 0
    %329 = vmatpush1.bf16.msra.mxu0 0
    %330 = vmatprep.mubr.bf16.mxu0 0
    %331 = vmatmul.mubr.bf16.gmra.mrb[0].mxu0 %v217
    %v332 = vpop.f32.mrb[0].mxu0
    %v333 = vadd.f32 0.0, %v332
    %v334 = vpop.f32.mrb[0].mxu0
    %v335 = vpop.f32.mrb[0].mxu0
    %v336 = vadd.f32 0.0, %v335
    %v337 = vpop.f32.mrb[0].mxu0
    %338 = vmatprep.mubr.bf16.mxu0 0
    %339 = vmatmul.mubr.bf16.gmra.mrb[0].mxu0 %v220
    %v340 = vpop.f32.mrb[0].mxu0
    %v341 = vadd.f32 0.0, %v340
    %v342 = vpop.f32.mrb[0].mxu0
    %v343 = vpop.f32.mrb[0].mxu0
    %v344 = vadd.f32 0.0, %v343
    %v345 = vpop.f32.mrb[0].mxu0
    %346 = vmatprep.mubr.bf16.mxu0 0
    %347 = vmatmul.mubr.bf16.gmra.mrb[0].mxu0 %v223
    %v348 = vpop.f32.mrb[0].mxu0
    %v349 = vadd.f32 0.0, %v348
    %v350 = vpop.f32.mrb[0].mxu0
    %v351 = vpop.f32.mrb[0].mxu0
    %v352 = vadd.f32 0.0, %v351
    %v353 = vpop.f32.mrb[0].mxu0
    %354 = vdwg.mxu0
    %356 = vset.pattern.permute.xlu0 0
    %357 = vperm.xlu0 %356, %v178
    %v358 = vpop.permute.xlu0 %357
    %361 = vset.pattern.permute.xlu0 0
    %362 = vperm.xlu0 %361, %v179
    %v363 = vpop.permute.xlu0 %362
    %366 = vset.pattern.permute.xlu0 0
    %367 = vperm.xlu0 %366, %v180
    %v368 = vpop.permute.xlu0 %367
    %371 = vset.pattern.permute.xlu0 0
    %372 = vperm.xlu0 %371, %v181
    %v373 = vpop.permute.xlu0 %372
    %376 = vset.pattern.permute.xlu0 0
    %377 = vperm.xlu0 %376, %v182
    %v378 = vpop.permute.xlu0 %377
    %381 = vset.pattern.permute.xlu0 0
    %382 = vperm.xlu0 %381, %v183
    %v383 = vpop.permute.xlu0 %382
    %v385 = vmul.f32 %v358, %v270
    %v386 = vmul.f32 %v363, %v274
    %v387 = vmul.f32 %v368, %v280
    %v388 = vmul.f32 %v373, %v284
    %v389 = vmul.f32 %v378, %v290
    %v390 = vmul.f32 %v383, %v294
    %391 = vset.pattern.permute.xlu0 1
    %392 = vperm.xlu0 %391, %v178
    %v393 = vpop.permute.xlu0 %392
    %395 = vset.pattern.permute.xlu0 1
    %396 = vperm.xlu0 %395, %v179
    %v397 = vpop.permute.xlu0 %396
    %399 = vset.pattern.permute.xlu0 1
    %400 = vperm.xlu0 %399, %v180
    %v401 = vpop.permute.xlu0 %400
    %403 = vset.pattern.permute.xlu0 1
    %404 = vperm.xlu0 %403, %v181
    %v405 = vpop.permute.xlu0 %404
    %407 = vset.pattern.permute.xlu0 1
    %408 = vperm.xlu0 %407, %v182
    %v409 = vpop.permute.xlu0 %408
    %411 = vset.pattern.permute.xlu0 1
    %412 = vperm.xlu0 %411, %v183
    %v413 = vpop.permute.xlu0 %412
    %v415 = vmul.f32 %v393, %v270
    %v416 = vmul.f32 %v397, %v274
    %v417 = vmul.f32 %v401, %v280
    %v418 = vmul.f32 %v405, %v284
    %v419 = vmul.f32 %v409, %v290
    %v420 = vmul.f32 %v413, %v294
    %427 = vrot.lane.b32.xlu0 %v415, 96
    %v428 = vpop.permute.xlu0 %427
    %429 = vrot.lane.b32.xlu0 %v416, 96
    %v430 = vpop.permute.xlu0 %429
    %431 = vrot.lane.b32.xlu0 %v417, 96
    %v432 = vpop.permute.xlu0 %431
    %433 = vrot.lane.b32.xlu0 %v418, 96
    %v434 = vpop.permute.xlu0 %433
    %435 = vrot.lane.b32.xlu0 %v419, 96
    %v436 = vpop.permute.xlu0 %435
    %437 = vrot.lane.b32.xlu0 %v420, 96
    %v438 = vpop.permute.xlu0 %437
    %v445 = vadd.f32 %v385, %v428
    %v446 = vadd.f32 %v386, %v430
    %v447 = vadd.f32 %v387, %v432
    %v448 = vadd.f32 %v388, %v434
    %v449 = vadd.f32 %v389, %v436
    %v450 = vadd.f32 %v390, %v438
    %451 = vset.pattern.permute.xlu0 2
    %452 = vperm.xlu0 %451, %v178
    %v453 = vpop.permute.xlu0 %452
    %455 = vset.pattern.permute.xlu0 2
    %456 = vperm.xlu0 %455, %v179
    %v457 = vpop.permute.xlu0 %456
    %459 = vset.pattern.permute.xlu0 2
    %460 = vperm.xlu0 %459, %v180
    %v461 = vpop.permute.xlu0 %460
    %463 = vset.pattern.permute.xlu0 2
    %464 = vperm.xlu0 %463, %v181
    %v465 = vpop.permute.xlu0 %464
    %467 = vset.pattern.permute.xlu0 2
    %468 = vperm.xlu0 %467, %v182
    %v469 = vpop.permute.xlu0 %468
    %471 = vset.pattern.permute.xlu0 2
    %472 = vperm.xlu0 %471, %v183
    %v473 = vpop.permute.xlu0 %472
    %v475 = vmul.f32 %v453, %v270
    %v476 = vmul.f32 %v457, %v274
    %v477 = vmul.f32 %v461, %v280
    %v478 = vmul.f32 %v465, %v284
    %v479 = vmul.f32 %v469, %v290
    %v480 = vmul.f32 %v473, %v294
    %487 = vrot.lane.b32.xlu0 %v475, 64
    %v488 = vpop.permute.xlu0 %487
    %489 = vrot.lane.b32.xlu0 %v476, 64
    %v490 = vpop.permute.xlu0 %489
    %491 = vrot.lane.b32.xlu0 %v477, 64
    %v492 = vpop.permute.xlu0 %491
    %493 = vrot.lane.b32.xlu0 %v478, 64
    %v494 = vpop.permute.xlu0 %493
    %495 = vrot.lane.b32.xlu0 %v479, 64
    %v496 = vpop.permute.xlu0 %495
    %497 = vrot.lane.b32.xlu0 %v480, 64
    %v498 = vpop.permute.xlu0 %497
    %v505 = vadd.f32 %v445, %v488
    %v506 = vadd.f32 %v446, %v490
    %v507 = vadd.f32 %v447, %v492
    %v508 = vadd.f32 %v448, %v494
    %v509 = vadd.f32 %v449, %v496
    %v510 = vadd.f32 %v450, %v498
    %511 = vset.pattern.permute.xlu0 3
    %512 = vperm.xlu0 %511, %v178
    %v513 = vpop.permute.xlu0 %512
    %515 = vset.pattern.permute.xlu0 3
    %516 = vperm.xlu0 %515, %v179
    %v517 = vpop.permute.xlu0 %516
    %519 = vset.pattern.permute.xlu0 3
    %520 = vperm.xlu0 %519, %v180
    %v521 = vpop.permute.xlu0 %520
    %523 = vset.pattern.permute.xlu0 3
    %524 = vperm.xlu0 %523, %v181
    %v525 = vpop.permute.xlu0 %524
    %527 = vset.pattern.permute.xlu0 3
    %528 = vperm.xlu0 %527, %v182
    %v529 = vpop.permute.xlu0 %528
    %531 = vset.pattern.permute.xlu0 3
    %532 = vperm.xlu0 %531, %v183
    %v533 = vpop.permute.xlu0 %532
    %v535 = vmul.f32 %v513, %v270
    %v536 = vmul.f32 %v517, %v274
    %v537 = vmul.f32 %v521, %v280
    %v538 = vmul.f32 %v525, %v284
    %v539 = vmul.f32 %v529, %v290
    %v540 = vmul.f32 %v533, %v294
    %547 = vrot.lane.b32.xlu0 %v535, 32
    %v548 = vpop.permute.xlu0 %547
    %549 = vrot.lane.b32.xlu0 %v536, 32
    %v550 = vpop.permute.xlu0 %549
    %551 = vrot.lane.b32.xlu0 %v537, 32
    %v552 = vpop.permute.xlu0 %551
    %553 = vrot.lane.b32.xlu0 %v538, 32
    %v554 = vpop.permute.xlu0 %553
    %555 = vrot.lane.b32.xlu0 %v539, 32
    %v556 = vpop.permute.xlu0 %555
    %557 = vrot.lane.b32.xlu0 %v540, 32
    %v558 = vpop.permute.xlu0 %557
    %v565 = vadd.f32 %v505, %v548
    %v566 = vadd.f32 %v506, %v550
    %v567 = vadd.f32 %v507, %v552
    %v568 = vadd.f32 %v508, %v554
    %v569 = vadd.f32 %v509, %v556
    %v570 = vadd.f32 %v510, %v558
    %571 = vset.pattern.permute.xlu0 4
    %572 = vperm.xlu0 %571, %v178
    %v573 = vpop.permute.xlu0 %572
    %575 = vset.pattern.permute.xlu0 4
    %576 = vperm.xlu0 %575, %v179
    %v577 = vpop.permute.xlu0 %576
    %579 = vset.pattern.permute.xlu0 4
    %580 = vperm.xlu0 %579, %v180
    %v581 = vpop.permute.xlu0 %580
    %583 = vset.pattern.permute.xlu0 4
    %584 = vperm.xlu0 %583, %v181
    %v585 = vpop.permute.xlu0 %584
    %587 = vset.pattern.permute.xlu0 4
    %588 = vperm.xlu0 %587, %v182
    %v589 = vpop.permute.xlu0 %588
    %591 = vset.pattern.permute.xlu0 4
    %592 = vperm.xlu0 %591, %v183
    %v593 = vpop.permute.xlu0 %592
    %v595 = vmul.f32 %v573, %v272
    %v596 = vmul.f32 %v577, %v276
    %v597 = vmul.f32 %v581, %v282
    %v598 = vmul.f32 %v585, %v286
    %v599 = vmul.f32 %v589, %v292
    %v600 = vmul.f32 %v593, %v296
    %v601 = vadd.f32 %v565, %v595
    %v602 = vadd.f32 %v566, %v596
    %v603 = vadd.f32 %v567, %v597
    %v604 = vadd.f32 %v568, %v598
    %v605 = vadd.f32 %v569, %v599
    %v606 = vadd.f32 %v570, %v600
    %607 = vset.pattern.permute.xlu0 5
    %608 = vperm.xlu0 %607, %v178
    %v609 = vpop.permute.xlu0 %608
    %611 = vset.pattern.permute.xlu0 5
    %612 = vperm.xlu0 %611, %v179
    %v613 = vpop.permute.xlu0 %612
    %615 = vset.pattern.permute.xlu0 5
    %616 = vperm.xlu0 %615, %v180
    %v617 = vpop.permute.xlu0 %616
    %619 = vset.pattern.permute.xlu0 5
    %620 = vperm.xlu0 %619, %v181
    %v621 = vpop.permute.xlu0 %620
    %623 = vset.pattern.permute.xlu0 5
    %624 = vperm.xlu0 %623, %v182
    %v625 = vpop.permute.xlu0 %624
    %627 = vset.pattern.permute.xlu0 5
    %628 = vperm.xlu0 %627, %v183
    %v629 = vpop.permute.xlu0 %628
    %v631 = vmul.f32 %v609, %v272
    %v632 = vmul.f32 %v613, %v276
    %v633 = vmul.f32 %v617, %v282
    %v634 = vmul.f32 %v621, %v286
    %v635 = vmul.f32 %v625, %v292
    %v636 = vmul.f32 %v629, %v296
    %643 = vrot.lane.b32.xlu0 %v631, 96
    %v644 = vpop.permute.xlu0 %643
    %645 = vrot.lane.b32.xlu0 %v632, 96
    %v646 = vpop.permute.xlu0 %645
    %647 = vrot.lane.b32.xlu0 %v633, 96
    %v648 = vpop.permute.xlu0 %647
    %649 = vrot.lane.b32.xlu0 %v634, 96
    %v650 = vpop.permute.xlu0 %649
    %651 = vrot.lane.b32.xlu0 %v635, 96
    %v652 = vpop.permute.xlu0 %651
    %653 = vrot.lane.b32.xlu0 %v636, 96
    %v654 = vpop.permute.xlu0 %653
    %v661 = vadd.f32 %v601, %v644
    %v662 = vadd.f32 %v602, %v646
    %v663 = vadd.f32 %v603, %v648
    %v664 = vadd.f32 %v604, %v650
    %v665 = vadd.f32 %v605, %v652
    %v666 = vadd.f32 %v606, %v654
    %667 = vset.pattern.permute.xlu0 6
    %668 = vperm.xlu0 %667, %v178
    %v669 = vpop.permute.xlu0 %668
    %671 = vset.pattern.permute.xlu0 6
    %672 = vperm.xlu0 %671, %v179
    %v673 = vpop.permute.xlu0 %672
    %675 = vset.pattern.permute.xlu0 6
    %676 = vperm.xlu0 %675, %v180
    %v677 = vpop.permute.xlu0 %676
    %679 = vset.pattern.permute.xlu0 6
    %680 = vperm.xlu0 %679, %v181
    %v681 = vpop.permute.xlu0 %680
    %683 = vset.pattern.permute.xlu0 6
    %684 = vperm.xlu0 %683, %v182
    %v685 = vpop.permute.xlu0 %684
    %687 = vset.pattern.permute.xlu0 6
    %688 = vperm.xlu0 %687, %v183
    %v689 = vpop.permute.xlu0 %688
    %v691 = vmul.f32 %v669, %v272
    %v692 = vmul.f32 %v673, %v276
    %v693 = vmul.f32 %v677, %v282
    %v694 = vmul.f32 %v681, %v286
    %v695 = vmul.f32 %v685, %v292
    %v696 = vmul.f32 %v689, %v296
    %703 = vrot.lane.b32.xlu0 %v691, 64
    %v704 = vpop.permute.xlu0 %703
    %705 = vrot.lane.b32.xlu0 %v692, 64
    %v706 = vpop.permute.xlu0 %705
    %707 = vrot.lane.b32.xlu0 %v693, 64
    %v708 = vpop.permute.xlu0 %707
    %709 = vrot.lane.b32.xlu0 %v694, 64
    %v710 = vpop.permute.xlu0 %709
    %711 = vrot.lane.b32.xlu0 %v695, 64
    %v712 = vpop.permute.xlu0 %711
    %713 = vrot.lane.b32.xlu0 %v696, 64
    %v714 = vpop.permute.xlu0 %713
    %v721 = vadd.f32 %v661, %v704
    %v722 = vadd.f32 %v662, %v706
    %v723 = vadd.f32 %v663, %v708
    %v724 = vadd.f32 %v664, %v710
    %v725 = vadd.f32 %v665, %v712
    %v726 = vadd.f32 %v666, %v714
    %727 = vset.pattern.permute.xlu0 7
    %728 = vperm.xlu0 %727, %v178
    %v729 = vpop.permute.xlu0 %728
    %731 = vset.pattern.permute.xlu0 7
    %732 = vperm.xlu0 %731, %v179
    %v733 = vpop.permute.xlu0 %732
    %735 = vset.pattern.permute.xlu0 7
    %736 = vperm.xlu0 %735, %v180
    %v737 = vpop.permute.xlu0 %736
    %739 = vset.pattern.permute.xlu0 7
    %740 = vperm.xlu0 %739, %v181
    %v741 = vpop.permute.xlu0 %740
    %743 = vset.pattern.permute.xlu0 7
    %744 = vperm.xlu0 %743, %v182
    %v745 = vpop.permute.xlu0 %744
    %747 = vset.pattern.permute.xlu0 7
    %748 = vperm.xlu0 %747, %v183
    %v749 = vpop.permute.xlu0 %748
    %v751 = vmul.f32 %v729, %v272
    %v752 = vmul.f32 %v733, %v276
    %v753 = vmul.f32 %v737, %v282
    %v754 = vmul.f32 %v741, %v286
    %v755 = vmul.f32 %v745, %v292
    %v756 = vmul.f32 %v749, %v296
    %763 = vrot.lane.b32.xlu0 %v751, 32
    %v764 = vpop.permute.xlu0 %763
    %765 = vrot.lane.b32.xlu0 %v752, 32
    %v766 = vpop.permute.xlu0 %765
    %767 = vrot.lane.b32.xlu0 %v753, 32
    %v768 = vpop.permute.xlu0 %767
    %769 = vrot.lane.b32.xlu0 %v754, 32
    %v770 = vpop.permute.xlu0 %769
    %771 = vrot.lane.b32.xlu0 %v755, 32
    %v772 = vpop.permute.xlu0 %771
    %773 = vrot.lane.b32.xlu0 %v756, 32
    %v774 = vpop.permute.xlu0 %773
    %v781 = vadd.f32 %v721, %v764
    %v782 = vadd.f32 %v722, %v766
    %v783 = vadd.f32 %v723, %v768
    %v784 = vadd.f32 %v724, %v770
    %v785 = vadd.f32 %v725, %v772
    %v786 = vadd.f32 %v726, %v774
    %787 = vset.pattern.permute.xlu0 8
    %788 = vperm.xlu0 %787, %v178
    %v789 = vpop.permute.xlu0 %788
    %791 = vset.pattern.permute.xlu0 8
    %792 = vperm.xlu0 %791, %v179
    %v793 = vpop.permute.xlu0 %792
    %795 = vset.pattern.permute.xlu0 8
    %796 = vperm.xlu0 %795, %v180
    %v797 = vpop.permute.xlu0 %796
    %799 = vset.pattern.permute.xlu0 8
    %800 = vperm.xlu0 %799, %v181
    %v801 = vpop.permute.xlu0 %800
    %803 = vset.pattern.permute.xlu0 8
    %804 = vperm.xlu0 %803, %v182
    %v805 = vpop.permute.xlu0 %804
    %807 = vset.pattern.permute.xlu0 8
    %808 = vperm.xlu0 %807, %v183
    %v809 = vpop.permute.xlu0 %808
    %v811 = vmul.f32 %v789, %v333
    %v812 = vmul.f32 %v793, %v336
    %v813 = vmul.f32 %v797, %v341
    %v814 = vmul.f32 %v801, %v344
    %v815 = vmul.f32 %v805, %v349
    %v816 = vmul.f32 %v809, %v352
    %v817 = vadd.f32 %v781, %v811
    %v818 = vadd.f32 %v782, %v812
    %v819 = vadd.f32 %v783, %v813
    %v820 = vadd.f32 %v784, %v814
    %v821 = vadd.f32 %v785, %v815
    %v822 = vadd.f32 %v786, %v816
    %vm823 = vcmask 261120
    %824 = vst.msk [vmem:[#allocation11] sm:$0xff] %vm823, %v817
    %825 = vst.msk [vmem:[#allocation11 + $0x8] sm:$0xff] %vm823, %v818
    %826 = vst.msk [vmem:[#allocation11 + $0x10] sm:$0xff] %vm823, %v819
    %827 = vst.msk [vmem:[#allocation11 + $0x18] sm:$0xff] %vm823, %v820
    %828 = vst.msk [vmem:[#allocation11 + $0x20] sm:$0xff] %vm823, %v821
    %829 = vst.msk [vmem:[#allocation11 + $0x28] sm:$0xff] %vm823, %v822
    // Predicated region
    $region42: #{dual_gnn_forward.18} parent=1 // pred_check
      _
    $region43: #{dual_gnn_forward.18} parent=1 // pred_check_branch
      %831 = sbr.rel (0) target = $region45
    $region44: #{dual_gnn_forward.18} parent=1 // pred_region
      %s833 = ssub.s32 768, 768
      %834 = vsyncadd [#allocation4], %s833
      %s835 = sshll.u32 [#allocation11], 4
      %s836 = int_to_ptr.vmem [resolvable:$true] %s835
      %841 = dma.vmem_to_hbm [thread:$0]  %s836, 768, %s5, [#allocation4], 128, 128, 8
    $region45: #{dual_gnn_forward.18} parent=1 // pred_fallthru
      _
    // Predicated region
    $region46: #{dual_gnn_forward.18} parent=1 // pred_check
      _
    $region47: #{dual_gnn_forward.18} parent=1 // pred_check_branch
      %843 = sbr.rel (0) target = $region49
    $region48: #{dual_gnn_forward.18} parent=1 // pred_region
      %844 = dma.done [#allocation4], 768
    $region49: #{dual_gnn_forward.18} parent=1 // pred_fallthru
      _
    %845 = vsyncpa [#allocation3], 1
    %846 = vsyncpa [#allocation6], 1
    %847 = vsyncpa [#allocation9], 1
    %848 = vsyncpa [#allocation4], 1

// kernel: dual_gnn_forward.19
$region0: #{dual_gnn_forward.19}
  #allocation0 [shape = 'u32[]', space=smem, size = 0x4, offset = 0x4, fixed_abs, tag = 'smem constant byte address 0x4 - core index']
  #allocation1 [shape = 'u32[144,128]{1,0:T(1,128)}', space=vmem, size = 0x12000, scoped, tag = 'internal scratch']
  %s0 = inlined_call_operand.hbm [shape: f32[32,9], index: 0, kind: input, shape index: {}]
  %s1 = inlined_call_operand.hbm [shape: f32[32,9], index: 1, kind: input, shape index: {}]
  %s2 = inlined_call_operand.hbm [shape: bf16[32,32], index: 2, kind: input, shape index: {}]
  %s3 = inlined_call_operand.hbm [shape: f32[1,9], index: 3, kind: input, shape index: {}]
  %s4 = inlined_call_operand.hbm [shape: bf16[32,576], index: 4, kind: input, shape index: {}]
  %s5 = inlined_call_operand.hbm [shape: f32[32,64], index: 5, kind: output, shape index: {}]
  %s6 = sld [smem:[#allocation0]]
  $region50: #{dual_gnn_forward.19} parent=0
    _
  %s8 = ssub.s32 1, %s6
  %s9 = scalar_select 0, %s8, %s6
  $region1: #{dual_gnn_forward.19} parent=0
    #allocation2 [shape = 'u8[16384]{0}', space=vmem, size = 0x4000, scoped, tag = 'input window, operand 0, single buffered']
    #allocation3 [shape = 's32[1]{0}', space=sflag, size = 0x4, scoped, tag = 'scoped memory for dual_gnn_forward.19']
    #allocation4 [shape = 's32[1]{0}', space=sflag, size = 0x4, scoped, tag = 'scoped memory for dual_gnn_forward.19']
    #allocation5 [shape = 'u8[16384]{0}', space=vmem, size = 0x4000, scoped, tag = 'input window, operand 1, single buffered']
    #allocation6 [shape = 's32[1]{0}', space=sflag, size = 0x4, scoped, tag = 'scoped memory for dual_gnn_forward.19']
    #allocation7 [shape = 'u8[8192]{0}', space=vmem, size = 0x2000, scoped, tag = 'input window, operand 2, single buffered']
    #allocation8 [shape = 'u8[512]{0}', space=vmem, size = 0x400, scoped, tag = 'input window, operand 3, single buffered']
    #allocation9 [shape = 's32[1]{0}', space=sflag, size = 0x4, scoped, tag = 'scoped memory for dual_gnn_forward.19']
    #allocation10 [shape = 'u8[40960]{0}', space=vmem, size = 0xa000, scoped, tag = 'input window, operand 4, single buffered']
    #allocation11 [shape = 'u8[16384]{0}', space=vmem, size = 0x4000, scoped, tag = 'output window, operand 0, single buffered']
    %10 = vsyncpa [#allocation3], 0
    %11 = vsyncpa [#allocation6], 0
    %12 = vsyncpa [#allocation9], 0
    %13 = vsyncpa [#allocation4], 0
    // Predicated region
    $region2: #{dual_gnn_forward.19} parent=1 // pred_check
      _
    $region3: #{dual_gnn_forward.19} parent=1 // pred_check_branch
      %15 = sbr.rel (0) target = $region5
    $region4: #{dual_gnn_forward.19} parent=1 // pred_region
      %s17 = ssub.s32 512, 512
      %18 = vsyncadd [#allocation3], %s17
      %s19 = sshll.u32 [#allocation2], 4
      %s20 = int_to_ptr.vmem [resolvable:$true] %s19
      %25 = dma.hbm_to_vmem [thread:$0]  %s0, 512, %s20, [#allocation3], 128, 128, 8
    $region5: #{dual_gnn_forward.19} parent=1 // pred_fallthru
      _
    // Predicated region
    $region6: #{dual_gnn_forward.19} parent=1 // pred_check
      _
    $region7: #{dual_gnn_forward.19} parent=1 // pred_check_branch
      %27 = sbr.rel (0) target = $region9
    $region8: #{dual_gnn_forward.19} parent=1 // pred_region
      %s29 = ssub.s32 512, 512
      %30 = vsyncadd [#allocation6], %s29
      %s31 = sshll.u32 [#allocation5], 4
      %s32 = int_to_ptr.vmem [resolvable:$true] %s31
      %37 = dma.hbm_to_vmem [thread:$0]  %s1, 512, %s32, [#allocation6], 128, 128, 8
    $region9: #{dual_gnn_forward.19} parent=1 // pred_fallthru
      _
    // Predicated region
    $region10: #{dual_gnn_forward.19} parent=1 // pred_check
      _
    $region11: #{dual_gnn_forward.19} parent=1 // pred_check_branch
      %39 = sbr.rel (0) target = $region13
    $region12: #{dual_gnn_forward.19} parent=1 // pred_region
      %s41 = ssub.s32 256, 256
      %42 = vsyncadd [#allocation6], %s41
      %s43 = sshll.u32 [#allocation7], 4
      %s44 = int_to_ptr.vmem [resolvable:$true] %s43
      %49 = dma.hbm_to_vmem [thread:$0]  %s2, 256, %s44, [#allocation6], 64, 64, 4
    $region13: #{dual_gnn_forward.19} parent=1 // pred_fallthru
      _
    // Predicated region
    $region14: #{dual_gnn_forward.19} parent=1 // pred_check
      _
    $region15: #{dual_gnn_forward.19} parent=1 // pred_check_branch
      %51 = sbr.rel (0) target = $region17
    $region16: #{dual_gnn_forward.19} parent=1 // pred_region
      %s53 = ssub.s32 16, 16
      %54 = vsyncadd [#allocation9], %s53
      %s56 = sshll.u32 [#allocation8], 4
      %s57 = int_to_ptr.vmem [resolvable:$true] %s56
      %59 = dma.hbm_to_vmem [thread:$0]  %s3, 16, %s57, [#allocation9]
    $region17: #{dual_gnn_forward.19} parent=1 // pred_fallthru
      _
    // Predicated region
    $region18: #{dual_gnn_forward.19} parent=1 // pred_check
      _
    $region19: #{dual_gnn_forward.19} parent=1 // pred_check_branch
      %61 = sbr.rel (0) target = $region21
    $region20: #{dual_gnn_forward.19} parent=1 // pred_region
      %s63 = ssub.s32 1280, 1280
      %64 = vsyncadd [#allocation9], %s63
      %s65 = sshll.u32 [#allocation10], 4
      %s66 = int_to_ptr.vmem [resolvable:$true] %s65
      %71 = dma.hbm_to_vmem [thread:$0]  %s4, 1280, %s66, [#allocation9], 320, 320, 20
    $region21: #{dual_gnn_forward.19} parent=1 // pred_fallthru
      _
    // Predicated region
    $region22: #{dual_gnn_forward.19} parent=1 // pred_check
      _
    $region23: #{dual_gnn_forward.19} parent=1 // pred_check_branch
      %73 = sbr.rel (0) target = $region25
    $region24: #{dual_gnn_forward.19} parent=1 // pred_region
      %74 = dma.done [#allocation3], 512
    $region25: #{dual_gnn_forward.19} parent=1 // pred_fallthru
      _
    // Predicated region
    $region26: #{dual_gnn_forward.19} parent=1 // pred_check
      _
    $region27: #{dual_gnn_forward.19} parent=1 // pred_check_branch
      %76 = sbr.rel (0) target = $region29
    $region28: #{dual_gnn_forward.19} parent=1 // pred_region
      %77 = dma.done [#allocation6], 512
    $region29: #{dual_gnn_forward.19} parent=1 // pred_fallthru
      _
    // Predicated region
    $region30: #{dual_gnn_forward.19} parent=1 // pred_check
      _
    $region31: #{dual_gnn_forward.19} parent=1 // pred_check_branch
      %79 = sbr.rel (0) target = $region33
    $region32: #{dual_gnn_forward.19} parent=1 // pred_region
      %80 = dma.done [#allocation6], 256
    $region33: #{dual_gnn_forward.19} parent=1 // pred_fallthru
      _
    // Predicated region
    $region34: #{dual_gnn_forward.19} parent=1 // pred_check
      _
    $region35: #{dual_gnn_forward.19} parent=1 // pred_check_branch
      %82 = sbr.rel (0) target = $region37
    $region36: #{dual_gnn_forward.19} parent=1 // pred_region
      %83 = dma.done [#allocation9], 16
    $region37: #{dual_gnn_forward.19} parent=1 // pred_fallthru
      _
    // Predicated region
    $region38: #{dual_gnn_forward.19} parent=1 // pred_check
      _
    $region39: #{dual_gnn_forward.19} parent=1 // pred_check_branch
      %85 = sbr.rel (0) target = $region41
    $region40: #{dual_gnn_forward.19} parent=1 // pred_region
      %86 = dma.done [#allocation9], 1280
    $region41: #{dual_gnn_forward.19} parent=1 // pred_fallthru
      _
    %v88 = vld [vmem:[#allocation2] sm:$0xff]
    %v89 = vld [vmem:[#allocation2 + $0x8] sm:$0xff]
    %v90 = vld [vmem:[#allocation2 + $0x10] sm:$0xff]
    %v91 = vld [vmem:[#allocation2 + $0x18] sm:$0xff]
    %v92 = vld [vmem:[#allocation5] sm:$0xff]
    %v93 = vld [vmem:[#allocation5 + $0x8] sm:$0xff]
    %v94 = vld [vmem:[#allocation5 + $0x10] sm:$0xff]
    %v95 = vld [vmem:[#allocation5 + $0x18] sm:$0xff]
    %v96 = vsub.f32 %v88, %v92
    %v97 = vsub.f32 %v89, %v93
    %v98 = vsub.f32 %v90, %v94
    %v99 = vsub.f32 %v91, %v95
    %v100 = vld [vmem:[#allocation8] sm:$0x1]
    %v102 = vlaneseq
    %v103 = vshrl.u32 %v102, 7
    %v104 = vsub.s32 0, %v103
    %v105 = vrot.slane %v100, %v104
    %v107 = vadd.f32 %v96, %v105
    %v108 = vadd.f32 %v97, %v105
    %v109 = vadd.f32 %v98, %v105
    %v110 = vadd.f32 %v99, %v105
    %vm111 = vcmask 72704
    %v112 = vsel %vm111, %v107, -inf
    %113 = vmax.xlane.f32.xlu0 %v112
    %v114 = vpop.xlane.xlu0 %113
    %v115 = vsel %vm111, %v108, -inf
    %116 = vmax.xlane.f32.xlu0 %v115
    %v117 = vpop.xlane.xlu0 %116
    %v118 = vsel %vm111, %v109, -inf
    %119 = vmax.xlane.f32.xlu0 %v118
    %v120 = vpop.xlane.xlu0 %119
    %v121 = vsel %vm111, %v110, -inf
    %122 = vmax.xlane.f32.xlu0 %v121
    %v123 = vpop.xlane.xlu0 %122
    %v124 = vsub.f32 %v107, %v114
    %v125 = vsub.f32 %v108, %v117
    %v126 = vsub.f32 %v109, %v120
    %v127 = vsub.f32 %v110, %v123
    %v128 = vmul.f32 %v124, 1.442695
    %v129 = vpow.pop %v128
    %v130 = vmul.f32 %v125, 1.442695
    %v131 = vpow.pop %v130
    %v132 = vmul.f32 %v126, 1.442695
    %v133 = vpow.pop %v132
    %v134 = vmul.f32 %v127, 1.442695
    %v135 = vpow.pop %v134
    %v136 = vsel %vm111, %v129, 0.0
    %137 = vadd.xlane.f32.xlu0 %v136
    %v138 = vpop.xlane.xlu0 %137
    %v139 = vsel %vm111, %v131, 0.0
    %140 = vadd.xlane.f32.xlu0 %v139
    %v141 = vpop.xlane.xlu0 %140
    %v142 = vsel %vm111, %v133, 0.0
    %143 = vadd.xlane.f32.xlu0 %v142
    %v144 = vpop.xlane.xlu0 %143
    %v145 = vsel %vm111, %v135, 0.0
    %146 = vadd.xlane.f32.xlu0 %v145
    %v147 = vpop.xlane.xlu0 %146
    %v148 = vrcp.pop %v138
    %v149 = vrcp.pop %v141
    %v150 = vrcp.pop %v144
    %v151 = vrcp.pop %v147
    %v152 = vmul.f32 %v129, %v148
    %v153 = vmul.f32 %v131, %v149
    %v154 = vmul.f32 %v133, %v150
    %v155 = vmul.f32 %v135, %v151
    %v156 = vld [vmem:[#allocation7] sm:$0xf]
    %v157 = vld [vmem:[#allocation7 + $0x4] sm:$0xf]
    %v158 = vld [vmem:[#allocation7 + $0x8] sm:$0xf]
    %v159 = vld [vmem:[#allocation7 + $0xc] sm:$0xf]
    %v160 = vld [vmem:[#allocation10] sm:$0xff]
    %v161 = vld [vmem:[#allocation10 + $0x8] sm:$0xff]
    %v162 = vld [vmem:[#allocation10 + $0x10] sm:$0xf]
    %v163 = vld [vmem:[#allocation10 + $0x14] sm:$0xff]
    %v164 = vld [vmem:[#allocation10 + $0x1c] sm:$0xff]
    %v165 = vld [vmem:[#allocation10 + $0x24] sm:$0xf]
    %v166 = vld [vmem:[#allocation10 + $0x28] sm:$0xff]
    %v167 = vld [vmem:[#allocation10 + $0x30] sm:$0xff]
    %v168 = vld [vmem:[#allocation10 + $0x38] sm:$0xf]
    %v169 = vld [vmem:[#allocation10 + $0x3c] sm:$0xff]
    %v170 = vld [vmem:[#allocation10 + $0x44] sm:$0xff]
    %v171 = vld [vmem:[#allocation10 + $0x4c] sm:$0xf]
    %v176 = vunpack.c.l.b16 %v156
    %v177 = vunpack.c.l.b16 %v157
    %v178 = vunpack.c.l.b16 %v158
    %v179 = vunpack.c.l.b16 %v159
    %v180 = vpack.c.b16 %v177, %v176
    %v181 = vpack.c.b16 %v179, %v178
    %v194 = vunpack.c.l.b16 %v160
    %v195 = vunpack.c.h.b16 %v160
    %v196 = vunpack.c.l.b16 %v161
    %v197 = vunpack.c.h.b16 %v161
    %v198 = vunpack.c.l.b16 %v162
    %v199 = vunpack.c.l.b16 %v163
    %v200 = vunpack.c.h.b16 %v163
    %v201 = vunpack.c.l.b16 %v164
    %v202 = vunpack.c.h.b16 %v164
    %v203 = vunpack.c.l.b16 %v165
    %v204 = vunpack.c.l.b16 %v166
    %v205 = vunpack.c.h.b16 %v166
    %v206 = vunpack.c.l.b16 %v167
    %v207 = vunpack.c.h.b16 %v167
    %v208 = vunpack.c.l.b16 %v168
    %v209 = vunpack.c.l.b16 %v169
    %v210 = vunpack.c.h.b16 %v169
    %v211 = vunpack.c.l.b16 %v170
    %v212 = vunpack.c.h.b16 %v170
    %v213 = vunpack.c.l.b16 %v171
    %v214 = vpack.c.b16 %v199, %v194
    %v215 = vpack.c.b16 %v200, %v195
    %v216 = vpack.c.b16 %v201, %v196
    %v217 = vpack.c.b16 %v202, %v197
    %v218 = vpack.c.b16 %v203, %v198
    %v219 = vpack.c.b16 %v209, %v204
    %v220 = vpack.c.b16 %v210, %v205
    %v221 = vpack.c.b16 %v211, %v206
    %v222 = vpack.c.b16 %v212, %v207
    %v223 = vpack.c.b16 %v213, %v208
    %vm234 = vcmask 261120
    %v236 = vsel %vm234, %v180, 0
    %v239 = vsel %vm234, %v181, 0
    %241 = vmatprep.subr.bf16.mxu0 %v215
    %242 = vmatpush1.bf16.msra.mxu0 %v214
    %243 = vmatprep.subr.bf16.mxu0 %v220
    %244 = vmatpush1.bf16.msra.mxu0 %v219
    %245 = vmatprep.subr.bf16.mxu0 0
    %246 = vmatpush1.bf16.msra.mxu0 0
    %247 = vmatprep.subr.bf16.mxu0 0
    %248 = vmatpush1.bf16.msra.mxu0 0
    %249 = vmatprep.subr.bf16.mxu0 0
    %250 = vmatpush1.bf16.msra.mxu0 0
    %251 = vmatprep.subr.bf16.mxu0 0
    %252 = vmatpush1.bf16.msra.mxu0 0
    %253 = vmatprep.subr.bf16.mxu0 0
    %254 = vmatpush1.bf16.msra.mxu0 0
    %255 = vmatprep.subr.bf16.mxu0 0
    %256 = vmatpush1.bf16.msra.mxu0 0
    %257 = vmatprep.subr.bf16.mxu0 0
    %258 = vmatpush1.bf16.msra.mxu0 0
    %259 = vmatprep.subr.bf16.mxu0 0
    %260 = vmatpush1.bf16.msra.mxu0 0
    %261 = vmatprep.subr.bf16.mxu0 0
    %262 = vmatpush1.bf16.msra.mxu0 0
    %263 = vmatprep.subr.bf16.mxu0 0
    %264 = vmatpush1.bf16.msra.mxu0 0
    %265 = vmatprep.subr.bf16.mxu0 0
    %266 = vmatpush1.bf16.msra.mxu0 0
    %267 = vmatprep.subr.bf16.mxu0 0
    %268 = vmatpush1.bf16.msra.mxu0 0
    %269 = vmatprep.subr.bf16.mxu0 0
    %270 = vmatpush1.bf16.msra.mxu0 0
    %271 = vmatprep.subr.bf16.mxu0 0
    %272 = vmatpush1.bf16.msra.mxu0 0
    %273 = vmatprep.mubr.bf16.mxu0 0
    %274 = vmatmul.mubr.bf16.gmra.mrb[0].mxu0 %v236
    %v275 = vpop.f32.mrb[0].mxu0
    %v276 = vadd.f32 0.0, %v275
    %v277 = vpop.f32.mrb[0].mxu0
    %v278 = vadd.f32 0.0, %v277
    %v279 = vpop.f32.mrb[0].mxu0
    %v280 = vadd.f32 0.0, %v279
    %v281 = vpop.f32.mrb[0].mxu0
    %v282 = vadd.f32 0.0, %v281
    %283 = vmatprep.mubr.bf16.mxu0 0
    %284 = vmatmul.mubr.bf16.gmra.mrb[0].mxu0 %v239
    %v285 = vpop.f32.mrb[0].mxu0
    %v286 = vadd.f32 0.0, %v285
    %v287 = vpop.f32.mrb[0].mxu0
    %v288 = vadd.f32 0.0, %v287
    %v289 = vpop.f32.mrb[0].mxu0
    %v290 = vadd.f32 0.0, %v289
    %v291 = vpop.f32.mrb[0].mxu0
    %v292 = vadd.f32 0.0, %v291
    %293 = vdwg.mxu0
    %294 = vmatprep.subr.bf16.mxu0 %v217
    %295 = vmatpush1.bf16.msra.mxu0 %v216
    %296 = vmatprep.subr.bf16.mxu0 %v222
    %297 = vmatpush1.bf16.msra.mxu0 %v221
    %298 = vmatprep.subr.bf16.mxu0 0
    %299 = vmatpush1.bf16.msra.mxu0 0
    %300 = vmatprep.subr.bf16.mxu0 0
    %301 = vmatpush1.bf16.msra.mxu0 0
    %302 = vmatprep.subr.bf16.mxu0 0
    %303 = vmatpush1.bf16.msra.mxu0 0
    %304 = vmatprep.subr.bf16.mxu0 0
    %305 = vmatpush1.bf16.msra.mxu0 0
    %306 = vmatprep.subr.bf16.mxu0 0
    %307 = vmatpush1.bf16.msra.mxu0 0
    %308 = vmatprep.subr.bf16.mxu0 0
    %309 = vmatpush1.bf16.msra.mxu0 0
    %310 = vmatprep.subr.bf16.mxu0 0
    %311 = vmatpush1.bf16.msra.mxu0 0
    %312 = vmatprep.subr.bf16.mxu0 0
    %313 = vmatpush1.bf16.msra.mxu0 0
    %314 = vmatprep.subr.bf16.mxu0 0
    %315 = vmatpush1.bf16.msra.mxu0 0
    %316 = vmatprep.subr.bf16.mxu0 0
    %317 = vmatpush1.bf16.msra.mxu0 0
    %318 = vmatprep.subr.bf16.mxu0 0
    %319 = vmatpush1.bf16.msra.mxu0 0
    %320 = vmatprep.subr.bf16.mxu0 0
    %321 = vmatpush1.bf16.msra.mxu0 0
    %322 = vmatprep.subr.bf16.mxu0 0
    %323 = vmatpush1.bf16.msra.mxu0 0
    %324 = vmatprep.subr.bf16.mxu0 0
    %325 = vmatpush1.bf16.msra.mxu0 0
    %326 = vmatprep.mubr.bf16.mxu0 0
    %327 = vmatmul.mubr.bf16.gmra.mrb[0].mxu0 %v236
    %v328 = vpop.f32.mrb[0].mxu0
    %v329 = vadd.f32 0.0, %v328
    %v330 = vpop.f32.mrb[0].mxu0
    %v331 = vadd.f32 0.0, %v330
    %v332 = vpop.f32.mrb[0].mxu0
    %v333 = vadd.f32 0.0, %v332
    %v334 = vpop.f32.mrb[0].mxu0
    %v335 = vadd.f32 0.0, %v334
    %336 = vmatprep.mubr.bf16.mxu0 0
    %337 = vmatmul.mubr.bf16.gmra.mrb[0].mxu0 %v239
    %v338 = vpop.f32.mrb[0].mxu0
    %v339 = vadd.f32 0.0, %v338
    %v340 = vpop.f32.mrb[0].mxu0
    %v341 = vadd.f32 0.0, %v340
    %v342 = vpop.f32.mrb[0].mxu0
    %v343 = vadd.f32 0.0, %v342
    %v344 = vpop.f32.mrb[0].mxu0
    %v345 = vadd.f32 0.0, %v344
    %346 = vdwg.mxu0
    %347 = vmatprep.subr.bf16.mxu0 0
    %348 = vmatpush1.bf16.msra.mxu0 %v218
    %349 = vmatprep.subr.bf16.mxu0 0
    %350 = vmatpush1.bf16.msra.mxu0 %v223
    %351 = vmatprep.subr.bf16.mxu0 0
    %352 = vmatpush1.bf16.msra.mxu0 0
    %353 = vmatprep.subr.bf16.mxu0 0
    %354 = vmatpush1.bf16.msra.mxu0 0
    %355 = vmatprep.subr.bf16.mxu0 0
    %356 = vmatpush1.bf16.msra.mxu0 0
    %357 = vmatprep.subr.bf16.mxu0 0
    %358 = vmatpush1.bf16.msra.mxu0 0
    %359 = vmatprep.subr.bf16.mxu0 0
    %360 = vmatpush1.bf16.msra.mxu0 0
    %361 = vmatprep.subr.bf16.mxu0 0
    %362 = vmatpush1.bf16.msra.mxu0 0
    %363 = vmatprep.subr.bf16.mxu0 0
    %364 = vmatpush1.bf16.msra.mxu0 0
    %365 = vmatprep.subr.bf16.mxu0 0
    %366 = vmatpush1.bf16.msra.mxu0 0
    %367 = vmatprep.subr.bf16.mxu0 0
    %368 = vmatpush1.bf16.msra.mxu0 0
    %369 = vmatprep.subr.bf16.mxu0 0
    %370 = vmatpush1.bf16.msra.mxu0 0
    %371 = vmatprep.subr.bf16.mxu0 0
    %372 = vmatpush1.bf16.msra.mxu0 0
    %373 = vmatprep.subr.bf16.mxu0 0
    %374 = vmatpush1.bf16.msra.mxu0 0
    %375 = vmatprep.subr.bf16.mxu0 0
    %376 = vmatpush1.bf16.msra.mxu0 0
    %377 = vmatprep.subr.bf16.mxu0 0
    %378 = vmatpush1.bf16.msra.mxu0 0
    %379 = vmatprep.mubr.bf16.mxu0 0
    %380 = vmatmul.mubr.bf16.gmra.mrb[0].mxu0 %v236
    %v381 = vpop.f32.mrb[0].mxu0
    %v382 = vadd.f32 0.0, %v381
    %v383 = vpop.f32.mrb[0].mxu0
    %v384 = vpop.f32.mrb[0].mxu0
    %v385 = vadd.f32 0.0, %v384
    %v386 = vpop.f32.mrb[0].mxu0
    %387 = vmatprep.mubr.bf16.mxu0 0
    %388 = vmatmul.mubr.bf16.gmra.mrb[0].mxu0 %v239
    %v389 = vpop.f32.mrb[0].mxu0
    %v390 = vadd.f32 0.0, %v389
    %v391 = vpop.f32.mrb[0].mxu0
    %v392 = vpop.f32.mrb[0].mxu0
    %v393 = vadd.f32 0.0, %v392
    %v394 = vpop.f32.mrb[0].mxu0
    %395 = vdwg.mxu0
    %397 = vset.pattern.permute.xlu0 0
    %398 = vperm.xlu0 %397, %v152
    %v399 = vpop.permute.xlu0 %398
    %402 = vset.pattern.permute.xlu0 0
    %403 = vperm.xlu0 %402, %v153
    %v404 = vpop.permute.xlu0 %403
    %407 = vset.pattern.permute.xlu0 0
    %408 = vperm.xlu0 %407, %v154
    %v409 = vpop.permute.xlu0 %408
    %412 = vset.pattern.permute.xlu0 0
    %413 = vperm.xlu0 %412, %v155
    %v414 = vpop.permute.xlu0 %413
    %v416 = vmul.f32 %v399, %v276
    %v417 = vmul.f32 %v404, %v280
    %v418 = vmul.f32 %v409, %v286
    %v419 = vmul.f32 %v414, %v290
    %420 = vset.pattern.permute.xlu0 1
    %421 = vperm.xlu0 %420, %v152
    %v422 = vpop.permute.xlu0 %421
    %424 = vset.pattern.permute.xlu0 1
    %425 = vperm.xlu0 %424, %v153
    %v426 = vpop.permute.xlu0 %425
    %428 = vset.pattern.permute.xlu0 1
    %429 = vperm.xlu0 %428, %v154
    %v430 = vpop.permute.xlu0 %429
    %432 = vset.pattern.permute.xlu0 1
    %433 = vperm.xlu0 %432, %v155
    %v434 = vpop.permute.xlu0 %433
    %v436 = vmul.f32 %v422, %v276
    %v437 = vmul.f32 %v426, %v280
    %v438 = vmul.f32 %v430, %v286
    %v439 = vmul.f32 %v434, %v290
    %444 = vrot.lane.b32.xlu0 %v436, 64
    %v445 = vpop.permute.xlu0 %444
    %446 = vrot.lane.b32.xlu0 %v437, 64
    %v447 = vpop.permute.xlu0 %446
    %448 = vrot.lane.b32.xlu0 %v438, 64
    %v449 = vpop.permute.xlu0 %448
    %450 = vrot.lane.b32.xlu0 %v439, 64
    %v451 = vpop.permute.xlu0 %450
    %v456 = vadd.f32 %v416, %v445
    %v457 = vadd.f32 %v417, %v447
    %v458 = vadd.f32 %v418, %v449
    %v459 = vadd.f32 %v419, %v451
    %460 = vset.pattern.permute.xlu0 2
    %461 = vperm.xlu0 %460, %v152
    %v462 = vpop.permute.xlu0 %461
    %464 = vset.pattern.permute.xlu0 2
    %465 = vperm.xlu0 %464, %v153
    %v466 = vpop.permute.xlu0 %465
    %468 = vset.pattern.permute.xlu0 2
    %469 = vperm.xlu0 %468, %v154
    %v470 = vpop.permute.xlu0 %469
    %472 = vset.pattern.permute.xlu0 2
    %473 = vperm.xlu0 %472, %v155
    %v474 = vpop.permute.xlu0 %473
    %v476 = vmul.f32 %v462, %v278
    %v477 = vmul.f32 %v466, %v282
    %v478 = vmul.f32 %v470, %v288
    %v479 = vmul.f32 %v474, %v292
    %v480 = vadd.f32 %v456, %v476
    %v481 = vadd.f32 %v457, %v477
    %v482 = vadd.f32 %v458, %v478
    %v483 = vadd.f32 %v459, %v479
    %484 = vset.pattern.permute.xlu0 3
    %485 = vperm.xlu0 %484, %v152
    %v486 = vpop.permute.xlu0 %485
    %488 = vset.pattern.permute.xlu0 3
    %489 = vperm.xlu0 %488, %v153
    %v490 = vpop.permute.xlu0 %489
    %492 = vset.pattern.permute.xlu0 3
    %493 = vperm.xlu0 %492, %v154
    %v494 = vpop.permute.xlu0 %493
    %496 = vset.pattern.permute.xlu0 3
    %497 = vperm.xlu0 %496, %v155
    %v498 = vpop.permute.xlu0 %497
    %v500 = vmul.f32 %v486, %v278
    %v501 = vmul.f32 %v490, %v282
    %v502 = vmul.f32 %v494, %v288
    %v503 = vmul.f32 %v498, %v292
    %508 = vrot.lane.b32.xlu0 %v500, 64
    %v509 = vpop.permute.xlu0 %508
    %510 = vrot.lane.b32.xlu0 %v501, 64
    %v511 = vpop.permute.xlu0 %510
    %512 = vrot.lane.b32.xlu0 %v502, 64
    %v513 = vpop.permute.xlu0 %512
    %514 = vrot.lane.b32.xlu0 %v503, 64
    %v515 = vpop.permute.xlu0 %514
    %v520 = vadd.f32 %v480, %v509
    %v521 = vadd.f32 %v481, %v511
    %v522 = vadd.f32 %v482, %v513
    %v523 = vadd.f32 %v483, %v515
    %524 = vset.pattern.permute.xlu0 4
    %525 = vperm.xlu0 %524, %v152
    %v526 = vpop.permute.xlu0 %525
    %528 = vset.pattern.permute.xlu0 4
    %529 = vperm.xlu0 %528, %v153
    %v530 = vpop.permute.xlu0 %529
    %532 = vset.pattern.permute.xlu0 4
    %533 = vperm.xlu0 %532, %v154
    %v534 = vpop.permute.xlu0 %533
    %536 = vset.pattern.permute.xlu0 4
    %537 = vperm.xlu0 %536, %v155
    %v538 = vpop.permute.xlu0 %537
    %v540 = vmul.f32 %v526, %v329
    %v541 = vmul.f32 %v530, %v333
    %v542 = vmul.f32 %v534, %v339
    %v543 = vmul.f32 %v538, %v343
    %v544 = vadd.f32 %v520, %v540
    %v545 = vadd.f32 %v521, %v541
    %v546 = vadd.f32 %v522, %v542
    %v547 = vadd.f32 %v523, %v543
    %548 = vset.pattern.permute.xlu0 5
    %549 = vperm.xlu0 %548, %v152
    %v550 = vpop.permute.xlu0 %549
    %552 = vset.pattern.permute.xlu0 5
    %553 = vperm.xlu0 %552, %v153
    %v554 = vpop.permute.xlu0 %553
    %556 = vset.pattern.permute.xlu0 5
    %557 = vperm.xlu0 %556, %v154
    %v558 = vpop.permute.xlu0 %557
    %560 = vset.pattern.permute.xlu0 5
    %561 = vperm.xlu0 %560, %v155
    %v562 = vpop.permute.xlu0 %561
    %v564 = vmul.f32 %v550, %v329
    %v565 = vmul.f32 %v554, %v333
    %v566 = vmul.f32 %v558, %v339
    %v567 = vmul.f32 %v562, %v343
    %572 = vrot.lane.b32.xlu0 %v564, 64
    %v573 = vpop.permute.xlu0 %572
    %574 = vrot.lane.b32.xlu0 %v565, 64
    %v575 = vpop.permute.xlu0 %574
    %576 = vrot.lane.b32.xlu0 %v566, 64
    %v577 = vpop.permute.xlu0 %576
    %578 = vrot.lane.b32.xlu0 %v567, 64
    %v579 = vpop.permute.xlu0 %578
    %v584 = vadd.f32 %v544, %v573
    %v585 = vadd.f32 %v545, %v575
    %v586 = vadd.f32 %v546, %v577
    %v587 = vadd.f32 %v547, %v579
    %588 = vset.pattern.permute.xlu0 6
    %589 = vperm.xlu0 %588, %v152
    %v590 = vpop.permute.xlu0 %589
    %592 = vset.pattern.permute.xlu0 6
    %593 = vperm.xlu0 %592, %v153
    %v594 = vpop.permute.xlu0 %593
    %596 = vset.pattern.permute.xlu0 6
    %597 = vperm.xlu0 %596, %v154
    %v598 = vpop.permute.xlu0 %597
    %600 = vset.pattern.permute.xlu0 6
    %601 = vperm.xlu0 %600, %v155
    %v602 = vpop.permute.xlu0 %601
    %v604 = vmul.f32 %v590, %v331
    %v605 = vmul.f32 %v594, %v335
    %v606 = vmul.f32 %v598, %v341
    %v607 = vmul.f32 %v602, %v345
    %v608 = vadd.f32 %v584, %v604
    %v609 = vadd.f32 %v585, %v605
    %v610 = vadd.f32 %v586, %v606
    %v611 = vadd.f32 %v587, %v607
    %612 = vset.pattern.permute.xlu0 7
    %613 = vperm.xlu0 %612, %v152
    %v614 = vpop.permute.xlu0 %613
    %616 = vset.pattern.permute.xlu0 7
    %617 = vperm.xlu0 %616, %v153
    %v618 = vpop.permute.xlu0 %617
    %620 = vset.pattern.permute.xlu0 7
    %621 = vperm.xlu0 %620, %v154
    %v622 = vpop.permute.xlu0 %621
    %624 = vset.pattern.permute.xlu0 7
    %625 = vperm.xlu0 %624, %v155
    %v626 = vpop.permute.xlu0 %625
    %v628 = vmul.f32 %v614, %v331
    %v629 = vmul.f32 %v618, %v335
    %v630 = vmul.f32 %v622, %v341
    %v631 = vmul.f32 %v626, %v345
    %636 = vrot.lane.b32.xlu0 %v628, 64
    %v637 = vpop.permute.xlu0 %636
    %638 = vrot.lane.b32.xlu0 %v629, 64
    %v639 = vpop.permute.xlu0 %638
    %640 = vrot.lane.b32.xlu0 %v630, 64
    %v641 = vpop.permute.xlu0 %640
    %642 = vrot.lane.b32.xlu0 %v631, 64
    %v643 = vpop.permute.xlu0 %642
    %v648 = vadd.f32 %v608, %v637
    %v649 = vadd.f32 %v609, %v639
    %v650 = vadd.f32 %v610, %v641
    %v651 = vadd.f32 %v611, %v643
    %652 = vset.pattern.permute.xlu0 8
    %653 = vperm.xlu0 %652, %v152
    %v654 = vpop.permute.xlu0 %653
    %656 = vset.pattern.permute.xlu0 8
    %657 = vperm.xlu0 %656, %v153
    %v658 = vpop.permute.xlu0 %657
    %660 = vset.pattern.permute.xlu0 8
    %661 = vperm.xlu0 %660, %v154
    %v662 = vpop.permute.xlu0 %661
    %664 = vset.pattern.permute.xlu0 8
    %665 = vperm.xlu0 %664, %v155
    %v666 = vpop.permute.xlu0 %665
    %v668 = vmul.f32 %v654, %v382
    %v669 = vmul.f32 %v658, %v385
    %v670 = vmul.f32 %v662, %v390
    %v671 = vmul.f32 %v666, %v393
    %v672 = vadd.f32 %v648, %v668
    %v673 = vadd.f32 %v649, %v669
    %v674 = vadd.f32 %v650, %v670
    %v675 = vadd.f32 %v651, %v671
    %vm676 = vcmask 523264
    %677 = vst.msk [vmem:[#allocation11] sm:$0xff] %vm676, %v672
    %678 = vst.msk [vmem:[#allocation11 + $0x8] sm:$0xff] %vm676, %v673
    %679 = vst.msk [vmem:[#allocation11 + $0x10] sm:$0xff] %vm676, %v674
    %680 = vst.msk [vmem:[#allocation11 + $0x18] sm:$0xff] %vm676, %v675
    // Predicated region
    $region42: #{dual_gnn_forward.19} parent=1 // pred_check
      _
    $region43: #{dual_gnn_forward.19} parent=1 // pred_check_branch
      %682 = sbr.rel (0) target = $region45
    $region44: #{dual_gnn_forward.19} parent=1 // pred_region
      %s684 = ssub.s32 512, 512
      %685 = vsyncadd [#allocation4], %s684
      %s686 = sshll.u32 [#allocation11], 4
      %s687 = int_to_ptr.vmem [resolvable:$true] %s686
      %692 = dma.vmem_to_hbm [thread:$0]  %s687, 512, %s5, [#allocation4], 128, 128, 8
    $region45: #{dual_gnn_forward.19} parent=1 // pred_fallthru
      _
    // Predicated region
    $region46: #{dual_gnn_forward.19} parent=1 // pred_check
      _
    $region47: #{dual_gnn_forward.19} parent=1 // pred_check_branch
      %694 = sbr.rel (0) target = $region49
    $region48: #{dual_gnn_forward.19} parent=1 // pred_region
      %695 = dma.done [#allocation4], 512
    $region49: #{dual_gnn_forward.19} parent=1 // pred_fallthru
      _
    %696 = vsyncpa [#allocation3], 1
    %697 = vsyncpa [#allocation6], 1
    %698 = vsyncpa [#allocation9], 1
    %699 = vsyncpa [#allocation4], 1

// kernel: dual_gnn_forward.20
$region0: #{dual_gnn_forward.20}
  #allocation0 [shape = 'u32[]', space=smem, size = 0x4, offset = 0x4, fixed_abs, tag = 'smem constant byte address 0x4 - core index']
  #allocation1 [shape = 'u32[144,128]{1,0:T(1,128)}', space=vmem, size = 0x12000, scoped, tag = 'internal scratch']
  %s0 = inlined_call_operand.hbm [shape: f32[16,9], index: 0, kind: input, shape index: {}]
  %s1 = inlined_call_operand.hbm [shape: f32[16,9], index: 1, kind: input, shape index: {}]
  %s2 = inlined_call_operand.hbm [shape: bf16[16,64], index: 2, kind: input, shape index: {}]
  %s3 = inlined_call_operand.hbm [shape: f32[1,9], index: 3, kind: input, shape index: {}]
  %s4 = inlined_call_operand.hbm [shape: bf16[64,1152], index: 4, kind: input, shape index: {}]
  %s5 = inlined_call_operand.hbm [shape: f32[16,128], index: 5, kind: output, shape index: {}]
  %s6 = sld [smem:[#allocation0]]
  $region50: #{dual_gnn_forward.20} parent=0
    _
  %s8 = ssub.s32 1, %s6
  %s9 = scalar_select 0, %s8, %s6
  $region1: #{dual_gnn_forward.20} parent=0
    #allocation2 [shape = 'u8[8192]{0}', space=vmem, size = 0x2000, scoped, tag = 'input window, operand 0, single buffered']
    #allocation3 [shape = 's32[1]{0}', space=sflag, size = 0x4, scoped, tag = 'scoped memory for dual_gnn_forward.20']
    #allocation4 [shape = 's32[1]{0}', space=sflag, size = 0x4, scoped, tag = 'scoped memory for dual_gnn_forward.20']
    #allocation5 [shape = 'u8[8192]{0}', space=vmem, size = 0x2000, scoped, tag = 'input window, operand 1, single buffered']
    #allocation6 [shape = 's32[1]{0}', space=sflag, size = 0x4, scoped, tag = 'scoped memory for dual_gnn_forward.20']
    #allocation7 [shape = 'u8[4096]{0}', space=vmem, size = 0x1000, scoped, tag = 'input window, operand 2, single buffered']
    #allocation8 [shape = 'u8[512]{0}', space=vmem, size = 0x400, scoped, tag = 'input window, operand 3, single buffered']
    #allocation9 [shape = 's32[1]{0}', space=sflag, size = 0x4, scoped, tag = 'scoped memory for dual_gnn_forward.20']
    #allocation10 [shape = 'u8[147456]{0}', space=vmem, size = 0x24000, scoped, tag = 'input window, operand 4, single buffered']
    #allocation11 [shape = 'u8[8192]{0}', space=vmem, size = 0x2000, scoped, tag = 'output window, operand 0, single buffered']
    %10 = vsyncpa [#allocation3], 0
    %11 = vsyncpa [#allocation6], 0
    %12 = vsyncpa [#allocation9], 0
    %13 = vsyncpa [#allocation4], 0
    // Predicated region
    $region2: #{dual_gnn_forward.20} parent=1 // pred_check
      _
    $region3: #{dual_gnn_forward.20} parent=1 // pred_check_branch
      %15 = sbr.rel (0) target = $region5
    $region4: #{dual_gnn_forward.20} parent=1 // pred_region
      %s17 = ssub.s32 256, 256
      %18 = vsyncadd [#allocation3], %s17
      %s19 = sshll.u32 [#allocation2], 4
      %s20 = int_to_ptr.vmem [resolvable:$true] %s19
      %25 = dma.hbm_to_vmem [thread:$0]  %s0, 256, %s20, [#allocation3], 128, 128, 8
    $region5: #{dual_gnn_forward.20} parent=1 // pred_fallthru
      _
    // Predicated region
    $region6: #{dual_gnn_forward.20} parent=1 // pred_check
      _
    $region7: #{dual_gnn_forward.20} parent=1 // pred_check_branch
      %27 = sbr.rel (0) target = $region9
    $region8: #{dual_gnn_forward.20} parent=1 // pred_region
      %s29 = ssub.s32 256, 256
      %30 = vsyncadd [#allocation6], %s29
      %s31 = sshll.u32 [#allocation5], 4
      %s32 = int_to_ptr.vmem [resolvable:$true] %s31
      %37 = dma.hbm_to_vmem [thread:$0]  %s1, 256, %s32, [#allocation6], 128, 128, 8
    $region9: #{dual_gnn_forward.20} parent=1 // pred_fallthru
      _
    // Predicated region
    $region10: #{dual_gnn_forward.20} parent=1 // pred_check
      _
    $region11: #{dual_gnn_forward.20} parent=1 // pred_check_branch
      %39 = sbr.rel (0) target = $region13
    $region12: #{dual_gnn_forward.20} parent=1 // pred_region
      %s41 = ssub.s32 128, 128
      %42 = vsyncadd [#allocation6], %s41
      %s43 = sshll.u32 [#allocation7], 4
      %s44 = int_to_ptr.vmem [resolvable:$true] %s43
      %49 = dma.hbm_to_vmem [thread:$0]  %s2, 128, %s44, [#allocation6], 64, 64, 4
    $region13: #{dual_gnn_forward.20} parent=1 // pred_fallthru
      _
    // Predicated region
    $region14: #{dual_gnn_forward.20} parent=1 // pred_check
      _
    $region15: #{dual_gnn_forward.20} parent=1 // pred_check_branch
      %51 = sbr.rel (0) target = $region17
    $region16: #{dual_gnn_forward.20} parent=1 // pred_region
      %s53 = ssub.s32 16, 16
      %54 = vsyncadd [#allocation9], %s53
      %s56 = sshll.u32 [#allocation8], 4
      %s57 = int_to_ptr.vmem [resolvable:$true] %s56
      %59 = dma.hbm_to_vmem [thread:$0]  %s3, 16, %s57, [#allocation9]
    $region17: #{dual_gnn_forward.20} parent=1 // pred_fallthru
      _
    // Predicated region
    $region18: #{dual_gnn_forward.20} parent=1 // pred_check
      _
    $region19: #{dual_gnn_forward.20} parent=1 // pred_check_branch
      %61 = sbr.rel (0) target = $region21
    $region20: #{dual_gnn_forward.20} parent=1 // pred_region
      %s63 = ssub.s32 4608, 4608
      %64 = vsyncadd [#allocation9], %s63
      %s65 = sshll.u32 [#allocation10], 4
      %s66 = int_to_ptr.vmem [resolvable:$true] %s65
      %71 = dma.hbm_to_vmem [thread:$0]  %s4, 4608, %s66, [#allocation9], 576, 576, 36
    $region21: #{dual_gnn_forward.20} parent=1 // pred_fallthru
      _
    // Predicated region
    $region22: #{dual_gnn_forward.20} parent=1 // pred_check
      _
    $region23: #{dual_gnn_forward.20} parent=1 // pred_check_branch
      %73 = sbr.rel (0) target = $region25
    $region24: #{dual_gnn_forward.20} parent=1 // pred_region
      %74 = dma.done [#allocation3], 256
    $region25: #{dual_gnn_forward.20} parent=1 // pred_fallthru
      _
    // Predicated region
    $region26: #{dual_gnn_forward.20} parent=1 // pred_check
      _
    $region27: #{dual_gnn_forward.20} parent=1 // pred_check_branch
      %76 = sbr.rel (0) target = $region29
    $region28: #{dual_gnn_forward.20} parent=1 // pred_region
      %77 = dma.done [#allocation6], 256
    $region29: #{dual_gnn_forward.20} parent=1 // pred_fallthru
      _
    // Predicated region
    $region30: #{dual_gnn_forward.20} parent=1 // pred_check
      _
    $region31: #{dual_gnn_forward.20} parent=1 // pred_check_branch
      %79 = sbr.rel (0) target = $region33
    $region32: #{dual_gnn_forward.20} parent=1 // pred_region
      %80 = dma.done [#allocation6], 128
    $region33: #{dual_gnn_forward.20} parent=1 // pred_fallthru
      _
    // Predicated region
    $region34: #{dual_gnn_forward.20} parent=1 // pred_check
      _
    $region35: #{dual_gnn_forward.20} parent=1 // pred_check_branch
      %82 = sbr.rel (0) target = $region37
    $region36: #{dual_gnn_forward.20} parent=1 // pred_region
      %83 = dma.done [#allocation9], 16
    $region37: #{dual_gnn_forward.20} parent=1 // pred_fallthru
      _
    // Predicated region
    $region38: #{dual_gnn_forward.20} parent=1 // pred_check
      _
    $region39: #{dual_gnn_forward.20} parent=1 // pred_check_branch
      %85 = sbr.rel (0) target = $region41
    $region40: #{dual_gnn_forward.20} parent=1 // pred_region
      %86 = dma.done [#allocation9], 4608
    $region41: #{dual_gnn_forward.20} parent=1 // pred_fallthru
      _
    %v88 = vld [vmem:[#allocation2] sm:$0xff]
    %v89 = vld [vmem:[#allocation2 + $0x8] sm:$0xff]
    %v90 = vld [vmem:[#allocation5] sm:$0xff]
    %v91 = vld [vmem:[#allocation5 + $0x8] sm:$0xff]
    %v92 = vsub.f32 %v88, %v90
    %v93 = vsub.f32 %v89, %v91
    %v94 = vld [vmem:[#allocation8] sm:$0x1]
    %v96 = vlaneseq
    %v97 = vshrl.u32 %v96, 7
    %v98 = vsub.s32 0, %v97
    %v99 = vrot.slane %v94, %v98
    %v101 = vadd.f32 %v92, %v99
    %v102 = vadd.f32 %v93, %v99
    %vm103 = vcmask 72704
    %v104 = vsel %vm103, %v101, -inf
    %105 = vmax.xlane.f32.xlu0 %v104
    %v106 = vpop.xlane.xlu0 %105
    %v107 = vsel %vm103, %v102, -inf
    %108 = vmax.xlane.f32.xlu0 %v107
    %v109 = vpop.xlane.xlu0 %108
    %v110 = vsub.f32 %v101, %v106
    %v111 = vsub.f32 %v102, %v109
    %v112 = vmul.f32 %v110, 1.442695
    %v113 = vpow.pop %v112
    %v114 = vmul.f32 %v111, 1.442695
    %v115 = vpow.pop %v114
    %v116 = vsel %vm103, %v113, 0.0
    %117 = vadd.xlane.f32.xlu0 %v116
    %v118 = vpop.xlane.xlu0 %117
    %v119 = vsel %vm103, %v115, 0.0
    %120 = vadd.xlane.f32.xlu0 %v119
    %v121 = vpop.xlane.xlu0 %120
    %v122 = vrcp.pop %v118
    %v123 = vrcp.pop %v121
    %v124 = vmul.f32 %v113, %v122
    %v125 = vmul.f32 %v115, %v123
    %v126 = vld [vmem:[#allocation7] sm:$0xf]
    %v127 = vld [vmem:[#allocation7 + $0x4] sm:$0xf]
    %v128 = vld [vmem:[#allocation10] sm:$0xff]
    %v129 = vld [vmem:[#allocation10 + $0x8] sm:$0xff]
    %v130 = vld [vmem:[#allocation10 + $0x10] sm:$0xff]
    %v131 = vld [vmem:[#allocation10 + $0x18] sm:$0xff]
    %v132 = vld [vmem:[#allocation10 + $0x20] sm:$0xf]
    %v133 = vld [vmem:[#allocation10 + $0x24] sm:$0xff]
    %v134 = vld [vmem:[#allocation10 + $0x2c] sm:$0xff]
    %v135 = vld [vmem:[#allocation10 + $0x34] sm:$0xff]
    %v136 = vld [vmem:[#allocation10 + $0x3c] sm:$0xff]
    %v137 = vld [vmem:[#allocation10 + $0x44] sm:$0xf]
    %v138 = vld [vmem:[#allocation10 + $0x48] sm:$0xff]
    %v139 = vld [vmem:[#allocation10 + $0x50] sm:$0xff]
    %v140 = vld [vmem:[#allocation10 + $0x58] sm:$0xff]
    %v141 = vld [vmem:[#allocation10 + $0x60] sm:$0xff]
    %v142 = vld [vmem:[#allocation10 + $0x68] sm:$0xf]
    %v143 = vld [vmem:[#allocation10 + $0x6c] sm:$0xff]
    %v144 = vld [vmem:[#allocation10 + $0x74] sm:$0xff]
    %v145 = vld [vmem:[#allocation10 + $0x7c] sm:$0xff]
    %v146 = vld [vmem:[#allocation10 + $0x84] sm:$0xff]
    %v147 = vld [vmem:[#allocation10 + $0x8c] sm:$0xf]
    %v148 = vld [vmem:[#allocation10 + $0x90] sm:$0xff]
    %v149 = vld [vmem:[#allocation10 + $0x98] sm:$0xff]
    %v150 = vld [vmem:[#allocation10 + $0xa0] sm:$0xff]
    %v151 = vld [vmem:[#allocation10 + $0xa8] sm:$0xff]
    %v152 = vld [vmem:[#allocation10 + $0xb0] sm:$0xf]
    %v153 = vld [vmem:[#allocation10 + $0xb4] sm:$0xff]
    %v154 = vld [vmem:[#allocation10 + $0xbc] sm:$0xff]
    %v155 = vld [vmem:[#allocation10 + $0xc4] sm:$0xff]
    %v156 = vld [vmem:[#allocation10 + $0xcc] sm:$0xff]
    %v157 = vld [vmem:[#allocation10 + $0xd4] sm:$0xf]
    %v158 = vld [vmem:[#allocation10 + $0xd8] sm:$0xff]
    %v159 = vld [vmem:[#allocation10 + $0xe0] sm:$0xff]
    %v160 = vld [vmem:[#allocation10 + $0xe8] sm:$0xff]
    %v161 = vld [vmem:[#allocation10 + $0xf0] sm:$0xff]
    %v162 = vld [vmem:[#allocation10 + $0xf8] sm:$0xf]
    %v163 = vld [vmem:[#allocation10 + $0xfc] sm:$0xff]
    %v164 = vld [vmem:[#allocation10 + $0x104] sm:$0xff]
    %v165 = vld [vmem:[#allocation10 + $0x10c] sm:$0xff]
    %v166 = vld [vmem:[#allocation10 + $0x114] sm:$0xff]
    %v167 = vld [vmem:[#allocation10 + $0x11c] sm:$0xf]
    %v170 = vunpack.c.l.b16 %v126
    %v171 = vunpack.c.l.b16 %v127
    %v172 = vpack.c.b16 %v171, %v170
    %v213 = vunpack.c.l.b16 %v128
    %v214 = vunpack.c.h.b16 %v128
    %v215 = vunpack.c.l.b16 %v129
    %v216 = vunpack.c.h.b16 %v129
    %v217 = vunpack.c.l.b16 %v130
    %v218 = vunpack.c.h.b16 %v130
    %v219 = vunpack.c.l.b16 %v131
    %v220 = vunpack.c.h.b16 %v131
    %v221 = vunpack.c.l.b16 %v132
    %v222 = vunpack.c.l.b16 %v133
    %v223 = vunpack.c.h.b16 %v133
    %v224 = vunpack.c.l.b16 %v134
    %v225 = vunpack.c.h.b16 %v134
    %v226 = vunpack.c.l.b16 %v135
    %v227 = vunpack.c.h.b16 %v135
    %v228 = vunpack.c.l.b16 %v136
    %v229 = vunpack.c.h.b16 %v136
    %v230 = vunpack.c.l.b16 %v137
    %v231 = vunpack.c.l.b16 %v138
    %v232 = vunpack.c.h.b16 %v138
    %v233 = vunpack.c.l.b16 %v139
    %v234 = vunpack.c.h.b16 %v139
    %v235 = vunpack.c.l.b16 %v140
    %v236 = vunpack.c.h.b16 %v140
    %v237 = vunpack.c.l.b16 %v141
    %v238 = vunpack.c.h.b16 %v141
    %v239 = vunpack.c.l.b16 %v142
    %v240 = vunpack.c.l.b16 %v143
    %v241 = vunpack.c.h.b16 %v143
    %v242 = vunpack.c.l.b16 %v144
    %v243 = vunpack.c.h.b16 %v144
    %v244 = vunpack.c.l.b16 %v145
    %v245 = vunpack.c.h.b16 %v145
    %v246 = vunpack.c.l.b16 %v146
    %v247 = vunpack.c.h.b16 %v146
    %v248 = vunpack.c.l.b16 %v147
    %v249 = vunpack.c.l.b16 %v148
    %v250 = vunpack.c.h.b16 %v148
    %v251 = vunpack.c.l.b16 %v149
    %v252 = vunpack.c.h.b16 %v149
    %v253 = vunpack.c.l.b16 %v150
    %v254 = vunpack.c.h.b16 %v150
    %v255 = vunpack.c.l.b16 %v151
    %v256 = vunpack.c.h.b16 %v151
    %v257 = vunpack.c.l.b16 %v152
    %v258 = vunpack.c.l.b16 %v153
    %v259 = vunpack.c.h.b16 %v153
    %v260 = vunpack.c.l.b16 %v154
    %v261 = vunpack.c.h.b16 %v154
    %v262 = vunpack.c.l.b16 %v155
    %v263 = vunpack.c.h.b16 %v155
    %v264 = vunpack.c.l.b16 %v156
    %v265 = vunpack.c.h.b16 %v156
    %v266 = vunpack.c.l.b16 %v157
    %v267 = vunpack.c.l.b16 %v158
    %v268 = vunpack.c.h.b16 %v158
    %v269 = vunpack.c.l.b16 %v159
    %v270 = vunpack.c.h.b16 %v159
    %v271 = vunpack.c.l.b16 %v160
    %v272 = vunpack.c.h.b16 %v160
    %v273 = vunpack.c.l.b16 %v161
    %v274 = vunpack.c.h.b16 %v161
    %v275 = vunpack.c.l.b16 %v162
    %v276 = vunpack.c.l.b16 %v163
    %v277 = vunpack.c.h.b16 %v163
    %v278 = vunpack.c.l.b16 %v164
    %v279 = vunpack.c.h.b16 %v164
    %v280 = vunpack.c.l.b16 %v165
    %v281 = vunpack.c.h.b16 %v165
    %v282 = vunpack.c.l.b16 %v166
    %v283 = vunpack.c.h.b16 %v166
    %v284 = vunpack.c.l.b16 %v167
    %v285 = vpack.c.b16 %v222, %v213
    %v286 = vpack.c.b16 %v223, %v214
    %v287 = vpack.c.b16 %v224, %v215
    %v288 = vpack.c.b16 %v225, %v216
    %v289 = vpack.c.b16 %v226, %v217
    %v290 = vpack.c.b16 %v227, %v218
    %v291 = vpack.c.b16 %v228, %v219
    %v292 = vpack.c.b16 %v229, %v220
    %v293 = vpack.c.b16 %v230, %v221
    %v294 = vpack.c.b16 %v240, %v231
    %v295 = vpack.c.b16 %v241, %v232
    %v296 = vpack.c.b16 %v242, %v233
    %v297 = vpack.c.b16 %v243, %v234
    %v298 = vpack.c.b16 %v244, %v235
    %v299 = vpack.c.b16 %v245, %v236
    %v300 = vpack.c.b16 %v246, %v237
    %v301 = vpack.c.b16 %v247, %v238
    %v302 = vpack.c.b16 %v248, %v239
    %v303 = vpack.c.b16 %v258, %v249
    %v304 = vpack.c.b16 %v259, %v250
    %v305 = vpack.c.b16 %v260, %v251
    %v306 = vpack.c.b16 %v261, %v252
    %v307 = vpack.c.b16 %v262, %v253
    %v308 = vpack.c.b16 %v263, %v254
    %v309 = vpack.c.b16 %v264, %v255
    %v310 = vpack.c.b16 %v265, %v256
    %v311 = vpack.c.b16 %v266, %v257
    %v312 = vpack.c.b16 %v276, %v267
    %v313 = vpack.c.b16 %v277, %v268
    %v314 = vpack.c.b16 %v278, %v269
    %v315 = vpack.c.b16 %v279, %v270
    %v316 = vpack.c.b16 %v280, %v271
    %v317 = vpack.c.b16 %v281, %v272
    %v318 = vpack.c.b16 %v282, %v273
    %v319 = vpack.c.b16 %v283, %v274
    %v320 = vpack.c.b16 %v284, %v275
    %vm357 = vcmask 523264
    %v359 = vsel %vm357, %v172, 0
    %361 = vmatprep.subr.bf16.mxu0 %v286
    %362 = vmatpush1.bf16.msra.mxu0 %v285
    %363 = vmatprep.subr.bf16.mxu0 %v295
    %364 = vmatpush1.bf16.msra.mxu0 %v294
    %365 = vmatprep.subr.bf16.mxu0 %v304
    %366 = vmatpush1.bf16.msra.mxu0 %v303
    %367 = vmatprep.subr.bf16.mxu0 %v313
    %368 = vmatpush1.bf16.msra.mxu0 %v312
    %369 = vmatprep.subr.bf16.mxu0 0
    %370 = vmatpush1.bf16.msra.mxu0 0
    %371 = vmatprep.subr.bf16.mxu0 0
    %372 = vmatpush1.bf16.msra.mxu0 0
    %373 = vmatprep.subr.bf16.mxu0 0
    %374 = vmatpush1.bf16.msra.mxu0 0
    %375 = vmatprep.subr.bf16.mxu0 0
    %376 = vmatpush1.bf16.msra.mxu0 0
    %377 = vmatprep.subr.bf16.mxu0 0
    %378 = vmatpush1.bf16.msra.mxu0 0
    %379 = vmatprep.subr.bf16.mxu0 0
    %380 = vmatpush1.bf16.msra.mxu0 0
    %381 = vmatprep.subr.bf16.mxu0 0
    %382 = vmatpush1.bf16.msra.mxu0 0
    %383 = vmatprep.subr.bf16.mxu0 0
    %384 = vmatpush1.bf16.msra.mxu0 0
    %385 = vmatprep.subr.bf16.mxu0 0
    %386 = vmatpush1.bf16.msra.mxu0 0
    %387 = vmatprep.subr.bf16.mxu0 0
    %388 = vmatpush1.bf16.msra.mxu0 0
    %389 = vmatprep.subr.bf16.mxu0 0
    %390 = vmatpush1.bf16.msra.mxu0 0
    %391 = vmatprep.subr.bf16.mxu0 0
    %392 = vmatpush1.bf16.msra.mxu0 0
    %393 = vmatprep.mubr.bf16.mxu0 0
    %394 = vmatmul.mubr.bf16.gmra.mrb[0].mxu0 %v359
    %v395 = vpop.f32.mrb[0].mxu0
    %v396 = vadd.f32 0.0, %v395
    %v397 = vpop.f32.mrb[0].mxu0
    %v398 = vadd.f32 0.0, %v397
    %v399 = vpop.f32.mrb[0].mxu0
    %v400 = vadd.f32 0.0, %v399
    %v401 = vpop.f32.mrb[0].mxu0
    %v402 = vadd.f32 0.0, %v401
    %403 = vdwg.mxu0
    %404 = vmatprep.subr.bf16.mxu0 %v288
    %405 = vmatpush1.bf16.msra.mxu0 %v287
    %406 = vmatprep.subr.bf16.mxu0 %v297
    %407 = vmatpush1.bf16.msra.mxu0 %v296
    %408 = vmatprep.subr.bf16.mxu0 %v306
    %409 = vmatpush1.bf16.msra.mxu0 %v305
    %410 = vmatprep.subr.bf16.mxu0 %v315
    %411 = vmatpush1.bf16.msra.mxu0 %v314
    %412 = vmatprep.subr.bf16.mxu0 0
    %413 = vmatpush1.bf16.msra.mxu0 0
    %414 = vmatprep.subr.bf16.mxu0 0
    %415 = vmatpush1.bf16.msra.mxu0 0
    %416 = vmatprep.subr.bf16.mxu0 0
    %417 = vmatpush1.bf16.msra.mxu0 0
    %418 = vmatprep.subr.bf16.mxu0 0
    %419 = vmatpush1.bf16.msra.mxu0 0
    %420 = vmatprep.subr.bf16.mxu0 0
    %421 = vmatpush1.bf16.msra.mxu0 0
    %422 = vmatprep.subr.bf16.mxu0 0
    %423 = vmatpush1.bf16.msra.mxu0 0
    %424 = vmatprep.subr.bf16.mxu0 0
    %425 = vmatpush1.bf16.msra.mxu0 0
    %426 = vmatprep.subr.bf16.mxu0 0
    %427 = vmatpush1.bf16.msra.mxu0 0
    %428 = vmatprep.subr.bf16.mxu0 0
    %429 = vmatpush1.bf16.msra.mxu0 0
    %430 = vmatprep.subr.bf16.mxu0 0
    %431 = vmatpush1.bf16.msra.mxu0 0
    %432 = vmatprep.subr.bf16.mxu0 0
    %433 = vmatpush1.bf16.msra.mxu0 0
    %434 = vmatprep.subr.bf16.mxu0 0
    %435 = vmatpush1.bf16.msra.mxu0 0
    %436 = vmatprep.mubr.bf16.mxu0 0
    %437 = vmatmul.mubr.bf16.gmra.mrb[0].mxu0 %v359
    %v438 = vpop.f32.mrb[0].mxu0
    %v439 = vadd.f32 0.0, %v438
    %v440 = vpop.f32.mrb[0].mxu0
    %v441 = vadd.f32 0.0, %v440
    %v442 = vpop.f32.mrb[0].mxu0
    %v443 = vadd.f32 0.0, %v442
    %v444 = vpop.f32.mrb[0].mxu0
    %v445 = vadd.f32 0.0, %v444
    %446 = vdwg.mxu0
    %447 = vmatprep.subr.bf16.mxu0 %v290
    %448 = vmatpush1.bf16.msra.mxu0 %v289
    %449 = vmatprep.subr.bf16.mxu0 %v299
    %450 = vmatpush1.bf16.msra.mxu0 %v298
    %451 = vmatprep.subr.bf16.mxu0 %v308
    %452 = vmatpush1.bf16.msra.mxu0 %v307
    %453 = vmatprep.subr.bf16.mxu0 %v317
    %454 = vmatpush1.bf16.msra.mxu0 %v316
    %455 = vmatprep.subr.bf16.mxu0 0
    %456 = vmatpush1.bf16.msra.mxu0 0
    %457 = vmatprep.subr.bf16.mxu0 0
    %458 = vmatpush1.bf16.msra.mxu0 0
    %459 = vmatprep.subr.bf16.mxu0 0
    %460 = vmatpush1.bf16.msra.mxu0 0
    %461 = vmatprep.subr.bf16.mxu0 0
    %462 = vmatpush1.bf16.msra.mxu0 0
    %463 = vmatprep.subr.bf16.mxu0 0
    %464 = vmatpush1.bf16.msra.mxu0 0
    %465 = vmatprep.subr.bf16.mxu0 0
    %466 = vmatpush1.bf16.msra.mxu0 0
    %467 = vmatprep.subr.bf16.mxu0 0
    %468 = vmatpush1.bf16.msra.mxu0 0
    %469 = vmatprep.subr.bf16.mxu0 0
    %470 = vmatpush1.bf16.msra.mxu0 0
    %471 = vmatprep.subr.bf16.mxu0 0
    %472 = vmatpush1.bf16.msra.mxu0 0
    %473 = vmatprep.subr.bf16.mxu0 0
    %474 = vmatpush1.bf16.msra.mxu0 0
    %475 = vmatprep.subr.bf16.mxu0 0
    %476 = vmatpush1.bf16.msra.mxu0 0
    %477 = vmatprep.subr.bf16.mxu0 0
    %478 = vmatpush1.bf16.msra.mxu0 0
    %479 = vmatprep.mubr.bf16.mxu0 0
    %480 = vmatmul.mubr.bf16.gmra.mrb[0].mxu0 %v359
    %v481 = vpop.f32.mrb[0].mxu0
    %v482 = vadd.f32 0.0, %v481
    %v483 = vpop.f32.mrb[0].mxu0
    %v484 = vadd.f32 0.0, %v483
    %v485 = vpop.f32.mrb[0].mxu0
    %v486 = vadd.f32 0.0, %v485
    %v487 = vpop.f32.mrb[0].mxu0
    %v488 = vadd.f32 0.0, %v487
    %489 = vdwg.mxu0
    %490 = vmatprep.subr.bf16.mxu0 %v292
    %491 = vmatpush1.bf16.msra.mxu0 %v291
    %492 = vmatprep.subr.bf16.mxu0 %v301
    %493 = vmatpush1.bf16.msra.mxu0 %v300
    %494 = vmatprep.subr.bf16.mxu0 %v310
    %495 = vmatpush1.bf16.msra.mxu0 %v309
    %496 = vmatprep.subr.bf16.mxu0 %v319
    %497 = vmatpush1.bf16.msra.mxu0 %v318
    %498 = vmatprep.subr.bf16.mxu0 0
    %499 = vmatpush1.bf16.msra.mxu0 0
    %500 = vmatprep.subr.bf16.mxu0 0
    %501 = vmatpush1.bf16.msra.mxu0 0
    %502 = vmatprep.subr.bf16.mxu0 0
    %503 = vmatpush1.bf16.msra.mxu0 0
    %504 = vmatprep.subr.bf16.mxu0 0
    %505 = vmatpush1.bf16.msra.mxu0 0
    %506 = vmatprep.subr.bf16.mxu0 0
    %507 = vmatpush1.bf16.msra.mxu0 0
    %508 = vmatprep.subr.bf16.mxu0 0
    %509 = vmatpush1.bf16.msra.mxu0 0
    %510 = vmatprep.subr.bf16.mxu0 0
    %511 = vmatpush1.bf16.msra.mxu0 0
    %512 = vmatprep.subr.bf16.mxu0 0
    %513 = vmatpush1.bf16.msra.mxu0 0
    %514 = vmatprep.subr.bf16.mxu0 0
    %515 = vmatpush1.bf16.msra.mxu0 0
    %516 = vmatprep.subr.bf16.mxu0 0
    %517 = vmatpush1.bf16.msra.mxu0 0
    %518 = vmatprep.subr.bf16.mxu0 0
    %519 = vmatpush1.bf16.msra.mxu0 0
    %520 = vmatprep.subr.bf16.mxu0 0
    %521 = vmatpush1.bf16.msra.mxu0 0
    %522 = vmatprep.mubr.bf16.mxu0 0
    %523 = vmatmul.mubr.bf16.gmra.mrb[0].mxu0 %v359
    %v524 = vpop.f32.mrb[0].mxu0
    %v525 = vadd.f32 0.0, %v524
    %v526 = vpop.f32.mrb[0].mxu0
    %v527 = vadd.f32 0.0, %v526
    %v528 = vpop.f32.mrb[0].mxu0
    %v529 = vadd.f32 0.0, %v528
    %v530 = vpop.f32.mrb[0].mxu0
    %v531 = vadd.f32 0.0, %v530
    %532 = vdwg.mxu0
    %533 = vmatprep.subr.bf16.mxu0 0
    %534 = vmatpush1.bf16.msra.mxu0 %v293
    %535 = vmatprep.subr.bf16.mxu0 0
    %536 = vmatpush1.bf16.msra.mxu0 %v302
    %537 = vmatprep.subr.bf16.mxu0 0
    %538 = vmatpush1.bf16.msra.mxu0 %v311
    %539 = vmatprep.subr.bf16.mxu0 0
    %540 = vmatpush1.bf16.msra.mxu0 %v320
    %541 = vmatprep.subr.bf16.mxu0 0
    %542 = vmatpush1.bf16.msra.mxu0 0
    %543 = vmatprep.subr.bf16.mxu0 0
    %544 = vmatpush1.bf16.msra.mxu0 0
    %545 = vmatprep.subr.bf16.mxu0 0
    %546 = vmatpush1.bf16.msra.mxu0 0
    %547 = vmatprep.subr.bf16.mxu0 0
    %548 = vmatpush1.bf16.msra.mxu0 0
    %549 = vmatprep.subr.bf16.mxu0 0
    %550 = vmatpush1.bf16.msra.mxu0 0
    %551 = vmatprep.subr.bf16.mxu0 0
    %552 = vmatpush1.bf16.msra.mxu0 0
    %553 = vmatprep.subr.bf16.mxu0 0
    %554 = vmatpush1.bf16.msra.mxu0 0
    %555 = vmatprep.subr.bf16.mxu0 0
    %556 = vmatpush1.bf16.msra.mxu0 0
    %557 = vmatprep.subr.bf16.mxu0 0
    %558 = vmatpush1.bf16.msra.mxu0 0
    %559 = vmatprep.subr.bf16.mxu0 0
    %560 = vmatpush1.bf16.msra.mxu0 0
    %561 = vmatprep.subr.bf16.mxu0 0
    %562 = vmatpush1.bf16.msra.mxu0 0
    %563 = vmatprep.subr.bf16.mxu0 0
    %564 = vmatpush1.bf16.msra.mxu0 0
    %565 = vmatprep.mubr.bf16.mxu0 0
    %566 = vmatmul.mubr.bf16.gmra.mrb[0].mxu0 %v359
    %v567 = vpop.f32.mrb[0].mxu0
    %v568 = vadd.f32 0.0, %v567
    %v569 = vpop.f32.mrb[0].mxu0
    %v570 = vpop.f32.mrb[0].mxu0
    %v571 = vadd.f32 0.0, %v570
    %v572 = vpop.f32.mrb[0].mxu0
    %573 = vdwg.mxu0
    %575 = vset.pattern.permute.xlu0 0
    %576 = vperm.xlu0 %575, %v124
    %v577 = vpop.permute.xlu0 %576
    %580 = vset.pattern.permute.xlu0 0
    %581 = vperm.xlu0 %580, %v125
    %v582 = vpop.permute.xlu0 %581
    %v584 = vmul.f32 %v577, %v396
    %v585 = vmul.f32 %v582, %v400
    %586 = vset.pattern.permute.xlu0 1
    %587 = vperm.xlu0 %586, %v124
    %v588 = vpop.permute.xlu0 %587
    %590 = vset.pattern.permute.xlu0 1
    %591 = vperm.xlu0 %590, %v125
    %v592 = vpop.permute.xlu0 %591
    %v594 = vmul.f32 %v588, %v398
    %v595 = vmul.f32 %v592, %v402
    %v596 = vadd.f32 %v584, %v594
    %v597 = vadd.f32 %v585, %v595
    %598 = vset.pattern.permute.xlu0 2
    %599 = vperm.xlu0 %598, %v124
    %v600 = vpop.permute.xlu0 %599
    %602 = vset.pattern.permute.xlu0 2
    %603 = vperm.xlu0 %602, %v125
    %v604 = vpop.permute.xlu0 %603
    %v606 = vmul.f32 %v600, %v439
    %v607 = vmul.f32 %v604, %v443
    %v608 = vadd.f32 %v596, %v606
    %v609 = vadd.f32 %v597, %v607
    %610 = vset.pattern.permute.xlu0 3
    %611 = vperm.xlu0 %610, %v124
    %v612 = vpop.permute.xlu0 %611
    %614 = vset.pattern.permute.xlu0 3
    %615 = vperm.xlu0 %614, %v125
    %v616 = vpop.permute.xlu0 %615
    %v618 = vmul.f32 %v612, %v441
    %v619 = vmul.f32 %v616, %v445
    %v620 = vadd.f32 %v608, %v618
    %v621 = vadd.f32 %v609, %v619
    %622 = vset.pattern.permute.xlu0 4
    %623 = vperm.xlu0 %622, %v124
    %v624 = vpop.permute.xlu0 %623
    %626 = vset.pattern.permute.xlu0 4
    %627 = vperm.xlu0 %626, %v125
    %v628 = vpop.permute.xlu0 %627
    %v630 = vmul.f32 %v624, %v482
    %v631 = vmul.f32 %v628, %v486
    %v632 = vadd.f32 %v620, %v630
    %v633 = vadd.f32 %v621, %v631
    %634 = vset.pattern.permute.xlu0 5
    %635 = vperm.xlu0 %634, %v124
    %v636 = vpop.permute.xlu0 %635
    %638 = vset.pattern.permute.xlu0 5
    %639 = vperm.xlu0 %638, %v125
    %v640 = vpop.permute.xlu0 %639
    %v642 = vmul.f32 %v636, %v484
    %v643 = vmul.f32 %v640, %v488
    %v644 = vadd.f32 %v632, %v642
    %v645 = vadd.f32 %v633, %v643
    %646 = vset.pattern.permute.xlu0 6
    %647 = vperm.xlu0 %646, %v124
    %v648 = vpop.permute.xlu0 %647
    %650 = vset.pattern.permute.xlu0 6
    %651 = vperm.xlu0 %650, %v125
    %v652 = vpop.permute.xlu0 %651
    %v654 = vmul.f32 %v648, %v525
    %v655 = vmul.f32 %v652, %v529
    %v656 = vadd.f32 %v644, %v654
    %v657 = vadd.f32 %v645, %v655
    %658 = vset.pattern.permute.xlu0 7
    %659 = vperm.xlu0 %658, %v124
    %v660 = vpop.permute.xlu0 %659
    %662 = vset.pattern.permute.xlu0 7
    %663 = vperm.xlu0 %662, %v125
    %v664 = vpop.permute.xlu0 %663
    %v666 = vmul.f32 %v660, %v527
    %v667 = vmul.f32 %v664, %v531
    %v668 = vadd.f32 %v656, %v666
    %v669 = vadd.f32 %v657, %v667
    %670 = vset.pattern.permute.xlu0 8
    %671 = vperm.xlu0 %670, %v124
    %v672 = vpop.permute.xlu0 %671
    %674 = vset.pattern.permute.xlu0 8
    %675 = vperm.xlu0 %674, %v125
    %v676 = vpop.permute.xlu0 %675
    %v678 = vmul.f32 %v672, %v568
    %v679 = vmul.f32 %v676, %v571
    %v680 = vadd.f32 %v668, %v678
    %v681 = vadd.f32 %v669, %v679
    %682 = vst [vmem:[#allocation11] sm:$0xff] %v680
    %683 = vst [vmem:[#allocation11 + $0x8] sm:$0xff] %v681
    // Predicated region
    $region42: #{dual_gnn_forward.20} parent=1 // pred_check
      _
    $region43: #{dual_gnn_forward.20} parent=1 // pred_check_branch
      %685 = sbr.rel (0) target = $region45
    $region44: #{dual_gnn_forward.20} parent=1 // pred_region
      %s687 = ssub.s32 256, 256
      %688 = vsyncadd [#allocation4], %s687
      %s689 = sshll.u32 [#allocation11], 4
      %s690 = int_to_ptr.vmem [resolvable:$true] %s689
      %695 = dma.vmem_to_hbm [thread:$0]  %s690, 256, %s5, [#allocation4], 128, 128, 8
    $region45: #{dual_gnn_forward.20} parent=1 // pred_fallthru
      _
    // Predicated region
    $region46: #{dual_gnn_forward.20} parent=1 // pred_check
      _
    $region47: #{dual_gnn_forward.20} parent=1 // pred_check_branch
      %697 = sbr.rel (0) target = $region49
    $region48: #{dual_gnn_forward.20} parent=1 // pred_region
      %698 = dma.done [#allocation4], 256
    $region49: #{dual_gnn_forward.20} parent=1 // pred_fallthru
      _
    %699 = vsyncpa [#allocation3], 1
    %700 = vsyncpa [#allocation6], 1
    %701 = vsyncpa [#allocation9], 1
    %702 = vsyncpa [#allocation4], 1

// kernel: dual_gnn_forward.22
$region0: #{dual_gnn_forward.22}
  #allocation0 [shape = 'u32[]', space=smem, size = 0x4, offset = 0x4, fixed_abs, tag = 'smem constant byte address 0x4 - core index']
  #allocation1 [shape = 'u32[144,128]{1,0:T(1,128)}', space=vmem, size = 0x12000, scoped, tag = 'internal scratch']
  %s0 = inlined_call_operand.hbm [shape: f32[32,9], index: 0, kind: input, shape index: {}]
  %s1 = inlined_call_operand.hbm [shape: f32[32,9], index: 1, kind: input, shape index: {}]
  %s2 = inlined_call_operand.hbm [shape: bf16[32,128], index: 2, kind: input, shape index: {}]
  %s3 = inlined_call_operand.hbm [shape: f32[1,9], index: 3, kind: input, shape index: {}]
  %s4 = inlined_call_operand.hbm [shape: bf16[128,576], index: 4, kind: input, shape index: {}]
  %s5 = inlined_call_operand.hbm [shape: f32[32,64], index: 5, kind: output, shape index: {}]
  %s6 = sld [smem:[#allocation0]]
  $region50: #{dual_gnn_forward.22} parent=0
    _
  %s8 = ssub.s32 1, %s6
  %s9 = scalar_select 0, %s8, %s6
  $region1: #{dual_gnn_forward.22} parent=0
    #allocation2 [shape = 'u8[16384]{0}', space=vmem, size = 0x4000, scoped, tag = 'input window, operand 0, single buffered']
    #allocation3 [shape = 's32[1]{0}', space=sflag, size = 0x4, scoped, tag = 'scoped memory for dual_gnn_forward.22']
    #allocation4 [shape = 's32[1]{0}', space=sflag, size = 0x4, scoped, tag = 'scoped memory for dual_gnn_forward.22']
    #allocation5 [shape = 'u8[16384]{0}', space=vmem, size = 0x4000, scoped, tag = 'input window, operand 1, single buffered']
    #allocation6 [shape = 's32[1]{0}', space=sflag, size = 0x4, scoped, tag = 'scoped memory for dual_gnn_forward.22']
    #allocation7 [shape = 'u8[8192]{0}', space=vmem, size = 0x2000, scoped, tag = 'input window, operand 2, single buffered']
    #allocation8 [shape = 'u8[512]{0}', space=vmem, size = 0x400, scoped, tag = 'input window, operand 3, single buffered']
    #allocation9 [shape = 's32[1]{0}', space=sflag, size = 0x4, scoped, tag = 'scoped memory for dual_gnn_forward.22']
    #allocation10 [shape = 'u8[163840]{0}', space=vmem, size = 0x28000, scoped, tag = 'input window, operand 4, single buffered']
    #allocation11 [shape = 'u8[16384]{0}', space=vmem, size = 0x4000, scoped, tag = 'output window, operand 0, single buffered']
    %10 = vsyncpa [#allocation3], 0
    %11 = vsyncpa [#allocation6], 0
    %12 = vsyncpa [#allocation9], 0
    %13 = vsyncpa [#allocation4], 0
    // Predicated region
    $region2: #{dual_gnn_forward.22} parent=1 // pred_check
      _
    $region3: #{dual_gnn_forward.22} parent=1 // pred_check_branch
      %15 = sbr.rel (0) target = $region5
    $region4: #{dual_gnn_forward.22} parent=1 // pred_region
      %s17 = ssub.s32 512, 512
      %18 = vsyncadd [#allocation3], %s17
      %s19 = sshll.u32 [#allocation2], 4
      %s20 = int_to_ptr.vmem [resolvable:$true] %s19
      %25 = dma.hbm_to_vmem [thread:$0]  %s0, 512, %s20, [#allocation3], 128, 128, 8
    $region5: #{dual_gnn_forward.22} parent=1 // pred_fallthru
      _
    // Predicated region
    $region6: #{dual_gnn_forward.22} parent=1 // pred_check
      _
    $region7: #{dual_gnn_forward.22} parent=1 // pred_check_branch
      %27 = sbr.rel (0) target = $region9
    $region8: #{dual_gnn_forward.22} parent=1 // pred_region
      %s29 = ssub.s32 512, 512
      %30 = vsyncadd [#allocation6], %s29
      %s31 = sshll.u32 [#allocation5], 4
      %s32 = int_to_ptr.vmem [resolvable:$true] %s31
      %37 = dma.hbm_to_vmem [thread:$0]  %s1, 512, %s32, [#allocation6], 128, 128, 8
    $region9: #{dual_gnn_forward.22} parent=1 // pred_fallthru
      _
    // Predicated region
    $region10: #{dual_gnn_forward.22} parent=1 // pred_check
      _
    $region11: #{dual_gnn_forward.22} parent=1 // pred_check_branch
      %39 = sbr.rel (0) target = $region13
    $region12: #{dual_gnn_forward.22} parent=1 // pred_region
      %s41 = ssub.s32 256, 256
      %42 = vsyncadd [#allocation6], %s41
      %s43 = sshll.u32 [#allocation7], 4
      %s44 = int_to_ptr.vmem [resolvable:$true] %s43
      %49 = dma.hbm_to_vmem [thread:$0]  %s2, 256, %s44, [#allocation6], 64, 64, 4
    $region13: #{dual_gnn_forward.22} parent=1 // pred_fallthru
      _
    // Predicated region
    $region14: #{dual_gnn_forward.22} parent=1 // pred_check
      _
    $region15: #{dual_gnn_forward.22} parent=1 // pred_check_branch
      %51 = sbr.rel (0) target = $region17
    $region16: #{dual_gnn_forward.22} parent=1 // pred_region
      %s53 = ssub.s32 16, 16
      %54 = vsyncadd [#allocation9], %s53
      %s56 = sshll.u32 [#allocation8], 4
      %s57 = int_to_ptr.vmem [resolvable:$true] %s56
      %59 = dma.hbm_to_vmem [thread:$0]  %s3, 16, %s57, [#allocation9]
    $region17: #{dual_gnn_forward.22} parent=1 // pred_fallthru
      _
    // Predicated region
    $region18: #{dual_gnn_forward.22} parent=1 // pred_check
      _
    $region19: #{dual_gnn_forward.22} parent=1 // pred_check_branch
      %61 = sbr.rel (0) target = $region21
    $region20: #{dual_gnn_forward.22} parent=1 // pred_region
      %s63 = ssub.s32 5120, 5120
      %64 = vsyncadd [#allocation9], %s63
      %s65 = sshll.u32 [#allocation10], 4
      %s66 = int_to_ptr.vmem [resolvable:$true] %s65
      %71 = dma.hbm_to_vmem [thread:$0]  %s4, 5120, %s66, [#allocation9], 320, 320, 20
    $region21: #{dual_gnn_forward.22} parent=1 // pred_fallthru
      _
    // Predicated region
    $region22: #{dual_gnn_forward.22} parent=1 // pred_check
      _
    $region23: #{dual_gnn_forward.22} parent=1 // pred_check_branch
      %73 = sbr.rel (0) target = $region25
    $region24: #{dual_gnn_forward.22} parent=1 // pred_region
      %74 = dma.done [#allocation3], 512
    $region25: #{dual_gnn_forward.22} parent=1 // pred_fallthru
      _
    // Predicated region
    $region26: #{dual_gnn_forward.22} parent=1 // pred_check
      _
    $region27: #{dual_gnn_forward.22} parent=1 // pred_check_branch
      %76 = sbr.rel (0) target = $region29
    $region28: #{dual_gnn_forward.22} parent=1 // pred_region
      %77 = dma.done [#allocation6], 512
    $region29: #{dual_gnn_forward.22} parent=1 // pred_fallthru
      _
    // Predicated region
    $region30: #{dual_gnn_forward.22} parent=1 // pred_check
      _
    $region31: #{dual_gnn_forward.22} parent=1 // pred_check_branch
      %79 = sbr.rel (0) target = $region33
    $region32: #{dual_gnn_forward.22} parent=1 // pred_region
      %80 = dma.done [#allocation6], 256
    $region33: #{dual_gnn_forward.22} parent=1 // pred_fallthru
      _
    // Predicated region
    $region34: #{dual_gnn_forward.22} parent=1 // pred_check
      _
    $region35: #{dual_gnn_forward.22} parent=1 // pred_check_branch
      %82 = sbr.rel (0) target = $region37
    $region36: #{dual_gnn_forward.22} parent=1 // pred_region
      %83 = dma.done [#allocation9], 16
    $region37: #{dual_gnn_forward.22} parent=1 // pred_fallthru
      _
    // Predicated region
    $region38: #{dual_gnn_forward.22} parent=1 // pred_check
      _
    $region39: #{dual_gnn_forward.22} parent=1 // pred_check_branch
      %85 = sbr.rel (0) target = $region41
    $region40: #{dual_gnn_forward.22} parent=1 // pred_region
      %86 = dma.done [#allocation9], 5120
    $region41: #{dual_gnn_forward.22} parent=1 // pred_fallthru
      _
    %v88 = vld [vmem:[#allocation2] sm:$0xff]
    %v89 = vld [vmem:[#allocation2 + $0x8] sm:$0xff]
    %v90 = vld [vmem:[#allocation2 + $0x10] sm:$0xff]
    %v91 = vld [vmem:[#allocation2 + $0x18] sm:$0xff]
    %v92 = vld [vmem:[#allocation5] sm:$0xff]
    %v93 = vld [vmem:[#allocation5 + $0x8] sm:$0xff]
    %v94 = vld [vmem:[#allocation5 + $0x10] sm:$0xff]
    %v95 = vld [vmem:[#allocation5 + $0x18] sm:$0xff]
    %v96 = vsub.f32 %v88, %v92
    %v97 = vsub.f32 %v89, %v93
    %v98 = vsub.f32 %v90, %v94
    %v99 = vsub.f32 %v91, %v95
    %v100 = vld [vmem:[#allocation8] sm:$0x1]
    %v102 = vlaneseq
    %v103 = vshrl.u32 %v102, 7
    %v104 = vsub.s32 0, %v103
    %v105 = vrot.slane %v100, %v104
    %v107 = vadd.f32 %v96, %v105
    %v108 = vadd.f32 %v97, %v105
    %v109 = vadd.f32 %v98, %v105
    %v110 = vadd.f32 %v99, %v105
    %vm111 = vcmask 72704
    %v112 = vsel %vm111, %v107, -inf
    %113 = vmax.xlane.f32.xlu0 %v112
    %v114 = vpop.xlane.xlu0 %113
    %v115 = vsel %vm111, %v108, -inf
    %116 = vmax.xlane.f32.xlu0 %v115
    %v117 = vpop.xlane.xlu0 %116
    %v118 = vsel %vm111, %v109, -inf
    %119 = vmax.xlane.f32.xlu0 %v118
    %v120 = vpop.xlane.xlu0 %119
    %v121 = vsel %vm111, %v110, -inf
    %122 = vmax.xlane.f32.xlu0 %v121
    %v123 = vpop.xlane.xlu0 %122
    %v124 = vsub.f32 %v107, %v114
    %v125 = vsub.f32 %v108, %v117
    %v126 = vsub.f32 %v109, %v120
    %v127 = vsub.f32 %v110, %v123
    %v128 = vmul.f32 %v124, 1.442695
    %v129 = vpow.pop %v128
    %v130 = vmul.f32 %v125, 1.442695
    %v131 = vpow.pop %v130
    %v132 = vmul.f32 %v126, 1.442695
    %v133 = vpow.pop %v132
    %v134 = vmul.f32 %v127, 1.442695
    %v135 = vpow.pop %v134
    %v136 = vsel %vm111, %v129, 0.0
    %137 = vadd.xlane.f32.xlu0 %v136
    %v138 = vpop.xlane.xlu0 %137
    %v139 = vsel %vm111, %v131, 0.0
    %140 = vadd.xlane.f32.xlu0 %v139
    %v141 = vpop.xlane.xlu0 %140
    %v142 = vsel %vm111, %v133, 0.0
    %143 = vadd.xlane.f32.xlu0 %v142
    %v144 = vpop.xlane.xlu0 %143
    %v145 = vsel %vm111, %v135, 0.0
    %146 = vadd.xlane.f32.xlu0 %v145
    %v147 = vpop.xlane.xlu0 %146
    %v148 = vrcp.pop %v138
    %v149 = vrcp.pop %v141
    %v150 = vrcp.pop %v144
    %v151 = vrcp.pop %v147
    %v152 = vmul.f32 %v129, %v148
    %v153 = vmul.f32 %v131, %v149
    %v154 = vmul.f32 %v133, %v150
    %v155 = vmul.f32 %v135, %v151
    %v156 = vld [vmem:[#allocation7] sm:$0xf]
    %v157 = vld [vmem:[#allocation7 + $0x4] sm:$0xf]
    %v158 = vld [vmem:[#allocation7 + $0x8] sm:$0xf]
    %v159 = vld [vmem:[#allocation7 + $0xc] sm:$0xf]
    %v160 = vld [vmem:[#allocation10] sm:$0xff]
    %v161 = vld [vmem:[#allocation10 + $0x8] sm:$0xff]
    %v162 = vld [vmem:[#allocation10 + $0x10] sm:$0xf]
    %v163 = vld [vmem:[#allocation10 + $0x14] sm:$0xff]
    %v164 = vld [vmem:[#allocation10 + $0x1c] sm:$0xff]
    %v165 = vld [vmem:[#allocation10 + $0x24] sm:$0xf]
    %v166 = vld [vmem:[#allocation10 + $0x28] sm:$0xff]
    %v167 = vld [vmem:[#allocation10 + $0x30] sm:$0xff]
    %v168 = vld [vmem:[#allocation10 + $0x38] sm:$0xf]
    %v169 = vld [vmem:[#allocation10 + $0x3c] sm:$0xff]
    %v170 = vld [vmem:[#allocation10 + $0x44] sm:$0xff]
    %v171 = vld [vmem:[#allocation10 + $0x4c] sm:$0xf]
    %v172 = vld [vmem:[#allocation10 + $0x50] sm:$0xff]
    %v173 = vld [vmem:[#allocation10 + $0x58] sm:$0xff]
    %v174 = vld [vmem:[#allocation10 + $0x60] sm:$0xf]
    %v175 = vld [vmem:[#allocation10 + $0x64] sm:$0xff]
    %v176 = vld [vmem:[#allocation10 + $0x6c] sm:$0xff]
    %v177 = vld [vmem:[#allocation10 + $0x74] sm:$0xf]
    %v178 = vld [vmem:[#allocation10 + $0x78] sm:$0xff]
    %v179 = vld [vmem:[#allocation10 + $0x80] sm:$0xff]
    %v180 = vld [vmem:[#allocation10 + $0x88] sm:$0xf]
    %v181 = vld [vmem:[#allocation10 + $0x8c] sm:$0xff]
    %v182 = vld [vmem:[#allocation10 + $0x94] sm:$0xff]
    %v183 = vld [vmem:[#allocation10 + $0x9c] sm:$0xf]
    %v184 = vld [vmem:[#allocation10 + $0xa0] sm:$0xff]
    %v185 = vld [vmem:[#allocation10 + $0xa8] sm:$0xff]
    %v186 = vld [vmem:[#allocation10 + $0xb0] sm:$0xf]
    %v187 = vld [vmem:[#allocation10 + $0xb4] sm:$0xff]
    %v188 = vld [vmem:[#allocation10 + $0xbc] sm:$0xff]
    %v189 = vld [vmem:[#allocation10 + $0xc4] sm:$0xf]
    %v190 = vld [vmem:[#allocation10 + $0xc8] sm:$0xff]
    %v191 = vld [vmem:[#allocation10 + $0xd0] sm:$0xff]
    %v192 = vld [vmem:[#allocation10 + $0xd8] sm:$0xf]
    %v193 = vld [vmem:[#allocation10 + $0xdc] sm:$0xff]
    %v194 = vld [vmem:[#allocation10 + $0xe4] sm:$0xff]
    %v195 = vld [vmem:[#allocation10 + $0xec] sm:$0xf]
    %v196 = vld [vmem:[#allocation10 + $0xf0] sm:$0xff]
    %v197 = vld [vmem:[#allocation10 + $0xf8] sm:$0xff]
    %v198 = vld [vmem:[#allocation10 + $0x100] sm:$0xf]
    %v199 = vld [vmem:[#allocation10 + $0x104] sm:$0xff]
    %v200 = vld [vmem:[#allocation10 + $0x10c] sm:$0xff]
    %v201 = vld [vmem:[#allocation10 + $0x114] sm:$0xf]
    %v202 = vld [vmem:[#allocation10 + $0x118] sm:$0xff]
    %v203 = vld [vmem:[#allocation10 + $0x120] sm:$0xff]
    %v204 = vld [vmem:[#allocation10 + $0x128] sm:$0xf]
    %v205 = vld [vmem:[#allocation10 + $0x12c] sm:$0xff]
    %v206 = vld [vmem:[#allocation10 + $0x134] sm:$0xff]
    %v207 = vld [vmem:[#allocation10 + $0x13c] sm:$0xf]
    %v212 = vunpack.c.l.b16 %v156
    %v213 = vunpack.c.l.b16 %v157
    %v214 = vunpack.c.l.b16 %v158
    %v215 = vunpack.c.l.b16 %v159
    %v216 = vpack.c.b16 %v213, %v212
    %v217 = vpack.c.b16 %v215, %v214
    %v268 = vunpack.c.l.b16 %v160
    %v269 = vunpack.c.h.b16 %v160
    %v270 = vunpack.c.l.b16 %v161
    %v271 = vunpack.c.h.b16 %v161
    %v272 = vunpack.c.l.b16 %v162
    %v273 = vunpack.c.l.b16 %v163
    %v274 = vunpack.c.h.b16 %v163
    %v275 = vunpack.c.l.b16 %v164
    %v276 = vunpack.c.h.b16 %v164
    %v277 = vunpack.c.l.b16 %v165
    %v278 = vunpack.c.l.b16 %v166
    %v279 = vunpack.c.h.b16 %v166
    %v280 = vunpack.c.l.b16 %v167
    %v281 = vunpack.c.h.b16 %v167
    %v282 = vunpack.c.l.b16 %v168
    %v283 = vunpack.c.l.b16 %v169
    %v284 = vunpack.c.h.b16 %v169
    %v285 = vunpack.c.l.b16 %v170
    %v286 = vunpack.c.h.b16 %v170
    %v287 = vunpack.c.l.b16 %v171
    %v288 = vunpack.c.l.b16 %v172
    %v289 = vunpack.c.h.b16 %v172
    %v290 = vunpack.c.l.b16 %v173
    %v291 = vunpack.c.h.b16 %v173
    %v292 = vunpack.c.l.b16 %v174
    %v293 = vunpack.c.l.b16 %v175
    %v294 = vunpack.c.h.b16 %v175
    %v295 = vunpack.c.l.b16 %v176
    %v296 = vunpack.c.h.b16 %v176
    %v297 = vunpack.c.l.b16 %v177
    %v298 = vunpack.c.l.b16 %v178
    %v299 = vunpack.c.h.b16 %v178
    %v300 = vunpack.c.l.b16 %v179
    %v301 = vunpack.c.h.b16 %v179
    %v302 = vunpack.c.l.b16 %v180
    %v303 = vunpack.c.l.b16 %v181
    %v304 = vunpack.c.h.b16 %v181
    %v305 = vunpack.c.l.b16 %v182
    %v306 = vunpack.c.h.b16 %v182
    %v307 = vunpack.c.l.b16 %v183
    %v308 = vunpack.c.l.b16 %v184
    %v309 = vunpack.c.h.b16 %v184
    %v310 = vunpack.c.l.b16 %v185
    %v311 = vunpack.c.h.b16 %v185
    %v312 = vunpack.c.l.b16 %v186
    %v313 = vunpack.c.l.b16 %v187
    %v314 = vunpack.c.h.b16 %v187
    %v315 = vunpack.c.l.b16 %v188
    %v316 = vunpack.c.h.b16 %v188
    %v317 = vunpack.c.l.b16 %v189
    %v318 = vunpack.c.l.b16 %v190
    %v319 = vunpack.c.h.b16 %v190
    %v320 = vunpack.c.l.b16 %v191
    %v321 = vunpack.c.h.b16 %v191
    %v322 = vunpack.c.l.b16 %v192
    %v323 = vunpack.c.l.b16 %v193
    %v324 = vunpack.c.h.b16 %v193
    %v325 = vunpack.c.l.b16 %v194
    %v326 = vunpack.c.h.b16 %v194
    %v327 = vunpack.c.l.b16 %v195
    %v328 = vunpack.c.l.b16 %v196
    %v329 = vunpack.c.h.b16 %v196
    %v330 = vunpack.c.l.b16 %v197
    %v331 = vunpack.c.h.b16 %v197
    %v332 = vunpack.c.l.b16 %v198
    %v333 = vunpack.c.l.b16 %v199
    %v334 = vunpack.c.h.b16 %v199
    %v335 = vunpack.c.l.b16 %v200
    %v336 = vunpack.c.h.b16 %v200
    %v337 = vunpack.c.l.b16 %v201
    %v338 = vunpack.c.l.b16 %v202
    %v339 = vunpack.c.h.b16 %v202
    %v340 = vunpack.c.l.b16 %v203
    %v341 = vunpack.c.h.b16 %v203
    %v342 = vunpack.c.l.b16 %v204
    %v343 = vunpack.c.l.b16 %v205
    %v344 = vunpack.c.h.b16 %v205
    %v345 = vunpack.c.l.b16 %v206
    %v346 = vunpack.c.h.b16 %v206
    %v347 = vunpack.c.l.b16 %v207
    %v348 = vpack.c.b16 %v273, %v268
    %v349 = vpack.c.b16 %v274, %v269
    %v350 = vpack.c.b16 %v275, %v270
    %v351 = vpack.c.b16 %v276, %v271
    %v352 = vpack.c.b16 %v277, %v272
    %v353 = vpack.c.b16 %v283, %v278
    %v354 = vpack.c.b16 %v284, %v279
    %v355 = vpack.c.b16 %v285, %v280
    %v356 = vpack.c.b16 %v286, %v281
    %v357 = vpack.c.b16 %v287, %v282
    %v358 = vpack.c.b16 %v293, %v288
    %v359 = vpack.c.b16 %v294, %v289
    %v360 = vpack.c.b16 %v295, %v290
    %v361 = vpack.c.b16 %v296, %v291
    %v362 = vpack.c.b16 %v297, %v292
    %v363 = vpack.c.b16 %v303, %v298
    %v364 = vpack.c.b16 %v304, %v299
    %v365 = vpack.c.b16 %v305, %v300
    %v366 = vpack.c.b16 %v306, %v301
    %v367 = vpack.c.b16 %v307, %v302
    %v368 = vpack.c.b16 %v313, %v308
    %v369 = vpack.c.b16 %v314, %v309
    %v370 = vpack.c.b16 %v315, %v310
    %v371 = vpack.c.b16 %v316, %v311
    %v372 = vpack.c.b16 %v317, %v312
    %v373 = vpack.c.b16 %v323, %v318
    %v374 = vpack.c.b16 %v324, %v319
    %v375 = vpack.c.b16 %v325, %v320
    %v376 = vpack.c.b16 %v326, %v321
    %v377 = vpack.c.b16 %v327, %v322
    %v378 = vpack.c.b16 %v333, %v328
    %v379 = vpack.c.b16 %v334, %v329
    %v380 = vpack.c.b16 %v335, %v330
    %v381 = vpack.c.b16 %v336, %v331
    %v382 = vpack.c.b16 %v337, %v332
    %v383 = vpack.c.b16 %v343, %v338
    %v384 = vpack.c.b16 %v344, %v339
    %v385 = vpack.c.b16 %v345, %v340
    %v386 = vpack.c.b16 %v346, %v341
    %v387 = vpack.c.b16 %v347, %v342
    %428 = vmatprep.subr.bf16.mxu0 %v349
    %429 = vmatpush1.bf16.msra.mxu0 %v348
    %430 = vmatprep.subr.bf16.mxu0 %v354
    %431 = vmatpush1.bf16.msra.mxu0 %v353
    %432 = vmatprep.subr.bf16.mxu0 %v359
    %433 = vmatpush1.bf16.msra.mxu0 %v358
    %434 = vmatprep.subr.bf16.mxu0 %v364
    %435 = vmatpush1.bf16.msra.mxu0 %v363
    %436 = vmatprep.subr.bf16.mxu0 %v369
    %437 = vmatpush1.bf16.msra.mxu0 %v368
    %438 = vmatprep.subr.bf16.mxu0 %v374
    %439 = vmatpush1.bf16.msra.mxu0 %v373
    %440 = vmatprep.subr.bf16.mxu0 %v379
    %441 = vmatpush1.bf16.msra.mxu0 %v378
    %442 = vmatprep.subr.bf16.mxu0 %v384
    %443 = vmatpush1.bf16.msra.mxu0 %v383
    %444 = vmatprep.subr.bf16.mxu0 0
    %445 = vmatpush1.bf16.msra.mxu0 0
    %446 = vmatprep.subr.bf16.mxu0 0
    %447 = vmatpush1.bf16.msra.mxu0 0
    %448 = vmatprep.subr.bf16.mxu0 0
    %449 = vmatpush1.bf16.msra.mxu0 0
    %450 = vmatprep.subr.bf16.mxu0 0
    %451 = vmatpush1.bf16.msra.mxu0 0
    %452 = vmatprep.subr.bf16.mxu0 0
    %453 = vmatpush1.bf16.msra.mxu0 0
    %454 = vmatprep.subr.bf16.mxu0 0
    %455 = vmatpush1.bf16.msra.mxu0 0
    %456 = vmatprep.subr.bf16.mxu0 0
    %457 = vmatpush1.bf16.msra.mxu0 0
    %458 = vmatprep.subr.bf16.mxu0 0
    %459 = vmatpush1.bf16.msra.mxu0 0
    %460 = vmatprep.mubr.bf16.mxu0 0
    %461 = vmatmul.mubr.bf16.gmra.mrb[0].mxu0 %v216
    %v462 = vpop.f32.mrb[0].mxu0
    %v463 = vadd.f32 0.0, %v462
    %v464 = vpop.f32.mrb[0].mxu0
    %v465 = vadd.f32 0.0, %v464
    %v466 = vpop.f32.mrb[0].mxu0
    %v467 = vadd.f32 0.0, %v466
    %v468 = vpop.f32.mrb[0].mxu0
    %v469 = vadd.f32 0.0, %v468
    %470 = vmatprep.mubr.bf16.mxu0 0
    %471 = vmatmul.mubr.bf16.gmra.mrb[0].mxu0 %v217
    %v472 = vpop.f32.mrb[0].mxu0
    %v473 = vadd.f32 0.0, %v472
    %v474 = vpop.f32.mrb[0].mxu0
    %v475 = vadd.f32 0.0, %v474
    %v476 = vpop.f32.mrb[0].mxu0
    %v477 = vadd.f32 0.0, %v476
    %v478 = vpop.f32.mrb[0].mxu0
    %v479 = vadd.f32 0.0, %v478
    %480 = vdwg.mxu0
    %481 = vmatprep.subr.bf16.mxu0 %v351
    %482 = vmatpush1.bf16.msra.mxu0 %v350
    %483 = vmatprep.subr.bf16.mxu0 %v356
    %484 = vmatpush1.bf16.msra.mxu0 %v355
    %485 = vmatprep.subr.bf16.mxu0 %v361
    %486 = vmatpush1.bf16.msra.mxu0 %v360
    %487 = vmatprep.subr.bf16.mxu0 %v366
    %488 = vmatpush1.bf16.msra.mxu0 %v365
    %489 = vmatprep.subr.bf16.mxu0 %v371
    %490 = vmatpush1.bf16.msra.mxu0 %v370
    %491 = vmatprep.subr.bf16.mxu0 %v376
    %492 = vmatpush1.bf16.msra.mxu0 %v375
    %493 = vmatprep.subr.bf16.mxu0 %v381
    %494 = vmatpush1.bf16.msra.mxu0 %v380
    %495 = vmatprep.subr.bf16.mxu0 %v386
    %496 = vmatpush1.bf16.msra.mxu0 %v385
    %497 = vmatprep.subr.bf16.mxu0 0
    %498 = vmatpush1.bf16.msra.mxu0 0
    %499 = vmatprep.subr.bf16.mxu0 0
    %500 = vmatpush1.bf16.msra.mxu0 0
    %501 = vmatprep.subr.bf16.mxu0 0
    %502 = vmatpush1.bf16.msra.mxu0 0
    %503 = vmatprep.subr.bf16.mxu0 0
    %504 = vmatpush1.bf16.msra.mxu0 0
    %505 = vmatprep.subr.bf16.mxu0 0
    %506 = vmatpush1.bf16.msra.mxu0 0
    %507 = vmatprep.subr.bf16.mxu0 0
    %508 = vmatpush1.bf16.msra.mxu0 0
    %509 = vmatprep.subr.bf16.mxu0 0
    %510 = vmatpush1.bf16.msra.mxu0 0
    %511 = vmatprep.subr.bf16.mxu0 0
    %512 = vmatpush1.bf16.msra.mxu0 0
    %513 = vmatprep.mubr.bf16.mxu0 0
    %514 = vmatmul.mubr.bf16.gmra.mrb[0].mxu0 %v216
    %v515 = vpop.f32.mrb[0].mxu0
    %v516 = vadd.f32 0.0, %v515
    %v517 = vpop.f32.mrb[0].mxu0
    %v518 = vadd.f32 0.0, %v517
    %v519 = vpop.f32.mrb[0].mxu0
    %v520 = vadd.f32 0.0, %v519
    %v521 = vpop.f32.mrb[0].mxu0
    %v522 = vadd.f32 0.0, %v521
    %523 = vmatprep.mubr.bf16.mxu0 0
    %524 = vmatmul.mubr.bf16.gmra.mrb[0].mxu0 %v217
    %v525 = vpop.f32.mrb[0].mxu0
    %v526 = vadd.f32 0.0, %v525
    %v527 = vpop.f32.mrb[0].mxu0
    %v528 = vadd.f32 0.0, %v527
    %v529 = vpop.f32.mrb[0].mxu0
    %v530 = vadd.f32 0.0, %v529
    %v531 = vpop.f32.mrb[0].mxu0
    %v532 = vadd.f32 0.0, %v531
    %533 = vdwg.mxu0
    %534 = vmatprep.subr.bf16.mxu0 0
    %535 = vmatpush1.bf16.msra.mxu0 %v352
    %536 = vmatprep.subr.bf16.mxu0 0
    %537 = vmatpush1.bf16.msra.mxu0 %v357
    %538 = vmatprep.subr.bf16.mxu0 0
    %539 = vmatpush1.bf16.msra.mxu0 %v362
    %540 = vmatprep.subr.bf16.mxu0 0
    %541 = vmatpush1.bf16.msra.mxu0 %v367
    %542 = vmatprep.subr.bf16.mxu0 0
    %543 = vmatpush1.bf16.msra.mxu0 %v372
    %544 = vmatprep.subr.bf16.mxu0 0
    %545 = vmatpush1.bf16.msra.mxu0 %v377
    %546 = vmatprep.subr.bf16.mxu0 0
    %547 = vmatpush1.bf16.msra.mxu0 %v382
    %548 = vmatprep.subr.bf16.mxu0 0
    %549 = vmatpush1.bf16.msra.mxu0 %v387
    %550 = vmatprep.subr.bf16.mxu0 0
    %551 = vmatpush1.bf16.msra.mxu0 0
    %552 = vmatprep.subr.bf16.mxu0 0
    %553 = vmatpush1.bf16.msra.mxu0 0
    %554 = vmatprep.subr.bf16.mxu0 0
    %555 = vmatpush1.bf16.msra.mxu0 0
    %556 = vmatprep.subr.bf16.mxu0 0
    %557 = vmatpush1.bf16.msra.mxu0 0
    %558 = vmatprep.subr.bf16.mxu0 0
    %559 = vmatpush1.bf16.msra.mxu0 0
    %560 = vmatprep.subr.bf16.mxu0 0
    %561 = vmatpush1.bf16.msra.mxu0 0
    %562 = vmatprep.subr.bf16.mxu0 0
    %563 = vmatpush1.bf16.msra.mxu0 0
    %564 = vmatprep.subr.bf16.mxu0 0
    %565 = vmatpush1.bf16.msra.mxu0 0
    %566 = vmatprep.mubr.bf16.mxu0 0
    %567 = vmatmul.mubr.bf16.gmra.mrb[0].mxu0 %v216
    %v568 = vpop.f32.mrb[0].mxu0
    %v569 = vadd.f32 0.0, %v568
    %v570 = vpop.f32.mrb[0].mxu0
    %v571 = vpop.f32.mrb[0].mxu0
    %v572 = vadd.f32 0.0, %v571
    %v573 = vpop.f32.mrb[0].mxu0
    %574 = vmatprep.mubr.bf16.mxu0 0
    %575 = vmatmul.mubr.bf16.gmra.mrb[0].mxu0 %v217
    %v576 = vpop.f32.mrb[0].mxu0
    %v577 = vadd.f32 0.0, %v576
    %v578 = vpop.f32.mrb[0].mxu0
    %v579 = vpop.f32.mrb[0].mxu0
    %v580 = vadd.f32 0.0, %v579
    %v581 = vpop.f32.mrb[0].mxu0
    %582 = vdwg.mxu0
    %584 = vset.pattern.permute.xlu0 0
    %585 = vperm.xlu0 %584, %v152
    %v586 = vpop.permute.xlu0 %585
    %589 = vset.pattern.permute.xlu0 0
    %590 = vperm.xlu0 %589, %v153
    %v591 = vpop.permute.xlu0 %590
    %594 = vset.pattern.permute.xlu0 0
    %595 = vperm.xlu0 %594, %v154
    %v596 = vpop.permute.xlu0 %595
    %599 = vset.pattern.permute.xlu0 0
    %600 = vperm.xlu0 %599, %v155
    %v601 = vpop.permute.xlu0 %600
    %v603 = vmul.f32 %v586, %v463
    %v604 = vmul.f32 %v591, %v467
    %v605 = vmul.f32 %v596, %v473
    %v606 = vmul.f32 %v601, %v477
    %607 = vset.pattern.permute.xlu0 1
    %608 = vperm.xlu0 %607, %v152
    %v609 = vpop.permute.xlu0 %608
    %611 = vset.pattern.permute.xlu0 1
    %612 = vperm.xlu0 %611, %v153
    %v613 = vpop.permute.xlu0 %612
    %615 = vset.pattern.permute.xlu0 1
    %616 = vperm.xlu0 %615, %v154
    %v617 = vpop.permute.xlu0 %616
    %619 = vset.pattern.permute.xlu0 1
    %620 = vperm.xlu0 %619, %v155
    %v621 = vpop.permute.xlu0 %620
    %v623 = vmul.f32 %v609, %v463
    %v624 = vmul.f32 %v613, %v467
    %v625 = vmul.f32 %v617, %v473
    %v626 = vmul.f32 %v621, %v477
    %631 = vrot.lane.b32.xlu0 %v623, 64
    %v632 = vpop.permute.xlu0 %631
    %633 = vrot.lane.b32.xlu0 %v624, 64
    %v634 = vpop.permute.xlu0 %633
    %635 = vrot.lane.b32.xlu0 %v625, 64
    %v636 = vpop.permute.xlu0 %635
    %637 = vrot.lane.b32.xlu0 %v626, 64
    %v638 = vpop.permute.xlu0 %637
    %v643 = vadd.f32 %v603, %v632
    %v644 = vadd.f32 %v604, %v634
    %v645 = vadd.f32 %v605, %v636
    %v646 = vadd.f32 %v606, %v638
    %647 = vset.pattern.permute.xlu0 2
    %648 = vperm.xlu0 %647, %v152
    %v649 = vpop.permute.xlu0 %648
    %651 = vset.pattern.permute.xlu0 2
    %652 = vperm.xlu0 %651, %v153
    %v653 = vpop.permute.xlu0 %652
    %655 = vset.pattern.permute.xlu0 2
    %656 = vperm.xlu0 %655, %v154
    %v657 = vpop.permute.xlu0 %656
    %659 = vset.pattern.permute.xlu0 2
    %660 = vperm.xlu0 %659, %v155
    %v661 = vpop.permute.xlu0 %660
    %v663 = vmul.f32 %v649, %v465
    %v664 = vmul.f32 %v653, %v469
    %v665 = vmul.f32 %v657, %v475
    %v666 = vmul.f32 %v661, %v479
    %v667 = vadd.f32 %v643, %v663
    %v668 = vadd.f32 %v644, %v664
    %v669 = vadd.f32 %v645, %v665
    %v670 = vadd.f32 %v646, %v666
    %671 = vset.pattern.permute.xlu0 3
    %672 = vperm.xlu0 %671, %v152
    %v673 = vpop.permute.xlu0 %672
    %675 = vset.pattern.permute.xlu0 3
    %676 = vperm.xlu0 %675, %v153
    %v677 = vpop.permute.xlu0 %676
    %679 = vset.pattern.permute.xlu0 3
    %680 = vperm.xlu0 %679, %v154
    %v681 = vpop.permute.xlu0 %680
    %683 = vset.pattern.permute.xlu0 3
    %684 = vperm.xlu0 %683, %v155
    %v685 = vpop.permute.xlu0 %684
    %v687 = vmul.f32 %v673, %v465
    %v688 = vmul.f32 %v677, %v469
    %v689 = vmul.f32 %v681, %v475
    %v690 = vmul.f32 %v685, %v479
    %695 = vrot.lane.b32.xlu0 %v687, 64
    %v696 = vpop.permute.xlu0 %695
    %697 = vrot.lane.b32.xlu0 %v688, 64
    %v698 = vpop.permute.xlu0 %697
    %699 = vrot.lane.b32.xlu0 %v689, 64
    %v700 = vpop.permute.xlu0 %699
    %701 = vrot.lane.b32.xlu0 %v690, 64
    %v702 = vpop.permute.xlu0 %701
    %v707 = vadd.f32 %v667, %v696
    %v708 = vadd.f32 %v668, %v698
    %v709 = vadd.f32 %v669, %v700
    %v710 = vadd.f32 %v670, %v702
    %711 = vset.pattern.permute.xlu0 4
    %712 = vperm.xlu0 %711, %v152
    %v713 = vpop.permute.xlu0 %712
    %715 = vset.pattern.permute.xlu0 4
    %716 = vperm.xlu0 %715, %v153
    %v717 = vpop.permute.xlu0 %716
    %719 = vset.pattern.permute.xlu0 4
    %720 = vperm.xlu0 %719, %v154
    %v721 = vpop.permute.xlu0 %720
    %723 = vset.pattern.permute.xlu0 4
    %724 = vperm.xlu0 %723, %v155
    %v725 = vpop.permute.xlu0 %724
    %v727 = vmul.f32 %v713, %v516
    %v728 = vmul.f32 %v717, %v520
    %v729 = vmul.f32 %v721, %v526
    %v730 = vmul.f32 %v725, %v530
    %v731 = vadd.f32 %v707, %v727
    %v732 = vadd.f32 %v708, %v728
    %v733 = vadd.f32 %v709, %v729
    %v734 = vadd.f32 %v710, %v730
    %735 = vset.pattern.permute.xlu0 5
    %736 = vperm.xlu0 %735, %v152
    %v737 = vpop.permute.xlu0 %736
    %739 = vset.pattern.permute.xlu0 5
    %740 = vperm.xlu0 %739, %v153
    %v741 = vpop.permute.xlu0 %740
    %743 = vset.pattern.permute.xlu0 5
    %744 = vperm.xlu0 %743, %v154
    %v745 = vpop.permute.xlu0 %744
    %747 = vset.pattern.permute.xlu0 5
    %748 = vperm.xlu0 %747, %v155
    %v749 = vpop.permute.xlu0 %748
    %v751 = vmul.f32 %v737, %v516
    %v752 = vmul.f32 %v741, %v520
    %v753 = vmul.f32 %v745, %v526
    %v754 = vmul.f32 %v749, %v530
    %759 = vrot.lane.b32.xlu0 %v751, 64
    %v760 = vpop.permute.xlu0 %759
    %761 = vrot.lane.b32.xlu0 %v752, 64
    %v762 = vpop.permute.xlu0 %761
    %763 = vrot.lane.b32.xlu0 %v753, 64
    %v764 = vpop.permute.xlu0 %763
    %765 = vrot.lane.b32.xlu0 %v754, 64
    %v766 = vpop.permute.xlu0 %765
    %v771 = vadd.f32 %v731, %v760
    %v772 = vadd.f32 %v732, %v762
    %v773 = vadd.f32 %v733, %v764
    %v774 = vadd.f32 %v734, %v766
    %775 = vset.pattern.permute.xlu0 6
    %776 = vperm.xlu0 %775, %v152
    %v777 = vpop.permute.xlu0 %776
    %779 = vset.pattern.permute.xlu0 6
    %780 = vperm.xlu0 %779, %v153
    %v781 = vpop.permute.xlu0 %780
    %783 = vset.pattern.permute.xlu0 6
    %784 = vperm.xlu0 %783, %v154
    %v785 = vpop.permute.xlu0 %784
    %787 = vset.pattern.permute.xlu0 6
    %788 = vperm.xlu0 %787, %v155
    %v789 = vpop.permute.xlu0 %788
    %v791 = vmul.f32 %v777, %v518
    %v792 = vmul.f32 %v781, %v522
    %v793 = vmul.f32 %v785, %v528
    %v794 = vmul.f32 %v789, %v532
    %v795 = vadd.f32 %v771, %v791
    %v796 = vadd.f32 %v772, %v792
    %v797 = vadd.f32 %v773, %v793
    %v798 = vadd.f32 %v774, %v794
    %799 = vset.pattern.permute.xlu0 7
    %800 = vperm.xlu0 %799, %v152
    %v801 = vpop.permute.xlu0 %800
    %803 = vset.pattern.permute.xlu0 7
    %804 = vperm.xlu0 %803, %v153
    %v805 = vpop.permute.xlu0 %804
    %807 = vset.pattern.permute.xlu0 7
    %808 = vperm.xlu0 %807, %v154
    %v809 = vpop.permute.xlu0 %808
    %811 = vset.pattern.permute.xlu0 7
    %812 = vperm.xlu0 %811, %v155
    %v813 = vpop.permute.xlu0 %812
    %v815 = vmul.f32 %v801, %v518
    %v816 = vmul.f32 %v805, %v522
    %v817 = vmul.f32 %v809, %v528
    %v818 = vmul.f32 %v813, %v532
    %823 = vrot.lane.b32.xlu0 %v815, 64
    %v824 = vpop.permute.xlu0 %823
    %825 = vrot.lane.b32.xlu0 %v816, 64
    %v826 = vpop.permute.xlu0 %825
    %827 = vrot.lane.b32.xlu0 %v817, 64
    %v828 = vpop.permute.xlu0 %827
    %829 = vrot.lane.b32.xlu0 %v818, 64
    %v830 = vpop.permute.xlu0 %829
    %v835 = vadd.f32 %v795, %v824
    %v836 = vadd.f32 %v796, %v826
    %v837 = vadd.f32 %v797, %v828
    %v838 = vadd.f32 %v798, %v830
    %839 = vset.pattern.permute.xlu0 8
    %840 = vperm.xlu0 %839, %v152
    %v841 = vpop.permute.xlu0 %840
    %843 = vset.pattern.permute.xlu0 8
    %844 = vperm.xlu0 %843, %v153
    %v845 = vpop.permute.xlu0 %844
    %847 = vset.pattern.permute.xlu0 8
    %848 = vperm.xlu0 %847, %v154
    %v849 = vpop.permute.xlu0 %848
    %851 = vset.pattern.permute.xlu0 8
    %852 = vperm.xlu0 %851, %v155
    %v853 = vpop.permute.xlu0 %852
    %v855 = vmul.f32 %v841, %v569
    %v856 = vmul.f32 %v845, %v572
    %v857 = vmul.f32 %v849, %v577
    %v858 = vmul.f32 %v853, %v580
    %v859 = vadd.f32 %v835, %v855
    %v860 = vadd.f32 %v836, %v856
    %v861 = vadd.f32 %v837, %v857
    %v862 = vadd.f32 %v838, %v858
    %vm863 = vcmask 523264
    %864 = vst.msk [vmem:[#allocation11] sm:$0xff] %vm863, %v859
    %865 = vst.msk [vmem:[#allocation11 + $0x8] sm:$0xff] %vm863, %v860
    %866 = vst.msk [vmem:[#allocation11 + $0x10] sm:$0xff] %vm863, %v861
    %867 = vst.msk [vmem:[#allocation11 + $0x18] sm:$0xff] %vm863, %v862
    // Predicated region
    $region42: #{dual_gnn_forward.22} parent=1 // pred_check
      _
    $region43: #{dual_gnn_forward.22} parent=1 // pred_check_branch
      %869 = sbr.rel (0) target = $region45
    $region44: #{dual_gnn_forward.22} parent=1 // pred_region
      %s871 = ssub.s32 512, 512
      %872 = vsyncadd [#allocation4], %s871
      %s873 = sshll.u32 [#allocation11], 4
      %s874 = int_to_ptr.vmem [resolvable:$true] %s873
      %879 = dma.vmem_to_hbm [thread:$0]  %s874, 512, %s5, [#allocation4], 128, 128, 8
    $region45: #{dual_gnn_forward.22} parent=1 // pred_fallthru
      _
    // Predicated region
    $region46: #{dual_gnn_forward.22} parent=1 // pred_check
      _
    $region47: #{dual_gnn_forward.22} parent=1 // pred_check_branch
      %881 = sbr.rel (0) target = $region49
    $region48: #{dual_gnn_forward.22} parent=1 // pred_region
      %882 = dma.done [#allocation4], 512
    $region49: #{dual_gnn_forward.22} parent=1 // pred_fallthru
      _
    %883 = vsyncpa [#allocation3], 1
    %884 = vsyncpa [#allocation6], 1
    %885 = vsyncpa [#allocation9], 1
    %886 = vsyncpa [#allocation4], 1

// kernel: dual_gnn_forward.21
$region0: #{dual_gnn_forward.21}
  #allocation0 [shape = 'u32[]', space=smem, size = 0x4, offset = 0x4, fixed_abs, tag = 'smem constant byte address 0x4 - core index']
  #allocation1 [shape = 'u32[144,128]{1,0:T(1,128)}', space=vmem, size = 0x12000, scoped, tag = 'internal scratch']
  %s0 = inlined_call_operand.hbm [shape: f32[16,9], index: 0, kind: input, shape index: {}]
  %s1 = inlined_call_operand.hbm [shape: f32[16,9], index: 1, kind: input, shape index: {}]
  %s2 = inlined_call_operand.hbm [shape: bf16[16,128], index: 2, kind: input, shape index: {}]
  %s3 = inlined_call_operand.hbm [shape: f32[1,9], index: 3, kind: input, shape index: {}]
  %s4 = inlined_call_operand.hbm [shape: bf16[128,1152], index: 4, kind: input, shape index: {}]
  %s5 = inlined_call_operand.hbm [shape: f32[16,128], index: 5, kind: output, shape index: {}]
  %s6 = sld [smem:[#allocation0]]
  $region50: #{dual_gnn_forward.21} parent=0
    _
  %s8 = ssub.s32 1, %s6
  %s9 = scalar_select 0, %s8, %s6
  $region1: #{dual_gnn_forward.21} parent=0
    #allocation2 [shape = 'u8[8192]{0}', space=vmem, size = 0x2000, scoped, tag = 'input window, operand 0, single buffered']
    #allocation3 [shape = 's32[1]{0}', space=sflag, size = 0x4, scoped, tag = 'scoped memory for dual_gnn_forward.21']
    #allocation4 [shape = 's32[1]{0}', space=sflag, size = 0x4, scoped, tag = 'scoped memory for dual_gnn_forward.21']
    #allocation5 [shape = 'u8[8192]{0}', space=vmem, size = 0x2000, scoped, tag = 'input window, operand 1, single buffered']
    #allocation6 [shape = 's32[1]{0}', space=sflag, size = 0x4, scoped, tag = 'scoped memory for dual_gnn_forward.21']
    #allocation7 [shape = 'u8[4096]{0}', space=vmem, size = 0x1000, scoped, tag = 'input window, operand 2, single buffered']
    #allocation8 [shape = 'u8[512]{0}', space=vmem, size = 0x400, scoped, tag = 'input window, operand 3, single buffered']
    #allocation9 [shape = 's32[1]{0}', space=sflag, size = 0x4, scoped, tag = 'scoped memory for dual_gnn_forward.21']
    #allocation10 [shape = 'u8[294912]{0}', space=vmem, size = 0x48000, scoped, tag = 'input window, operand 4, single buffered']
    #allocation11 [shape = 'u8[8192]{0}', space=vmem, size = 0x2000, scoped, tag = 'output window, operand 0, single buffered']
    %10 = vsyncpa [#allocation3], 0
    %11 = vsyncpa [#allocation6], 0
    %12 = vsyncpa [#allocation9], 0
    %13 = vsyncpa [#allocation4], 0
    // Predicated region
    $region2: #{dual_gnn_forward.21} parent=1 // pred_check
      _
    $region3: #{dual_gnn_forward.21} parent=1 // pred_check_branch
      %15 = sbr.rel (0) target = $region5
    $region4: #{dual_gnn_forward.21} parent=1 // pred_region
      %s17 = ssub.s32 256, 256
      %18 = vsyncadd [#allocation3], %s17
      %s19 = sshll.u32 [#allocation2], 4
      %s20 = int_to_ptr.vmem [resolvable:$true] %s19
      %25 = dma.hbm_to_vmem [thread:$0]  %s0, 256, %s20, [#allocation3], 128, 128, 8
    $region5: #{dual_gnn_forward.21} parent=1 // pred_fallthru
      _
    // Predicated region
    $region6: #{dual_gnn_forward.21} parent=1 // pred_check
      _
    $region7: #{dual_gnn_forward.21} parent=1 // pred_check_branch
      %27 = sbr.rel (0) target = $region9
    $region8: #{dual_gnn_forward.21} parent=1 // pred_region
      %s29 = ssub.s32 256, 256
      %30 = vsyncadd [#allocation6], %s29
      %s31 = sshll.u32 [#allocation5], 4
      %s32 = int_to_ptr.vmem [resolvable:$true] %s31
      %37 = dma.hbm_to_vmem [thread:$0]  %s1, 256, %s32, [#allocation6], 128, 128, 8
    $region9: #{dual_gnn_forward.21} parent=1 // pred_fallthru
      _
    // Predicated region
    $region10: #{dual_gnn_forward.21} parent=1 // pred_check
      _
    $region11: #{dual_gnn_forward.21} parent=1 // pred_check_branch
      %39 = sbr.rel (0) target = $region13
    $region12: #{dual_gnn_forward.21} parent=1 // pred_region
      %s41 = ssub.s32 128, 128
      %42 = vsyncadd [#allocation6], %s41
      %s43 = sshll.u32 [#allocation7], 4
      %s44 = int_to_ptr.vmem [resolvable:$true] %s43
      %49 = dma.hbm_to_vmem [thread:$0]  %s2, 128, %s44, [#allocation6], 64, 64, 4
    $region13: #{dual_gnn_forward.21} parent=1 // pred_fallthru
      _
    // Predicated region
    $region14: #{dual_gnn_forward.21} parent=1 // pred_check
      _
    $region15: #{dual_gnn_forward.21} parent=1 // pred_check_branch
      %51 = sbr.rel (0) target = $region17
    $region16: #{dual_gnn_forward.21} parent=1 // pred_region
      %s53 = ssub.s32 16, 16
      %54 = vsyncadd [#allocation9], %s53
      %s56 = sshll.u32 [#allocation8], 4
      %s57 = int_to_ptr.vmem [resolvable:$true] %s56
      %59 = dma.hbm_to_vmem [thread:$0]  %s3, 16, %s57, [#allocation9]
    $region17: #{dual_gnn_forward.21} parent=1 // pred_fallthru
      _
    // Predicated region
    $region18: #{dual_gnn_forward.21} parent=1 // pred_check
      _
    $region19: #{dual_gnn_forward.21} parent=1 // pred_check_branch
      %61 = sbr.rel (0) target = $region21
    $region20: #{dual_gnn_forward.21} parent=1 // pred_region
      %s63 = ssub.s32 9216, 9216
      %64 = vsyncadd [#allocation9], %s63
      %s65 = sshll.u32 [#allocation10], 4
      %s66 = int_to_ptr.vmem [resolvable:$true] %s65
      %71 = dma.hbm_to_vmem [thread:$0]  %s4, 9216, %s66, [#allocation9], 576, 576, 36
    $region21: #{dual_gnn_forward.21} parent=1 // pred_fallthru
      _
    // Predicated region
    $region22: #{dual_gnn_forward.21} parent=1 // pred_check
      _
    $region23: #{dual_gnn_forward.21} parent=1 // pred_check_branch
      %73 = sbr.rel (0) target = $region25
    $region24: #{dual_gnn_forward.21} parent=1 // pred_region
      %74 = dma.done [#allocation3], 256
    $region25: #{dual_gnn_forward.21} parent=1 // pred_fallthru
      _
    // Predicated region
    $region26: #{dual_gnn_forward.21} parent=1 // pred_check
      _
    $region27: #{dual_gnn_forward.21} parent=1 // pred_check_branch
      %76 = sbr.rel (0) target = $region29
    $region28: #{dual_gnn_forward.21} parent=1 // pred_region
      %77 = dma.done [#allocation6], 256
    $region29: #{dual_gnn_forward.21} parent=1 // pred_fallthru
      _
    // Predicated region
    $region30: #{dual_gnn_forward.21} parent=1 // pred_check
      _
    $region31: #{dual_gnn_forward.21} parent=1 // pred_check_branch
      %79 = sbr.rel (0) target = $region33
    $region32: #{dual_gnn_forward.21} parent=1 // pred_region
      %80 = dma.done [#allocation6], 128
    $region33: #{dual_gnn_forward.21} parent=1 // pred_fallthru
      _
    // Predicated region
    $region34: #{dual_gnn_forward.21} parent=1 // pred_check
      _
    $region35: #{dual_gnn_forward.21} parent=1 // pred_check_branch
      %82 = sbr.rel (0) target = $region37
    $region36: #{dual_gnn_forward.21} parent=1 // pred_region
      %83 = dma.done [#allocation9], 16
    $region37: #{dual_gnn_forward.21} parent=1 // pred_fallthru
      _
    // Predicated region
    $region38: #{dual_gnn_forward.21} parent=1 // pred_check
      _
    $region39: #{dual_gnn_forward.21} parent=1 // pred_check_branch
      %85 = sbr.rel (0) target = $region41
    $region40: #{dual_gnn_forward.21} parent=1 // pred_region
      %86 = dma.done [#allocation9], 9216
    $region41: #{dual_gnn_forward.21} parent=1 // pred_fallthru
      _
    %v88 = vld [vmem:[#allocation2] sm:$0xff]
    %v89 = vld [vmem:[#allocation2 + $0x8] sm:$0xff]
    %v90 = vld [vmem:[#allocation5] sm:$0xff]
    %v91 = vld [vmem:[#allocation5 + $0x8] sm:$0xff]
    %v92 = vsub.f32 %v88, %v90
    %v93 = vsub.f32 %v89, %v91
    %v94 = vld [vmem:[#allocation8] sm:$0x1]
    %v96 = vlaneseq
    %v97 = vshrl.u32 %v96, 7
    %v98 = vsub.s32 0, %v97
    %v99 = vrot.slane %v94, %v98
    %v101 = vadd.f32 %v92, %v99
    %v102 = vadd.f32 %v93, %v99
    %vm103 = vcmask 72704
    %v104 = vsel %vm103, %v101, -inf
    %105 = vmax.xlane.f32.xlu0 %v104
    %v106 = vpop.xlane.xlu0 %105
    %v107 = vsel %vm103, %v102, -inf
    %108 = vmax.xlane.f32.xlu0 %v107
    %v109 = vpop.xlane.xlu0 %108
    %v110 = vsub.f32 %v101, %v106
    %v111 = vsub.f32 %v102, %v109
    %v112 = vmul.f32 %v110, 1.442695
    %v113 = vpow.pop %v112
    %v114 = vmul.f32 %v111, 1.442695
    %v115 = vpow.pop %v114
    %v116 = vsel %vm103, %v113, 0.0
    %117 = vadd.xlane.f32.xlu0 %v116
    %v118 = vpop.xlane.xlu0 %117
    %v119 = vsel %vm103, %v115, 0.0
    %120 = vadd.xlane.f32.xlu0 %v119
    %v121 = vpop.xlane.xlu0 %120
    %v122 = vrcp.pop %v118
    %v123 = vrcp.pop %v121
    %v124 = vmul.f32 %v113, %v122
    %v125 = vmul.f32 %v115, %v123
    %v126 = vld [vmem:[#allocation7] sm:$0xf]
    %v127 = vld [vmem:[#allocation7 + $0x4] sm:$0xf]
    %v128 = vld [vmem:[#allocation10] sm:$0xff]
    %v129 = vld [vmem:[#allocation10 + $0x8] sm:$0xff]
    %v130 = vld [vmem:[#allocation10 + $0x10] sm:$0xff]
    %v131 = vld [vmem:[#allocation10 + $0x18] sm:$0xff]
    %v132 = vld [vmem:[#allocation10 + $0x20] sm:$0xf]
    %v133 = vld [vmem:[#allocation10 + $0x24] sm:$0xff]
    %v134 = vld [vmem:[#allocation10 + $0x2c] sm:$0xff]
    %v135 = vld [vmem:[#allocation10 + $0x34] sm:$0xff]
    %v136 = vld [vmem:[#allocation10 + $0x3c] sm:$0xff]
    %v137 = vld [vmem:[#allocation10 + $0x44] sm:$0xf]
    %v138 = vld [vmem:[#allocation10 + $0x48] sm:$0xff]
    %v139 = vld [vmem:[#allocation10 + $0x50] sm:$0xff]
    %v140 = vld [vmem:[#allocation10 + $0x58] sm:$0xff]
    %v141 = vld [vmem:[#allocation10 + $0x60] sm:$0xff]
    %v142 = vld [vmem:[#allocation10 + $0x68] sm:$0xf]
    %v143 = vld [vmem:[#allocation10 + $0x6c] sm:$0xff]
    %v144 = vld [vmem:[#allocation10 + $0x74] sm:$0xff]
    %v145 = vld [vmem:[#allocation10 + $0x7c] sm:$0xff]
    %v146 = vld [vmem:[#allocation10 + $0x84] sm:$0xff]
    %v147 = vld [vmem:[#allocation10 + $0x8c] sm:$0xf]
    %v148 = vld [vmem:[#allocation10 + $0x90] sm:$0xff]
    %v149 = vld [vmem:[#allocation10 + $0x98] sm:$0xff]
    %v150 = vld [vmem:[#allocation10 + $0xa0] sm:$0xff]
    %v151 = vld [vmem:[#allocation10 + $0xa8] sm:$0xff]
    %v152 = vld [vmem:[#allocation10 + $0xb0] sm:$0xf]
    %v153 = vld [vmem:[#allocation10 + $0xb4] sm:$0xff]
    %v154 = vld [vmem:[#allocation10 + $0xbc] sm:$0xff]
    %v155 = vld [vmem:[#allocation10 + $0xc4] sm:$0xff]
    %v156 = vld [vmem:[#allocation10 + $0xcc] sm:$0xff]
    %v157 = vld [vmem:[#allocation10 + $0xd4] sm:$0xf]
    %v158 = vld [vmem:[#allocation10 + $0xd8] sm:$0xff]
    %v159 = vld [vmem:[#allocation10 + $0xe0] sm:$0xff]
    %v160 = vld [vmem:[#allocation10 + $0xe8] sm:$0xff]
    %v161 = vld [vmem:[#allocation10 + $0xf0] sm:$0xff]
    %v162 = vld [vmem:[#allocation10 + $0xf8] sm:$0xf]
    %v163 = vld [vmem:[#allocation10 + $0xfc] sm:$0xff]
    %v164 = vld [vmem:[#allocation10 + $0x104] sm:$0xff]
    %v165 = vld [vmem:[#allocation10 + $0x10c] sm:$0xff]
    %v166 = vld [vmem:[#allocation10 + $0x114] sm:$0xff]
    %v167 = vld [vmem:[#allocation10 + $0x11c] sm:$0xf]
    %v168 = vld [vmem:[#allocation10 + $0x120] sm:$0xff]
    %v169 = vld [vmem:[#allocation10 + $0x128] sm:$0xff]
    %v170 = vld [vmem:[#allocation10 + $0x130] sm:$0xff]
    %v171 = vld [vmem:[#allocation10 + $0x138] sm:$0xff]
    %v172 = vld [vmem:[#allocation10 + $0x140] sm:$0xf]
    %v173 = vld [vmem:[#allocation10 + $0x144] sm:$0xff]
    %v174 = vld [vmem:[#allocation10 + $0x14c] sm:$0xff]
    %v175 = vld [vmem:[#allocation10 + $0x154] sm:$0xff]
    %v176 = vld [vmem:[#allocation10 + $0x15c] sm:$0xff]
    %v177 = vld [vmem:[#allocation10 + $0x164] sm:$0xf]
    %v178 = vld [vmem:[#allocation10 + $0x168] sm:$0xff]
    %v179 = vld [vmem:[#allocation10 + $0x170] sm:$0xff]
    %v180 = vld [vmem:[#allocation10 + $0x178] sm:$0xff]
    %v181 = vld [vmem:[#allocation10 + $0x180] sm:$0xff]
    %v182 = vld [vmem:[#allocation10 + $0x188] sm:$0xf]
    %v183 = vld [vmem:[#allocation10 + $0x18c] sm:$0xff]
    %v184 = vld [vmem:[#allocation10 + $0x194] sm:$0xff]
    %v185 = vld [vmem:[#allocation10 + $0x19c] sm:$0xff]
    %v186 = vld [vmem:[#allocation10 + $0x1a4] sm:$0xff]
    %v187 = vld [vmem:[#allocation10 + $0x1ac] sm:$0xf]
    %v188 = vld [vmem:[#allocation10 + $0x1b0] sm:$0xff]
    %v189 = vld [vmem:[#allocation10 + $0x1b8] sm:$0xff]
    %v190 = vld [vmem:[#allocation10 + $0x1c0] sm:$0xff]
    %v191 = vld [vmem:[#allocation10 + $0x1c8] sm:$0xff]
    %v192 = vld [vmem:[#allocation10 + $0x1d0] sm:$0xf]
    %v193 = vld [vmem:[#allocation10 + $0x1d4] sm:$0xff]
    %v194 = vld [vmem:[#allocation10 + $0x1dc] sm:$0xff]
    %v195 = vld [vmem:[#allocation10 + $0x1e4] sm:$0xff]
    %v196 = vld [vmem:[#allocation10 + $0x1ec] sm:$0xff]
    %v197 = vld [vmem:[#allocation10 + $0x1f4] sm:$0xf]
    %v198 = vld [vmem:[#allocation10 + $0x1f8] sm:$0xff]
    %v199 = vld [vmem:[#allocation10 + $0x200] sm:$0xff]
    %v200 = vld [vmem:[#allocation10 + $0x208] sm:$0xff]
    %v201 = vld [vmem:[#allocation10 + $0x210] sm:$0xff]
    %v202 = vld [vmem:[#allocation10 + $0x218] sm:$0xf]
    %v203 = vld [vmem:[#allocation10 + $0x21c] sm:$0xff]
    %v204 = vld [vmem:[#allocation10 + $0x224] sm:$0xff]
    %v205 = vld [vmem:[#allocation10 + $0x22c] sm:$0xff]
    %v206 = vld [vmem:[#allocation10 + $0x234] sm:$0xff]
    %v207 = vld [vmem:[#allocation10 + $0x23c] sm:$0xf]
    %v210 = vunpack.c.l.b16 %v126
    %v211 = vunpack.c.l.b16 %v127
    %v212 = vpack.c.b16 %v211, %v210
    %v294 = vunpack.c.l.b16 %v128
    %v295 = vunpack.c.h.b16 %v128
    %v296 = vunpack.c.l.b16 %v129
    %v297 = vunpack.c.h.b16 %v129
    %v298 = vunpack.c.l.b16 %v130
    %v299 = vunpack.c.h.b16 %v130
    %v300 = vunpack.c.l.b16 %v131
    %v301 = vunpack.c.h.b16 %v131
    %v302 = vunpack.c.l.b16 %v132
    %v303 = vunpack.c.l.b16 %v133
    %v304 = vunpack.c.h.b16 %v133
    %v305 = vunpack.c.l.b16 %v134
    %v306 = vunpack.c.h.b16 %v134
    %v307 = vunpack.c.l.b16 %v135
    %v308 = vunpack.c.h.b16 %v135
    %v309 = vunpack.c.l.b16 %v136
    %v310 = vunpack.c.h.b16 %v136
    %v311 = vunpack.c.l.b16 %v137
    %v312 = vunpack.c.l.b16 %v138
    %v313 = vunpack.c.h.b16 %v138
    %v314 = vunpack.c.l.b16 %v139
    %v315 = vunpack.c.h.b16 %v139
    %v316 = vunpack.c.l.b16 %v140
    %v317 = vunpack.c.h.b16 %v140
    %v318 = vunpack.c.l.b16 %v141
    %v319 = vunpack.c.h.b16 %v141
    %v320 = vunpack.c.l.b16 %v142
    %v321 = vunpack.c.l.b16 %v143
    %v322 = vunpack.c.h.b16 %v143
    %v323 = vunpack.c.l.b16 %v144
    %v324 = vunpack.c.h.b16 %v144
    %v325 = vunpack.c.l.b16 %v145
    %v326 = vunpack.c.h.b16 %v145
    %v327 = vunpack.c.l.b16 %v146
    %v328 = vunpack.c.h.b16 %v146
    %v329 = vunpack.c.l.b16 %v147
    %v330 = vunpack.c.l.b16 %v148
    %v331 = vunpack.c.h.b16 %v148
    %v332 = vunpack.c.l.b16 %v149
    %v333 = vunpack.c.h.b16 %v149
    %v334 = vunpack.c.l.b16 %v150
    %v335 = vunpack.c.h.b16 %v150
    %v336 = vunpack.c.l.b16 %v151
    %v337 = vunpack.c.h.b16 %v151
    %v338 = vunpack.c.l.b16 %v152
    %v339 = vunpack.c.l.b16 %v153
    %v340 = vunpack.c.h.b16 %v153
    %v341 = vunpack.c.l.b16 %v154
    %v342 = vunpack.c.h.b16 %v154
    %v343 = vunpack.c.l.b16 %v155
    %v344 = vunpack.c.h.b16 %v155
    %v345 = vunpack.c.l.b16 %v156
    %v346 = vunpack.c.h.b16 %v156
    %v347 = vunpack.c.l.b16 %v157
    %v348 = vunpack.c.l.b16 %v158
    %v349 = vunpack.c.h.b16 %v158
    %v350 = vunpack.c.l.b16 %v159
    %v351 = vunpack.c.h.b16 %v159
    %v352 = vunpack.c.l.b16 %v160
    %v353 = vunpack.c.h.b16 %v160
    %v354 = vunpack.c.l.b16 %v161
    %v355 = vunpack.c.h.b16 %v161
    %v356 = vunpack.c.l.b16 %v162
    %v357 = vunpack.c.l.b16 %v163
    %v358 = vunpack.c.h.b16 %v163
    %v359 = vunpack.c.l.b16 %v164
    %v360 = vunpack.c.h.b16 %v164
    %v361 = vunpack.c.l.b16 %v165
    %v362 = vunpack.c.h.b16 %v165
    %v363 = vunpack.c.l.b16 %v166
    %v364 = vunpack.c.h.b16 %v166
    %v365 = vunpack.c.l.b16 %v167
    %v366 = vunpack.c.l.b16 %v168
    %v367 = vunpack.c.h.b16 %v168
    %v368 = vunpack.c.l.b16 %v169
    %v369 = vunpack.c.h.b16 %v169
    %v370 = vunpack.c.l.b16 %v170
    %v371 = vunpack.c.h.b16 %v170
    %v372 = vunpack.c.l.b16 %v171
    %v373 = vunpack.c.h.b16 %v171
    %v374 = vunpack.c.l.b16 %v172
    %v375 = vunpack.c.l.b16 %v173
    %v376 = vunpack.c.h.b16 %v173
    %v377 = vunpack.c.l.b16 %v174
    %v378 = vunpack.c.h.b16 %v174
    %v379 = vunpack.c.l.b16 %v175
    %v380 = vunpack.c.h.b16 %v175
    %v381 = vunpack.c.l.b16 %v176
    %v382 = vunpack.c.h.b16 %v176
    %v383 = vunpack.c.l.b16 %v177
    %v384 = vunpack.c.l.b16 %v178
    %v385 = vunpack.c.h.b16 %v178
    %v386 = vunpack.c.l.b16 %v179
    %v387 = vunpack.c.h.b16 %v179
    %v388 = vunpack.c.l.b16 %v180
    %v389 = vunpack.c.h.b16 %v180
    %v390 = vunpack.c.l.b16 %v181
    %v391 = vunpack.c.h.b16 %v181
    %v392 = vunpack.c.l.b16 %v182
    %v393 = vunpack.c.l.b16 %v183
    %v394 = vunpack.c.h.b16 %v183
    %v395 = vunpack.c.l.b16 %v184
    %v396 = vunpack.c.h.b16 %v184
    %v397 = vunpack.c.l.b16 %v185
    %v398 = vunpack.c.h.b16 %v185
    %v399 = vunpack.c.l.b16 %v186
    %v400 = vunpack.c.h.b16 %v186
    %v401 = vunpack.c.l.b16 %v187
    %v402 = vunpack.c.l.b16 %v188
    %v403 = vunpack.c.h.b16 %v188
    %v404 = vunpack.c.l.b16 %v189
    %v405 = vunpack.c.h.b16 %v189
    %v406 = vunpack.c.l.b16 %v190
    %v407 = vunpack.c.h.b16 %v190
    %v408 = vunpack.c.l.b16 %v191
    %v409 = vunpack.c.h.b16 %v191
    %v410 = vunpack.c.l.b16 %v192
    %v411 = vunpack.c.l.b16 %v193
    %v412 = vunpack.c.h.b16 %v193
    %v413 = vunpack.c.l.b16 %v194
    %v414 = vunpack.c.h.b16 %v194
    %v415 = vunpack.c.l.b16 %v195
    %v416 = vunpack.c.h.b16 %v195
    %v417 = vunpack.c.l.b16 %v196
    %v418 = vunpack.c.h.b16 %v196
    %v419 = vunpack.c.l.b16 %v197
    %v420 = vunpack.c.l.b16 %v198
    %v421 = vunpack.c.h.b16 %v198
    %v422 = vunpack.c.l.b16 %v199
    %v423 = vunpack.c.h.b16 %v199
    %v424 = vunpack.c.l.b16 %v200
    %v425 = vunpack.c.h.b16 %v200
    %v426 = vunpack.c.l.b16 %v201
    %v427 = vunpack.c.h.b16 %v201
    %v428 = vunpack.c.l.b16 %v202
    %v429 = vunpack.c.l.b16 %v203
    %v430 = vunpack.c.h.b16 %v203
    %v431 = vunpack.c.l.b16 %v204
    %v432 = vunpack.c.h.b16 %v204
    %v433 = vunpack.c.l.b16 %v205
    %v434 = vunpack.c.h.b16 %v205
    %v435 = vunpack.c.l.b16 %v206
    %v436 = vunpack.c.h.b16 %v206
    %v437 = vunpack.c.l.b16 %v207
    %v438 = vpack.c.b16 %v303, %v294
    %v439 = vpack.c.b16 %v304, %v295
    %v440 = vpack.c.b16 %v305, %v296
    %v441 = vpack.c.b16 %v306, %v297
    %v442 = vpack.c.b16 %v307, %v298
    %v443 = vpack.c.b16 %v308, %v299
    %v444 = vpack.c.b16 %v309, %v300
    %v445 = vpack.c.b16 %v310, %v301
    %v446 = vpack.c.b16 %v311, %v302
    %v447 = vpack.c.b16 %v321, %v312
    %v448 = vpack.c.b16 %v322, %v313
    %v449 = vpack.c.b16 %v323, %v314
    %v450 = vpack.c.b16 %v324, %v315
    %v451 = vpack.c.b16 %v325, %v316
    %v452 = vpack.c.b16 %v326, %v317
    %v453 = vpack.c.b16 %v327, %v318
    %v454 = vpack.c.b16 %v328, %v319
    %v455 = vpack.c.b16 %v329, %v320
    %v456 = vpack.c.b16 %v339, %v330
    %v457 = vpack.c.b16 %v340, %v331
    %v458 = vpack.c.b16 %v341, %v332
    %v459 = vpack.c.b16 %v342, %v333
    %v460 = vpack.c.b16 %v343, %v334
    %v461 = vpack.c.b16 %v344, %v335
    %v462 = vpack.c.b16 %v345, %v336
    %v463 = vpack.c.b16 %v346, %v337
    %v464 = vpack.c.b16 %v347, %v338
    %v465 = vpack.c.b16 %v357, %v348
    %v466 = vpack.c.b16 %v358, %v349
    %v467 = vpack.c.b16 %v359, %v350
    %v468 = vpack.c.b16 %v360, %v351
    %v469 = vpack.c.b16 %v361, %v352
    %v470 = vpack.c.b16 %v362, %v353
    %v471 = vpack.c.b16 %v363, %v354
    %v472 = vpack.c.b16 %v364, %v355
    %v473 = vpack.c.b16 %v365, %v356
    %v474 = vpack.c.b16 %v375, %v366
    %v475 = vpack.c.b16 %v376, %v367
    %v476 = vpack.c.b16 %v377, %v368
    %v477 = vpack.c.b16 %v378, %v369
    %v478 = vpack.c.b16 %v379, %v370
    %v479 = vpack.c.b16 %v380, %v371
    %v480 = vpack.c.b16 %v381, %v372
    %v481 = vpack.c.b16 %v382, %v373
    %v482 = vpack.c.b16 %v383, %v374
    %v483 = vpack.c.b16 %v393, %v384
    %v484 = vpack.c.b16 %v394, %v385
    %v485 = vpack.c.b16 %v395, %v386
    %v486 = vpack.c.b16 %v396, %v387
    %v487 = vpack.c.b16 %v397, %v388
    %v488 = vpack.c.b16 %v398, %v389
    %v489 = vpack.c.b16 %v399, %v390
    %v490 = vpack.c.b16 %v400, %v391
    %v491 = vpack.c.b16 %v401, %v392
    %v492 = vpack.c.b16 %v411, %v402
    %v493 = vpack.c.b16 %v412, %v403
    %v494 = vpack.c.b16 %v413, %v404
    %v495 = vpack.c.b16 %v414, %v405
    %v496 = vpack.c.b16 %v415, %v406
    %v497 = vpack.c.b16 %v416, %v407
    %v498 = vpack.c.b16 %v417, %v408
    %v499 = vpack.c.b16 %v418, %v409
    %v500 = vpack.c.b16 %v419, %v410
    %v501 = vpack.c.b16 %v429, %v420
    %v502 = vpack.c.b16 %v430, %v421
    %v503 = vpack.c.b16 %v431, %v422
    %v504 = vpack.c.b16 %v432, %v423
    %v505 = vpack.c.b16 %v433, %v424
    %v506 = vpack.c.b16 %v434, %v425
    %v507 = vpack.c.b16 %v435, %v426
    %v508 = vpack.c.b16 %v436, %v427
    %v509 = vpack.c.b16 %v437, %v428
    %582 = vmatprep.subr.bf16.mxu0 %v439
    %583 = vmatpush1.bf16.msra.mxu0 %v438
    %584 = vmatprep.subr.bf16.mxu0 %v448
    %585 = vmatpush1.bf16.msra.mxu0 %v447
    %586 = vmatprep.subr.bf16.mxu0 %v457
    %587 = vmatpush1.bf16.msra.mxu0 %v456
    %588 = vmatprep.subr.bf16.mxu0 %v466
    %589 = vmatpush1.bf16.msra.mxu0 %v465
    %590 = vmatprep.subr.bf16.mxu0 %v475
    %591 = vmatpush1.bf16.msra.mxu0 %v474
    %592 = vmatprep.subr.bf16.mxu0 %v484
    %593 = vmatpush1.bf16.msra.mxu0 %v483
    %594 = vmatprep.subr.bf16.mxu0 %v493
    %595 = vmatpush1.bf16.msra.mxu0 %v492
    %596 = vmatprep.subr.bf16.mxu0 %v502
    %597 = vmatpush1.bf16.msra.mxu0 %v501
    %598 = vmatprep.subr.bf16.mxu0 0
    %599 = vmatpush1.bf16.msra.mxu0 0
    %600 = vmatprep.subr.bf16.mxu0 0
    %601 = vmatpush1.bf16.msra.mxu0 0
    %602 = vmatprep.subr.bf16.mxu0 0
    %603 = vmatpush1.bf16.msra.mxu0 0
    %604 = vmatprep.subr.bf16.mxu0 0
    %605 = vmatpush1.bf16.msra.mxu0 0
    %606 = vmatprep.subr.bf16.mxu0 0
    %607 = vmatpush1.bf16.msra.mxu0 0
    %608 = vmatprep.subr.bf16.mxu0 0
    %609 = vmatpush1.bf16.msra.mxu0 0
    %610 = vmatprep.subr.bf16.mxu0 0
    %611 = vmatpush1.bf16.msra.mxu0 0
    %612 = vmatprep.subr.bf16.mxu0 0
    %613 = vmatpush1.bf16.msra.mxu0 0
    %614 = vmatprep.mubr.bf16.mxu0 0
    %615 = vmatmul.mubr.bf16.gmra.mrb[0].mxu0 %v212
    %v616 = vpop.f32.mrb[0].mxu0
    %v617 = vadd.f32 0.0, %v616
    %v618 = vpop.f32.mrb[0].mxu0
    %v619 = vadd.f32 0.0, %v618
    %v620 = vpop.f32.mrb[0].mxu0
    %v621 = vadd.f32 0.0, %v620
    %v622 = vpop.f32.mrb[0].mxu0
    %v623 = vadd.f32 0.0, %v622
    %624 = vdwg.mxu0
    %625 = vmatprep.subr.bf16.mxu0 %v441
    %626 = vmatpush1.bf16.msra.mxu0 %v440
    %627 = vmatprep.subr.bf16.mxu0 %v450
    %628 = vmatpush1.bf16.msra.mxu0 %v449
    %629 = vmatprep.subr.bf16.mxu0 %v459
    %630 = vmatpush1.bf16.msra.mxu0 %v458
    %631 = vmatprep.subr.bf16.mxu0 %v468
    %632 = vmatpush1.bf16.msra.mxu0 %v467
    %633 = vmatprep.subr.bf16.mxu0 %v477
    %634 = vmatpush1.bf16.msra.mxu0 %v476
    %635 = vmatprep.subr.bf16.mxu0 %v486
    %636 = vmatpush1.bf16.msra.mxu0 %v485
    %637 = vmatprep.subr.bf16.mxu0 %v495
    %638 = vmatpush1.bf16.msra.mxu0 %v494
    %639 = vmatprep.subr.bf16.mxu0 %v504
    %640 = vmatpush1.bf16.msra.mxu0 %v503
    %641 = vmatprep.subr.bf16.mxu0 0
    %642 = vmatpush1.bf16.msra.mxu0 0
    %643 = vmatprep.subr.bf16.mxu0 0
    %644 = vmatpush1.bf16.msra.mxu0 0
    %645 = vmatprep.subr.bf16.mxu0 0
    %646 = vmatpush1.bf16.msra.mxu0 0
    %647 = vmatprep.subr.bf16.mxu0 0
    %648 = vmatpush1.bf16.msra.mxu0 0
    %649 = vmatprep.subr.bf16.mxu0 0
    %650 = vmatpush1.bf16.msra.mxu0 0
    %651 = vmatprep.subr.bf16.mxu0 0
    %652 = vmatpush1.bf16.msra.mxu0 0
    %653 = vmatprep.subr.bf16.mxu0 0
    %654 = vmatpush1.bf16.msra.mxu0 0
    %655 = vmatprep.subr.bf16.mxu0 0
    %656 = vmatpush1.bf16.msra.mxu0 0
    %657 = vmatprep.mubr.bf16.mxu0 0
    %658 = vmatmul.mubr.bf16.gmra.mrb[0].mxu0 %v212
    %v659 = vpop.f32.mrb[0].mxu0
    %v660 = vadd.f32 0.0, %v659
    %v661 = vpop.f32.mrb[0].mxu0
    %v662 = vadd.f32 0.0, %v661
    %v663 = vpop.f32.mrb[0].mxu0
    %v664 = vadd.f32 0.0, %v663
    %v665 = vpop.f32.mrb[0].mxu0
    %v666 = vadd.f32 0.0, %v665
    %667 = vdwg.mxu0
    %668 = vmatprep.subr.bf16.mxu0 %v443
    %669 = vmatpush1.bf16.msra.mxu0 %v442
    %670 = vmatprep.subr.bf16.mxu0 %v452
    %671 = vmatpush1.bf16.msra.mxu0 %v451
    %672 = vmatprep.subr.bf16.mxu0 %v461
    %673 = vmatpush1.bf16.msra.mxu0 %v460
    %674 = vmatprep.subr.bf16.mxu0 %v470
    %675 = vmatpush1.bf16.msra.mxu0 %v469
    %676 = vmatprep.subr.bf16.mxu0 %v479
    %677 = vmatpush1.bf16.msra.mxu0 %v478
    %678 = vmatprep.subr.bf16.mxu0 %v488
    %679 = vmatpush1.bf16.msra.mxu0 %v487
    %680 = vmatprep.subr.bf16.mxu0 %v497
    %681 = vmatpush1.bf16.msra.mxu0 %v496
    %682 = vmatprep.subr.bf16.mxu0 %v506
    %683 = vmatpush1.bf16.msra.mxu0 %v505
    %684 = vmatprep.subr.bf16.mxu0 0
    %685 = vmatpush1.bf16.msra.mxu0 0
    %686 = vmatprep.subr.bf16.mxu0 0
    %687 = vmatpush1.bf16.msra.mxu0 0
    %688 = vmatprep.subr.bf16.mxu0 0
    %689 = vmatpush1.bf16.msra.mxu0 0
    %690 = vmatprep.subr.bf16.mxu0 0
    %691 = vmatpush1.bf16.msra.mxu0 0
    %692 = vmatprep.subr.bf16.mxu0 0
    %693 = vmatpush1.bf16.msra.mxu0 0
    %694 = vmatprep.subr.bf16.mxu0 0
    %695 = vmatpush1.bf16.msra.mxu0 0
    %696 = vmatprep.subr.bf16.mxu0 0
    %697 = vmatpush1.bf16.msra.mxu0 0
    %698 = vmatprep.subr.bf16.mxu0 0
    %699 = vmatpush1.bf16.msra.mxu0 0
    %700 = vmatprep.mubr.bf16.mxu0 0
    %701 = vmatmul.mubr.bf16.gmra.mrb[0].mxu0 %v212
    %v702 = vpop.f32.mrb[0].mxu0
    %v703 = vadd.f32 0.0, %v702
    %v704 = vpop.f32.mrb[0].mxu0
    %v705 = vadd.f32 0.0, %v704
    %v706 = vpop.f32.mrb[0].mxu0
    %v707 = vadd.f32 0.0, %v706
    %v708 = vpop.f32.mrb[0].mxu0
    %v709 = vadd.f32 0.0, %v708
    %710 = vdwg.mxu0
    %711 = vmatprep.subr.bf16.mxu0 %v445
    %712 = vmatpush1.bf16.msra.mxu0 %v444
    %713 = vmatprep.subr.bf16.mxu0 %v454
    %714 = vmatpush1.bf16.msra.mxu0 %v453
    %715 = vmatprep.subr.bf16.mxu0 %v463
    %716 = vmatpush1.bf16.msra.mxu0 %v462
    %717 = vmatprep.subr.bf16.mxu0 %v472
    %718 = vmatpush1.bf16.msra.mxu0 %v471
    %719 = vmatprep.subr.bf16.mxu0 %v481
    %720 = vmatpush1.bf16.msra.mxu0 %v480
    %721 = vmatprep.subr.bf16.mxu0 %v490
    %722 = vmatpush1.bf16.msra.mxu0 %v489
    %723 = vmatprep.subr.bf16.mxu0 %v499
    %724 = vmatpush1.bf16.msra.mxu0 %v498
    %725 = vmatprep.subr.bf16.mxu0 %v508
    %726 = vmatpush1.bf16.msra.mxu0 %v507
    %727 = vmatprep.subr.bf16.mxu0 0
    %728 = vmatpush1.bf16.msra.mxu0 0
    %729 = vmatprep.subr.bf16.mxu0 0
    %730 = vmatpush1.bf16.msra.mxu0 0
    %731 = vmatprep.subr.bf16.mxu0 0
    %732 = vmatpush1.bf16.msra.mxu0 0
    %733 = vmatprep.subr.bf16.mxu0 0
    %734 = vmatpush1.bf16.msra.mxu0 0
    %735 = vmatprep.subr.bf16.mxu0 0
    %736 = vmatpush1.bf16.msra.mxu0 0
    %737 = vmatprep.subr.bf16.mxu0 0
    %738 = vmatpush1.bf16.msra.mxu0 0
    %739 = vmatprep.subr.bf16.mxu0 0
    %740 = vmatpush1.bf16.msra.mxu0 0
    %741 = vmatprep.subr.bf16.mxu0 0
    %742 = vmatpush1.bf16.msra.mxu0 0
    %743 = vmatprep.mubr.bf16.mxu0 0
    %744 = vmatmul.mubr.bf16.gmra.mrb[0].mxu0 %v212
    %v745 = vpop.f32.mrb[0].mxu0
    %v746 = vadd.f32 0.0, %v745
    %v747 = vpop.f32.mrb[0].mxu0
    %v748 = vadd.f32 0.0, %v747
    %v749 = vpop.f32.mrb[0].mxu0
    %v750 = vadd.f32 0.0, %v749
    %v751 = vpop.f32.mrb[0].mxu0
    %v752 = vadd.f32 0.0, %v751
    %753 = vdwg.mxu0
    %754 = vmatprep.subr.bf16.mxu0 0
    %755 = vmatpush1.bf16.msra.mxu0 %v446
    %756 = vmatprep.subr.bf16.mxu0 0
    %757 = vmatpush1.bf16.msra.mxu0 %v455
    %758 = vmatprep.subr.bf16.mxu0 0
    %759 = vmatpush1.bf16.msra.mxu0 %v464
    %760 = vmatprep.subr.bf16.mxu0 0
    %761 = vmatpush1.bf16.msra.mxu0 %v473
    %762 = vmatprep.subr.bf16.mxu0 0
    %763 = vmatpush1.bf16.msra.mxu0 %v482
    %764 = vmatprep.subr.bf16.mxu0 0
    %765 = vmatpush1.bf16.msra.mxu0 %v491
    %766 = vmatprep.subr.bf16.mxu0 0
    %767 = vmatpush1.bf16.msra.mxu0 %v500
    %768 = vmatprep.subr.bf16.mxu0 0
    %769 = vmatpush1.bf16.msra.mxu0 %v509
    %770 = vmatprep.subr.bf16.mxu0 0
    %771 = vmatpush1.bf16.msra.mxu0 0
    %772 = vmatprep.subr.bf16.mxu0 0
    %773 = vmatpush1.bf16.msra.mxu0 0
    %774 = vmatprep.subr.bf16.mxu0 0
    %775 = vmatpush1.bf16.msra.mxu0 0
    %776 = vmatprep.subr.bf16.mxu0 0
    %777 = vmatpush1.bf16.msra.mxu0 0
    %778 = vmatprep.subr.bf16.mxu0 0
    %779 = vmatpush1.bf16.msra.mxu0 0
    %780 = vmatprep.subr.bf16.mxu0 0
    %781 = vmatpush1.bf16.msra.mxu0 0
    %782 = vmatprep.subr.bf16.mxu0 0
    %783 = vmatpush1.bf16.msra.mxu0 0
    %784 = vmatprep.subr.bf16.mxu0 0
    %785 = vmatpush1.bf16.msra.mxu0 0
    %786 = vmatprep.mubr.bf16.mxu0 0
    %787 = vmatmul.mubr.bf16.gmra.mrb[0].mxu0 %v212
    %v788 = vpop.f32.mrb[0].mxu0
    %v789 = vadd.f32 0.0, %v788
    %v790 = vpop.f32.mrb[0].mxu0
    %v791 = vpop.f32.mrb[0].mxu0
    %v792 = vadd.f32 0.0, %v791
    %v793 = vpop.f32.mrb[0].mxu0
    %794 = vdwg.mxu0
    %796 = vset.pattern.permute.xlu0 0
    %797 = vperm.xlu0 %796, %v124
    %v798 = vpop.permute.xlu0 %797
    %801 = vset.pattern.permute.xlu0 0
    %802 = vperm.xlu0 %801, %v125
    %v803 = vpop.permute.xlu0 %802
    %v805 = vmul.f32 %v798, %v617
    %v806 = vmul.f32 %v803, %v621
    %807 = vset.pattern.permute.xlu0 1
    %808 = vperm.xlu0 %807, %v124
    %v809 = vpop.permute.xlu0 %808
    %811 = vset.pattern.permute.xlu0 1
    %812 = vperm.xlu0 %811, %v125
    %v813 = vpop.permute.xlu0 %812
    %v815 = vmul.f32 %v809, %v619
    %v816 = vmul.f32 %v813, %v623
    %v817 = vadd.f32 %v805, %v815
    %v818 = vadd.f32 %v806, %v816
    %819 = vset.pattern.permute.xlu0 2
    %820 = vperm.xlu0 %819, %v124
    %v821 = vpop.permute.xlu0 %820
    %823 = vset.pattern.permute.xlu0 2
    %824 = vperm.xlu0 %823, %v125
    %v825 = vpop.permute.xlu0 %824
    %v827 = vmul.f32 %v821, %v660
    %v828 = vmul.f32 %v825, %v664
    %v829 = vadd.f32 %v817, %v827
    %v830 = vadd.f32 %v818, %v828
    %831 = vset.pattern.permute.xlu0 3
    %832 = vperm.xlu0 %831, %v124
    %v833 = vpop.permute.xlu0 %832
    %835 = vset.pattern.permute.xlu0 3
    %836 = vperm.xlu0 %835, %v125
    %v837 = vpop.permute.xlu0 %836
    %v839 = vmul.f32 %v833, %v662
    %v840 = vmul.f32 %v837, %v666
    %v841 = vadd.f32 %v829, %v839
    %v842 = vadd.f32 %v830, %v840
    %843 = vset.pattern.permute.xlu0 4
    %844 = vperm.xlu0 %843, %v124
    %v845 = vpop.permute.xlu0 %844
    %847 = vset.pattern.permute.xlu0 4
    %848 = vperm.xlu0 %847, %v125
    %v849 = vpop.permute.xlu0 %848
    %v851 = vmul.f32 %v845, %v703
    %v852 = vmul.f32 %v849, %v707
    %v853 = vadd.f32 %v841, %v851
    %v854 = vadd.f32 %v842, %v852
    %855 = vset.pattern.permute.xlu0 5
    %856 = vperm.xlu0 %855, %v124
    %v857 = vpop.permute.xlu0 %856
    %859 = vset.pattern.permute.xlu0 5
    %860 = vperm.xlu0 %859, %v125
    %v861 = vpop.permute.xlu0 %860
    %v863 = vmul.f32 %v857, %v705
    %v864 = vmul.f32 %v861, %v709
    %v865 = vadd.f32 %v853, %v863
    %v866 = vadd.f32 %v854, %v864
    %867 = vset.pattern.permute.xlu0 6
    %868 = vperm.xlu0 %867, %v124
    %v869 = vpop.permute.xlu0 %868
    %871 = vset.pattern.permute.xlu0 6
    %872 = vperm.xlu0 %871, %v125
    %v873 = vpop.permute.xlu0 %872
    %v875 = vmul.f32 %v869, %v746
    %v876 = vmul.f32 %v873, %v750
    %v877 = vadd.f32 %v865, %v875
    %v878 = vadd.f32 %v866, %v876
    %879 = vset.pattern.permute.xlu0 7
    %880 = vperm.xlu0 %879, %v124
    %v881 = vpop.permute.xlu0 %880
    %883 = vset.pattern.permute.xlu0 7
    %884 = vperm.xlu0 %883, %v125
    %v885 = vpop.permute.xlu0 %884
    %v887 = vmul.f32 %v881, %v748
    %v888 = vmul.f32 %v885, %v752
    %v889 = vadd.f32 %v877, %v887
    %v890 = vadd.f32 %v878, %v888
    %891 = vset.pattern.permute.xlu0 8
    %892 = vperm.xlu0 %891, %v124
    %v893 = vpop.permute.xlu0 %892
    %895 = vset.pattern.permute.xlu0 8
    %896 = vperm.xlu0 %895, %v125
    %v897 = vpop.permute.xlu0 %896
    %v899 = vmul.f32 %v893, %v789
    %v900 = vmul.f32 %v897, %v792
    %v901 = vadd.f32 %v889, %v899
    %v902 = vadd.f32 %v890, %v900
    %903 = vst [vmem:[#allocation11] sm:$0xff] %v901
    %904 = vst [vmem:[#allocation11 + $0x8] sm:$0xff] %v902
    // Predicated region
    $region42: #{dual_gnn_forward.21} parent=1 // pred_check
      _
    $region43: #{dual_gnn_forward.21} parent=1 // pred_check_branch
      %906 = sbr.rel (0) target = $region45
    $region44: #{dual_gnn_forward.21} parent=1 // pred_region
      %s908 = ssub.s32 256, 256
      %909 = vsyncadd [#allocation4], %s908
      %s910 = sshll.u32 [#allocation11], 4
      %s911 = int_to_ptr.vmem [resolvable:$true] %s910
      %916 = dma.vmem_to_hbm [thread:$0]  %s911, 256, %s5, [#allocation4], 128, 128, 8
    $region45: #{dual_gnn_forward.21} parent=1 // pred_fallthru
      _
    // Predicated region
    $region46: #{dual_gnn_forward.21} parent=1 // pred_check
      _
    $region47: #{dual_gnn_forward.21} parent=1 // pred_check_branch
      %918 = sbr.rel (0) target = $region49
    $region48: #{dual_gnn_forward.21} parent=1 // pred_region
      %919 = dma.done [#allocation4], 256
    $region49: #{dual_gnn_forward.21} parent=1 // pred_fallthru
      _
    %920 = vsyncpa [#allocation3], 1
    %921 = vsyncpa [#allocation6], 1
    %922 = vsyncpa [#allocation9], 1
    %923 = vsyncpa [#allocation4], 1

// kernel: dual_gnn_forward.24
$region0: #{dual_gnn_forward.24}
  #allocation0 [shape = 'u32[]', space=smem, size = 0x4, offset = 0x4, fixed_abs, tag = 'smem constant byte address 0x4 - core index']
  #allocation1 [shape = 'u32[144,128]{1,0:T(1,128)}', space=vmem, size = 0x12000, scoped, tag = 'internal scratch']
  %s0 = inlined_call_operand.hbm [shape: f32[48,9], index: 0, kind: input, shape index: {}]
  %s1 = inlined_call_operand.hbm [shape: f32[48,9], index: 1, kind: input, shape index: {}]
  %s2 = inlined_call_operand.hbm [shape: bf16[48,64], index: 2, kind: input, shape index: {}]
  %s3 = inlined_call_operand.hbm [shape: f32[1,9], index: 3, kind: input, shape index: {}]
  %s4 = inlined_call_operand.hbm [shape: bf16[64,288], index: 4, kind: input, shape index: {}]
  %s5 = inlined_call_operand.hbm [shape: f32[48,32], index: 5, kind: output, shape index: {}]
  %s6 = sld [smem:[#allocation0]]
  $region50: #{dual_gnn_forward.24} parent=0
    _
  %s8 = ssub.s32 1, %s6
  %s9 = scalar_select 0, %s8, %s6
  $region1: #{dual_gnn_forward.24} parent=0
    #allocation2 [shape = 'u8[24576]{0}', space=vmem, size = 0x6000, scoped, tag = 'input window, operand 0, single buffered']
    #allocation3 [shape = 's32[1]{0}', space=sflag, size = 0x4, scoped, tag = 'scoped memory for dual_gnn_forward.24']
    #allocation4 [shape = 's32[1]{0}', space=sflag, size = 0x4, scoped, tag = 'scoped memory for dual_gnn_forward.24']
    #allocation5 [shape = 'u8[24576]{0}', space=vmem, size = 0x6000, scoped, tag = 'input window, operand 1, single buffered']
    #allocation6 [shape = 's32[1]{0}', space=sflag, size = 0x4, scoped, tag = 'scoped memory for dual_gnn_forward.24']
    #allocation7 [shape = 'u8[12288]{0}', space=vmem, size = 0x3000, scoped, tag = 'input window, operand 2, single buffered']
    #allocation8 [shape = 'u8[512]{0}', space=vmem, size = 0x400, scoped, tag = 'input window, operand 3, single buffered']
    #allocation9 [shape = 's32[1]{0}', space=sflag, size = 0x4, scoped, tag = 'scoped memory for dual_gnn_forward.24']
    #allocation10 [shape = 'u8[49152]{0}', space=vmem, size = 0xc000, scoped, tag = 'input window, operand 4, single buffered']
    #allocation11 [shape = 'u8[24576]{0}', space=vmem, size = 0x6000, scoped, tag = 'output window, operand 0, single buffered']
    %10 = vsyncpa [#allocation3], 0
    %11 = vsyncpa [#allocation6], 0
    %12 = vsyncpa [#allocation9], 0
    %13 = vsyncpa [#allocation4], 0
    // Predicated region
    $region2: #{dual_gnn_forward.24} parent=1 // pred_check
      _
    $region3: #{dual_gnn_forward.24} parent=1 // pred_check_branch
      %15 = sbr.rel (0) target = $region5
    $region4: #{dual_gnn_forward.24} parent=1 // pred_region
      %s17 = ssub.s32 768, 768
      %18 = vsyncadd [#allocation3], %s17
      %s19 = sshll.u32 [#allocation2], 4
      %s20 = int_to_ptr.vmem [resolvable:$true] %s19
      %25 = dma.hbm_to_vmem [thread:$0]  %s0, 768, %s20, [#allocation3], 128, 128, 8
    $region5: #{dual_gnn_forward.24} parent=1 // pred_fallthru
      _
    // Predicated region
    $region6: #{dual_gnn_forward.24} parent=1 // pred_check
      _
    $region7: #{dual_gnn_forward.24} parent=1 // pred_check_branch
      %27 = sbr.rel (0) target = $region9
    $region8: #{dual_gnn_forward.24} parent=1 // pred_region
      %s29 = ssub.s32 768, 768
      %30 = vsyncadd [#allocation6], %s29
      %s31 = sshll.u32 [#allocation5], 4
      %s32 = int_to_ptr.vmem [resolvable:$true] %s31
      %37 = dma.hbm_to_vmem [thread:$0]  %s1, 768, %s32, [#allocation6], 128, 128, 8
    $region9: #{dual_gnn_forward.24} parent=1 // pred_fallthru
      _
    // Predicated region
    $region10: #{dual_gnn_forward.24} parent=1 // pred_check
      _
    $region11: #{dual_gnn_forward.24} parent=1 // pred_check_branch
      %39 = sbr.rel (0) target = $region13
    $region12: #{dual_gnn_forward.24} parent=1 // pred_region
      %s41 = ssub.s32 384, 384
      %42 = vsyncadd [#allocation6], %s41
      %s43 = sshll.u32 [#allocation7], 4
      %s44 = int_to_ptr.vmem [resolvable:$true] %s43
      %49 = dma.hbm_to_vmem [thread:$0]  %s2, 384, %s44, [#allocation6], 64, 64, 4
    $region13: #{dual_gnn_forward.24} parent=1 // pred_fallthru
      _
    // Predicated region
    $region14: #{dual_gnn_forward.24} parent=1 // pred_check
      _
    $region15: #{dual_gnn_forward.24} parent=1 // pred_check_branch
      %51 = sbr.rel (0) target = $region17
    $region16: #{dual_gnn_forward.24} parent=1 // pred_region
      %s53 = ssub.s32 16, 16
      %54 = vsyncadd [#allocation9], %s53
      %s56 = sshll.u32 [#allocation8], 4
      %s57 = int_to_ptr.vmem [resolvable:$true] %s56
      %59 = dma.hbm_to_vmem [thread:$0]  %s3, 16, %s57, [#allocation9]
    $region17: #{dual_gnn_forward.24} parent=1 // pred_fallthru
      _
    // Predicated region
    $region18: #{dual_gnn_forward.24} parent=1 // pred_check
      _
    $region19: #{dual_gnn_forward.24} parent=1 // pred_check_branch
      %61 = sbr.rel (0) target = $region21
    $region20: #{dual_gnn_forward.24} parent=1 // pred_region
      %s63 = ssub.s32 1536, 1536
      %64 = vsyncadd [#allocation9], %s63
      %s65 = sshll.u32 [#allocation10], 4
      %s66 = int_to_ptr.vmem [resolvable:$true] %s65
      %71 = dma.hbm_to_vmem [thread:$0]  %s4, 1536, %s66, [#allocation9], 192, 192, 12
    $region21: #{dual_gnn_forward.24} parent=1 // pred_fallthru
      _
    // Predicated region
    $region22: #{dual_gnn_forward.24} parent=1 // pred_check
      _
    $region23: #{dual_gnn_forward.24} parent=1 // pred_check_branch
      %73 = sbr.rel (0) target = $region25
    $region24: #{dual_gnn_forward.24} parent=1 // pred_region
      %74 = dma.done [#allocation3], 768
    $region25: #{dual_gnn_forward.24} parent=1 // pred_fallthru
      _
    // Predicated region
    $region26: #{dual_gnn_forward.24} parent=1 // pred_check
      _
    $region27: #{dual_gnn_forward.24} parent=1 // pred_check_branch
      %76 = sbr.rel (0) target = $region29
    $region28: #{dual_gnn_forward.24} parent=1 // pred_region
      %77 = dma.done [#allocation6], 768
    $region29: #{dual_gnn_forward.24} parent=1 // pred_fallthru
      _
    // Predicated region
    $region30: #{dual_gnn_forward.24} parent=1 // pred_check
      _
    $region31: #{dual_gnn_forward.24} parent=1 // pred_check_branch
      %79 = sbr.rel (0) target = $region33
    $region32: #{dual_gnn_forward.24} parent=1 // pred_region
      %80 = dma.done [#allocation6], 384
    $region33: #{dual_gnn_forward.24} parent=1 // pred_fallthru
      _
    // Predicated region
    $region34: #{dual_gnn_forward.24} parent=1 // pred_check
      _
    $region35: #{dual_gnn_forward.24} parent=1 // pred_check_branch
      %82 = sbr.rel (0) target = $region37
    $region36: #{dual_gnn_forward.24} parent=1 // pred_region
      %83 = dma.done [#allocation9], 16
    $region37: #{dual_gnn_forward.24} parent=1 // pred_fallthru
      _
    // Predicated region
    $region38: #{dual_gnn_forward.24} parent=1 // pred_check
      _
    $region39: #{dual_gnn_forward.24} parent=1 // pred_check_branch
      %85 = sbr.rel (0) target = $region41
    $region40: #{dual_gnn_forward.24} parent=1 // pred_region
      %86 = dma.done [#allocation9], 1536
    $region41: #{dual_gnn_forward.24} parent=1 // pred_fallthru
      _
    %v88 = vld [vmem:[#allocation2] sm:$0xff]
    %v89 = vld [vmem:[#allocation2 + $0x8] sm:$0xff]
    %v90 = vld [vmem:[#allocation2 + $0x10] sm:$0xff]
    %v91 = vld [vmem:[#allocation2 + $0x18] sm:$0xff]
    %v92 = vld [vmem:[#allocation2 + $0x20] sm:$0xff]
    %v93 = vld [vmem:[#allocation2 + $0x28] sm:$0xff]
    %v94 = vld [vmem:[#allocation5] sm:$0xff]
    %v95 = vld [vmem:[#allocation5 + $0x8] sm:$0xff]
    %v96 = vld [vmem:[#allocation5 + $0x10] sm:$0xff]
    %v97 = vld [vmem:[#allocation5 + $0x18] sm:$0xff]
    %v98 = vld [vmem:[#allocation5 + $0x20] sm:$0xff]
    %v99 = vld [vmem:[#allocation5 + $0x28] sm:$0xff]
    %v100 = vsub.f32 %v88, %v94
    %v101 = vsub.f32 %v89, %v95
    %v102 = vsub.f32 %v90, %v96
    %v103 = vsub.f32 %v91, %v97
    %v104 = vsub.f32 %v92, %v98
    %v105 = vsub.f32 %v93, %v99
    %v106 = vld [vmem:[#allocation8] sm:$0x1]
    %v108 = vlaneseq
    %v109 = vshrl.u32 %v108, 7
    %v110 = vsub.s32 0, %v109
    %v111 = vrot.slane %v106, %v110
    %v113 = vadd.f32 %v100, %v111
    %v114 = vadd.f32 %v101, %v111
    %v115 = vadd.f32 %v102, %v111
    %v116 = vadd.f32 %v103, %v111
    %v117 = vadd.f32 %v104, %v111
    %v118 = vadd.f32 %v105, %v111
    %vm119 = vcmask 72704
    %v120 = vsel %vm119, %v113, -inf
    %121 = vmax.xlane.f32.xlu0 %v120
    %v122 = vpop.xlane.xlu0 %121
    %v123 = vsel %vm119, %v114, -inf
    %124 = vmax.xlane.f32.xlu0 %v123
    %v125 = vpop.xlane.xlu0 %124
    %v126 = vsel %vm119, %v115, -inf
    %127 = vmax.xlane.f32.xlu0 %v126
    %v128 = vpop.xlane.xlu0 %127
    %v129 = vsel %vm119, %v116, -inf
    %130 = vmax.xlane.f32.xlu0 %v129
    %v131 = vpop.xlane.xlu0 %130
    %v132 = vsel %vm119, %v117, -inf
    %133 = vmax.xlane.f32.xlu0 %v132
    %v134 = vpop.xlane.xlu0 %133
    %v135 = vsel %vm119, %v118, -inf
    %136 = vmax.xlane.f32.xlu0 %v135
    %v137 = vpop.xlane.xlu0 %136
    %v138 = vsub.f32 %v113, %v122
    %v139 = vsub.f32 %v114, %v125
    %v140 = vsub.f32 %v115, %v128
    %v141 = vsub.f32 %v116, %v131
    %v142 = vsub.f32 %v117, %v134
    %v143 = vsub.f32 %v118, %v137
    %v144 = vmul.f32 %v138, 1.442695
    %v145 = vpow.pop %v144
    %v146 = vmul.f32 %v139, 1.442695
    %v147 = vpow.pop %v146
    %v148 = vmul.f32 %v140, 1.442695
    %v149 = vpow.pop %v148
    %v150 = vmul.f32 %v141, 1.442695
    %v151 = vpow.pop %v150
    %v152 = vmul.f32 %v142, 1.442695
    %v153 = vpow.pop %v152
    %v154 = vmul.f32 %v143, 1.442695
    %v155 = vpow.pop %v154
    %v156 = vsel %vm119, %v145, 0.0
    %157 = vadd.xlane.f32.xlu0 %v156
    %v158 = vpop.xlane.xlu0 %157
    %v159 = vsel %vm119, %v147, 0.0
    %160 = vadd.xlane.f32.xlu0 %v159
    %v161 = vpop.xlane.xlu0 %160
    %v162 = vsel %vm119, %v149, 0.0
    %163 = vadd.xlane.f32.xlu0 %v162
    %v164 = vpop.xlane.xlu0 %163
    %v165 = vsel %vm119, %v151, 0.0
    %166 = vadd.xlane.f32.xlu0 %v165
    %v167 = vpop.xlane.xlu0 %166
    %v168 = vsel %vm119, %v153, 0.0
    %169 = vadd.xlane.f32.xlu0 %v168
    %v170 = vpop.xlane.xlu0 %169
    %v171 = vsel %vm119, %v155, 0.0
    %172 = vadd.xlane.f32.xlu0 %v171
    %v173 = vpop.xlane.xlu0 %172
    %v174 = vrcp.pop %v158
    %v175 = vrcp.pop %v161
    %v176 = vrcp.pop %v164
    %v177 = vrcp.pop %v167
    %v178 = vrcp.pop %v170
    %v179 = vrcp.pop %v173
    %v180 = vmul.f32 %v145, %v174
    %v181 = vmul.f32 %v147, %v175
    %v182 = vmul.f32 %v149, %v176
    %v183 = vmul.f32 %v151, %v177
    %v184 = vmul.f32 %v153, %v178
    %v185 = vmul.f32 %v155, %v179
    %v186 = vld [vmem:[#allocation7] sm:$0xf]
    %v187 = vld [vmem:[#allocation7 + $0x4] sm:$0xf]
    %v188 = vld [vmem:[#allocation7 + $0x8] sm:$0xf]
    %v189 = vld [vmem:[#allocation7 + $0xc] sm:$0xf]
    %v190 = vld [vmem:[#allocation7 + $0x10] sm:$0xf]
    %v191 = vld [vmem:[#allocation7 + $0x14] sm:$0xf]
    %v192 = vld [vmem:[#allocation10] sm:$0xff]
    %v193 = vld [vmem:[#allocation10 + $0x8] sm:$0xf]
    %v194 = vld [vmem:[#allocation10 + $0xc] sm:$0xff]
    %v195 = vld [vmem:[#allocation10 + $0x14] sm:$0xf]
    %v196 = vld [vmem:[#allocation10 + $0x18] sm:$0xff]
    %v197 = vld [vmem:[#allocation10 + $0x20] sm:$0xf]
    %v198 = vld [vmem:[#allocation10 + $0x24] sm:$0xff]
    %v199 = vld [vmem:[#allocation10 + $0x2c] sm:$0xf]
    %v200 = vld [vmem:[#allocation10 + $0x30] sm:$0xff]
    %v201 = vld [vmem:[#allocation10 + $0x38] sm:$0xf]
    %v202 = vld [vmem:[#allocation10 + $0x3c] sm:$0xff]
    %v203 = vld [vmem:[#allocation10 + $0x44] sm:$0xf]
    %v204 = vld [vmem:[#allocation10 + $0x48] sm:$0xff]
    %v205 = vld [vmem:[#allocation10 + $0x50] sm:$0xf]
    %v206 = vld [vmem:[#allocation10 + $0x54] sm:$0xff]
    %v207 = vld [vmem:[#allocation10 + $0x5c] sm:$0xf]
    %v214 = vunpack.c.l.b16 %v186
    %v215 = vunpack.c.l.b16 %v187
    %v216 = vunpack.c.l.b16 %v188
    %v217 = vunpack.c.l.b16 %v189
    %v218 = vunpack.c.l.b16 %v190
    %v219 = vunpack.c.l.b16 %v191
    %v220 = vpack.c.b16 %v215, %v214
    %v221 = vpack.c.b16 %v217, %v216
    %v222 = vpack.c.b16 %v219, %v218
    %v239 = vunpack.c.l.b16 %v192
    %v240 = vunpack.c.h.b16 %v192
    %v241 = vunpack.c.l.b16 %v193
    %v242 = vunpack.c.l.b16 %v194
    %v243 = vunpack.c.h.b16 %v194
    %v244 = vunpack.c.l.b16 %v195
    %v245 = vunpack.c.l.b16 %v196
    %v246 = vunpack.c.h.b16 %v196
    %v247 = vunpack.c.l.b16 %v197
    %v248 = vunpack.c.l.b16 %v198
    %v249 = vunpack.c.h.b16 %v198
    %v250 = vunpack.c.l.b16 %v199
    %v251 = vunpack.c.l.b16 %v200
    %v252 = vunpack.c.h.b16 %v200
    %v253 = vunpack.c.l.b16 %v201
    %v254 = vunpack.c.l.b16 %v202
    %v255 = vunpack.c.h.b16 %v202
    %v256 = vunpack.c.l.b16 %v203
    %v257 = vunpack.c.l.b16 %v204
    %v258 = vunpack.c.h.b16 %v204
    %v259 = vunpack.c.l.b16 %v205
    %v260 = vunpack.c.l.b16 %v206
    %v261 = vunpack.c.h.b16 %v206
    %v262 = vunpack.c.l.b16 %v207
    %v263 = vpack.c.b16 %v242, %v239
    %v264 = vpack.c.b16 %v243, %v240
    %v265 = vpack.c.b16 %v244, %v241
    %v266 = vpack.c.b16 %v248, %v245
    %v267 = vpack.c.b16 %v249, %v246
    %v268 = vpack.c.b16 %v250, %v247
    %v269 = vpack.c.b16 %v254, %v251
    %v270 = vpack.c.b16 %v255, %v252
    %v271 = vpack.c.b16 %v256, %v253
    %v272 = vpack.c.b16 %v260, %v257
    %v273 = vpack.c.b16 %v261, %v258
    %v274 = vpack.c.b16 %v262, %v259
    %vm287 = vcmask 523264
    %v289 = vsel %vm287, %v220, 0
    %v292 = vsel %vm287, %v221, 0
    %v295 = vsel %vm287, %v222, 0
    %297 = vmatprep.subr.bf16.mxu0 %v264
    %298 = vmatpush1.bf16.msra.mxu0 %v263
    %299 = vmatprep.subr.bf16.mxu0 %v267
    %300 = vmatpush1.bf16.msra.mxu0 %v266
    %301 = vmatprep.subr.bf16.mxu0 %v270
    %302 = vmatpush1.bf16.msra.mxu0 %v269
    %303 = vmatprep.subr.bf16.mxu0 %v273
    %304 = vmatpush1.bf16.msra.mxu0 %v272
    %305 = vmatprep.subr.bf16.mxu0 0
    %306 = vmatpush1.bf16.msra.mxu0 0
    %307 = vmatprep.subr.bf16.mxu0 0
    %308 = vmatpush1.bf16.msra.mxu0 0
    %309 = vmatprep.subr.bf16.mxu0 0
    %310 = vmatpush1.bf16.msra.mxu0 0
    %311 = vmatprep.subr.bf16.mxu0 0
    %312 = vmatpush1.bf16.msra.mxu0 0
    %313 = vmatprep.subr.bf16.mxu0 0
    %314 = vmatpush1.bf16.msra.mxu0 0
    %315 = vmatprep.subr.bf16.mxu0 0
    %316 = vmatpush1.bf16.msra.mxu0 0
    %317 = vmatprep.subr.bf16.mxu0 0
    %318 = vmatpush1.bf16.msra.mxu0 0
    %319 = vmatprep.subr.bf16.mxu0 0
    %320 = vmatpush1.bf16.msra.mxu0 0
    %321 = vmatprep.subr.bf16.mxu0 0
    %322 = vmatpush1.bf16.msra.mxu0 0
    %323 = vmatprep.subr.bf16.mxu0 0
    %324 = vmatpush1.bf16.msra.mxu0 0
    %325 = vmatprep.subr.bf16.mxu0 0
    %326 = vmatpush1.bf16.msra.mxu0 0
    %327 = vmatprep.subr.bf16.mxu0 0
    %328 = vmatpush1.bf16.msra.mxu0 0
    %329 = vmatprep.mubr.bf16.mxu0 0
    %330 = vmatmul.mubr.bf16.gmra.mrb[0].mxu0 %v289
    %v331 = vpop.f32.mrb[0].mxu0
    %v332 = vadd.f32 0.0, %v331
    %v333 = vpop.f32.mrb[0].mxu0
    %v334 = vadd.f32 0.0, %v333
    %v335 = vpop.f32.mrb[0].mxu0
    %v336 = vadd.f32 0.0, %v335
    %v337 = vpop.f32.mrb[0].mxu0
    %v338 = vadd.f32 0.0, %v337
    %339 = vmatprep.mubr.bf16.mxu0 0
    %340 = vmatmul.mubr.bf16.gmra.mrb[0].mxu0 %v292
    %v341 = vpop.f32.mrb[0].mxu0
    %v342 = vadd.f32 0.0, %v341
    %v343 = vpop.f32.mrb[0].mxu0
    %v344 = vadd.f32 0.0, %v343
    %v345 = vpop.f32.mrb[0].mxu0
    %v346 = vadd.f32 0.0, %v345
    %v347 = vpop.f32.mrb[0].mxu0
    %v348 = vadd.f32 0.0, %v347
    %349 = vmatprep.mubr.bf16.mxu0 0
    %350 = vmatmul.mubr.bf16.gmra.mrb[0].mxu0 %v295
    %v351 = vpop.f32.mrb[0].mxu0
    %v352 = vadd.f32 0.0, %v351
    %v353 = vpop.f32.mrb[0].mxu0
    %v354 = vadd.f32 0.0, %v353
    %v355 = vpop.f32.mrb[0].mxu0
    %v356 = vadd.f32 0.0, %v355
    %v357 = vpop.f32.mrb[0].mxu0
    %v358 = vadd.f32 0.0, %v357
    %359 = vdwg.mxu0
    %360 = vmatprep.subr.bf16.mxu0 0
    %361 = vmatpush1.bf16.msra.mxu0 %v265
    %362 = vmatprep.subr.bf16.mxu0 0
    %363 = vmatpush1.bf16.msra.mxu0 %v268
    %364 = vmatprep.subr.bf16.mxu0 0
    %365 = vmatpush1.bf16.msra.mxu0 %v271
    %366 = vmatprep.subr.bf16.mxu0 0
    %367 = vmatpush1.bf16.msra.mxu0 %v274
    %368 = vmatprep.subr.bf16.mxu0 0
    %369 = vmatpush1.bf16.msra.mxu0 0
    %370 = vmatprep.subr.bf16.mxu0 0
    %371 = vmatpush1.bf16.msra.mxu0 0
    %372 = vmatprep.subr.bf16.mxu0 0
    %373 = vmatpush1.bf16.msra.mxu0 0
    %374 = vmatprep.subr.bf16.mxu0 0
    %375 = vmatpush1.bf16.msra.mxu0 0
    %376 = vmatprep.subr.bf16.mxu0 0
    %377 = vmatpush1.bf16.msra.mxu0 0
    %378 = vmatprep.subr.bf16.mxu0 0
    %379 = vmatpush1.bf16.msra.mxu0 0
    %380 = vmatprep.subr.bf16.mxu0 0
    %381 = vmatpush1.bf16.msra.mxu0 0
    %382 = vmatprep.subr.bf16.mxu0 0
    %383 = vmatpush1.bf16.msra.mxu0 0
    %384 = vmatprep.subr.bf16.mxu0 0
    %385 = vmatpush1.bf16.msra.mxu0 0
    %386 = vmatprep.subr.bf16.mxu0 0
    %387 = vmatpush1.bf16.msra.mxu0 0
    %388 = vmatprep.subr.bf16.mxu0 0
    %389 = vmatpush1.bf16.msra.mxu0 0
    %390 = vmatprep.subr.bf16.mxu0 0
    %391 = vmatpush1.bf16.msra.mxu0 0
    %392 = vmatprep.mubr.bf16.mxu0 0
    %393 = vmatmul.mubr.bf16.gmra.mrb[0].mxu0 %v289
    %v394 = vpop.f32.mrb[0].mxu0
    %v395 = vadd.f32 0.0, %v394
    %v396 = vpop.f32.mrb[0].mxu0
    %v397 = vpop.f32.mrb[0].mxu0
    %v398 = vadd.f32 0.0, %v397
    %v399 = vpop.f32.mrb[0].mxu0
    %400 = vmatprep.mubr.bf16.mxu0 0
    %401 = vmatmul.mubr.bf16.gmra.mrb[0].mxu0 %v292
    %v402 = vpop.f32.mrb[0].mxu0
    %v403 = vadd.f32 0.0, %v402
    %v404 = vpop.f32.mrb[0].mxu0
    %v405 = vpop.f32.mrb[0].mxu0
    %v406 = vadd.f32 0.0, %v405
    %v407 = vpop.f32.mrb[0].mxu0
    %408 = vmatprep.mubr.bf16.mxu0 0
    %409 = vmatmul.mubr.bf16.gmra.mrb[0].mxu0 %v295
    %v410 = vpop.f32.mrb[0].mxu0
    %v411 = vadd.f32 0.0, %v410
    %v412 = vpop.f32.mrb[0].mxu0
    %v413 = vpop.f32.mrb[0].mxu0
    %v414 = vadd.f32 0.0, %v413
    %v415 = vpop.f32.mrb[0].mxu0
    %416 = vdwg.mxu0
    %418 = vset.pattern.permute.xlu0 0
    %419 = vperm.xlu0 %418, %v180
    %v420 = vpop.permute.xlu0 %419
    %423 = vset.pattern.permute.xlu0 0
    %424 = vperm.xlu0 %423, %v181
    %v425 = vpop.permute.xlu0 %424
    %428 = vset.pattern.permute.xlu0 0
    %429 = vperm.xlu0 %428, %v182
    %v430 = vpop.permute.xlu0 %429
    %433 = vset.pattern.permute.xlu0 0
    %434 = vperm.xlu0 %433, %v183
    %v435 = vpop.permute.xlu0 %434
    %438 = vset.pattern.permute.xlu0 0
    %439 = vperm.xlu0 %438, %v184
    %v440 = vpop.permute.xlu0 %439
    %443 = vset.pattern.permute.xlu0 0
    %444 = vperm.xlu0 %443, %v185
    %v445 = vpop.permute.xlu0 %444
    %v447 = vmul.f32 %v420, %v332
    %v448 = vmul.f32 %v425, %v336
    %v449 = vmul.f32 %v430, %v342
    %v450 = vmul.f32 %v435, %v346
    %v451 = vmul.f32 %v440, %v352
    %v452 = vmul.f32 %v445, %v356
    %453 = vset.pattern.permute.xlu0 1
    %454 = vperm.xlu0 %453, %v180
    %v455 = vpop.permute.xlu0 %454
    %457 = vset.pattern.permute.xlu0 1
    %458 = vperm.xlu0 %457, %v181
    %v459 = vpop.permute.xlu0 %458
    %461 = vset.pattern.permute.xlu0 1
    %462 = vperm.xlu0 %461, %v182
    %v463 = vpop.permute.xlu0 %462
    %465 = vset.pattern.permute.xlu0 1
    %466 = vperm.xlu0 %465, %v183
    %v467 = vpop.permute.xlu0 %466
    %469 = vset.pattern.permute.xlu0 1
    %470 = vperm.xlu0 %469, %v184
    %v471 = vpop.permute.xlu0 %470
    %473 = vset.pattern.permute.xlu0 1
    %474 = vperm.xlu0 %473, %v185
    %v475 = vpop.permute.xlu0 %474
    %v477 = vmul.f32 %v455, %v332
    %v478 = vmul.f32 %v459, %v336
    %v479 = vmul.f32 %v463, %v342
    %v480 = vmul.f32 %v467, %v346
    %v481 = vmul.f32 %v471, %v352
    %v482 = vmul.f32 %v475, %v356
    %489 = vrot.lane.b32.xlu0 %v477, 96
    %v490 = vpop.permute.xlu0 %489
    %491 = vrot.lane.b32.xlu0 %v478, 96
    %v492 = vpop.permute.xlu0 %491
    %493 = vrot.lane.b32.xlu0 %v479, 96
    %v494 = vpop.permute.xlu0 %493
    %495 = vrot.lane.b32.xlu0 %v480, 96
    %v496 = vpop.permute.xlu0 %495
    %497 = vrot.lane.b32.xlu0 %v481, 96
    %v498 = vpop.permute.xlu0 %497
    %499 = vrot.lane.b32.xlu0 %v482, 96
    %v500 = vpop.permute.xlu0 %499
    %v507 = vadd.f32 %v447, %v490
    %v508 = vadd.f32 %v448, %v492
    %v509 = vadd.f32 %v449, %v494
    %v510 = vadd.f32 %v450, %v496
    %v511 = vadd.f32 %v451, %v498
    %v512 = vadd.f32 %v452, %v500
    %513 = vset.pattern.permute.xlu0 2
    %514 = vperm.xlu0 %513, %v180
    %v515 = vpop.permute.xlu0 %514
    %517 = vset.pattern.permute.xlu0 2
    %518 = vperm.xlu0 %517, %v181
    %v519 = vpop.permute.xlu0 %518
    %521 = vset.pattern.permute.xlu0 2
    %522 = vperm.xlu0 %521, %v182
    %v523 = vpop.permute.xlu0 %522
    %525 = vset.pattern.permute.xlu0 2
    %526 = vperm.xlu0 %525, %v183
    %v527 = vpop.permute.xlu0 %526
    %529 = vset.pattern.permute.xlu0 2
    %530 = vperm.xlu0 %529, %v184
    %v531 = vpop.permute.xlu0 %530
    %533 = vset.pattern.permute.xlu0 2
    %534 = vperm.xlu0 %533, %v185
    %v535 = vpop.permute.xlu0 %534
    %v537 = vmul.f32 %v515, %v332
    %v538 = vmul.f32 %v519, %v336
    %v539 = vmul.f32 %v523, %v342
    %v540 = vmul.f32 %v527, %v346
    %v541 = vmul.f32 %v531, %v352
    %v542 = vmul.f32 %v535, %v356
    %549 = vrot.lane.b32.xlu0 %v537, 64
    %v550 = vpop.permute.xlu0 %549
    %551 = vrot.lane.b32.xlu0 %v538, 64
    %v552 = vpop.permute.xlu0 %551
    %553 = vrot.lane.b32.xlu0 %v539, 64
    %v554 = vpop.permute.xlu0 %553
    %555 = vrot.lane.b32.xlu0 %v540, 64
    %v556 = vpop.permute.xlu0 %555
    %557 = vrot.lane.b32.xlu0 %v541, 64
    %v558 = vpop.permute.xlu0 %557
    %559 = vrot.lane.b32.xlu0 %v542, 64
    %v560 = vpop.permute.xlu0 %559
    %v567 = vadd.f32 %v507, %v550
    %v568 = vadd.f32 %v508, %v552
    %v569 = vadd.f32 %v509, %v554
    %v570 = vadd.f32 %v510, %v556
    %v571 = vadd.f32 %v511, %v558
    %v572 = vadd.f32 %v512, %v560
    %573 = vset.pattern.permute.xlu0 3
    %574 = vperm.xlu0 %573, %v180
    %v575 = vpop.permute.xlu0 %574
    %577 = vset.pattern.permute.xlu0 3
    %578 = vperm.xlu0 %577, %v181
    %v579 = vpop.permute.xlu0 %578
    %581 = vset.pattern.permute.xlu0 3
    %582 = vperm.xlu0 %581, %v182
    %v583 = vpop.permute.xlu0 %582
    %585 = vset.pattern.permute.xlu0 3
    %586 = vperm.xlu0 %585, %v183
    %v587 = vpop.permute.xlu0 %586
    %589 = vset.pattern.permute.xlu0 3
    %590 = vperm.xlu0 %589, %v184
    %v591 = vpop.permute.xlu0 %590
    %593 = vset.pattern.permute.xlu0 3
    %594 = vperm.xlu0 %593, %v185
    %v595 = vpop.permute.xlu0 %594
    %v597 = vmul.f32 %v575, %v332
    %v598 = vmul.f32 %v579, %v336
    %v599 = vmul.f32 %v583, %v342
    %v600 = vmul.f32 %v587, %v346
    %v601 = vmul.f32 %v591, %v352
    %v602 = vmul.f32 %v595, %v356
    %609 = vrot.lane.b32.xlu0 %v597, 32
    %v610 = vpop.permute.xlu0 %609
    %611 = vrot.lane.b32.xlu0 %v598, 32
    %v612 = vpop.permute.xlu0 %611
    %613 = vrot.lane.b32.xlu0 %v599, 32
    %v614 = vpop.permute.xlu0 %613
    %615 = vrot.lane.b32.xlu0 %v600, 32
    %v616 = vpop.permute.xlu0 %615
    %617 = vrot.lane.b32.xlu0 %v601, 32
    %v618 = vpop.permute.xlu0 %617
    %619 = vrot.lane.b32.xlu0 %v602, 32
    %v620 = vpop.permute.xlu0 %619
    %v627 = vadd.f32 %v567, %v610
    %v628 = vadd.f32 %v568, %v612
    %v629 = vadd.f32 %v569, %v614
    %v630 = vadd.f32 %v570, %v616
    %v631 = vadd.f32 %v571, %v618
    %v632 = vadd.f32 %v572, %v620
    %633 = vset.pattern.permute.xlu0 4
    %634 = vperm.xlu0 %633, %v180
    %v635 = vpop.permute.xlu0 %634
    %637 = vset.pattern.permute.xlu0 4
    %638 = vperm.xlu0 %637, %v181
    %v639 = vpop.permute.xlu0 %638
    %641 = vset.pattern.permute.xlu0 4
    %642 = vperm.xlu0 %641, %v182
    %v643 = vpop.permute.xlu0 %642
    %645 = vset.pattern.permute.xlu0 4
    %646 = vperm.xlu0 %645, %v183
    %v647 = vpop.permute.xlu0 %646
    %649 = vset.pattern.permute.xlu0 4
    %650 = vperm.xlu0 %649, %v184
    %v651 = vpop.permute.xlu0 %650
    %653 = vset.pattern.permute.xlu0 4
    %654 = vperm.xlu0 %653, %v185
    %v655 = vpop.permute.xlu0 %654
    %v657 = vmul.f32 %v635, %v334
    %v658 = vmul.f32 %v639, %v338
    %v659 = vmul.f32 %v643, %v344
    %v660 = vmul.f32 %v647, %v348
    %v661 = vmul.f32 %v651, %v354
    %v662 = vmul.f32 %v655, %v358
    %v663 = vadd.f32 %v627, %v657
    %v664 = vadd.f32 %v628, %v658
    %v665 = vadd.f32 %v629, %v659
    %v666 = vadd.f32 %v630, %v660
    %v667 = vadd.f32 %v631, %v661
    %v668 = vadd.f32 %v632, %v662
    %669 = vset.pattern.permute.xlu0 5
    %670 = vperm.xlu0 %669, %v180
    %v671 = vpop.permute.xlu0 %670
    %673 = vset.pattern.permute.xlu0 5
    %674 = vperm.xlu0 %673, %v181
    %v675 = vpop.permute.xlu0 %674
    %677 = vset.pattern.permute.xlu0 5
    %678 = vperm.xlu0 %677, %v182
    %v679 = vpop.permute.xlu0 %678
    %681 = vset.pattern.permute.xlu0 5
    %682 = vperm.xlu0 %681, %v183
    %v683 = vpop.permute.xlu0 %682
    %685 = vset.pattern.permute.xlu0 5
    %686 = vperm.xlu0 %685, %v184
    %v687 = vpop.permute.xlu0 %686
    %689 = vset.pattern.permute.xlu0 5
    %690 = vperm.xlu0 %689, %v185
    %v691 = vpop.permute.xlu0 %690
    %v693 = vmul.f32 %v671, %v334
    %v694 = vmul.f32 %v675, %v338
    %v695 = vmul.f32 %v679, %v344
    %v696 = vmul.f32 %v683, %v348
    %v697 = vmul.f32 %v687, %v354
    %v698 = vmul.f32 %v691, %v358
    %705 = vrot.lane.b32.xlu0 %v693, 96
    %v706 = vpop.permute.xlu0 %705
    %707 = vrot.lane.b32.xlu0 %v694, 96
    %v708 = vpop.permute.xlu0 %707
    %709 = vrot.lane.b32.xlu0 %v695, 96
    %v710 = vpop.permute.xlu0 %709
    %711 = vrot.lane.b32.xlu0 %v696, 96
    %v712 = vpop.permute.xlu0 %711
    %713 = vrot.lane.b32.xlu0 %v697, 96
    %v714 = vpop.permute.xlu0 %713
    %715 = vrot.lane.b32.xlu0 %v698, 96
    %v716 = vpop.permute.xlu0 %715
    %v723 = vadd.f32 %v663, %v706
    %v724 = vadd.f32 %v664, %v708
    %v725 = vadd.f32 %v665, %v710
    %v726 = vadd.f32 %v666, %v712
    %v727 = vadd.f32 %v667, %v714
    %v728 = vadd.f32 %v668, %v716
    %729 = vset.pattern.permute.xlu0 6
    %730 = vperm.xlu0 %729, %v180
    %v731 = vpop.permute.xlu0 %730
    %733 = vset.pattern.permute.xlu0 6
    %734 = vperm.xlu0 %733, %v181
    %v735 = vpop.permute.xlu0 %734
    %737 = vset.pattern.permute.xlu0 6
    %738 = vperm.xlu0 %737, %v182
    %v739 = vpop.permute.xlu0 %738
    %741 = vset.pattern.permute.xlu0 6
    %742 = vperm.xlu0 %741, %v183
    %v743 = vpop.permute.xlu0 %742
    %745 = vset.pattern.permute.xlu0 6
    %746 = vperm.xlu0 %745, %v184
    %v747 = vpop.permute.xlu0 %746
    %749 = vset.pattern.permute.xlu0 6
    %750 = vperm.xlu0 %749, %v185
    %v751 = vpop.permute.xlu0 %750
    %v753 = vmul.f32 %v731, %v334
    %v754 = vmul.f32 %v735, %v338
    %v755 = vmul.f32 %v739, %v344
    %v756 = vmul.f32 %v743, %v348
    %v757 = vmul.f32 %v747, %v354
    %v758 = vmul.f32 %v751, %v358
    %765 = vrot.lane.b32.xlu0 %v753, 64
    %v766 = vpop.permute.xlu0 %765
    %767 = vrot.lane.b32.xlu0 %v754, 64
    %v768 = vpop.permute.xlu0 %767
    %769 = vrot.lane.b32.xlu0 %v755, 64
    %v770 = vpop.permute.xlu0 %769
    %771 = vrot.lane.b32.xlu0 %v756, 64
    %v772 = vpop.permute.xlu0 %771
    %773 = vrot.lane.b32.xlu0 %v757, 64
    %v774 = vpop.permute.xlu0 %773
    %775 = vrot.lane.b32.xlu0 %v758, 64
    %v776 = vpop.permute.xlu0 %775
    %v783 = vadd.f32 %v723, %v766
    %v784 = vadd.f32 %v724, %v768
    %v785 = vadd.f32 %v725, %v770
    %v786 = vadd.f32 %v726, %v772
    %v787 = vadd.f32 %v727, %v774
    %v788 = vadd.f32 %v728, %v776
    %789 = vset.pattern.permute.xlu0 7
    %790 = vperm.xlu0 %789, %v180
    %v791 = vpop.permute.xlu0 %790
    %793 = vset.pattern.permute.xlu0 7
    %794 = vperm.xlu0 %793, %v181
    %v795 = vpop.permute.xlu0 %794
    %797 = vset.pattern.permute.xlu0 7
    %798 = vperm.xlu0 %797, %v182
    %v799 = vpop.permute.xlu0 %798
    %801 = vset.pattern.permute.xlu0 7
    %802 = vperm.xlu0 %801, %v183
    %v803 = vpop.permute.xlu0 %802
    %805 = vset.pattern.permute.xlu0 7
    %806 = vperm.xlu0 %805, %v184
    %v807 = vpop.permute.xlu0 %806
    %809 = vset.pattern.permute.xlu0 7
    %810 = vperm.xlu0 %809, %v185
    %v811 = vpop.permute.xlu0 %810
    %v813 = vmul.f32 %v791, %v334
    %v814 = vmul.f32 %v795, %v338
    %v815 = vmul.f32 %v799, %v344
    %v816 = vmul.f32 %v803, %v348
    %v817 = vmul.f32 %v807, %v354
    %v818 = vmul.f32 %v811, %v358
    %825 = vrot.lane.b32.xlu0 %v813, 32
    %v826 = vpop.permute.xlu0 %825
    %827 = vrot.lane.b32.xlu0 %v814, 32
    %v828 = vpop.permute.xlu0 %827
    %829 = vrot.lane.b32.xlu0 %v815, 32
    %v830 = vpop.permute.xlu0 %829
    %831 = vrot.lane.b32.xlu0 %v816, 32
    %v832 = vpop.permute.xlu0 %831
    %833 = vrot.lane.b32.xlu0 %v817, 32
    %v834 = vpop.permute.xlu0 %833
    %835 = vrot.lane.b32.xlu0 %v818, 32
    %v836 = vpop.permute.xlu0 %835
    %v843 = vadd.f32 %v783, %v826
    %v844 = vadd.f32 %v784, %v828
    %v845 = vadd.f32 %v785, %v830
    %v846 = vadd.f32 %v786, %v832
    %v847 = vadd.f32 %v787, %v834
    %v848 = vadd.f32 %v788, %v836
    %849 = vset.pattern.permute.xlu0 8
    %850 = vperm.xlu0 %849, %v180
    %v851 = vpop.permute.xlu0 %850
    %853 = vset.pattern.permute.xlu0 8
    %854 = vperm.xlu0 %853, %v181
    %v855 = vpop.permute.xlu0 %854
    %857 = vset.pattern.permute.xlu0 8
    %858 = vperm.xlu0 %857, %v182
    %v859 = vpop.permute.xlu0 %858
    %861 = vset.pattern.permute.xlu0 8
    %862 = vperm.xlu0 %861, %v183
    %v863 = vpop.permute.xlu0 %862
    %865 = vset.pattern.permute.xlu0 8
    %866 = vperm.xlu0 %865, %v184
    %v867 = vpop.permute.xlu0 %866
    %869 = vset.pattern.permute.xlu0 8
    %870 = vperm.xlu0 %869, %v185
    %v871 = vpop.permute.xlu0 %870
    %v873 = vmul.f32 %v851, %v395
    %v874 = vmul.f32 %v855, %v398
    %v875 = vmul.f32 %v859, %v403
    %v876 = vmul.f32 %v863, %v406
    %v877 = vmul.f32 %v867, %v411
    %v878 = vmul.f32 %v871, %v414
    %v879 = vadd.f32 %v843, %v873
    %v880 = vadd.f32 %v844, %v874
    %v881 = vadd.f32 %v845, %v875
    %v882 = vadd.f32 %v846, %v876
    %v883 = vadd.f32 %v847, %v877
    %v884 = vadd.f32 %v848, %v878
    %vm885 = vcmask 261120
    %886 = vst.msk [vmem:[#allocation11] sm:$0xff] %vm885, %v879
    %887 = vst.msk [vmem:[#allocation11 + $0x8] sm:$0xff] %vm885, %v880
    %888 = vst.msk [vmem:[#allocation11 + $0x10] sm:$0xff] %vm885, %v881
    %889 = vst.msk [vmem:[#allocation11 + $0x18] sm:$0xff] %vm885, %v882
    %890 = vst.msk [vmem:[#allocation11 + $0x20] sm:$0xff] %vm885, %v883
    %891 = vst.msk [vmem:[#allocation11 + $0x28] sm:$0xff] %vm885, %v884
    // Predicated region
    $region42: #{dual_gnn_forward.24} parent=1 // pred_check
      _
    $region43: #{dual_gnn_forward.24} parent=1 // pred_check_branch
      %893 = sbr.rel (0) target = $region45
    $region44: #{dual_gnn_forward.24} parent=1 // pred_region
      %s895 = ssub.s32 768, 768
      %896 = vsyncadd [#allocation4], %s895
      %s897 = sshll.u32 [#allocation11], 4
      %s898 = int_to_ptr.vmem [resolvable:$true] %s897
      %903 = dma.vmem_to_hbm [thread:$0]  %s898, 768, %s5, [#allocation4], 128, 128, 8
    $region45: #{dual_gnn_forward.24} parent=1 // pred_fallthru
      _
    // Predicated region
    $region46: #{dual_gnn_forward.24} parent=1 // pred_check
      _
    $region47: #{dual_gnn_forward.24} parent=1 // pred_check_branch
      %905 = sbr.rel (0) target = $region49
    $region48: #{dual_gnn_forward.24} parent=1 // pred_region
      %906 = dma.done [#allocation4], 768
    $region49: #{dual_gnn_forward.24} parent=1 // pred_fallthru
      _
    %907 = vsyncpa [#allocation3], 1
    %908 = vsyncpa [#allocation6], 1
    %909 = vsyncpa [#allocation9], 1
    %910 = vsyncpa [#allocation4], 1

// kernel: dual_gnn_forward.26
$region0: #{dual_gnn_forward.26}
  #allocation0 [shape = 'u32[]', space=smem, size = 0x4, offset = 0x4, fixed_abs, tag = 'smem constant byte address 0x4 - core index']
  #allocation1 [shape = 'u32[144,128]{1,0:T(1,128)}', space=vmem, size = 0x12000, scoped, tag = 'internal scratch']
  %s0 = inlined_call_operand.hbm [shape: f32[16,32], index: 0, kind: input, shape index: {}]
  %s1 = inlined_call_operand.hbm [shape: bf16[32,1024], index: 1, kind: input, shape index: {}]
  %s2 = inlined_call_operand.hbm [shape: f32[1,1024], index: 2, kind: input, shape index: {}]
  %s3 = inlined_call_operand.hbm [shape: bf16[1024,3], index: 3, kind: input, shape index: {}]
  %s4 = inlined_call_operand.hbm [shape: f32[1,3], index: 4, kind: input, shape index: {}]
  %s5 = inlined_call_operand.hbm [shape: f32[16,3], index: 5, kind: output, shape index: {}]
  %s6 = sld [smem:[#allocation0]]
  $region50: #{dual_gnn_forward.26} parent=0
    _
  %s8 = ssub.s32 1, %s6
  %s9 = scalar_select 0, %s8, %s6
  $region1: #{dual_gnn_forward.26} parent=0
    #allocation2 [shape = 'u8[8192]{0}', space=vmem, size = 0x2000, scoped, tag = 'input window, operand 0, single buffered']
    #allocation3 [shape = 's32[1]{0}', space=sflag, size = 0x4, scoped, tag = 'scoped memory for dual_gnn_forward.26']
    #allocation4 [shape = 's32[1]{0}', space=sflag, size = 0x4, scoped, tag = 'scoped memory for dual_gnn_forward.26']
    #allocation5 [shape = 'u8[65536]{0}', space=vmem, size = 0x10000, scoped, tag = 'input window, operand 1, single buffered']
    #allocation6 [shape = 's32[1]{0}', space=sflag, size = 0x4, scoped, tag = 'scoped memory for dual_gnn_forward.26']
    #allocation7 [shape = 'u8[4096]{0}', space=vmem, size = 0x1000, scoped, tag = 'input window, operand 2, single buffered']
    #allocation8 [shape = 'u8[262144]{0}', space=vmem, size = 0x40000, scoped, tag = 'input window, operand 3, single buffered']
    #allocation9 [shape = 's32[1]{0}', space=sflag, size = 0x4, scoped, tag = 'scoped memory for dual_gnn_forward.26']
    #allocation10 [shape = 'u8[512]{0}', space=vmem, size = 0x400, scoped, tag = 'input window, operand 4, single buffered']
    #allocation11 [shape = 'u8[8192]{0}', space=vmem, size = 0x2000, scoped, tag = 'output window, operand 0, single buffered']
    %10 = vsyncpa [#allocation3], 0
    %11 = vsyncpa [#allocation6], 0
    %12 = vsyncpa [#allocation9], 0
    %13 = vsyncpa [#allocation4], 0
    // Predicated region
    $region2: #{dual_gnn_forward.26} parent=1 // pred_check
      _
    $region3: #{dual_gnn_forward.26} parent=1 // pred_check_branch
      %15 = sbr.rel (0) target = $region5
    $region4: #{dual_gnn_forward.26} parent=1 // pred_region
      %s17 = ssub.s32 256, 256
      %18 = vsyncadd [#allocation3], %s17
      %s19 = sshll.u32 [#allocation2], 4
      %s20 = int_to_ptr.vmem [resolvable:$true] %s19
      %25 = dma.hbm_to_vmem [thread:$0]  %s0, 256, %s20, [#allocation3], 128, 128, 8
    $region5: #{dual_gnn_forward.26} parent=1 // pred_fallthru
      _
    // Predicated region
    $region6: #{dual_gnn_forward.26} parent=1 // pred_check
      _
    $region7: #{dual_gnn_forward.26} parent=1 // pred_check_branch
      %27 = sbr.rel (0) target = $region9
    $region8: #{dual_gnn_forward.26} parent=1 // pred_region
      %s29 = ssub.s32 2048, 2048
      %30 = vsyncadd [#allocation6], %s29
      %s31 = sshll.u32 [#allocation5], 4
      %s32 = int_to_ptr.vmem [resolvable:$true] %s31
      %37 = dma.hbm_to_vmem [thread:$0]  %s1, 2048, %s32, [#allocation6], 512, 512, 32
    $region9: #{dual_gnn_forward.26} parent=1 // pred_fallthru
      _
    // Predicated region
    $region10: #{dual_gnn_forward.26} parent=1 // pred_check
      _
    $region11: #{dual_gnn_forward.26} parent=1 // pred_check_branch
      %39 = sbr.rel (0) target = $region13
    $region12: #{dual_gnn_forward.26} parent=1 // pred_region
      %s41 = ssub.s32 128, 128
      %42 = vsyncadd [#allocation6], %s41
      %s44 = sshll.u32 [#allocation7], 4
      %s45 = int_to_ptr.vmem [resolvable:$true] %s44
      %47 = dma.hbm_to_vmem [thread:$0]  %s2, 128, %s45, [#allocation6]
    $region13: #{dual_gnn_forward.26} parent=1 // pred_fallthru
      _
    // Predicated region
    $region14: #{dual_gnn_forward.26} parent=1 // pred_check
      _
    $region15: #{dual_gnn_forward.26} parent=1 // pred_check_branch
      %49 = sbr.rel (0) target = $region17
    $region16: #{dual_gnn_forward.26} parent=1 // pred_region
      %s51 = ssub.s32 8192, 8192
      %52 = vsyncadd [#allocation9], %s51
      %s53 = sshll.u32 [#allocation8], 4
      %s54 = int_to_ptr.vmem [resolvable:$true] %s53
      %59 = dma.hbm_to_vmem [thread:$0]  %s3, 8192, %s54, [#allocation9], 64, 64, 4
    $region17: #{dual_gnn_forward.26} parent=1 // pred_fallthru
      _
    // Predicated region
    $region18: #{dual_gnn_forward.26} parent=1 // pred_check
      _
    $region19: #{dual_gnn_forward.26} parent=1 // pred_check_branch
      %61 = sbr.rel (0) target = $region21
    $region20: #{dual_gnn_forward.26} parent=1 // pred_region
      %s63 = ssub.s32 16, 16
      %64 = vsyncadd [#allocation9], %s63
      %s66 = sshll.u32 [#allocation10], 4
      %s67 = int_to_ptr.vmem [resolvable:$true] %s66
      %69 = dma.hbm_to_vmem [thread:$0]  %s4, 16, %s67, [#allocation9]
    $region21: #{dual_gnn_forward.26} parent=1 // pred_fallthru
      _
    // Predicated region
    $region22: #{dual_gnn_forward.26} parent=1 // pred_check
      _
    $region23: #{dual_gnn_forward.26} parent=1 // pred_check_branch
      %71 = sbr.rel (0) target = $region25
    $region24: #{dual_gnn_forward.26} parent=1 // pred_region
      %72 = dma.done [#allocation3], 256
    $region25: #{dual_gnn_forward.26} parent=1 // pred_fallthru
      _
    // Predicated region
    $region26: #{dual_gnn_forward.26} parent=1 // pred_check
      _
    $region27: #{dual_gnn_forward.26} parent=1 // pred_check_branch
      %74 = sbr.rel (0) target = $region29
    $region28: #{dual_gnn_forward.26} parent=1 // pred_region
      %75 = dma.done [#allocation6], 2048
    $region29: #{dual_gnn_forward.26} parent=1 // pred_fallthru
      _
    // Predicated region
    $region30: #{dual_gnn_forward.26} parent=1 // pred_check
      _
    $region31: #{dual_gnn_forward.26} parent=1 // pred_check_branch
      %77 = sbr.rel (0) target = $region33
    $region32: #{dual_gnn_forward.26} parent=1 // pred_region
      %78 = dma.done [#allocation6], 128
    $region33: #{dual_gnn_forward.26} parent=1 // pred_fallthru
      _
    // Predicated region
    $region34: #{dual_gnn_forward.26} parent=1 // pred_check
      _
    $region35: #{dual_gnn_forward.26} parent=1 // pred_check_branch
      %80 = sbr.rel (0) target = $region37
    $region36: #{dual_gnn_forward.26} parent=1 // pred_region
      %81 = dma.done [#allocation9], 8192
    $region37: #{dual_gnn_forward.26} parent=1 // pred_fallthru
      _
    // Predicated region
    $region38: #{dual_gnn_forward.26} parent=1 // pred_check
      _
    $region39: #{dual_gnn_forward.26} parent=1 // pred_check_branch
      %83 = sbr.rel (0) target = $region41
    $region40: #{dual_gnn_forward.26} parent=1 // pred_region
      %84 = dma.done [#allocation9], 16
    $region41: #{dual_gnn_forward.26} parent=1 // pred_fallthru
      _
    %v86 = vld [vmem:[#allocation2] sm:$0xff]
    %v87 = vld [vmem:[#allocation2 + $0x8] sm:$0xff]
    %v88 = vpack.c.bf16 %v87, %v86
    %v89 = vld [vmem:[#allocation5] sm:$0xff]
    %v90 = vld [vmem:[#allocation5 + $0x8] sm:$0xff]
    %v91 = vld [vmem:[#allocation5 + $0x10] sm:$0xff]
    %v92 = vld [vmem:[#allocation5 + $0x18] sm:$0xff]
    %v93 = vld [vmem:[#allocation5 + $0x20] sm:$0xff]
    %v94 = vld [vmem:[#allocation5 + $0x28] sm:$0xff]
    %v95 = vld [vmem:[#allocation5 + $0x30] sm:$0xff]
    %v96 = vld [vmem:[#allocation5 + $0x38] sm:$0xff]
    %v97 = vld [vmem:[#allocation5 + $0x40] sm:$0xff]
    %v98 = vld [vmem:[#allocation5 + $0x48] sm:$0xff]
    %v99 = vld [vmem:[#allocation5 + $0x50] sm:$0xff]
    %v100 = vld [vmem:[#allocation5 + $0x58] sm:$0xff]
    %v101 = vld [vmem:[#allocation5 + $0x60] sm:$0xff]
    %v102 = vld [vmem:[#allocation5 + $0x68] sm:$0xff]
    %v103 = vld [vmem:[#allocation5 + $0x70] sm:$0xff]
    %v104 = vld [vmem:[#allocation5 + $0x78] sm:$0xff]
    %v105 = vld [vmem:[#allocation7] sm:$0xff]
    %v107 = vlaneseq
    %v108 = vshrl.u32 %v107, 7
    %v109 = vsub.s32 0, %v108
    %v110 = vrot.slane %v105, %v109
    %v111 = vlaneseq
    %v112 = vshrl.u32 %v111, 7
    %v113 = vsub.s32 1, %v112
    %v114 = vrot.slane %v105, %v113
    %v115 = vlaneseq
    %v116 = vshrl.u32 %v115, 7
    %v117 = vsub.s32 2, %v116
    %v118 = vrot.slane %v105, %v117
    %v119 = vlaneseq
    %v120 = vshrl.u32 %v119, 7
    %v121 = vsub.s32 3, %v120
    %v122 = vrot.slane %v105, %v121
    %v123 = vlaneseq
    %v124 = vshrl.u32 %v123, 7
    %v125 = vsub.s32 4, %v124
    %v126 = vrot.slane %v105, %v125
    %v127 = vlaneseq
    %v128 = vshrl.u32 %v127, 7
    %v129 = vsub.s32 5, %v128
    %v130 = vrot.slane %v105, %v129
    %v131 = vlaneseq
    %v132 = vshrl.u32 %v131, 7
    %v133 = vsub.s32 6, %v132
    %v134 = vrot.slane %v105, %v133
    %v135 = vlaneseq
    %v136 = vshrl.u32 %v135, 7
    %v137 = vsub.s32 7, %v136
    %v138 = vrot.slane %v105, %v137
    %v163 = vunpack.c.l.b16 %v89
    %v164 = vunpack.c.h.b16 %v89
    %v165 = vunpack.c.l.b16 %v90
    %v166 = vunpack.c.h.b16 %v90
    %v167 = vunpack.c.l.b16 %v91
    %v168 = vunpack.c.h.b16 %v91
    %v169 = vunpack.c.l.b16 %v92
    %v170 = vunpack.c.h.b16 %v92
    %v171 = vunpack.c.l.b16 %v93
    %v172 = vunpack.c.h.b16 %v93
    %v173 = vunpack.c.l.b16 %v94
    %v174 = vunpack.c.h.b16 %v94
    %v175 = vunpack.c.l.b16 %v95
    %v176 = vunpack.c.h.b16 %v95
    %v177 = vunpack.c.l.b16 %v96
    %v178 = vunpack.c.h.b16 %v96
    %v179 = vunpack.c.l.b16 %v97
    %v180 = vunpack.c.h.b16 %v97
    %v181 = vunpack.c.l.b16 %v98
    %v182 = vunpack.c.h.b16 %v98
    %v183 = vunpack.c.l.b16 %v99
    %v184 = vunpack.c.h.b16 %v99
    %v185 = vunpack.c.l.b16 %v100
    %v186 = vunpack.c.h.b16 %v100
    %v187 = vunpack.c.l.b16 %v101
    %v188 = vunpack.c.h.b16 %v101
    %v189 = vunpack.c.l.b16 %v102
    %v190 = vunpack.c.h.b16 %v102
    %v191 = vunpack.c.l.b16 %v103
    %v192 = vunpack.c.h.b16 %v103
    %v193 = vunpack.c.l.b16 %v104
    %v194 = vunpack.c.h.b16 %v104
    %v195 = vpack.c.b16 %v171, %v163
    %v196 = vpack.c.b16 %v172, %v164
    %v197 = vpack.c.b16 %v173, %v165
    %v198 = vpack.c.b16 %v174, %v166
    %v199 = vpack.c.b16 %v175, %v167
    %v200 = vpack.c.b16 %v176, %v168
    %v201 = vpack.c.b16 %v177, %v169
    %v202 = vpack.c.b16 %v178, %v170
    %v203 = vpack.c.b16 %v187, %v179
    %v204 = vpack.c.b16 %v188, %v180
    %v205 = vpack.c.b16 %v189, %v181
    %v206 = vpack.c.b16 %v190, %v182
    %v207 = vpack.c.b16 %v191, %v183
    %v208 = vpack.c.b16 %v192, %v184
    %v209 = vpack.c.b16 %v193, %v185
    %v210 = vpack.c.b16 %v194, %v186
    %vm227 = vcmask 261120
    %v229 = vsel %vm227, %v88, 0
    %231 = vmatprep.subr.bf16.mxu0 %v196
    %232 = vmatpush1.bf16.msra.mxu0 %v195
    %233 = vmatprep.subr.bf16.mxu0 %v204
    %234 = vmatpush1.bf16.msra.mxu0 %v203
    %235 = vmatprep.subr.bf16.mxu0 0
    %236 = vmatpush1.bf16.msra.mxu0 0
    %237 = vmatprep.subr.bf16.mxu0 0
    %238 = vmatpush1.bf16.msra.mxu0 0
    %239 = vmatprep.subr.bf16.mxu0 0
    %240 = vmatpush1.bf16.msra.mxu0 0
    %241 = vmatprep.subr.bf16.mxu0 0
    %242 = vmatpush1.bf16.msra.mxu0 0
    %243 = vmatprep.subr.bf16.mxu0 0
    %244 = vmatpush1.bf16.msra.mxu0 0
    %245 = vmatprep.subr.bf16.mxu0 0
    %246 = vmatpush1.bf16.msra.mxu0 0
    %247 = vmatprep.subr.bf16.mxu0 0
    %248 = vmatpush1.bf16.msra.mxu0 0
    %249 = vmatprep.subr.bf16.mxu0 0
    %250 = vmatpush1.bf16.msra.mxu0 0
    %251 = vmatprep.subr.bf16.mxu0 0
    %252 = vmatpush1.bf16.msra.mxu0 0
    %253 = vmatprep.subr.bf16.mxu0 0
    %254 = vmatpush1.bf16.msra.mxu0 0
    %255 = vmatprep.subr.bf16.mxu0 0
    %256 = vmatpush1.bf16.msra.mxu0 0
    %257 = vmatprep.subr.bf16.mxu0 0
    %258 = vmatpush1.bf16.msra.mxu0 0
    %259 = vmatprep.subr.bf16.mxu0 0
    %260 = vmatpush1.bf16.msra.mxu0 0
    %261 = vmatprep.subr.bf16.mxu0 0
    %262 = vmatpush1.bf16.msra.mxu0 0
    %263 = vmatprep.mubr.bf16.mxu0 0
    %264 = vmatmul.mubr.bf16.gmra.mrb[0].mxu0 %v229
    %v265 = vpop.f32.mrb[0].mxu0
    %v266 = vadd.f32 %v110, %v265
    %v267 = vpop.f32.mrb[0].mxu0
    %v268 = vadd.f32 %v114, %v267
    %v269 = vpop.f32.mrb[0].mxu0
    %v270 = vadd.f32 %v110, %v269
    %v271 = vpop.f32.mrb[0].mxu0
    %v272 = vadd.f32 %v114, %v271
    %273 = vdwg.mxu0
    %274 = vmatprep.subr.bf16.mxu0 %v198
    %275 = vmatpush1.bf16.msra.mxu0 %v197
    %276 = vmatprep.subr.bf16.mxu0 %v206
    %277 = vmatpush1.bf16.msra.mxu0 %v205
    %278 = vmatprep.subr.bf16.mxu0 0
    %279 = vmatpush1.bf16.msra.mxu0 0
    %280 = vmatprep.subr.bf16.mxu0 0
    %281 = vmatpush1.bf16.msra.mxu0 0
    %282 = vmatprep.subr.bf16.mxu0 0
    %283 = vmatpush1.bf16.msra.mxu0 0
    %284 = vmatprep.subr.bf16.mxu0 0
    %285 = vmatpush1.bf16.msra.mxu0 0
    %286 = vmatprep.subr.bf16.mxu0 0
    %287 = vmatpush1.bf16.msra.mxu0 0
    %288 = vmatprep.subr.bf16.mxu0 0
    %289 = vmatpush1.bf16.msra.mxu0 0
    %290 = vmatprep.subr.bf16.mxu0 0
    %291 = vmatpush1.bf16.msra.mxu0 0
    %292 = vmatprep.subr.bf16.mxu0 0
    %293 = vmatpush1.bf16.msra.mxu0 0
    %294 = vmatprep.subr.bf16.mxu0 0
    %295 = vmatpush1.bf16.msra.mxu0 0
    %296 = vmatprep.subr.bf16.mxu0 0
    %297 = vmatpush1.bf16.msra.mxu0 0
    %298 = vmatprep.subr.bf16.mxu0 0
    %299 = vmatpush1.bf16.msra.mxu0 0
    %300 = vmatprep.subr.bf16.mxu0 0
    %301 = vmatpush1.bf16.msra.mxu0 0
    %302 = vmatprep.subr.bf16.mxu0 0
    %303 = vmatpush1.bf16.msra.mxu0 0
    %304 = vmatprep.subr.bf16.mxu0 0
    %305 = vmatpush1.bf16.msra.mxu0 0
    %306 = vmatprep.mubr.bf16.mxu0 0
    %307 = vmatmul.mubr.bf16.gmra.mrb[0].mxu0 %v229
    %v308 = vpop.f32.mrb[0].mxu0
    %v309 = vadd.f32 %v118, %v308
    %v310 = vpop.f32.mrb[0].mxu0
    %v311 = vadd.f32 %v122, %v310
    %v312 = vpop.f32.mrb[0].mxu0
    %v313 = vadd.f32 %v118, %v312
    %v314 = vpop.f32.mrb[0].mxu0
    %v315 = vadd.f32 %v122, %v314
    %316 = vdwg.mxu0
    %317 = vmatprep.subr.bf16.mxu0 %v200
    %318 = vmatpush1.bf16.msra.mxu0 %v199
    %319 = vmatprep.subr.bf16.mxu0 %v208
    %320 = vmatpush1.bf16.msra.mxu0 %v207
    %321 = vmatprep.subr.bf16.mxu0 0
    %322 = vmatpush1.bf16.msra.mxu0 0
    %323 = vmatprep.subr.bf16.mxu0 0
    %324 = vmatpush1.bf16.msra.mxu0 0
    %325 = vmatprep.subr.bf16.mxu0 0
    %326 = vmatpush1.bf16.msra.mxu0 0
    %327 = vmatprep.subr.bf16.mxu0 0
    %328 = vmatpush1.bf16.msra.mxu0 0
    %329 = vmatprep.subr.bf16.mxu0 0
    %330 = vmatpush1.bf16.msra.mxu0 0
    %331 = vmatprep.subr.bf16.mxu0 0
    %332 = vmatpush1.bf16.msra.mxu0 0
    %333 = vmatprep.subr.bf16.mxu0 0
    %334 = vmatpush1.bf16.msra.mxu0 0
    %335 = vmatprep.subr.bf16.mxu0 0
    %336 = vmatpush1.bf16.msra.mxu0 0
    %337 = vmatprep.subr.bf16.mxu0 0
    %338 = vmatpush1.bf16.msra.mxu0 0
    %339 = vmatprep.subr.bf16.mxu0 0
    %340 = vmatpush1.bf16.msra.mxu0 0
    %341 = vmatprep.subr.bf16.mxu0 0
    %342 = vmatpush1.bf16.msra.mxu0 0
    %343 = vmatprep.subr.bf16.mxu0 0
    %344 = vmatpush1.bf16.msra.mxu0 0
    %345 = vmatprep.subr.bf16.mxu0 0
    %346 = vmatpush1.bf16.msra.mxu0 0
    %347 = vmatprep.subr.bf16.mxu0 0
    %348 = vmatpush1.bf16.msra.mxu0 0
    %349 = vmatprep.mubr.bf16.mxu0 0
    %350 = vmatmul.mubr.bf16.gmra.mrb[0].mxu0 %v229
    %v351 = vpop.f32.mrb[0].mxu0
    %v352 = vadd.f32 %v126, %v351
    %v353 = vpop.f32.mrb[0].mxu0
    %v354 = vadd.f32 %v130, %v353
    %v355 = vpop.f32.mrb[0].mxu0
    %v356 = vadd.f32 %v126, %v355
    %v357 = vpop.f32.mrb[0].mxu0
    %v358 = vadd.f32 %v130, %v357
    %359 = vdwg.mxu0
    %360 = vmatprep.subr.bf16.mxu0 %v202
    %361 = vmatpush1.bf16.msra.mxu0 %v201
    %362 = vmatprep.subr.bf16.mxu0 %v210
    %363 = vmatpush1.bf16.msra.mxu0 %v209
    %364 = vmatprep.subr.bf16.mxu0 0
    %365 = vmatpush1.bf16.msra.mxu0 0
    %366 = vmatprep.subr.bf16.mxu0 0
    %367 = vmatpush1.bf16.msra.mxu0 0
    %368 = vmatprep.subr.bf16.mxu0 0
    %369 = vmatpush1.bf16.msra.mxu0 0
    %370 = vmatprep.subr.bf16.mxu0 0
    %371 = vmatpush1.bf16.msra.mxu0 0
    %372 = vmatprep.subr.bf16.mxu0 0
    %373 = vmatpush1.bf16.msra.mxu0 0
    %374 = vmatprep.subr.bf16.mxu0 0
    %375 = vmatpush1.bf16.msra.mxu0 0
    %376 = vmatprep.subr.bf16.mxu0 0
    %377 = vmatpush1.bf16.msra.mxu0 0
    %378 = vmatprep.subr.bf16.mxu0 0
    %379 = vmatpush1.bf16.msra.mxu0 0
    %380 = vmatprep.subr.bf16.mxu0 0
    %381 = vmatpush1.bf16.msra.mxu0 0
    %382 = vmatprep.subr.bf16.mxu0 0
    %383 = vmatpush1.bf16.msra.mxu0 0
    %384 = vmatprep.subr.bf16.mxu0 0
    %385 = vmatpush1.bf16.msra.mxu0 0
    %386 = vmatprep.subr.bf16.mxu0 0
    %387 = vmatpush1.bf16.msra.mxu0 0
    %388 = vmatprep.subr.bf16.mxu0 0
    %389 = vmatpush1.bf16.msra.mxu0 0
    %390 = vmatprep.subr.bf16.mxu0 0
    %391 = vmatpush1.bf16.msra.mxu0 0
    %392 = vmatprep.mubr.bf16.mxu0 0
    %393 = vmatmul.mubr.bf16.gmra.mrb[0].mxu0 %v229
    %v394 = vpop.f32.mrb[0].mxu0
    %v395 = vadd.f32 %v134, %v394
    %v396 = vpop.f32.mrb[0].mxu0
    %v397 = vadd.f32 %v138, %v396
    %v398 = vpop.f32.mrb[0].mxu0
    %v399 = vadd.f32 %v134, %v398
    %v400 = vpop.f32.mrb[0].mxu0
    %v401 = vadd.f32 %v138, %v400
    %402 = vdwg.mxu0
    %vm403 = vcmp.ge.f32.partialorder %v266, 0.0
    %vm404 = vcmp.ge.f32.partialorder %v268, 0.0
    %vm405 = vcmp.ge.f32.partialorder %v309, 0.0
    %vm406 = vcmp.ge.f32.partialorder %v311, 0.0
    %vm407 = vcmp.ge.f32.partialorder %v352, 0.0
    %vm408 = vcmp.ge.f32.partialorder %v354, 0.0
    %vm409 = vcmp.ge.f32.partialorder %v395, 0.0
    %vm410 = vcmp.ge.f32.partialorder %v397, 0.0
    %vm411 = vcmp.ge.f32.partialorder %v270, 0.0
    %vm412 = vcmp.ge.f32.partialorder %v272, 0.0
    %vm413 = vcmp.ge.f32.partialorder %v313, 0.0
    %vm414 = vcmp.ge.f32.partialorder %v315, 0.0
    %vm415 = vcmp.ge.f32.partialorder %v356, 0.0
    %vm416 = vcmp.ge.f32.partialorder %v358, 0.0
    %vm417 = vcmp.ge.f32.partialorder %v399, 0.0
    %vm418 = vcmp.ge.f32.partialorder %v401, 0.0
    %v419 = vmul.f32 %v266, 0.2
    %v420 = vmul.f32 %v268, 0.2
    %v421 = vmul.f32 %v309, 0.2
    %v422 = vmul.f32 %v311, 0.2
    %v423 = vmul.f32 %v352, 0.2
    %v424 = vmul.f32 %v354, 0.2
    %v425 = vmul.f32 %v395, 0.2
    %v426 = vmul.f32 %v397, 0.2
    %v427 = vmul.f32 %v270, 0.2
    %v428 = vmul.f32 %v272, 0.2
    %v429 = vmul.f32 %v313, 0.2
    %v430 = vmul.f32 %v315, 0.2
    %v431 = vmul.f32 %v356, 0.2
    %v432 = vmul.f32 %v358, 0.2
    %v433 = vmul.f32 %v399, 0.2
    %v434 = vmul.f32 %v401, 0.2
    %v435 = vsel %vm403, %v266, %v419
    %v436 = vsel %vm404, %v268, %v420
    %v437 = vsel %vm405, %v309, %v421
    %v438 = vsel %vm406, %v311, %v422
    %v439 = vsel %vm407, %v352, %v423
    %v440 = vsel %vm408, %v354, %v424
    %v441 = vsel %vm409, %v395, %v425
    %v442 = vsel %vm410, %v397, %v426
    %v443 = vsel %vm411, %v270, %v427
    %v444 = vsel %vm412, %v272, %v428
    %v445 = vsel %vm413, %v313, %v429
    %v446 = vsel %vm414, %v315, %v430
    %v447 = vsel %vm415, %v356, %v431
    %v448 = vsel %vm416, %v358, %v432
    %v449 = vsel %vm417, %v399, %v433
    %v450 = vsel %vm418, %v401, %v434
    %v451 = vpack.c.bf16 %v443, %v435
    %v452 = vpack.c.bf16 %v444, %v436
    %v453 = vpack.c.bf16 %v445, %v437
    %v454 = vpack.c.bf16 %v446, %v438
    %v455 = vpack.c.bf16 %v447, %v439
    %v456 = vpack.c.bf16 %v448, %v440
    %v457 = vpack.c.bf16 %v449, %v441
    %v458 = vpack.c.bf16 %v450, %v442
    %v459 = vld [vmem:[#allocation8] sm:$0xf]
    %v460 = vld [vmem:[#allocation8 + $0x4] sm:$0xf]
    %v461 = vld [vmem:[#allocation8 + $0x8] sm:$0xf]
    %v462 = vld [vmem:[#allocation8 + $0xc] sm:$0xf]
    %v463 = vld [vmem:[#allocation8 + $0x10] sm:$0xf]
    %v464 = vld [vmem:[#allocation8 + $0x14] sm:$0xf]
    %v465 = vld [vmem:[#allocation8 + $0x18] sm:$0xf]
    %v466 = vld [vmem:[#allocation8 + $0x1c] sm:$0xf]
    %v467 = vld [vmem:[#allocation8 + $0x20] sm:$0xf]
    %v468 = vld [vmem:[#allocation8 + $0x24] sm:$0xf]
    %v469 = vld [vmem:[#allocation8 + $0x28] sm:$0xf]
    %v470 = vld [vmem:[#allocation8 + $0x2c] sm:$0xf]
    %v471 = vld [vmem:[#allocation8 + $0x30] sm:$0xf]
    %v472 = vld [vmem:[#allocation8 + $0x34] sm:$0xf]
    %v473 = vld [vmem:[#allocation8 + $0x38] sm:$0xf]
    %v474 = vld [vmem:[#allocation8 + $0x3c] sm:$0xf]
    %v475 = vld [vmem:[#allocation8 + $0x40] sm:$0xf]
    %v476 = vld [vmem:[#allocation8 + $0x44] sm:$0xf]
    %v477 = vld [vmem:[#allocation8 + $0x48] sm:$0xf]
    %v478 = vld [vmem:[#allocation8 + $0x4c] sm:$0xf]
    %v479 = vld [vmem:[#allocation8 + $0x50] sm:$0xf]
    %v480 = vld [vmem:[#allocation8 + $0x54] sm:$0xf]
    %v481 = vld [vmem:[#allocation8 + $0x58] sm:$0xf]
    %v482 = vld [vmem:[#allocation8 + $0x5c] sm:$0xf]
    %v483 = vld [vmem:[#allocation8 + $0x60] sm:$0xf]
    %v484 = vld [vmem:[#allocation8 + $0x64] sm:$0xf]
    %v485 = vld [vmem:[#allocation8 + $0x68] sm:$0xf]
    %v486 = vld [vmem:[#allocation8 + $0x6c] sm:$0xf]
    %v487 = vld [vmem:[#allocation8 + $0x70] sm:$0xf]
    %v488 = vld [vmem:[#allocation8 + $0x74] sm:$0xf]
    %v489 = vld [vmem:[#allocation8 + $0x78] sm:$0xf]
    %v490 = vld [vmem:[#allocation8 + $0x7c] sm:$0xf]
    %v491 = vld [vmem:[#allocation8 + $0x80] sm:$0xf]
    %v492 = vld [vmem:[#allocation8 + $0x84] sm:$0xf]
    %v493 = vld [vmem:[#allocation8 + $0x88] sm:$0xf]
    %v494 = vld [vmem:[#allocation8 + $0x8c] sm:$0xf]
    %v495 = vld [vmem:[#allocation8 + $0x90] sm:$0xf]
    %v496 = vld [vmem:[#allocation8 + $0x94] sm:$0xf]
    %v497 = vld [vmem:[#allocation8 + $0x98] sm:$0xf]
    %v498 = vld [vmem:[#allocation8 + $0x9c] sm:$0xf]
    %v499 = vld [vmem:[#allocation8 + $0xa0] sm:$0xf]
    %v500 = vld [vmem:[#allocation8 + $0xa4] sm:$0xf]
    %v501 = vld [vmem:[#allocation8 + $0xa8] sm:$0xf]
    %v502 = vld [vmem:[#allocation8 + $0xac] sm:$0xf]
    %v503 = vld [vmem:[#allocation8 + $0xb0] sm:$0xf]
    %v504 = vld [vmem:[#allocation8 + $0xb4] sm:$0xf]
    %v505 = vld [vmem:[#allocation8 + $0xb8] sm:$0xf]
    %v506 = vld [vmem:[#allocation8 + $0xbc] sm:$0xf]
    %v507 = vld [vmem:[#allocation8 + $0xc0] sm:$0xf]
    %v508 = vld [vmem:[#allocation8 + $0xc4] sm:$0xf]
    %v509 = vld [vmem:[#allocation8 + $0xc8] sm:$0xf]
    %v510 = vld [vmem:[#allocation8 + $0xcc] sm:$0xf]
    %v511 = vld [vmem:[#allocation8 + $0xd0] sm:$0xf]
    %v512 = vld [vmem:[#allocation8 + $0xd4] sm:$0xf]
    %v513 = vld [vmem:[#allocation8 + $0xd8] sm:$0xf]
    %v514 = vld [vmem:[#allocation8 + $0xdc] sm:$0xf]
    %v515 = vld [vmem:[#allocation8 + $0xe0] sm:$0xf]
    %v516 = vld [vmem:[#allocation8 + $0xe4] sm:$0xf]
    %v517 = vld [vmem:[#allocation8 + $0xe8] sm:$0xf]
    %v518 = vld [vmem:[#allocation8 + $0xec] sm:$0xf]
    %v519 = vld [vmem:[#allocation8 + $0xf0] sm:$0xf]
    %v520 = vld [vmem:[#allocation8 + $0xf4] sm:$0xf]
    %v521 = vld [vmem:[#allocation8 + $0xf8] sm:$0xf]
    %v522 = vld [vmem:[#allocation8 + $0xfc] sm:$0xf]
    %v523 = vld [vmem:[#allocation8 + $0x100] sm:$0xf]
    %v524 = vld [vmem:[#allocation8 + $0x104] sm:$0xf]
    %v525 = vld [vmem:[#allocation8 + $0x108] sm:$0xf]
    %v526 = vld [vmem:[#allocation8 + $0x10c] sm:$0xf]
    %v527 = vld [vmem:[#allocation8 + $0x110] sm:$0xf]
    %v528 = vld [vmem:[#allocation8 + $0x114] sm:$0xf]
    %v529 = vld [vmem:[#allocation8 + $0x118] sm:$0xf]
    %v530 = vld [vmem:[#allocation8 + $0x11c] sm:$0xf]
    %v531 = vld [vmem:[#allocation8 + $0x120] sm:$0xf]
    %v532 = vld [vmem:[#allocation8 + $0x124] sm:$0xf]
    %v533 = vld [vmem:[#allocation8 + $0x128] sm:$0xf]
    %v534 = vld [vmem:[#allocation8 + $0x12c] sm:$0xf]
    %v535 = vld [vmem:[#allocation8 + $0x130] sm:$0xf]
    %v536 = vld [vmem:[#allocation8 + $0x134] sm:$0xf]
    %v537 = vld [vmem:[#allocation8 + $0x138] sm:$0xf]
    %v538 = vld [vmem:[#allocation8 + $0x13c] sm:$0xf]
    %v539 = vld [vmem:[#allocation8 + $0x140] sm:$0xf]
    %v540 = vld [vmem:[#allocation8 + $0x144] sm:$0xf]
    %v541 = vld [vmem:[#allocation8 + $0x148] sm:$0xf]
    %v542 = vld [vmem:[#allocation8 + $0x14c] sm:$0xf]
    %v543 = vld [vmem:[#allocation8 + $0x150] sm:$0xf]
    %v544 = vld [vmem:[#allocation8 + $0x154] sm:$0xf]
    %v545 = vld [vmem:[#allocation8 + $0x158] sm:$0xf]
    %v546 = vld [vmem:[#allocation8 + $0x15c] sm:$0xf]
    %v547 = vld [vmem:[#allocation8 + $0x160] sm:$0xf]
    %v548 = vld [vmem:[#allocation8 + $0x164] sm:$0xf]
    %v549 = vld [vmem:[#allocation8 + $0x168] sm:$0xf]
    %v550 = vld [vmem:[#allocation8 + $0x16c] sm:$0xf]
    %v551 = vld [vmem:[#allocation8 + $0x170] sm:$0xf]
    %v552 = vld [vmem:[#allocation8 + $0x174] sm:$0xf]
    %v553 = vld [vmem:[#allocation8 + $0x178] sm:$0xf]
    %v554 = vld [vmem:[#allocation8 + $0x17c] sm:$0xf]
    %v555 = vld [vmem:[#allocation8 + $0x180] sm:$0xf]
    %v556 = vld [vmem:[#allocation8 + $0x184] sm:$0xf]
    %v557 = vld [vmem:[#allocation8 + $0x188] sm:$0xf]
    %v558 = vld [vmem:[#allocation8 + $0x18c] sm:$0xf]
    %v559 = vld [vmem:[#allocation8 + $0x190] sm:$0xf]
    %v560 = vld [vmem:[#allocation8 + $0x194] sm:$0xf]
    %v561 = vld [vmem:[#allocation8 + $0x198] sm:$0xf]
    %v562 = vld [vmem:[#allocation8 + $0x19c] sm:$0xf]
    %v563 = vld [vmem:[#allocation8 + $0x1a0] sm:$0xf]
    %v564 = vld [vmem:[#allocation8 + $0x1a4] sm:$0xf]
    %v565 = vld [vmem:[#allocation8 + $0x1a8] sm:$0xf]
    %v566 = vld [vmem:[#allocation8 + $0x1ac] sm:$0xf]
    %v567 = vld [vmem:[#allocation8 + $0x1b0] sm:$0xf]
    %v568 = vld [vmem:[#allocation8 + $0x1b4] sm:$0xf]
    %v569 = vld [vmem:[#allocation8 + $0x1b8] sm:$0xf]
    %v570 = vld [vmem:[#allocation8 + $0x1bc] sm:$0xf]
    %v571 = vld [vmem:[#allocation8 + $0x1c0] sm:$0xf]
    %v572 = vld [vmem:[#allocation8 + $0x1c4] sm:$0xf]
    %v573 = vld [vmem:[#allocation8 + $0x1c8] sm:$0xf]
    %v574 = vld [vmem:[#allocation8 + $0x1cc] sm:$0xf]
    %v575 = vld [vmem:[#allocation8 + $0x1d0] sm:$0xf]
    %v576 = vld [vmem:[#allocation8 + $0x1d4] sm:$0xf]
    %v577 = vld [vmem:[#allocation8 + $0x1d8] sm:$0xf]
    %v578 = vld [vmem:[#allocation8 + $0x1dc] sm:$0xf]
    %v579 = vld [vmem:[#allocation8 + $0x1e0] sm:$0xf]
    %v580 = vld [vmem:[#allocation8 + $0x1e4] sm:$0xf]
    %v581 = vld [vmem:[#allocation8 + $0x1e8] sm:$0xf]
    %v582 = vld [vmem:[#allocation8 + $0x1ec] sm:$0xf]
    %v583 = vld [vmem:[#allocation8 + $0x1f0] sm:$0xf]
    %v584 = vld [vmem:[#allocation8 + $0x1f4] sm:$0xf]
    %v585 = vld [vmem:[#allocation8 + $0x1f8] sm:$0xf]
    %v586 = vld [vmem:[#allocation8 + $0x1fc] sm:$0xf]
    %v587 = vld [vmem:[#allocation10] sm:$0x1]
    %v589 = vlaneseq
    %v590 = vshrl.u32 %v589, 7
    %v591 = vsub.s32 0, %v590
    %v592 = vrot.slane %v587, %v591
    %v722 = vunpack.c.l.b16 %v459
    %v723 = vunpack.c.l.b16 %v460
    %v724 = vunpack.c.l.b16 %v461
    %v725 = vunpack.c.l.b16 %v462
    %v726 = vunpack.c.l.b16 %v463
    %v727 = vunpack.c.l.b16 %v464
    %v728 = vunpack.c.l.b16 %v465
    %v729 = vunpack.c.l.b16 %v466
    %v730 = vunpack.c.l.b16 %v467
    %v731 = vunpack.c.l.b16 %v468
    %v732 = vunpack.c.l.b16 %v469
    %v733 = vunpack.c.l.b16 %v470
    %v734 = vunpack.c.l.b16 %v471
    %v735 = vunpack.c.l.b16 %v472
    %v736 = vunpack.c.l.b16 %v473
    %v737 = vunpack.c.l.b16 %v474
    %v738 = vunpack.c.l.b16 %v475
    %v739 = vunpack.c.l.b16 %v476
    %v740 = vunpack.c.l.b16 %v477
    %v741 = vunpack.c.l.b16 %v478
    %v742 = vunpack.c.l.b16 %v479
    %v743 = vunpack.c.l.b16 %v480
    %v744 = vunpack.c.l.b16 %v481
    %v745 = vunpack.c.l.b16 %v482
    %v746 = vunpack.c.l.b16 %v483
    %v747 = vunpack.c.l.b16 %v484
    %v748 = vunpack.c.l.b16 %v485
    %v749 = vunpack.c.l.b16 %v486
    %v750 = vunpack.c.l.b16 %v487
    %v751 = vunpack.c.l.b16 %v488
    %v752 = vunpack.c.l.b16 %v489
    %v753 = vunpack.c.l.b16 %v490
    %v754 = vunpack.c.l.b16 %v491
    %v755 = vunpack.c.l.b16 %v492
    %v756 = vunpack.c.l.b16 %v493
    %v757 = vunpack.c.l.b16 %v494
    %v758 = vunpack.c.l.b16 %v495
    %v759 = vunpack.c.l.b16 %v496
    %v760 = vunpack.c.l.b16 %v497
    %v761 = vunpack.c.l.b16 %v498
    %v762 = vunpack.c.l.b16 %v499
    %v763 = vunpack.c.l.b16 %v500
    %v764 = vunpack.c.l.b16 %v501
    %v765 = vunpack.c.l.b16 %v502
    %v766 = vunpack.c.l.b16 %v503
    %v767 = vunpack.c.l.b16 %v504
    %v768 = vunpack.c.l.b16 %v505
    %v769 = vunpack.c.l.b16 %v506
    %v770 = vunpack.c.l.b16 %v507
    %v771 = vunpack.c.l.b16 %v508
    %v772 = vunpack.c.l.b16 %v509
    %v773 = vunpack.c.l.b16 %v510
    %v774 = vunpack.c.l.b16 %v511
    %v775 = vunpack.c.l.b16 %v512
    %v776 = vunpack.c.l.b16 %v513
    %v777 = vunpack.c.l.b16 %v514
    %v778 = vunpack.c.l.b16 %v515
    %v779 = vunpack.c.l.b16 %v516
    %v780 = vunpack.c.l.b16 %v517
    %v781 = vunpack.c.l.b16 %v518
    %v782 = vunpack.c.l.b16 %v519
    %v783 = vunpack.c.l.b16 %v520
    %v784 = vunpack.c.l.b16 %v521
    %v785 = vunpack.c.l.b16 %v522
    %v786 = vunpack.c.l.b16 %v523
    %v787 = vunpack.c.l.b16 %v524
    %v788 = vunpack.c.l.b16 %v525
    %v789 = vunpack.c.l.b16 %v526
    %v790 = vunpack.c.l.b16 %v527
    %v791 = vunpack.c.l.b16 %v528
    %v792 = vunpack.c.l.b16 %v529
    %v793 = vunpack.c.l.b16 %v530
    %v794 = vunpack.c.l.b16 %v531
    %v795 = vunpack.c.l.b16 %v532
    %v796 = vunpack.c.l.b16 %v533
    %v797 = vunpack.c.l.b16 %v534
    %v798 = vunpack.c.l.b16 %v535
    %v799 = vunpack.c.l.b16 %v536
    %v800 = vunpack.c.l.b16 %v537
    %v801 = vunpack.c.l.b16 %v538
    %v802 = vunpack.c.l.b16 %v539
    %v803 = vunpack.c.l.b16 %v540
    %v804 = vunpack.c.l.b16 %v541
    %v805 = vunpack.c.l.b16 %v542
    %v806 = vunpack.c.l.b16 %v543
    %v807 = vunpack.c.l.b16 %v544
    %v808 = vunpack.c.l.b16 %v545
    %v809 = vunpack.c.l.b16 %v546
    %v810 = vunpack.c.l.b16 %v547
    %v811 = vunpack.c.l.b16 %v548
    %v812 = vunpack.c.l.b16 %v549
    %v813 = vunpack.c.l.b16 %v550
    %v814 = vunpack.c.l.b16 %v551
    %v815 = vunpack.c.l.b16 %v552
    %v816 = vunpack.c.l.b16 %v553
    %v817 = vunpack.c.l.b16 %v554
    %v818 = vunpack.c.l.b16 %v555
    %v819 = vunpack.c.l.b16 %v556
    %v820 = vunpack.c.l.b16 %v557
    %v821 = vunpack.c.l.b16 %v558
    %v822 = vunpack.c.l.b16 %v559
    %v823 = vunpack.c.l.b16 %v560
    %v824 = vunpack.c.l.b16 %v561
    %v825 = vunpack.c.l.b16 %v562
    %v826 = vunpack.c.l.b16 %v563
    %v827 = vunpack.c.l.b16 %v564
    %v828 = vunpack.c.l.b16 %v565
    %v829 = vunpack.c.l.b16 %v566
    %v830 = vunpack.c.l.b16 %v567
    %v831 = vunpack.c.l.b16 %v568
    %v832 = vunpack.c.l.b16 %v569
    %v833 = vunpack.c.l.b16 %v570
    %v834 = vunpack.c.l.b16 %v571
    %v835 = vunpack.c.l.b16 %v572
    %v836 = vunpack.c.l.b16 %v573
    %v837 = vunpack.c.l.b16 %v574
    %v838 = vunpack.c.l.b16 %v575
    %v839 = vunpack.c.l.b16 %v576
    %v840 = vunpack.c.l.b16 %v577
    %v841 = vunpack.c.l.b16 %v578
    %v842 = vunpack.c.l.b16 %v579
    %v843 = vunpack.c.l.b16 %v580
    %v844 = vunpack.c.l.b16 %v581
    %v845 = vunpack.c.l.b16 %v582
    %v846 = vunpack.c.l.b16 %v583
    %v847 = vunpack.c.l.b16 %v584
    %v848 = vunpack.c.l.b16 %v585
    %v849 = vunpack.c.l.b16 %v586
    %v850 = vpack.c.b16 %v723, %v722
    %v851 = vpack.c.b16 %v725, %v724
    %v852 = vpack.c.b16 %v727, %v726
    %v853 = vpack.c.b16 %v729, %v728
    %v854 = vpack.c.b16 %v731, %v730
    %v855 = vpack.c.b16 %v733, %v732
    %v856 = vpack.c.b16 %v735, %v734
    %v857 = vpack.c.b16 %v737, %v736
    %v858 = vpack.c.b16 %v739, %v738
    %v859 = vpack.c.b16 %v741, %v740
    %v860 = vpack.c.b16 %v743, %v742
    %v861 = vpack.c.b16 %v745, %v744
    %v862 = vpack.c.b16 %v747, %v746
    %v863 = vpack.c.b16 %v749, %v748
    %v864 = vpack.c.b16 %v751, %v750
    %v865 = vpack.c.b16 %v753, %v752
    %v866 = vpack.c.b16 %v755, %v754
    %v867 = vpack.c.b16 %v757, %v756
    %v868 = vpack.c.b16 %v759, %v758
    %v869 = vpack.c.b16 %v761, %v760
    %v870 = vpack.c.b16 %v763, %v762
    %v871 = vpack.c.b16 %v765, %v764
    %v872 = vpack.c.b16 %v767, %v766
    %v873 = vpack.c.b16 %v769, %v768
    %v874 = vpack.c.b16 %v771, %v770
    %v875 = vpack.c.b16 %v773, %v772
    %v876 = vpack.c.b16 %v775, %v774
    %v877 = vpack.c.b16 %v777, %v776
    %v878 = vpack.c.b16 %v779, %v778
    %v879 = vpack.c.b16 %v781, %v780
    %v880 = vpack.c.b16 %v783, %v782
    %v881 = vpack.c.b16 %v785, %v784
    %v882 = vpack.c.b16 %v787, %v786
    %v883 = vpack.c.b16 %v789, %v788
    %v884 = vpack.c.b16 %v791, %v790
    %v885 = vpack.c.b16 %v793, %v792
    %v886 = vpack.c.b16 %v795, %v794
    %v887 = vpack.c.b16 %v797, %v796
    %v888 = vpack.c.b16 %v799, %v798
    %v889 = vpack.c.b16 %v801, %v800
    %v890 = vpack.c.b16 %v803, %v802
    %v891 = vpack.c.b16 %v805, %v804
    %v892 = vpack.c.b16 %v807, %v806
    %v893 = vpack.c.b16 %v809, %v808
    %v894 = vpack.c.b16 %v811, %v810
    %v895 = vpack.c.b16 %v813, %v812
    %v896 = vpack.c.b16 %v815, %v814
    %v897 = vpack.c.b16 %v817, %v816
    %v898 = vpack.c.b16 %v819, %v818
    %v899 = vpack.c.b16 %v821, %v820
    %v900 = vpack.c.b16 %v823, %v822
    %v901 = vpack.c.b16 %v825, %v824
    %v902 = vpack.c.b16 %v827, %v826
    %v903 = vpack.c.b16 %v829, %v828
    %v904 = vpack.c.b16 %v831, %v830
    %v905 = vpack.c.b16 %v833, %v832
    %v906 = vpack.c.b16 %v835, %v834
    %v907 = vpack.c.b16 %v837, %v836
    %v908 = vpack.c.b16 %v839, %v838
    %v909 = vpack.c.b16 %v841, %v840
    %v910 = vpack.c.b16 %v843, %v842
    %v911 = vpack.c.b16 %v845, %v844
    %v912 = vpack.c.b16 %v847, %v846
    %v913 = vpack.c.b16 %v849, %v848
    %978 = vmatprep.subr.bf16.mxu0 0
    %979 = vmatpush1.bf16.msra.mxu0 %v850
    %980 = vmatprep.subr.bf16.mxu0 0
    %981 = vmatpush1.bf16.msra.mxu0 %v851
    %982 = vmatprep.subr.bf16.mxu0 0
    %983 = vmatpush1.bf16.msra.mxu0 %v852
    %984 = vmatprep.subr.bf16.mxu0 0
    %985 = vmatpush1.bf16.msra.mxu0 %v853
    %986 = vmatprep.subr.bf16.mxu0 0
    %987 = vmatpush1.bf16.msra.mxu0 %v854
    %988 = vmatprep.subr.bf16.mxu0 0
    %989 = vmatpush1.bf16.msra.mxu0 %v855
    %990 = vmatprep.subr.bf16.mxu0 0
    %991 = vmatpush1.bf16.msra.mxu0 %v856
    %992 = vmatprep.subr.bf16.mxu0 0
    %993 = vmatpush1.bf16.msra.mxu0 %v857
    %994 = vmatprep.subr.bf16.mxu0 0
    %995 = vmatpush1.bf16.msra.mxu0 %v858
    %996 = vmatprep.subr.bf16.mxu0 0
    %997 = vmatpush1.bf16.msra.mxu0 %v859
    %998 = vmatprep.subr.bf16.mxu0 0
    %999 = vmatpush1.bf16.msra.mxu0 %v860
    %1000 = vmatprep.subr.bf16.mxu0 0
    %1001 = vmatpush1.bf16.msra.mxu0 %v861
    %1002 = vmatprep.subr.bf16.mxu0 0
    %1003 = vmatpush1.bf16.msra.mxu0 %v862
    %1004 = vmatprep.subr.bf16.mxu0 0
    %1005 = vmatpush1.bf16.msra.mxu0 %v863
    %1006 = vmatprep.subr.bf16.mxu0 0
    %1007 = vmatpush1.bf16.msra.mxu0 %v864
    %1008 = vmatprep.subr.bf16.mxu0 0
    %1009 = vmatpush1.bf16.msra.mxu0 %v865
    %1010 = vmatprep.mubr.bf16.mxu0 %v452
    %1011 = vmatmul.mubr.bf16.gmra.mrb[0].mxu0 %v451
    %v1012 = vpop.f32.mrb[0].mxu0
    %v1013 = vadd.f32 %v592, %v1012
    %v1014 = vpop.f32.mrb[0].mxu0
    %v1015 = vpop.f32.mrb[0].mxu0
    %v1016 = vadd.f32 %v592, %v1015
    %v1017 = vpop.f32.mrb[0].mxu0
    %1018 = vdwg.mxu0
    %1019 = vmatprep.subr.bf16.mxu0 0
    %1020 = vmatpush1.bf16.msra.mxu0 %v866
    %1021 = vmatprep.subr.bf16.mxu0 0
    %1022 = vmatpush1.bf16.msra.mxu0 %v867
    %1023 = vmatprep.subr.bf16.mxu0 0
    %1024 = vmatpush1.bf16.msra.mxu0 %v868
    %1025 = vmatprep.subr.bf16.mxu0 0
    %1026 = vmatpush1.bf16.msra.mxu0 %v869
    %1027 = vmatprep.subr.bf16.mxu0 0
    %1028 = vmatpush1.bf16.msra.mxu0 %v870
    %1029 = vmatprep.subr.bf16.mxu0 0
    %1030 = vmatpush1.bf16.msra.mxu0 %v871
    %1031 = vmatprep.subr.bf16.mxu0 0
    %1032 = vmatpush1.bf16.msra.mxu0 %v872
    %1033 = vmatprep.subr.bf16.mxu0 0
    %1034 = vmatpush1.bf16.msra.mxu0 %v873
    %1035 = vmatprep.subr.bf16.mxu0 0
    %1036 = vmatpush1.bf16.msra.mxu0 %v874
    %1037 = vmatprep.subr.bf16.mxu0 0
    %1038 = vmatpush1.bf16.msra.mxu0 %v875
    %1039 = vmatprep.subr.bf16.mxu0 0
    %1040 = vmatpush1.bf16.msra.mxu0 %v876
    %1041 = vmatprep.subr.bf16.mxu0 0
    %1042 = vmatpush1.bf16.msra.mxu0 %v877
    %1043 = vmatprep.subr.bf16.mxu0 0
    %1044 = vmatpush1.bf16.msra.mxu0 %v878
    %1045 = vmatprep.subr.bf16.mxu0 0
    %1046 = vmatpush1.bf16.msra.mxu0 %v879
    %1047 = vmatprep.subr.bf16.mxu0 0
    %1048 = vmatpush1.bf16.msra.mxu0 %v880
    %1049 = vmatprep.subr.bf16.mxu0 0
    %1050 = vmatpush1.bf16.msra.mxu0 %v881
    %1051 = vmatprep.mubr.bf16.mxu0 %v454
    %1052 = vmatmul.mubr.bf16.gmra.mrb[0].mxu0 %v453
    %v1053 = vpop.f32.mrb[0].mxu0
    %v1054 = vadd.f32 %v1013, %v1053
    %v1055 = vpop.f32.mrb[0].mxu0
    %v1056 = vpop.f32.mrb[0].mxu0
    %v1057 = vadd.f32 %v1016, %v1056
    %v1058 = vpop.f32.mrb[0].mxu0
    %1059 = vdwg.mxu0
    %1060 = vmatprep.subr.bf16.mxu0 0
    %1061 = vmatpush1.bf16.msra.mxu0 %v882
    %1062 = vmatprep.subr.bf16.mxu0 0
    %1063 = vmatpush1.bf16.msra.mxu0 %v883
    %1064 = vmatprep.subr.bf16.mxu0 0
    %1065 = vmatpush1.bf16.msra.mxu0 %v884
    %1066 = vmatprep.subr.bf16.mxu0 0
    %1067 = vmatpush1.bf16.msra.mxu0 %v885
    %1068 = vmatprep.subr.bf16.mxu0 0
    %1069 = vmatpush1.bf16.msra.mxu0 %v886
    %1070 = vmatprep.subr.bf16.mxu0 0
    %1071 = vmatpush1.bf16.msra.mxu0 %v887
    %1072 = vmatprep.subr.bf16.mxu0 0
    %1073 = vmatpush1.bf16.msra.mxu0 %v888
    %1074 = vmatprep.subr.bf16.mxu0 0
    %1075 = vmatpush1.bf16.msra.mxu0 %v889
    %1076 = vmatprep.subr.bf16.mxu0 0
    %1077 = vmatpush1.bf16.msra.mxu0 %v890
    %1078 = vmatprep.subr.bf16.mxu0 0
    %1079 = vmatpush1.bf16.msra.mxu0 %v891
    %1080 = vmatprep.subr.bf16.mxu0 0
    %1081 = vmatpush1.bf16.msra.mxu0 %v892
    %1082 = vmatprep.subr.bf16.mxu0 0
    %1083 = vmatpush1.bf16.msra.mxu0 %v893
    %1084 = vmatprep.subr.bf16.mxu0 0
    %1085 = vmatpush1.bf16.msra.mxu0 %v894
    %1086 = vmatprep.subr.bf16.mxu0 0
    %1087 = vmatpush1.bf16.msra.mxu0 %v895
    %1088 = vmatprep.subr.bf16.mxu0 0
    %1089 = vmatpush1.bf16.msra.mxu0 %v896
    %1090 = vmatprep.subr.bf16.mxu0 0
    %1091 = vmatpush1.bf16.msra.mxu0 %v897
    %1092 = vmatprep.mubr.bf16.mxu0 %v456
    %1093 = vmatmul.mubr.bf16.gmra.mrb[0].mxu0 %v455
    %v1094 = vpop.f32.mrb[0].mxu0
    %v1095 = vadd.f32 %v1054, %v1094
    %v1096 = vpop.f32.mrb[0].mxu0
    %v1097 = vpop.f32.mrb[0].mxu0
    %v1098 = vadd.f32 %v1057, %v1097
    %v1099 = vpop.f32.mrb[0].mxu0
    %1100 = vdwg.mxu0
    %1101 = vmatprep.subr.bf16.mxu0 0
    %1102 = vmatpush1.bf16.msra.mxu0 %v898
    %1103 = vmatprep.subr.bf16.mxu0 0
    %1104 = vmatpush1.bf16.msra.mxu0 %v899
    %1105 = vmatprep.subr.bf16.mxu0 0
    %1106 = vmatpush1.bf16.msra.mxu0 %v900
    %1107 = vmatprep.subr.bf16.mxu0 0
    %1108 = vmatpush1.bf16.msra.mxu0 %v901
    %1109 = vmatprep.subr.bf16.mxu0 0
    %1110 = vmatpush1.bf16.msra.mxu0 %v902
    %1111 = vmatprep.subr.bf16.mxu0 0
    %1112 = vmatpush1.bf16.msra.mxu0 %v903
    %1113 = vmatprep.subr.bf16.mxu0 0
    %1114 = vmatpush1.bf16.msra.mxu0 %v904
    %1115 = vmatprep.subr.bf16.mxu0 0
    %1116 = vmatpush1.bf16.msra.mxu0 %v905
    %1117 = vmatprep.subr.bf16.mxu0 0
    %1118 = vmatpush1.bf16.msra.mxu0 %v906
    %1119 = vmatprep.subr.bf16.mxu0 0
    %1120 = vmatpush1.bf16.msra.mxu0 %v907
    %1121 = vmatprep.subr.bf16.mxu0 0
    %1122 = vmatpush1.bf16.msra.mxu0 %v908
    %1123 = vmatprep.subr.bf16.mxu0 0
    %1124 = vmatpush1.bf16.msra.mxu0 %v909
    %1125 = vmatprep.subr.bf16.mxu0 0
    %1126 = vmatpush1.bf16.msra.mxu0 %v910
    %1127 = vmatprep.subr.bf16.mxu0 0
    %1128 = vmatpush1.bf16.msra.mxu0 %v911
    %1129 = vmatprep.subr.bf16.mxu0 0
    %1130 = vmatpush1.bf16.msra.mxu0 %v912
    %1131 = vmatprep.subr.bf16.mxu0 0
    %1132 = vmatpush1.bf16.msra.mxu0 %v913
    %1133 = vmatprep.mubr.bf16.mxu0 %v458
    %1134 = vmatmul.mubr.bf16.gmra.mrb[0].mxu0 %v457
    %v1135 = vpop.f32.mrb[0].mxu0
    %v1136 = vadd.f32 %v1095, %v1135
    %v1137 = vpop.f32.mrb[0].mxu0
    %v1138 = vpop.f32.mrb[0].mxu0
    %v1139 = vadd.f32 %v1098, %v1138
    %v1140 = vpop.f32.mrb[0].mxu0
    %1141 = vdwg.mxu0
    %vm1142 = vcmask 23552
    %1143 = vst.msk [vmem:[#allocation11] sm:$0xff] %vm1142, %v1136
    %1144 = vst.msk [vmem:[#allocation11 + $0x8] sm:$0xff] %vm1142, %v1139
    // Predicated region
    $region42: #{dual_gnn_forward.26} parent=1 // pred_check
      _
    $region43: #{dual_gnn_forward.26} parent=1 // pred_check_branch
      %1146 = sbr.rel (0) target = $region45
    $region44: #{dual_gnn_forward.26} parent=1 // pred_region
      %s1148 = ssub.s32 256, 256
      %1149 = vsyncadd [#allocation4], %s1148
      %s1150 = sshll.u32 [#allocation11], 4
      %s1151 = int_to_ptr.vmem [resolvable:$true] %s1150
      %1156 = dma.vmem_to_hbm [thread:$0]  %s1151, 256, %s5, [#allocation4], 128, 128, 8
    $region45: #{dual_gnn_forward.26} parent=1 // pred_fallthru
      _
    // Predicated region
    $region46: #{dual_gnn_forward.26} parent=1 // pred_check
      _
    $region47: #{dual_gnn_forward.26} parent=1 // pred_check_branch
      %1158 = sbr.rel (0) target = $region49
    $region48: #{dual_gnn_forward.26} parent=1 // pred_region
      %1159 = dma.done [#allocation4], 256
    $region49: #{dual_gnn_forward.26} parent=1 // pred_fallthru
      _
    %1160 = vsyncpa [#allocation3], 1
    %1161 = vsyncpa [#allocation6], 1
    %1162 = vsyncpa [#allocation9], 1
    %1163 = vsyncpa [#allocation4], 1

// kernel: dual_gnn_forward.27
$region0: #{dual_gnn_forward.27}
  #allocation0 [shape = 'u32[]', space=smem, size = 0x4, offset = 0x4, fixed_abs, tag = 'smem constant byte address 0x4 - core index']
  #allocation1 [shape = 'u32[144,128]{1,0:T(1,128)}', space=vmem, size = 0x12000, scoped, tag = 'internal scratch']
  %s0 = inlined_call_operand.hbm [shape: f32[48,9], index: 0, kind: input, shape index: {}]
  %s1 = inlined_call_operand.hbm [shape: f32[48,9], index: 1, kind: input, shape index: {}]
  %s2 = inlined_call_operand.hbm [shape: bf16[48,12], index: 2, kind: input, shape index: {}]
  %s3 = inlined_call_operand.hbm [shape: f32[1,9], index: 3, kind: input, shape index: {}]
  %s4 = inlined_call_operand.hbm [shape: bf16[12,288], index: 4, kind: input, shape index: {}]
  %s5 = inlined_call_operand.hbm [shape: f32[48,32], index: 5, kind: output, shape index: {}]
  %s6 = sld [smem:[#allocation0]]
  $region50: #{dual_gnn_forward.27} parent=0
    _
  %s8 = ssub.s32 1, %s6
  %s9 = scalar_select 0, %s8, %s6
  $region1: #{dual_gnn_forward.27} parent=0
    #allocation2 [shape = 'u8[24576]{0}', space=vmem, size = 0x6000, scoped, tag = 'input window, operand 0, single buffered']
    #allocation3 [shape = 's32[1]{0}', space=sflag, size = 0x4, scoped, tag = 'scoped memory for dual_gnn_forward.27']
    #allocation4 [shape = 's32[1]{0}', space=sflag, size = 0x4, scoped, tag = 'scoped memory for dual_gnn_forward.27']
    #allocation5 [shape = 'u8[24576]{0}', space=vmem, size = 0x6000, scoped, tag = 'input window, operand 1, single buffered']
    #allocation6 [shape = 's32[1]{0}', space=sflag, size = 0x4, scoped, tag = 'scoped memory for dual_gnn_forward.27']
    #allocation7 [shape = 'u8[12288]{0}', space=vmem, size = 0x3000, scoped, tag = 'input window, operand 2, single buffered']
    #allocation8 [shape = 'u8[512]{0}', space=vmem, size = 0x400, scoped, tag = 'input window, operand 3, single buffered']
    #allocation9 [shape = 's32[1]{0}', space=sflag, size = 0x4, scoped, tag = 'scoped memory for dual_gnn_forward.27']
    #allocation10 [shape = 'u8[12288]{0}', space=vmem, size = 0x3000, scoped, tag = 'input window, operand 4, single buffered']
    #allocation11 [shape = 'u8[24576]{0}', space=vmem, size = 0x6000, scoped, tag = 'output window, operand 0, single buffered']
    %10 = vsyncpa [#allocation3], 0
    %11 = vsyncpa [#allocation6], 0
    %12 = vsyncpa [#allocation9], 0
    %13 = vsyncpa [#allocation4], 0
    // Predicated region
    $region2: #{dual_gnn_forward.27} parent=1 // pred_check
      _
    $region3: #{dual_gnn_forward.27} parent=1 // pred_check_branch
      %15 = sbr.rel (0) target = $region5
    $region4: #{dual_gnn_forward.27} parent=1 // pred_region
      %s17 = ssub.s32 768, 768
      %18 = vsyncadd [#allocation3], %s17
      %s19 = sshll.u32 [#allocation2], 4
      %s20 = int_to_ptr.vmem [resolvable:$true] %s19
      %25 = dma.hbm_to_vmem [thread:$0]  %s0, 768, %s20, [#allocation3], 128, 128, 8
    $region5: #{dual_gnn_forward.27} parent=1 // pred_fallthru
      _
    // Predicated region
    $region6: #{dual_gnn_forward.27} parent=1 // pred_check
      _
    $region7: #{dual_gnn_forward.27} parent=1 // pred_check_branch
      %27 = sbr.rel (0) target = $region9
    $region8: #{dual_gnn_forward.27} parent=1 // pred_region
      %s29 = ssub.s32 768, 768
      %30 = vsyncadd [#allocation6], %s29
      %s31 = sshll.u32 [#allocation5], 4
      %s32 = int_to_ptr.vmem [resolvable:$true] %s31
      %37 = dma.hbm_to_vmem [thread:$0]  %s1, 768, %s32, [#allocation6], 128, 128, 8
    $region9: #{dual_gnn_forward.27} parent=1 // pred_fallthru
      _
    // Predicated region
    $region10: #{dual_gnn_forward.27} parent=1 // pred_check
      _
    $region11: #{dual_gnn_forward.27} parent=1 // pred_check_branch
      %39 = sbr.rel (0) target = $region13
    $region12: #{dual_gnn_forward.27} parent=1 // pred_region
      %s41 = ssub.s32 384, 384
      %42 = vsyncadd [#allocation6], %s41
      %s43 = sshll.u32 [#allocation7], 4
      %s44 = int_to_ptr.vmem [resolvable:$true] %s43
      %49 = dma.hbm_to_vmem [thread:$0]  %s2, 384, %s44, [#allocation6], 64, 64, 4
    $region13: #{dual_gnn_forward.27} parent=1 // pred_fallthru
      _
    // Predicated region
    $region14: #{dual_gnn_forward.27} parent=1 // pred_check
      _
    $region15: #{dual_gnn_forward.27} parent=1 // pred_check_branch
      %51 = sbr.rel (0) target = $region17
    $region16: #{dual_gnn_forward.27} parent=1 // pred_region
      %s53 = ssub.s32 16, 16
      %54 = vsyncadd [#allocation9], %s53
      %s56 = sshll.u32 [#allocation8], 4
      %s57 = int_to_ptr.vmem [resolvable:$true] %s56
      %59 = dma.hbm_to_vmem [thread:$0]  %s3, 16, %s57, [#allocation9]
    $region17: #{dual_gnn_forward.27} parent=1 // pred_fallthru
      _
    // Predicated region
    $region18: #{dual_gnn_forward.27} parent=1 // pred_check
      _
    $region19: #{dual_gnn_forward.27} parent=1 // pred_check_branch
      %61 = sbr.rel (0) target = $region21
    $region20: #{dual_gnn_forward.27} parent=1 // pred_region
      %s63 = ssub.s32 384, 384
      %64 = vsyncadd [#allocation9], %s63
      %s65 = sshll.u32 [#allocation10], 4
      %s66 = int_to_ptr.vmem [resolvable:$true] %s65
      %71 = dma.hbm_to_vmem [thread:$0]  %s4, 384, %s66, [#allocation9], 192, 192, 12
    $region21: #{dual_gnn_forward.27} parent=1 // pred_fallthru
      _
    // Predicated region
    $region22: #{dual_gnn_forward.27} parent=1 // pred_check
      _
    $region23: #{dual_gnn_forward.27} parent=1 // pred_check_branch
      %73 = sbr.rel (0) target = $region25
    $region24: #{dual_gnn_forward.27} parent=1 // pred_region
      %74 = dma.done [#allocation3], 768
    $region25: #{dual_gnn_forward.27} parent=1 // pred_fallthru
      _
    // Predicated region
    $region26: #{dual_gnn_forward.27} parent=1 // pred_check
      _
    $region27: #{dual_gnn_forward.27} parent=1 // pred_check_branch
      %76 = sbr.rel (0) target = $region29
    $region28: #{dual_gnn_forward.27} parent=1 // pred_region
      %77 = dma.done [#allocation6], 768
    $region29: #{dual_gnn_forward.27} parent=1 // pred_fallthru
      _
    // Predicated region
    $region30: #{dual_gnn_forward.27} parent=1 // pred_check
      _
    $region31: #{dual_gnn_forward.27} parent=1 // pred_check_branch
      %79 = sbr.rel (0) target = $region33
    $region32: #{dual_gnn_forward.27} parent=1 // pred_region
      %80 = dma.done [#allocation6], 384
    $region33: #{dual_gnn_forward.27} parent=1 // pred_fallthru
      _
    // Predicated region
    $region34: #{dual_gnn_forward.27} parent=1 // pred_check
      _
    $region35: #{dual_gnn_forward.27} parent=1 // pred_check_branch
      %82 = sbr.rel (0) target = $region37
    $region36: #{dual_gnn_forward.27} parent=1 // pred_region
      %83 = dma.done [#allocation9], 16
    $region37: #{dual_gnn_forward.27} parent=1 // pred_fallthru
      _
    // Predicated region
    $region38: #{dual_gnn_forward.27} parent=1 // pred_check
      _
    $region39: #{dual_gnn_forward.27} parent=1 // pred_check_branch
      %85 = sbr.rel (0) target = $region41
    $region40: #{dual_gnn_forward.27} parent=1 // pred_region
      %86 = dma.done [#allocation9], 384
    $region41: #{dual_gnn_forward.27} parent=1 // pred_fallthru
      _
    %v88 = vld [vmem:[#allocation2] sm:$0xff]
    %v89 = vld [vmem:[#allocation2 + $0x8] sm:$0xff]
    %v90 = vld [vmem:[#allocation2 + $0x10] sm:$0xff]
    %v91 = vld [vmem:[#allocation2 + $0x18] sm:$0xff]
    %v92 = vld [vmem:[#allocation2 + $0x20] sm:$0xff]
    %v93 = vld [vmem:[#allocation2 + $0x28] sm:$0xff]
    %v94 = vld [vmem:[#allocation5] sm:$0xff]
    %v95 = vld [vmem:[#allocation5 + $0x8] sm:$0xff]
    %v96 = vld [vmem:[#allocation5 + $0x10] sm:$0xff]
    %v97 = vld [vmem:[#allocation5 + $0x18] sm:$0xff]
    %v98 = vld [vmem:[#allocation5 + $0x20] sm:$0xff]
    %v99 = vld [vmem:[#allocation5 + $0x28] sm:$0xff]
    %v100 = vsub.f32 %v88, %v94
    %v101 = vsub.f32 %v89, %v95
    %v102 = vsub.f32 %v90, %v96
    %v103 = vsub.f32 %v91, %v97
    %v104 = vsub.f32 %v92, %v98
    %v105 = vsub.f32 %v93, %v99
    %v106 = vld [vmem:[#allocation8] sm:$0x1]
    %v108 = vlaneseq
    %v109 = vshrl.u32 %v108, 7
    %v110 = vsub.s32 0, %v109
    %v111 = vrot.slane %v106, %v110
    %v113 = vadd.f32 %v100, %v111
    %v114 = vadd.f32 %v101, %v111
    %v115 = vadd.f32 %v102, %v111
    %v116 = vadd.f32 %v103, %v111
    %v117 = vadd.f32 %v104, %v111
    %v118 = vadd.f32 %v105, %v111
    %vm119 = vcmask 72704
    %v120 = vsel %vm119, %v113, -inf
    %121 = vmax.xlane.f32.xlu0 %v120
    %v122 = vpop.xlane.xlu0 %121
    %v123 = vsel %vm119, %v114, -inf
    %124 = vmax.xlane.f32.xlu0 %v123
    %v125 = vpop.xlane.xlu0 %124
    %v126 = vsel %vm119, %v115, -inf
    %127 = vmax.xlane.f32.xlu0 %v126
    %v128 = vpop.xlane.xlu0 %127
    %v129 = vsel %vm119, %v116, -inf
    %130 = vmax.xlane.f32.xlu0 %v129
    %v131 = vpop.xlane.xlu0 %130
    %v132 = vsel %vm119, %v117, -inf
    %133 = vmax.xlane.f32.xlu0 %v132
    %v134 = vpop.xlane.xlu0 %133
    %v135 = vsel %vm119, %v118, -inf
    %136 = vmax.xlane.f32.xlu0 %v135
    %v137 = vpop.xlane.xlu0 %136
    %v138 = vsub.f32 %v113, %v122
    %v139 = vsub.f32 %v114, %v125
    %v140 = vsub.f32 %v115, %v128
    %v141 = vsub.f32 %v116, %v131
    %v142 = vsub.f32 %v117, %v134
    %v143 = vsub.f32 %v118, %v137
    %v144 = vmul.f32 %v138, 1.442695
    %v145 = vpow.pop %v144
    %v146 = vmul.f32 %v139, 1.442695
    %v147 = vpow.pop %v146
    %v148 = vmul.f32 %v140, 1.442695
    %v149 = vpow.pop %v148
    %v150 = vmul.f32 %v141, 1.442695
    %v151 = vpow.pop %v150
    %v152 = vmul.f32 %v142, 1.442695
    %v153 = vpow.pop %v152
    %v154 = vmul.f32 %v143, 1.442695
    %v155 = vpow.pop %v154
    %v156 = vsel %vm119, %v145, 0.0
    %157 = vadd.xlane.f32.xlu0 %v156
    %v158 = vpop.xlane.xlu0 %157
    %v159 = vsel %vm119, %v147, 0.0
    %160 = vadd.xlane.f32.xlu0 %v159
    %v161 = vpop.xlane.xlu0 %160
    %v162 = vsel %vm119, %v149, 0.0
    %163 = vadd.xlane.f32.xlu0 %v162
    %v164 = vpop.xlane.xlu0 %163
    %v165 = vsel %vm119, %v151, 0.0
    %166 = vadd.xlane.f32.xlu0 %v165
    %v167 = vpop.xlane.xlu0 %166
    %v168 = vsel %vm119, %v153, 0.0
    %169 = vadd.xlane.f32.xlu0 %v168
    %v170 = vpop.xlane.xlu0 %169
    %v171 = vsel %vm119, %v155, 0.0
    %172 = vadd.xlane.f32.xlu0 %v171
    %v173 = vpop.xlane.xlu0 %172
    %v174 = vrcp.pop %v158
    %v175 = vrcp.pop %v161
    %v176 = vrcp.pop %v164
    %v177 = vrcp.pop %v167
    %v178 = vrcp.pop %v170
    %v179 = vrcp.pop %v173
    %v180 = vmul.f32 %v145, %v174
    %v181 = vmul.f32 %v147, %v175
    %v182 = vmul.f32 %v149, %v176
    %v183 = vmul.f32 %v151, %v177
    %v184 = vmul.f32 %v153, %v178
    %v185 = vmul.f32 %v155, %v179
    %v186 = vld [vmem:[#allocation7] sm:$0xf]
    %v187 = vld [vmem:[#allocation7 + $0x4] sm:$0xf]
    %v188 = vld [vmem:[#allocation7 + $0x8] sm:$0xf]
    %v189 = vld [vmem:[#allocation7 + $0xc] sm:$0xf]
    %v190 = vld [vmem:[#allocation7 + $0x10] sm:$0xf]
    %v191 = vld [vmem:[#allocation7 + $0x14] sm:$0xf]
    %v192 = vld [vmem:[#allocation10] sm:$0xff]
    %v193 = vld [vmem:[#allocation10 + $0x8] sm:$0xf]
    %v194 = vld [vmem:[#allocation10 + $0xc] sm:$0x33]
    %v195 = vld [vmem:[#allocation10 + $0x14] sm:$0x3]
    %v202 = vunpack.c.l.b16 %v186
    %v203 = vunpack.c.l.b16 %v187
    %v204 = vunpack.c.l.b16 %v188
    %v205 = vunpack.c.l.b16 %v189
    %v206 = vunpack.c.l.b16 %v190
    %v207 = vunpack.c.l.b16 %v191
    %v208 = vpack.c.b16 %v203, %v202
    %v209 = vpack.c.b16 %v205, %v204
    %v210 = vpack.c.b16 %v207, %v206
    %v215 = vunpack.c.l.b16 %v192
    %v216 = vunpack.c.h.b16 %v192
    %v217 = vunpack.c.l.b16 %v193
    %v218 = vunpack.c.l.b16 %v194
    %v219 = vunpack.c.h.b16 %v194
    %v220 = vunpack.c.l.b16 %v195
    %v221 = vpack.c.b16 %v218, %v215
    %v222 = vpack.c.b16 %v219, %v216
    %v223 = vpack.c.b16 %v220, %v217
    %vm224 = vcmask 97280
    %v226 = vsel %vm224, %v208, 0
    %v229 = vsel %vm224, %v209, 0
    %v232 = vsel %vm224, %v210, 0
    %vm234 = vcmask 1045504
    %v236 = vsel %vm234, %v221, 0
    %v239 = vsel %vm234, %v222, 0
    %v242 = vsel %vm234, %v223, 0
    %244 = vmatprep.subr.bf16.mxu0 %v239
    %245 = vmatpush1.bf16.msra.mxu0 %v236
    %246 = vmatprep.subr.bf16.mxu0 0
    %247 = vmatpush1.bf16.msra.mxu0 0
    %248 = vmatprep.subr.bf16.mxu0 0
    %249 = vmatpush1.bf16.msra.mxu0 0
    %250 = vmatprep.subr.bf16.mxu0 0
    %251 = vmatpush1.bf16.msra.mxu0 0
    %252 = vmatprep.subr.bf16.mxu0 0
    %253 = vmatpush1.bf16.msra.mxu0 0
    %254 = vmatprep.subr.bf16.mxu0 0
    %255 = vmatpush1.bf16.msra.mxu0 0
    %256 = vmatprep.subr.bf16.mxu0 0
    %257 = vmatpush1.bf16.msra.mxu0 0
    %258 = vmatprep.subr.bf16.mxu0 0
    %259 = vmatpush1.bf16.msra.mxu0 0
    %260 = vmatprep.subr.bf16.mxu0 0
    %261 = vmatpush1.bf16.msra.mxu0 0
    %262 = vmatprep.subr.bf16.mxu0 0
    %263 = vmatpush1.bf16.msra.mxu0 0
    %264 = vmatprep.subr.bf16.mxu0 0
    %265 = vmatpush1.bf16.msra.mxu0 0
    %266 = vmatprep.subr.bf16.mxu0 0
    %267 = vmatpush1.bf16.msra.mxu0 0
    %268 = vmatprep.subr.bf16.mxu0 0
    %269 = vmatpush1.bf16.msra.mxu0 0
    %270 = vmatprep.subr.bf16.mxu0 0
    %271 = vmatpush1.bf16.msra.mxu0 0
    %272 = vmatprep.subr.bf16.mxu0 0
    %273 = vmatpush1.bf16.msra.mxu0 0
    %274 = vmatprep.subr.bf16.mxu0 0
    %275 = vmatpush1.bf16.msra.mxu0 0
    %276 = vmatprep.mubr.bf16.mxu0 0
    %277 = vmatmul.mubr.bf16.gmra.mrb[0].mxu0 %v226
    %v278 = vpop.f32.mrb[0].mxu0
    %v279 = vadd.f32 0.0, %v278
    %v280 = vpop.f32.mrb[0].mxu0
    %v281 = vadd.f32 0.0, %v280
    %v282 = vpop.f32.mrb[0].mxu0
    %v283 = vadd.f32 0.0, %v282
    %v284 = vpop.f32.mrb[0].mxu0
    %v285 = vadd.f32 0.0, %v284
    %286 = vmatprep.mubr.bf16.mxu0 0
    %287 = vmatmul.mubr.bf16.gmra.mrb[0].mxu0 %v229
    %v288 = vpop.f32.mrb[0].mxu0
    %v289 = vadd.f32 0.0, %v288
    %v290 = vpop.f32.mrb[0].mxu0
    %v291 = vadd.f32 0.0, %v290
    %v292 = vpop.f32.mrb[0].mxu0
    %v293 = vadd.f32 0.0, %v292
    %v294 = vpop.f32.mrb[0].mxu0
    %v295 = vadd.f32 0.0, %v294
    %296 = vmatprep.mubr.bf16.mxu0 0
    %297 = vmatmul.mubr.bf16.gmra.mrb[0].mxu0 %v232
    %v298 = vpop.f32.mrb[0].mxu0
    %v299 = vadd.f32 0.0, %v298
    %v300 = vpop.f32.mrb[0].mxu0
    %v301 = vadd.f32 0.0, %v300
    %v302 = vpop.f32.mrb[0].mxu0
    %v303 = vadd.f32 0.0, %v302
    %v304 = vpop.f32.mrb[0].mxu0
    %v305 = vadd.f32 0.0, %v304
    %306 = vdwg.mxu0
    %307 = vmatprep.subr.bf16.mxu0 0
    %308 = vmatpush1.bf16.msra.mxu0 %v242
    %309 = vmatprep.subr.bf16.mxu0 0
    %310 = vmatpush1.bf16.msra.mxu0 0
    %311 = vmatprep.subr.bf16.mxu0 0
    %312 = vmatpush1.bf16.msra.mxu0 0
    %313 = vmatprep.subr.bf16.mxu0 0
    %314 = vmatpush1.bf16.msra.mxu0 0
    %315 = vmatprep.subr.bf16.mxu0 0
    %316 = vmatpush1.bf16.msra.mxu0 0
    %317 = vmatprep.subr.bf16.mxu0 0
    %318 = vmatpush1.bf16.msra.mxu0 0
    %319 = vmatprep.subr.bf16.mxu0 0
    %320 = vmatpush1.bf16.msra.mxu0 0
    %321 = vmatprep.subr.bf16.mxu0 0
    %322 = vmatpush1.bf16.msra.mxu0 0
    %323 = vmatprep.subr.bf16.mxu0 0
    %324 = vmatpush1.bf16.msra.mxu0 0
    %325 = vmatprep.subr.bf16.mxu0 0
    %326 = vmatpush1.bf16.msra.mxu0 0
    %327 = vmatprep.subr.bf16.mxu0 0
    %328 = vmatpush1.bf16.msra.mxu0 0
    %329 = vmatprep.subr.bf16.mxu0 0
    %330 = vmatpush1.bf16.msra.mxu0 0
    %331 = vmatprep.subr.bf16.mxu0 0
    %332 = vmatpush1.bf16.msra.mxu0 0
    %333 = vmatprep.subr.bf16.mxu0 0
    %334 = vmatpush1.bf16.msra.mxu0 0
    %335 = vmatprep.subr.bf16.mxu0 0
    %336 = vmatpush1.bf16.msra.mxu0 0
    %337 = vmatprep.subr.bf16.mxu0 0
    %338 = vmatpush1.bf16.msra.mxu0 0
    %339 = vmatprep.mubr.bf16.mxu0 0
    %340 = vmatmul.mubr.bf16.gmra.mrb[0].mxu0 %v226
    %v341 = vpop.f32.mrb[0].mxu0
    %v342 = vadd.f32 0.0, %v341
    %v343 = vpop.f32.mrb[0].mxu0
    %v344 = vpop.f32.mrb[0].mxu0
    %v345 = vadd.f32 0.0, %v344
    %v346 = vpop.f32.mrb[0].mxu0
    %347 = vmatprep.mubr.bf16.mxu0 0
    %348 = vmatmul.mubr.bf16.gmra.mrb[0].mxu0 %v229
    %v349 = vpop.f32.mrb[0].mxu0
    %v350 = vadd.f32 0.0, %v349
    %v351 = vpop.f32.mrb[0].mxu0
    %v352 = vpop.f32.mrb[0].mxu0
    %v353 = vadd.f32 0.0, %v352
    %v354 = vpop.f32.mrb[0].mxu0
    %355 = vmatprep.mubr.bf16.mxu0 0
    %356 = vmatmul.mubr.bf16.gmra.mrb[0].mxu0 %v232
    %v357 = vpop.f32.mrb[0].mxu0
    %v358 = vadd.f32 0.0, %v357
    %v359 = vpop.f32.mrb[0].mxu0
    %v360 = vpop.f32.mrb[0].mxu0
    %v361 = vadd.f32 0.0, %v360
    %v362 = vpop.f32.mrb[0].mxu0
    %363 = vdwg.mxu0
    %365 = vset.pattern.permute.xlu0 0
    %366 = vperm.xlu0 %365, %v180
    %v367 = vpop.permute.xlu0 %366
    %370 = vset.pattern.permute.xlu0 0
    %371 = vperm.xlu0 %370, %v181
    %v372 = vpop.permute.xlu0 %371
    %375 = vset.pattern.permute.xlu0 0
    %376 = vperm.xlu0 %375, %v182
    %v377 = vpop.permute.xlu0 %376
    %380 = vset.pattern.permute.xlu0 0
    %381 = vperm.xlu0 %380, %v183
    %v382 = vpop.permute.xlu0 %381
    %385 = vset.pattern.permute.xlu0 0
    %386 = vperm.xlu0 %385, %v184
    %v387 = vpop.permute.xlu0 %386
    %390 = vset.pattern.permute.xlu0 0
    %391 = vperm.xlu0 %390, %v185
    %v392 = vpop.permute.xlu0 %391
    %v394 = vmul.f32 %v367, %v279
    %v395 = vmul.f32 %v372, %v283
    %v396 = vmul.f32 %v377, %v289
    %v397 = vmul.f32 %v382, %v293
    %v398 = vmul.f32 %v387, %v299
    %v399 = vmul.f32 %v392, %v303
    %400 = vset.pattern.permute.xlu0 1
    %401 = vperm.xlu0 %400, %v180
    %v402 = vpop.permute.xlu0 %401
    %404 = vset.pattern.permute.xlu0 1
    %405 = vperm.xlu0 %404, %v181
    %v406 = vpop.permute.xlu0 %405
    %408 = vset.pattern.permute.xlu0 1
    %409 = vperm.xlu0 %408, %v182
    %v410 = vpop.permute.xlu0 %409
    %412 = vset.pattern.permute.xlu0 1
    %413 = vperm.xlu0 %412, %v183
    %v414 = vpop.permute.xlu0 %413
    %416 = vset.pattern.permute.xlu0 1
    %417 = vperm.xlu0 %416, %v184
    %v418 = vpop.permute.xlu0 %417
    %420 = vset.pattern.permute.xlu0 1
    %421 = vperm.xlu0 %420, %v185
    %v422 = vpop.permute.xlu0 %421
    %v424 = vmul.f32 %v402, %v279
    %v425 = vmul.f32 %v406, %v283
    %v426 = vmul.f32 %v410, %v289
    %v427 = vmul.f32 %v414, %v293
    %v428 = vmul.f32 %v418, %v299
    %v429 = vmul.f32 %v422, %v303
    %436 = vrot.lane.b32.xlu0 %v424, 96
    %v437 = vpop.permute.xlu0 %436
    %438 = vrot.lane.b32.xlu0 %v425, 96
    %v439 = vpop.permute.xlu0 %438
    %440 = vrot.lane.b32.xlu0 %v426, 96
    %v441 = vpop.permute.xlu0 %440
    %442 = vrot.lane.b32.xlu0 %v427, 96
    %v443 = vpop.permute.xlu0 %442
    %444 = vrot.lane.b32.xlu0 %v428, 96
    %v445 = vpop.permute.xlu0 %444
    %446 = vrot.lane.b32.xlu0 %v429, 96
    %v447 = vpop.permute.xlu0 %446
    %v454 = vadd.f32 %v394, %v437
    %v455 = vadd.f32 %v395, %v439
    %v456 = vadd.f32 %v396, %v441
    %v457 = vadd.f32 %v397, %v443
    %v458 = vadd.f32 %v398, %v445
    %v459 = vadd.f32 %v399, %v447
    %460 = vset.pattern.permute.xlu0 2
    %461 = vperm.xlu0 %460, %v180
    %v462 = vpop.permute.xlu0 %461
    %464 = vset.pattern.permute.xlu0 2
    %465 = vperm.xlu0 %464, %v181
    %v466 = vpop.permute.xlu0 %465
    %468 = vset.pattern.permute.xlu0 2
    %469 = vperm.xlu0 %468, %v182
    %v470 = vpop.permute.xlu0 %469
    %472 = vset.pattern.permute.xlu0 2
    %473 = vperm.xlu0 %472, %v183
    %v474 = vpop.permute.xlu0 %473
    %476 = vset.pattern.permute.xlu0 2
    %477 = vperm.xlu0 %476, %v184
    %v478 = vpop.permute.xlu0 %477
    %480 = vset.pattern.permute.xlu0 2
    %481 = vperm.xlu0 %480, %v185
    %v482 = vpop.permute.xlu0 %481
    %v484 = vmul.f32 %v462, %v279
    %v485 = vmul.f32 %v466, %v283
    %v486 = vmul.f32 %v470, %v289
    %v487 = vmul.f32 %v474, %v293
    %v488 = vmul.f32 %v478, %v299
    %v489 = vmul.f32 %v482, %v303
    %496 = vrot.lane.b32.xlu0 %v484, 64
    %v497 = vpop.permute.xlu0 %496
    %498 = vrot.lane.b32.xlu0 %v485, 64
    %v499 = vpop.permute.xlu0 %498
    %500 = vrot.lane.b32.xlu0 %v486, 64
    %v501 = vpop.permute.xlu0 %500
    %502 = vrot.lane.b32.xlu0 %v487, 64
    %v503 = vpop.permute.xlu0 %502
    %504 = vrot.lane.b32.xlu0 %v488, 64
    %v505 = vpop.permute.xlu0 %504
    %506 = vrot.lane.b32.xlu0 %v489, 64
    %v507 = vpop.permute.xlu0 %506
    %v514 = vadd.f32 %v454, %v497
    %v515 = vadd.f32 %v455, %v499
    %v516 = vadd.f32 %v456, %v501
    %v517 = vadd.f32 %v457, %v503
    %v518 = vadd.f32 %v458, %v505
    %v519 = vadd.f32 %v459, %v507
    %520 = vset.pattern.permute.xlu0 3
    %521 = vperm.xlu0 %520, %v180
    %v522 = vpop.permute.xlu0 %521
    %524 = vset.pattern.permute.xlu0 3
    %525 = vperm.xlu0 %524, %v181
    %v526 = vpop.permute.xlu0 %525
    %528 = vset.pattern.permute.xlu0 3
    %529 = vperm.xlu0 %528, %v182
    %v530 = vpop.permute.xlu0 %529
    %532 = vset.pattern.permute.xlu0 3
    %533 = vperm.xlu0 %532, %v183
    %v534 = vpop.permute.xlu0 %533
    %536 = vset.pattern.permute.xlu0 3
    %537 = vperm.xlu0 %536, %v184
    %v538 = vpop.permute.xlu0 %537
    %540 = vset.pattern.permute.xlu0 3
    %541 = vperm.xlu0 %540, %v185
    %v542 = vpop.permute.xlu0 %541
    %v544 = vmul.f32 %v522, %v279
    %v545 = vmul.f32 %v526, %v283
    %v546 = vmul.f32 %v530, %v289
    %v547 = vmul.f32 %v534, %v293
    %v548 = vmul.f32 %v538, %v299
    %v549 = vmul.f32 %v542, %v303
    %556 = vrot.lane.b32.xlu0 %v544, 32
    %v557 = vpop.permute.xlu0 %556
    %558 = vrot.lane.b32.xlu0 %v545, 32
    %v559 = vpop.permute.xlu0 %558
    %560 = vrot.lane.b32.xlu0 %v546, 32
    %v561 = vpop.permute.xlu0 %560
    %562 = vrot.lane.b32.xlu0 %v547, 32
    %v563 = vpop.permute.xlu0 %562
    %564 = vrot.lane.b32.xlu0 %v548, 32
    %v565 = vpop.permute.xlu0 %564
    %566 = vrot.lane.b32.xlu0 %v549, 32
    %v567 = vpop.permute.xlu0 %566
    %v574 = vadd.f32 %v514, %v557
    %v575 = vadd.f32 %v515, %v559
    %v576 = vadd.f32 %v516, %v561
    %v577 = vadd.f32 %v517, %v563
    %v578 = vadd.f32 %v518, %v565
    %v579 = vadd.f32 %v519, %v567
    %580 = vset.pattern.permute.xlu0 4
    %581 = vperm.xlu0 %580, %v180
    %v582 = vpop.permute.xlu0 %581
    %584 = vset.pattern.permute.xlu0 4
    %585 = vperm.xlu0 %584, %v181
    %v586 = vpop.permute.xlu0 %585
    %588 = vset.pattern.permute.xlu0 4
    %589 = vperm.xlu0 %588, %v182
    %v590 = vpop.permute.xlu0 %589
    %592 = vset.pattern.permute.xlu0 4
    %593 = vperm.xlu0 %592, %v183
    %v594 = vpop.permute.xlu0 %593
    %596 = vset.pattern.permute.xlu0 4
    %597 = vperm.xlu0 %596, %v184
    %v598 = vpop.permute.xlu0 %597
    %600 = vset.pattern.permute.xlu0 4
    %601 = vperm.xlu0 %600, %v185
    %v602 = vpop.permute.xlu0 %601
    %v604 = vmul.f32 %v582, %v281
    %v605 = vmul.f32 %v586, %v285
    %v606 = vmul.f32 %v590, %v291
    %v607 = vmul.f32 %v594, %v295
    %v608 = vmul.f32 %v598, %v301
    %v609 = vmul.f32 %v602, %v305
    %v610 = vadd.f32 %v574, %v604
    %v611 = vadd.f32 %v575, %v605
    %v612 = vadd.f32 %v576, %v606
    %v613 = vadd.f32 %v577, %v607
    %v614 = vadd.f32 %v578, %v608
    %v615 = vadd.f32 %v579, %v609
    %616 = vset.pattern.permute.xlu0 5
    %617 = vperm.xlu0 %616, %v180
    %v618 = vpop.permute.xlu0 %617
    %620 = vset.pattern.permute.xlu0 5
    %621 = vperm.xlu0 %620, %v181
    %v622 = vpop.permute.xlu0 %621
    %624 = vset.pattern.permute.xlu0 5
    %625 = vperm.xlu0 %624, %v182
    %v626 = vpop.permute.xlu0 %625
    %628 = vset.pattern.permute.xlu0 5
    %629 = vperm.xlu0 %628, %v183
    %v630 = vpop.permute.xlu0 %629
    %632 = vset.pattern.permute.xlu0 5
    %633 = vperm.xlu0 %632, %v184
    %v634 = vpop.permute.xlu0 %633
    %636 = vset.pattern.permute.xlu0 5
    %637 = vperm.xlu0 %636, %v185
    %v638 = vpop.permute.xlu0 %637
    %v640 = vmul.f32 %v618, %v281
    %v641 = vmul.f32 %v622, %v285
    %v642 = vmul.f32 %v626, %v291
    %v643 = vmul.f32 %v630, %v295
    %v644 = vmul.f32 %v634, %v301
    %v645 = vmul.f32 %v638, %v305
    %652 = vrot.lane.b32.xlu0 %v640, 96
    %v653 = vpop.permute.xlu0 %652
    %654 = vrot.lane.b32.xlu0 %v641, 96
    %v655 = vpop.permute.xlu0 %654
    %656 = vrot.lane.b32.xlu0 %v642, 96
    %v657 = vpop.permute.xlu0 %656
    %658 = vrot.lane.b32.xlu0 %v643, 96
    %v659 = vpop.permute.xlu0 %658
    %660 = vrot.lane.b32.xlu0 %v644, 96
    %v661 = vpop.permute.xlu0 %660
    %662 = vrot.lane.b32.xlu0 %v645, 96
    %v663 = vpop.permute.xlu0 %662
    %v670 = vadd.f32 %v610, %v653
    %v671 = vadd.f32 %v611, %v655
    %v672 = vadd.f32 %v612, %v657
    %v673 = vadd.f32 %v613, %v659
    %v674 = vadd.f32 %v614, %v661
    %v675 = vadd.f32 %v615, %v663
    %676 = vset.pattern.permute.xlu0 6
    %677 = vperm.xlu0 %676, %v180
    %v678 = vpop.permute.xlu0 %677
    %680 = vset.pattern.permute.xlu0 6
    %681 = vperm.xlu0 %680, %v181
    %v682 = vpop.permute.xlu0 %681
    %684 = vset.pattern.permute.xlu0 6
    %685 = vperm.xlu0 %684, %v182
    %v686 = vpop.permute.xlu0 %685
    %688 = vset.pattern.permute.xlu0 6
    %689 = vperm.xlu0 %688, %v183
    %v690 = vpop.permute.xlu0 %689
    %692 = vset.pattern.permute.xlu0 6
    %693 = vperm.xlu0 %692, %v184
    %v694 = vpop.permute.xlu0 %693
    %696 = vset.pattern.permute.xlu0 6
    %697 = vperm.xlu0 %696, %v185
    %v698 = vpop.permute.xlu0 %697
    %v700 = vmul.f32 %v678, %v281
    %v701 = vmul.f32 %v682, %v285
    %v702 = vmul.f32 %v686, %v291
    %v703 = vmul.f32 %v690, %v295
    %v704 = vmul.f32 %v694, %v301
    %v705 = vmul.f32 %v698, %v305
    %712 = vrot.lane.b32.xlu0 %v700, 64
    %v713 = vpop.permute.xlu0 %712
    %714 = vrot.lane.b32.xlu0 %v701, 64
    %v715 = vpop.permute.xlu0 %714
    %716 = vrot.lane.b32.xlu0 %v702, 64
    %v717 = vpop.permute.xlu0 %716
    %718 = vrot.lane.b32.xlu0 %v703, 64
    %v719 = vpop.permute.xlu0 %718
    %720 = vrot.lane.b32.xlu0 %v704, 64
    %v721 = vpop.permute.xlu0 %720
    %722 = vrot.lane.b32.xlu0 %v705, 64
    %v723 = vpop.permute.xlu0 %722
    %v730 = vadd.f32 %v670, %v713
    %v731 = vadd.f32 %v671, %v715
    %v732 = vadd.f32 %v672, %v717
    %v733 = vadd.f32 %v673, %v719
    %v734 = vadd.f32 %v674, %v721
    %v735 = vadd.f32 %v675, %v723
    %736 = vset.pattern.permute.xlu0 7
    %737 = vperm.xlu0 %736, %v180
    %v738 = vpop.permute.xlu0 %737
    %740 = vset.pattern.permute.xlu0 7
    %741 = vperm.xlu0 %740, %v181
    %v742 = vpop.permute.xlu0 %741
    %744 = vset.pattern.permute.xlu0 7
    %745 = vperm.xlu0 %744, %v182
    %v746 = vpop.permute.xlu0 %745
    %748 = vset.pattern.permute.xlu0 7
    %749 = vperm.xlu0 %748, %v183
    %v750 = vpop.permute.xlu0 %749
    %752 = vset.pattern.permute.xlu0 7
    %753 = vperm.xlu0 %752, %v184
    %v754 = vpop.permute.xlu0 %753
    %756 = vset.pattern.permute.xlu0 7
    %757 = vperm.xlu0 %756, %v185
    %v758 = vpop.permute.xlu0 %757
    %v760 = vmul.f32 %v738, %v281
    %v761 = vmul.f32 %v742, %v285
    %v762 = vmul.f32 %v746, %v291
    %v763 = vmul.f32 %v750, %v295
    %v764 = vmul.f32 %v754, %v301
    %v765 = vmul.f32 %v758, %v305
    %772 = vrot.lane.b32.xlu0 %v760, 32
    %v773 = vpop.permute.xlu0 %772
    %774 = vrot.lane.b32.xlu0 %v761, 32
    %v775 = vpop.permute.xlu0 %774
    %776 = vrot.lane.b32.xlu0 %v762, 32
    %v777 = vpop.permute.xlu0 %776
    %778 = vrot.lane.b32.xlu0 %v763, 32
    %v779 = vpop.permute.xlu0 %778
    %780 = vrot.lane.b32.xlu0 %v764, 32
    %v781 = vpop.permute.xlu0 %780
    %782 = vrot.lane.b32.xlu0 %v765, 32
    %v783 = vpop.permute.xlu0 %782
    %v790 = vadd.f32 %v730, %v773
    %v791 = vadd.f32 %v731, %v775
    %v792 = vadd.f32 %v732, %v777
    %v793 = vadd.f32 %v733, %v779
    %v794 = vadd.f32 %v734, %v781
    %v795 = vadd.f32 %v735, %v783
    %796 = vset.pattern.permute.xlu0 8
    %797 = vperm.xlu0 %796, %v180
    %v798 = vpop.permute.xlu0 %797
    %800 = vset.pattern.permute.xlu0 8
    %801 = vperm.xlu0 %800, %v181
    %v802 = vpop.permute.xlu0 %801
    %804 = vset.pattern.permute.xlu0 8
    %805 = vperm.xlu0 %804, %v182
    %v806 = vpop.permute.xlu0 %805
    %808 = vset.pattern.permute.xlu0 8
    %809 = vperm.xlu0 %808, %v183
    %v810 = vpop.permute.xlu0 %809
    %812 = vset.pattern.permute.xlu0 8
    %813 = vperm.xlu0 %812, %v184
    %v814 = vpop.permute.xlu0 %813
    %816 = vset.pattern.permute.xlu0 8
    %817 = vperm.xlu0 %816, %v185
    %v818 = vpop.permute.xlu0 %817
    %v820 = vmul.f32 %v798, %v342
    %v821 = vmul.f32 %v802, %v345
    %v822 = vmul.f32 %v806, %v350
    %v823 = vmul.f32 %v810, %v353
    %v824 = vmul.f32 %v814, %v358
    %v825 = vmul.f32 %v818, %v361
    %v826 = vadd.f32 %v790, %v820
    %v827 = vadd.f32 %v791, %v821
    %v828 = vadd.f32 %v792, %v822
    %v829 = vadd.f32 %v793, %v823
    %v830 = vadd.f32 %v794, %v824
    %v831 = vadd.f32 %v795, %v825
    %vm832 = vcmask 261120
    %833 = vst.msk [vmem:[#allocation11] sm:$0xff] %vm832, %v826
    %834 = vst.msk [vmem:[#allocation11 + $0x8] sm:$0xff] %vm832, %v827
    %835 = vst.msk [vmem:[#allocation11 + $0x10] sm:$0xff] %vm832, %v828
    %836 = vst.msk [vmem:[#allocation11 + $0x18] sm:$0xff] %vm832, %v829
    %837 = vst.msk [vmem:[#allocation11 + $0x20] sm:$0xff] %vm832, %v830
    %838 = vst.msk [vmem:[#allocation11 + $0x28] sm:$0xff] %vm832, %v831
    // Predicated region
    $region42: #{dual_gnn_forward.27} parent=1 // pred_check
      _
    $region43: #{dual_gnn_forward.27} parent=1 // pred_check_branch
      %840 = sbr.rel (0) target = $region45
    $region44: #{dual_gnn_forward.27} parent=1 // pred_region
      %s842 = ssub.s32 768, 768
      %843 = vsyncadd [#allocation4], %s842
      %s844 = sshll.u32 [#allocation11], 4
      %s845 = int_to_ptr.vmem [resolvable:$true] %s844
      %850 = dma.vmem_to_hbm [thread:$0]  %s845, 768, %s5, [#allocation4], 128, 128, 8
    $region45: #{dual_gnn_forward.27} parent=1 // pred_fallthru
      _
    // Predicated region
    $region46: #{dual_gnn_forward.27} parent=1 // pred_check
      _
    $region47: #{dual_gnn_forward.27} parent=1 // pred_check_branch
      %852 = sbr.rel (0) target = $region49
    $region48: #{dual_gnn_forward.27} parent=1 // pred_region
      %853 = dma.done [#allocation4], 768
    $region49: #{dual_gnn_forward.27} parent=1 // pred_fallthru
      _
    %854 = vsyncpa [#allocation3], 1
    %855 = vsyncpa [#allocation6], 1
    %856 = vsyncpa [#allocation9], 1
    %857 = vsyncpa [#allocation4], 1

</llo_original>
